<compile_context>
chip_gen: v5e
topology: v5e:2x2
jax: 0.10.0
libtpu: 0.0.40
codegen_flags: <defaults>
</compile_context>

<pallas_src>
import functools

import numpy as np
import jax
import jax.numpy as jnp
from jax.experimental import pallas as pl
from jax.experimental.pallas import tpu as pltpu


_VMEM_LIMIT = 32 * 1024 * 1024  # well under v7x's 64 MiB physical VMEM


def _mpad(H, W):
    """Length of a zero-padded (H+2, W+2) image flattened row-major, +2 tail
    entries so the last (di=2, dj=2) conv tap reads one contiguous window."""
    return (H + 2) * (W + 2) + 2


def _col_mask(H, W):
    """(H*(W+2), 1) f32 mask: 1 for valid columns q < W of each pitch-(W+2)
    row of the conv accumulator, 0 for the two cross-row garbage columns."""
    m = np.zeros((H, W + 2), np.float32)
    m[:, :W] = 1.0
    return jnp.asarray(m.reshape(H * (W + 2), 1))


def _upsample_matrix(Hs, Ws, src_padded):
    """0/1 matrix S with S @ cur == 2x nearest-neighbour upsample of `cur`,
    emitted directly in padded-flat layout at (2*Hs, 2*Ws).

    src_padded=True : `cur` is padded-flat at (Hs, Ws)  (pitch Ws+2).
    src_padded=False: `cur` is a raw conv accumulator at (Hs, Ws) (rows
                      p*(Ws+2)+q); its garbage rows are never referenced.
    Border / garbage rows of the target are all-zero rows of S, so the result
    is already correctly zero-padded for the following 3x3 conv.
    """
    Ht, Wt = 2 * Hs, 2 * Ws
    wrt, wrs = Wt + 2, Ws + 2
    src_len = _mpad(Hs, Ws) if src_padded else Hs * wrs
    S = np.zeros((_mpad(Ht, Wt), src_len), np.float32)
    for p in range(Ht):
        for q in range(Wt):
            if src_padded:
                j = (p // 2 + 1) * wrs + (q // 2 + 1)
            else:
                j = (p // 2) * wrs + (q // 2)
            S[(p + 1) * wrt + (q + 1), j] = 1.0
    return jnp.asarray(S, jnp.bfloat16)


# ----------------------------- in-kernel helpers -----------------------------

def _conv3x3(src_ref, w_ref, H, W, Cout):
    """3x3 conv (stride 1, pad 1) over a padded-flat f32 source ref as 9
    shifted (M, Cin) @ (Cin, Cout) bf16 MXU matmuls with f32 accumulation.
    Row p*(W+2)+q of the result is the conv output at pixel (p, q) for q < W;
    columns q in {W, W+1} are cross-row garbage the caller masks / ignores."""
    # TODO(synk): kept as 9 accumulated dots rather than one K-stacked
    # (M, 9*Cin) matmul -- stacking needs sub-128 lane-offset scatter stores
    # whose Mosaic lowering is not guaranteed at Cin=3; at this problem size
    # the conv is not the bottleneck.
    Wr = W + 2
    M = H * Wr
    acc = jnp.zeros((M, Cout), jnp.float32)
    for t in range(9):
        di, dj = divmod(t, 3)
        patch = src_ref[pl.ds(di * Wr + dj, M), :].astype(jnp.bfloat16)
        acc = acc + jnp.dot(patch, w_ref[t], preferred_element_type=jnp.float32)
    return acc


def _down_block(src_ref, w_ref, b_ref, m_ref, res_ref, pool_ref, H, W, Cout):
    """Fused DownSample block: y = relu(conv3x3(x)+b); residual <- y (padded-
    flat); pool <- maxpool2x2(y) (padded-flat, ready for the next conv)."""
    Wr = W + 2
    M = H * Wr
    Hp, Wp = H // 2, W // 2
    Wrp = Wp + 2

    acc = _conv3x3(src_ref, w_ref, H, W, Cout)
    acc = jnp.maximum(acc + b_ref[...], 0.0) * m_ref[...]   # bias+relu, zero garbage

    # Residual in padded-flat layout, interior written exactly once; only the
    # two (Wr+1)-row border strips get explicit zeros (masked garbage columns
    # land on the remaining border positions).
    edge = jnp.zeros((Wr + 1, Cout), jnp.float32)
    res_ref[pl.ds(0, Wr + 1), :] = edge
    res_ref[pl.ds(Wr + 1, M), :] = acc
    res_ref[pl.ds(Wr + 1 + M, Wr + 1), :] = edge

    # 2x2 max-pool: horizontal pair-max via two stride-2 loads over the whole
    # interior (pitch Wr is even so pairing stays aligned across rows; the
    # leftover entry per row is max(0, 0) and becomes the right border), then
    # an unrolled Hp-step vertical pair-max storing one full pooled row each.
    L = H * (Wp + 1)
    hm = jnp.maximum(res_ref[pl.ds(Wr + 1, L, stride=2), :],
                     res_ref[pl.ds(Wr + 2, L, stride=2), :])
    pool_ref[...] = jnp.zeros(pool_ref.shape, pool_ref.dtype)
    for i in range(Hp):
        r0 = hm[(2 * i) * (Wp + 1):(2 * i + 1) * (Wp + 1), :]
        r1 = hm[(2 * i + 1) * (Wp + 1):(2 * i + 2) * (Wp + 1), :]
        pool_ref[pl.ds((i + 1) * Wrp + 1, Wp + 1), :] = jnp.maximum(r0, r1)


def _up_block(c_ref, r_ref, s_ref, w_ref, b_ref, u_ref, H, W, Cout, relu):
    """Fused UpSample block: u = upsample2x(cur) + residual (one MXU matmul
    with a 0/1 selection matrix, result already zero-padded), then
    conv3x3 + bias (+relu).  Returns the raw (M, Cout) accumulator."""
    up = jnp.dot(s_ref[...], c_ref[...].astype(jnp.bfloat16),
                 preferred_element_type=jnp.float32)
    u_ref[...] = up + r_ref[...]                 # fused skip add (f32)
    acc = _conv3x3(u_ref, w_ref, H, W, Cout) + b_ref[...]
    if relu:
        acc = jnp.maximum(acc, 0.0)
    return acc


def _unet_kernel(*refs, nd, H, W, down_cout, up_cout):
    idx = 0
    x_ref = refs[idx]; idx += 1
    down_refs = [refs[idx + 3 * i: idx + 3 * i + 3] for i in range(nd)]
    idx += 3 * nd
    up_refs = [refs[idx + 3 * k: idx + 3 * k + 3] for k in range(nd)]
    idx += 3 * nd
    out_ref = refs[idx]; idx += 1
    res_refs = refs[idx: idx + nd]; idx += nd
    pool_refs = refs[idx: idx + nd]; idx += nd
    u_refs = refs[idx: idx + nd]; idx += nd
    t_refs = refs[idx: idx + nd - 1]; idx += nd - 1

    # ------------------------------ encoder ------------------------------
    src = x_ref
    for i in range(nd):
        w_ref, b_ref, m_ref = down_refs[i]
        _down_block(src, w_ref, b_ref, m_ref, res_refs[i], pool_refs[i],
                    H >> i, W >> i, down_cout[i])
        src = pool_refs[i]

    # ------------------------------ decoder ------------------------------
    cur = pool_refs[nd - 1]
    for k in range(nd):
        lvl = nd - 1 - k
        s_ref, w_ref, b_ref = up_refs[k]
        acc = _up_block(cur, res_refs[lvl], s_ref, w_ref, b_ref, u_refs[k],
                        H >> lvl, W >> lvl, up_cout[k],
                        relu=(k != nd - 1))
        if k != nd - 1:
            t_refs[k][...] = acc        # raw acc layout; garbage rows never read
            cur = t_refs[k]
        else:
            # Final conv output; garbage columns are sliced away outside.
            out_ref[...] = acc.astype(out_ref.dtype)


# ------------------------------- forward pass --------------------------------

def unet_forward(params, x_nchw):
    """UNet forward (NCHW in / NCHW out) via one fused Pallas TPU kernel."""
    x = jnp.transpose(x_nchw, (0, 2, 3, 1))            # NCHW -> NHWC
    N, H, W, Cin0 = x.shape
    nd = len(params["down"])
    assert H % (1 << nd) == 0 and W % (1 << nd) == 0, (H, W, nd)

    down_cout = tuple(w.shape[-1] for (w, _) in params["down"])
    up_cin = tuple(w.shape[-2] for (w, _) in params["up"])
    up_cout = tuple(w.shape[-1] for (w, _) in params["up"])

    def _const_spec(arr):
        zeros = (0,) * arr.ndim
        return pl.BlockSpec(arr.shape, lambda n, _z=zeros: _z)

    # single pad/flatten of the network input (only XLA glue on the in side)
    xp = jnp.pad(x, ((0, 0), (1, 1), (1, 1), (0, 0)))
    xf = jnp.pad(xp.reshape(N, (H + 2) * (W + 2), Cin0),
                 ((0, 0), (0, 2), (0, 0)))

    inputs = [xf]
    in_specs = [pl.BlockSpec((None, _mpad(H, W), Cin0), lambda n: (n, 0, 0))]

    for i, (w, b) in enumerate(params["down"]):
        ci, co = w.shape[-2], w.shape[-1]
        w9 = w.reshape(9, ci, co).astype(jnp.bfloat16)
        b2 = b.reshape(1, co).astype(jnp.float32)
        mk = _col_mask(H >> i, W >> i)
        for a in (w9, b2, mk):
            inputs.append(a)
            in_specs.append(_const_spec(a))

    for k, (w, b) in enumerate(params["up"]):
        ci, co = w.shape[-2], w.shape[-1]
        lvl = nd - 1 - k
        S = _upsample_matrix(H >> (lvl + 1), W >> (lvl + 1),
                             src_padded=(k == 0))
        w9 = w.reshape(9, ci, co).astype(jnp.bfloat16)
        b2 = b.reshape(1, co).astype(jnp.float32)
        for a in (S, w9, b2):
            inputs.append(a)
            in_specs.append(_const_spec(a))

    # VMEM scratch: every intermediate activation lives here (no HBM traffic).
    scratch = []
    for i in range(nd):                                 # residuals (padded-flat)
        scratch.append(pltpu.VMEM((_mpad(H >> i, W >> i), down_cout[i]),
                                  jnp.float32))
    for i in range(nd):                                 # pooled outputs (padded-flat)
        scratch.append(pltpu.VMEM((_mpad(H >> (i + 1), W >> (i + 1)),
                                   down_cout[i]), jnp.float32))
    for k in range(nd):                                 # up conv sources (padded-flat)
        lvl = nd - 1 - k
        scratch.append(pltpu.VMEM((_mpad(H >> lvl, W >> lvl), up_cin[k]),
                                  jnp.float32))
    for k in range(nd - 1):                             # up conv outputs (acc layout)
        lvl = nd - 1 - k
        scratch.append(pltpu.VMEM(((H >> lvl) * ((W >> lvl) + 2), up_cout[k]),
                                  jnp.float32))

    Cf = up_cout[-1]
    Mout = H * (W + 2)
    kernel = functools.partial(_unet_kernel, nd=nd, H=H, W=W,
                               down_cout=down_cout, up_cout=up_cout)

    out_flat = pl.pallas_call(
        kernel,
        out_shape=jax.ShapeDtypeStruct((N, Mout, Cf), jnp.float32),
        grid=(N,),
        in_specs=in_specs,
        out_specs=pl.BlockSpec((None, Mout, Cf), lambda n: (n, 0, 0)),
        scratch_shapes=scratch,
        compiler_params=pltpu.CompilerParams(
            dimension_semantics=("parallel",),   # batch=2 -> 2 TCs on v7x
            vmem_limit_bytes=_VMEM_LIMIT),
    )(*inputs)

    out = out_flat.reshape(N, H, W + 2, Cf)[:, :, :W, :]
    return jnp.transpose(out, (0, 3, 1, 2))             # NHWC -> NCHW


# -------------------------------- parameters ---------------------------------

def _init_conv(key, cin, cout):
    # mimics torch.nn.Conv2d default init (uniform +/- 1/sqrt(fan_in)); HWIO.
    kw, kb = jax.random.split(key)
    bound = 1.0 / float(cin * 9) ** 0.5
    w = jax.random.uniform(kw, (3, 3, cin, cout), jnp.float32, -bound, bound)
    b = jax.random.uniform(kb, (cout,), jnp.float32, -bound, bound)
    return w, b


def init_unet_params(key, channalsM=8, zoom=3):
    down_ch = [(3, channalsM)]
    up_ch = [(channalsM, 3)]
    for i in range(zoom - 1):
        down_ch.append((channalsM * 2 ** i, channalsM * 2 ** (i + 1)))
        up_ch.insert(0, (channalsM * 2 ** (i + 1), channalsM * 2 ** i))
    keys = jax.random.split(key, len(down_ch) + len(up_ch))
    params = {"down": [], "up": []}
    for k, (ci, co) in zip(keys[:len(down_ch)], down_ch):
        params["down"].append(_init_conv(k, ci, co))
    for k, (ci, co) in zip(keys[len(down_ch):], up_ch):
        params["up"].append(_init_conv(k, ci, co))
    return params


def unet_reference(params, x_nchw):
    """Pure-JAX (XLA) reference with identical assumed block semantics."""
    x = jnp.transpose(x_nchw, (0, 2, 3, 1))
    dn = ("NHWC", "HWIO", "NHWC")
    res = []
    for (w, b) in params["down"]:
        y = jax.lax.conv_general_dilated(x, w, (1, 1), "SAME",
                                         dimension_numbers=dn) + b
        y = jnp.maximum(y, 0.0)
        res.append(y)
        x = jax.lax.reduce_window(y, -jnp.inf, jax.lax.max,
                                  (1, 2, 2, 1), (1, 2, 2, 1), "VALID")
    n_up = len(params["up"])
    for k, (w, b) in enumerate(params["up"]):
        x = jnp.repeat(jnp.repeat(x, 2, axis=1), 2, axis=2) + res.pop(-1)
        x = jax.lax.conv_general_dilated(x, w, (1, 1), "SAME",
                                         dimension_numbers=dn) + b
        if k != n_up - 1:
            x = jnp.maximum(x, 0.0)
    return jnp.transpose(x, (0, 3, 1, 2))


# ----------------------------------- main -------------------------------------

if __name__ == "__main__":
    key = jax.random.PRNGKey(0)
    kp, kx = jax.random.split(key)

    channalsM, zoom = 8, 3                     # small UNet(channalsM, zoom)
    params = init_unet_params(kp, channalsM, zoom)
    x = jax.random.normal(kx, (2, 3, 16, 16), jnp.float32)   # NCHW input

    fwd = jax.jit(functools.partial(unet_forward, params))
    out = fwd(x)
    jax.block_until_ready(out)

    assert out.shape == (2, 3, 16, 16), out.shape
    assert out.dtype == jnp.float32
    assert bool(jnp.all(jnp.isfinite(out)))

    # loose tolerance: MXU operands are bf16 (f32 accumulation)
    ref = unet_reference(params, x)
    err = float(jnp.max(jnp.abs(out - ref)))
    assert err < 1.5e-1, f"max abs error vs XLA reference = {err}"
    print("KERNEL_OK")
</pallas_src>

<mosaic_0001>
module attributes {stable_mosaic.version = 11 : i64} {
  func.func @_unet_kernel(%arg0: i32, %arg1: memref<1x326x3xf32, #tpu.memory_space<vmem>>, %arg2: memref<9x3x8xbf16, #tpu.memory_space<vmem>>, %arg3: memref<1x8xf32, #tpu.memory_space<vmem>>, %arg4: memref<288x1xf32, #tpu.memory_space<vmem>>, %arg5: memref<9x8x16xbf16, #tpu.memory_space<vmem>>, %arg6: memref<1x16xf32, #tpu.memory_space<vmem>>, %arg7: memref<80x1xf32, #tpu.memory_space<vmem>>, %arg8: memref<9x16x32xbf16, #tpu.memory_space<vmem>>, %arg9: memref<1x32xf32, #tpu.memory_space<vmem>>, %arg10: memref<24x1xf32, #tpu.memory_space<vmem>>, %arg11: memref<38x18xbf16, #tpu.memory_space<vmem>>, %arg12: memref<9x32x16xbf16, #tpu.memory_space<vmem>>, %arg13: memref<1x16xf32, #tpu.memory_space<vmem>>, %arg14: memref<102x24xbf16, #tpu.memory_space<vmem>>, %arg15: memref<9x16x8xbf16, #tpu.memory_space<vmem>>, %arg16: memref<1x8xf32, #tpu.memory_space<vmem>>, %arg17: memref<326x80xbf16, #tpu.memory_space<vmem>>, %arg18: memref<9x8x3xbf16, #tpu.memory_space<vmem>>, %arg19: memref<1x3xf32, #tpu.memory_space<vmem>>, %arg20: memref<1x288x3xf32, #tpu.memory_space<vmem>>, %arg21: memref<326x8xf32, #tpu.memory_space<vmem>>, %arg22: memref<102x16xf32, #tpu.memory_space<vmem>>, %arg23: memref<38x32xf32, #tpu.memory_space<vmem>>, %arg24: memref<102x8xf32, #tpu.memory_space<vmem>>, %arg25: memref<38x16xf32, #tpu.memory_space<vmem>>, %arg26: memref<18x32xf32, #tpu.memory_space<vmem>>, %arg27: memref<38x32xf32, #tpu.memory_space<vmem>>, %arg28: memref<102x16xf32, #tpu.memory_space<vmem>>, %arg29: memref<326x8xf32, #tpu.memory_space<vmem>>, %arg30: memref<24x16xf32, #tpu.memory_space<vmem>>, %arg31: memref<80x8xf32, #tpu.memory_space<vmem>>) attributes {dimension_semantics = [#tpu.dimension_semantics<parallel>], iteration_bounds = array<i64: 2>, scalar_prefetch = 0 : i64, scratch_operands = 11 : i64, tpu.core_type = #tpu.core_type<tc>, window_params = [{transform_indices = @transform_0, window_bounds = array<i64: 1, 326, 3>}, {pipeline_mode = #tpu.pipeline_mode<synchronous>, transform_indices = @transform_1, window_bounds = array<i64: 9, 3, 8>}, {pipeline_mode = #tpu.pipeline_mode<synchronous>, transform_indices = @transform_2, window_bounds = array<i64: 1, 8>}, {pipeline_mode = #tpu.pipeline_mode<synchronous>, transform_indices = @transform_3, window_bounds = array<i64: 288, 1>}, {pipeline_mode = #tpu.pipeline_mode<synchronous>, transform_indices = @transform_4, window_bounds = array<i64: 9, 8, 16>}, {pipeline_mode = #tpu.pipeline_mode<synchronous>, transform_indices = @transform_5, window_bounds = array<i64: 1, 16>}, {pipeline_mode = #tpu.pipeline_mode<synchronous>, transform_indices = @transform_6, window_bounds = array<i64: 80, 1>}, {pipeline_mode = #tpu.pipeline_mode<synchronous>, transform_indices = @transform_7, window_bounds = array<i64: 9, 16, 32>}, {pipeline_mode = #tpu.pipeline_mode<synchronous>, transform_indices = @transform_8, window_bounds = array<i64: 1, 32>}, {pipeline_mode = #tpu.pipeline_mode<synchronous>, transform_indices = @transform_9, window_bounds = array<i64: 24, 1>}, {pipeline_mode = #tpu.pipeline_mode<synchronous>, transform_indices = @transform_10, window_bounds = array<i64: 38, 18>}, {pipeline_mode = #tpu.pipeline_mode<synchronous>, transform_indices = @transform_11, window_bounds = array<i64: 9, 32, 16>}, {pipeline_mode = #tpu.pipeline_mode<synchronous>, transform_indices = @transform_12, window_bounds = array<i64: 1, 16>}, {pipeline_mode = #tpu.pipeline_mode<synchronous>, transform_indices = @transform_13, window_bounds = array<i64: 102, 24>}, {pipeline_mode = #tpu.pipeline_mode<synchronous>, transform_indices = @transform_14, window_bounds = array<i64: 9, 16, 8>}, {pipeline_mode = #tpu.pipeline_mode<synchronous>, transform_indices = @transform_15, window_bounds = array<i64: 1, 8>}, {pipeline_mode = #tpu.pipeline_mode<synchronous>, transform_indices = @transform_16, window_bounds = array<i64: 326, 80>}, {pipeline_mode = #tpu.pipeline_mode<synchronous>, transform_indices = @transform_17, window_bounds = array<i64: 9, 8, 3>}, {pipeline_mode = #tpu.pipeline_mode<synchronous>, transform_indices = @transform_18, window_bounds = array<i64: 1, 3>}, {transform_indices = @transform_19, window_bounds = array<i64: 1, 288, 3>}]} {
    %cst = arith.constant 0.000000e+00 : f32
    %0 = vector.broadcast %cst : f32 to vector<288x8xf32>
    %c0 = arith.constant 0 : index
    %c0_0 = arith.constant 0 : index
    %c0_1 = arith.constant 0 : index
    %1 = vector.load %arg1[%c0, %c0_0, %c0_1] : memref<1x326x3xf32, #tpu.memory_space<vmem>>, vector<1x288x3xf32>
    %2 = vector.shape_cast %1 : vector<1x288x3xf32> to vector<288x3xf32>
    %3 = arith.truncf %2 : vector<288x3xf32> to vector<288x3xbf16>
    %c0_2 = arith.constant 0 : index
    %c0_3 = arith.constant 0 : index
    %c0_4 = arith.constant 0 : index
    %4 = vector.load %arg2[%c0_2, %c0_3, %c0_4] : memref<9x3x8xbf16, #tpu.memory_space<vmem>>, vector<1x3x8xbf16>
    %5 = vector.shape_cast %4 : vector<1x3x8xbf16> to vector<3x8xbf16>
    %cst_5 = arith.constant dense<0.000000e+00> : vector<288x8xf32>
    %6 = tpu.matmul %3, %5, %cst_5 {dimension_numbers = #tpu.dot_dimension_numbers<[1], [0], [0], [1], [0, 0, 1, 1], [], []>} : vector<288x3xbf16>, vector<3x8xbf16>, vector<288x8xf32> -> vector<288x8xf32>
    %7 = arith.addf %0, %6 : vector<288x8xf32>
    %c0_6 = arith.constant 0 : index
    %c1 = arith.constant 1 : index
    %c0_7 = arith.constant 0 : index
    %8 = vector.load %arg1[%c0_6, %c1, %c0_7] : memref<1x326x3xf32, #tpu.memory_space<vmem>>, vector<1x288x3xf32>
    %9 = vector.shape_cast %8 : vector<1x288x3xf32> to vector<288x3xf32>
    %10 = arith.truncf %9 : vector<288x3xf32> to vector<288x3xbf16>
    %c1_8 = arith.constant 1 : index
    %c0_9 = arith.constant 0 : index
    %c0_10 = arith.constant 0 : index
    %11 = vector.load %arg2[%c1_8, %c0_9, %c0_10] : memref<9x3x8xbf16, #tpu.memory_space<vmem>>, vector<1x3x8xbf16>
    %12 = vector.shape_cast %11 : vector<1x3x8xbf16> to vector<3x8xbf16>
    %cst_11 = arith.constant dense<0.000000e+00> : vector<288x8xf32>
    %13 = tpu.matmul %10, %12, %cst_11 {dimension_numbers = #tpu.dot_dimension_numbers<[1], [0], [0], [1], [0, 0, 1, 1], [], []>} : vector<288x3xbf16>, vector<3x8xbf16>, vector<288x8xf32> -> vector<288x8xf32>
    %14 = arith.addf %7, %13 : vector<288x8xf32>
    %c0_12 = arith.constant 0 : index
    %c2 = arith.constant 2 : index
    %c0_13 = arith.constant 0 : index
    %15 = vector.load %arg1[%c0_12, %c2, %c0_13] : memref<1x326x3xf32, #tpu.memory_space<vmem>>, vector<1x288x3xf32>
    %16 = vector.shape_cast %15 : vector<1x288x3xf32> to vector<288x3xf32>
    %17 = arith.truncf %16 : vector<288x3xf32> to vector<288x3xbf16>
    %c2_14 = arith.constant 2 : index
    %c0_15 = arith.constant 0 : index
    %c0_16 = arith.constant 0 : index
    %18 = vector.load %arg2[%c2_14, %c0_15, %c0_16] : memref<9x3x8xbf16, #tpu.memory_space<vmem>>, vector<1x3x8xbf16>
    %19 = vector.shape_cast %18 : vector<1x3x8xbf16> to vector<3x8xbf16>
    %cst_17 = arith.constant dense<0.000000e+00> : vector<288x8xf32>
    %20 = tpu.matmul %17, %19, %cst_17 {dimension_numbers = #tpu.dot_dimension_numbers<[1], [0], [0], [1], [0, 0, 1, 1], [], []>} : vector<288x3xbf16>, vector<3x8xbf16>, vector<288x8xf32> -> vector<288x8xf32>
    %21 = arith.addf %14, %20 : vector<288x8xf32>
    %c0_18 = arith.constant 0 : index
    %c18 = arith.constant 18 : index
    %c0_19 = arith.constant 0 : index
    %22 = vector.load %arg1[%c0_18, %c18, %c0_19] : memref<1x326x3xf32, #tpu.memory_space<vmem>>, vector<1x288x3xf32>
    %23 = vector.shape_cast %22 : vector<1x288x3xf32> to vector<288x3xf32>
    %24 = arith.truncf %23 : vector<288x3xf32> to vector<288x3xbf16>
    %c3 = arith.constant 3 : index
    %c0_20 = arith.constant 0 : index
    %c0_21 = arith.constant 0 : index
    %25 = vector.load %arg2[%c3, %c0_20, %c0_21] : memref<9x3x8xbf16, #tpu.memory_space<vmem>>, vector<1x3x8xbf16>
    %26 = vector.shape_cast %25 : vector<1x3x8xbf16> to vector<3x8xbf16>
    %cst_22 = arith.constant dense<0.000000e+00> : vector<288x8xf32>
    %27 = tpu.matmul %24, %26, %cst_22 {dimension_numbers = #tpu.dot_dimension_numbers<[1], [0], [0], [1], [0, 0, 1, 1], [], []>} : vector<288x3xbf16>, vector<3x8xbf16>, vector<288x8xf32> -> vector<288x8xf32>
    %28 = arith.addf %21, %27 : vector<288x8xf32>
    %c0_23 = arith.constant 0 : index
    %c19 = arith.constant 19 : index
    %c0_24 = arith.constant 0 : index
    %29 = vector.load %arg1[%c0_23, %c19, %c0_24] : memref<1x326x3xf32, #tpu.memory_space<vmem>>, vector<1x288x3xf32>
    %30 = vector.shape_cast %29 : vector<1x288x3xf32> to vector<288x3xf32>
    %31 = arith.truncf %30 : vector<288x3xf32> to vector<288x3xbf16>
    %c4 = arith.constant 4 : index
    %c0_25 = arith.constant 0 : index
    %c0_26 = arith.constant 0 : index
    %32 = vector.load %arg2[%c4, %c0_25, %c0_26] : memref<9x3x8xbf16, #tpu.memory_space<vmem>>, vector<1x3x8xbf16>
    %33 = vector.shape_cast %32 : vector<1x3x8xbf16> to vector<3x8xbf16>
    %cst_27 = arith.constant dense<0.000000e+00> : vector<288x8xf32>
    %34 = tpu.matmul %31, %33, %cst_27 {dimension_numbers = #tpu.dot_dimension_numbers<[1], [0], [0], [1], [0, 0, 1, 1], [], []>} : vector<288x3xbf16>, vector<3x8xbf16>, vector<288x8xf32> -> vector<288x8xf32>
    %35 = arith.addf %28, %34 : vector<288x8xf32>
    %c0_28 = arith.constant 0 : index
    %c20 = arith.constant 20 : index
    %c0_29 = arith.constant 0 : index
    %36 = vector.load %arg1[%c0_28, %c20, %c0_29] : memref<1x326x3xf32, #tpu.memory_space<vmem>>, vector<1x288x3xf32>
    %37 = vector.shape_cast %36 : vector<1x288x3xf32> to vector<288x3xf32>
    %38 = arith.truncf %37 : vector<288x3xf32> to vector<288x3xbf16>
    %c5 = arith.constant 5 : index
    %c0_30 = arith.constant 0 : index
    %c0_31 = arith.constant 0 : index
    %39 = vector.load %arg2[%c5, %c0_30, %c0_31] : memref<9x3x8xbf16, #tpu.memory_space<vmem>>, vector<1x3x8xbf16>
    %40 = vector.shape_cast %39 : vector<1x3x8xbf16> to vector<3x8xbf16>
    %cst_32 = arith.constant dense<0.000000e+00> : vector<288x8xf32>
    %41 = tpu.matmul %38, %40, %cst_32 {dimension_numbers = #tpu.dot_dimension_numbers<[1], [0], [0], [1], [0, 0, 1, 1], [], []>} : vector<288x3xbf16>, vector<3x8xbf16>, vector<288x8xf32> -> vector<288x8xf32>
    %42 = arith.addf %35, %41 : vector<288x8xf32>
    %c0_33 = arith.constant 0 : index
    %c36 = arith.constant 36 : index
    %c0_34 = arith.constant 0 : index
    %43 = vector.load %arg1[%c0_33, %c36, %c0_34] : memref<1x326x3xf32, #tpu.memory_space<vmem>>, vector<1x288x3xf32>
    %44 = vector.shape_cast %43 : vector<1x288x3xf32> to vector<288x3xf32>
    %45 = arith.truncf %44 : vector<288x3xf32> to vector<288x3xbf16>
    %c6 = arith.constant 6 : index
    %c0_35 = arith.constant 0 : index
    %c0_36 = arith.constant 0 : index
    %46 = vector.load %arg2[%c6, %c0_35, %c0_36] : memref<9x3x8xbf16, #tpu.memory_space<vmem>>, vector<1x3x8xbf16>
    %47 = vector.shape_cast %46 : vector<1x3x8xbf16> to vector<3x8xbf16>
    %cst_37 = arith.constant dense<0.000000e+00> : vector<288x8xf32>
    %48 = tpu.matmul %45, %47, %cst_37 {dimension_numbers = #tpu.dot_dimension_numbers<[1], [0], [0], [1], [0, 0, 1, 1], [], []>} : vector<288x3xbf16>, vector<3x8xbf16>, vector<288x8xf32> -> vector<288x8xf32>
    %49 = arith.addf %42, %48 : vector<288x8xf32>
    %c0_38 = arith.constant 0 : index
    %c37 = arith.constant 37 : index
    %c0_39 = arith.constant 0 : index
    %50 = vector.load %arg1[%c0_38, %c37, %c0_39] : memref<1x326x3xf32, #tpu.memory_space<vmem>>, vector<1x288x3xf32>
    %51 = vector.shape_cast %50 : vector<1x288x3xf32> to vector<288x3xf32>
    %52 = arith.truncf %51 : vector<288x3xf32> to vector<288x3xbf16>
    %c7 = arith.constant 7 : index
    %c0_40 = arith.constant 0 : index
    %c0_41 = arith.constant 0 : index
    %53 = vector.load %arg2[%c7, %c0_40, %c0_41] : memref<9x3x8xbf16, #tpu.memory_space<vmem>>, vector<1x3x8xbf16>
    %54 = vector.shape_cast %53 : vector<1x3x8xbf16> to vector<3x8xbf16>
    %cst_42 = arith.constant dense<0.000000e+00> : vector<288x8xf32>
    %55 = tpu.matmul %52, %54, %cst_42 {dimension_numbers = #tpu.dot_dimension_numbers<[1], [0], [0], [1], [0, 0, 1, 1], [], []>} : vector<288x3xbf16>, vector<3x8xbf16>, vector<288x8xf32> -> vector<288x8xf32>
    %56 = arith.addf %49, %55 : vector<288x8xf32>
    %c0_43 = arith.constant 0 : index
    %c38 = arith.constant 38 : index
    %c0_44 = arith.constant 0 : index
    %57 = vector.load %arg1[%c0_43, %c38, %c0_44] : memref<1x326x3xf32, #tpu.memory_space<vmem>>, vector<1x288x3xf32>
    %58 = vector.shape_cast %57 : vector<1x288x3xf32> to vector<288x3xf32>
    %59 = arith.truncf %58 : vector<288x3xf32> to vector<288x3xbf16>
    %c8 = arith.constant 8 : index
    %c0_45 = arith.constant 0 : index
    %c0_46 = arith.constant 0 : index
    %60 = vector.load %arg2[%c8, %c0_45, %c0_46] : memref<9x3x8xbf16, #tpu.memory_space<vmem>>, vector<1x3x8xbf16>
    %61 = vector.shape_cast %60 : vector<1x3x8xbf16> to vector<3x8xbf16>
    %cst_47 = arith.constant dense<0.000000e+00> : vector<288x8xf32>
    %62 = tpu.matmul %59, %61, %cst_47 {dimension_numbers = #tpu.dot_dimension_numbers<[1], [0], [0], [1], [0, 0, 1, 1], [], []>} : vector<288x3xbf16>, vector<3x8xbf16>, vector<288x8xf32> -> vector<288x8xf32>
    %63 = arith.addf %56, %62 : vector<288x8xf32>
    %c0_48 = arith.constant 0 : index
    %c0_49 = arith.constant 0 : index
    %64 = vector.load %arg3[%c0_48, %c0_49] : memref<1x8xf32, #tpu.memory_space<vmem>>, vector<1x8xf32>
    %65 = vector.broadcast %64 : vector<1x8xf32> to vector<288x8xf32>
    %66 = arith.addf %63, %65 : vector<288x8xf32>
    %cst_50 = arith.constant 0.000000e+00 : f32
    %67 = vector.broadcast %cst_50 : f32 to vector<288x8xf32>
    %68 = arith.maximumf %66, %67 : vector<288x8xf32>
    %c0_51 = arith.constant 0 : index
    %c0_52 = arith.constant 0 : index
    %69 = vector.load %arg4[%c0_51, %c0_52] : memref<288x1xf32, #tpu.memory_space<vmem>>, vector<288x1xf32>
    %70 = vector.broadcast %69 : vector<288x1xf32> to vector<288x8xf32>
    %71 = arith.mulf %68, %70 : vector<288x8xf32>
    %cst_53 = arith.constant 0.000000e+00 : f32
    %72 = vector.broadcast %cst_53 : f32 to vector<19x8xf32>
    %c0_54 = arith.constant 0 : index
    %c0_55 = arith.constant 0 : index
    %73 = vector.load %arg21[%c0_54, %c0_55] : memref<326x8xf32, #tpu.memory_space<vmem>>, vector<19x8xf32>
    tpu.vector_store %arg21[%c0_54, %c0_55], %72 {strides = array<i32>} : memref<326x8xf32, #tpu.memory_space<vmem>>, vector<19x8xf32>,
    %c19_56 = arith.constant 19 : index
    %c0_57 = arith.constant 0 : index
    %74 = vector.load %arg21[%c19_56, %c0_57] : memref<326x8xf32, #tpu.memory_space<vmem>>, vector<288x8xf32>
    tpu.vector_store %arg21[%c19_56, %c0_57], %71 {strides = array<i32>} : memref<326x8xf32, #tpu.memory_space<vmem>>, vector<288x8xf32>,
    %c307 = arith.constant 307 : index
    %c0_58 = arith.constant 0 : index
    %75 = vector.load %arg21[%c307, %c0_58] : memref<326x8xf32, #tpu.memory_space<vmem>>, vector<19x8xf32>
    tpu.vector_store %arg21[%c307, %c0_58], %72 {strides = array<i32>} : memref<326x8xf32, #tpu.memory_space<vmem>>, vector<19x8xf32>,
    %c19_59 = arith.constant 19 : index
    %c0_60 = arith.constant 0 : index
    %76 = tpu.strided_load %arg21[%c19_59, %c0_60] {strides = array<i32: 2, 1>} : memref<326x8xf32, #tpu.memory_space<vmem>>, vector<144x8xf32>
    %c20_61 = arith.constant 20 : index
    %c0_62 = arith.constant 0 : index
    %77 = tpu.strided_load %arg21[%c20_61, %c0_62] {strides = array<i32: 2, 1>} : memref<326x8xf32, #tpu.memory_space<vmem>>, vector<144x8xf32>
    %78 = arith.maximumf %76, %77 : vector<144x8xf32>
    %cst_63 = arith.constant 0.000000e+00 : f32
    %79 = vector.broadcast %cst_63 : f32 to vector<102x8xf32>
    %c0_64 = arith.constant 0 : index
    %c0_65 = arith.constant 0 : index
    %80 = vector.load %arg24[%c0_64, %c0_65] : memref<102x8xf32, #tpu.memory_space<vmem>>, vector<102x8xf32>
    tpu.vector_store %arg24[%c0_64, %c0_65], %79 {strides = array<i32>} : memref<102x8xf32, #tpu.memory_space<vmem>>, vector<102x8xf32>,
    %81 = vector.extract_strided_slice %78 {offsets = [0, 0], sizes = [9, 8], strides = [1, 1]} : vector<144x8xf32> to vector<9x8xf32>
    %82 = vector.extract_strided_slice %78 {offsets = [9, 0], sizes = [9, 8], strides = [1, 1]} : vector<144x8xf32> to vector<9x8xf32>
    %83 = arith.maximumf %81, %82 : vector<9x8xf32>
    %c11 = arith.constant 11 : index
    %c0_66 = arith.constant 0 : index
    %84 = vector.load %arg24[%c11, %c0_66] : memref<102x8xf32, #tpu.memory_space<vmem>>, vector<9x8xf32>
    tpu.vector_store %arg24[%c11, %c0_66], %83 {strides = array<i32>} : memref<102x8xf32, #tpu.memory_space<vmem>>, vector<9x8xf32>,
    %85 = vector.extract_strided_slice %78 {offsets = [18, 0], sizes = [9, 8], strides = [1, 1]} : vector<144x8xf32> to vector<9x8xf32>
    %86 = vector.extract_strided_slice %78 {offsets = [27, 0], sizes = [9, 8], strides = [1, 1]} : vector<144x8xf32> to vector<9x8xf32>
    %87 = arith.maximumf %85, %86 : vector<9x8xf32>
    %c21 = arith.constant 21 : index
    %c0_67 = arith.constant 0 : index
    %88 = vector.load %arg24[%c21, %c0_67] : memref<102x8xf32, #tpu.memory_space<vmem>>, vector<9x8xf32>
    tpu.vector_store %arg24[%c21, %c0_67], %87 {strides = array<i32>} : memref<102x8xf32, #tpu.memory_space<vmem>>, vector<9x8xf32>,
    %89 = vector.extract_strided_slice %78 {offsets = [36, 0], sizes = [9, 8], strides = [1, 1]} : vector<144x8xf32> to vector<9x8xf32>
    %90 = vector.extract_strided_slice %78 {offsets = [45, 0], sizes = [9, 8], strides = [1, 1]} : vector<144x8xf32> to vector<9x8xf32>
    %91 = arith.maximumf %89, %90 : vector<9x8xf32>
    %c31 = arith.constant 31 : index
    %c0_68 = arith.constant 0 : index
    %92 = vector.load %arg24[%c31, %c0_68] : memref<102x8xf32, #tpu.memory_space<vmem>>, vector<9x8xf32>
    tpu.vector_store %arg24[%c31, %c0_68], %91 {strides = array<i32>} : memref<102x8xf32, #tpu.memory_space<vmem>>, vector<9x8xf32>,
    %93 = vector.extract_strided_slice %78 {offsets = [54, 0], sizes = [9, 8], strides = [1, 1]} : vector<144x8xf32> to vector<9x8xf32>
    %94 = vector.extract_strided_slice %78 {offsets = [63, 0], sizes = [9, 8], strides = [1, 1]} : vector<144x8xf32> to vector<9x8xf32>
    %95 = arith.maximumf %93, %94 : vector<9x8xf32>
    %c41 = arith.constant 41 : index
    %c0_69 = arith.constant 0 : index
    %96 = vector.load %arg24[%c41, %c0_69] : memref<102x8xf32, #tpu.memory_space<vmem>>, vector<9x8xf32>
    tpu.vector_store %arg24[%c41, %c0_69], %95 {strides = array<i32>} : memref<102x8xf32, #tpu.memory_space<vmem>>, vector<9x8xf32>,
    %97 = vector.extract_strided_slice %78 {offsets = [72, 0], sizes = [9, 8], strides = [1, 1]} : vector<144x8xf32> to vector<9x8xf32>
    %98 = vector.extract_strided_slice %78 {offsets = [81, 0], sizes = [9, 8], strides = [1, 1]} : vector<144x8xf32> to vector<9x8xf32>
    %99 = arith.maximumf %97, %98 : vector<9x8xf32>
    %c51 = arith.constant 51 : index
    %c0_70 = arith.constant 0 : index
    %100 = vector.load %arg24[%c51, %c0_70] : memref<102x8xf32, #tpu.memory_space<vmem>>, vector<9x8xf32>
    tpu.vector_store %arg24[%c51, %c0_70], %99 {strides = array<i32>} : memref<102x8xf32, #tpu.memory_space<vmem>>, vector<9x8xf32>,
    %101 = vector.extract_strided_slice %78 {offsets = [90, 0], sizes = [9, 8], strides = [1, 1]} : vector<144x8xf32> to vector<9x8xf32>
    %102 = vector.extract_strided_slice %78 {offsets = [99, 0], sizes = [9, 8], strides = [1, 1]} : vector<144x8xf32> to vector<9x8xf32>
    %103 = arith.maximumf %101, %102 : vector<9x8xf32>
    %c61 = arith.constant 61 : index
    %c0_71 = arith.constant 0 : index
    %104 = vector.load %arg24[%c61, %c0_71] : memref<102x8xf32, #tpu.memory_space<vmem>>, vector<9x8xf32>
    tpu.vector_store %arg24[%c61, %c0_71], %103 {strides = array<i32>} : memref<102x8xf32, #tpu.memory_space<vmem>>, vector<9x8xf32>,
    %105 = vector.extract_strided_slice %78 {offsets = [108, 0], sizes = [9, 8], strides = [1, 1]} : vector<144x8xf32> to vector<9x8xf32>
    %106 = vector.extract_strided_slice %78 {offsets = [117, 0], sizes = [9, 8], strides = [1, 1]} : vector<144x8xf32> to vector<9x8xf32>
    %107 = arith.maximumf %105, %106 : vector<9x8xf32>
    %c71 = arith.constant 71 : index
    %c0_72 = arith.constant 0 : index
    %108 = vector.load %arg24[%c71, %c0_72] : memref<102x8xf32, #tpu.memory_space<vmem>>, vector<9x8xf32>
    tpu.vector_store %arg24[%c71, %c0_72], %107 {strides = array<i32>} : memref<102x8xf32, #tpu.memory_space<vmem>>, vector<9x8xf32>,
    %109 = vector.extract_strided_slice %78 {offsets = [126, 0], sizes = [9, 8], strides = [1, 1]} : vector<144x8xf32> to vector<9x8xf32>
    %110 = vector.extract_strided_slice %78 {offsets = [135, 0], sizes = [9, 8], strides = [1, 1]} : vector<144x8xf32> to vector<9x8xf32>
    %111 = arith.maximumf %109, %110 : vector<9x8xf32>
    %c81 = arith.constant 81 : index
    %c0_73 = arith.constant 0 : index
    %112 = vector.load %arg24[%c81, %c0_73] : memref<102x8xf32, #tpu.memory_space<vmem>>, vector<9x8xf32>
    tpu.vector_store %arg24[%c81, %c0_73], %111 {strides = array<i32>} : memref<102x8xf32, #tpu.memory_space<vmem>>, vector<9x8xf32>,
    %cst_74 = arith.constant 0.000000e+00 : f32
    %113 = vector.broadcast %cst_74 : f32 to vector<80x16xf32>
    %c0_75 = arith.constant 0 : index
    %c0_76 = arith.constant 0 : index
    %114 = vector.load %arg24[%c0_75, %c0_76] : memref<102x8xf32, #tpu.memory_space<vmem>>, vector<80x8xf32>
    %115 = arith.truncf %114 : vector<80x8xf32> to vector<80x8xbf16>
    %c0_77 = arith.constant 0 : index
    %c0_78 = arith.constant 0 : index
    %c0_79 = arith.constant 0 : index
    %116 = vector.load %arg5[%c0_77, %c0_78, %c0_79] : memref<9x8x16xbf16, #tpu.memory_space<vmem>>, vector<1x8x16xbf16>
    %117 = vector.shape_cast %116 : vector<1x8x16xbf16> to vector<8x16xbf16>
    %cst_80 = arith.constant dense<0.000000e+00> : vector<80x16xf32>
    %118 = tpu.matmul %115, %117, %cst_80 {dimension_numbers = #tpu.dot_dimension_numbers<[1], [0], [0], [1], [0, 0, 1, 1], [], []>} : vector<80x8xbf16>, vector<8x16xbf16>, vector<80x16xf32> -> vector<80x16xf32>
    %119 = arith.addf %113, %118 : vector<80x16xf32>
    %c1_81 = arith.constant 1 : index
    %c0_82 = arith.constant 0 : index
    %120 = vector.load %arg24[%c1_81, %c0_82] : memref<102x8xf32, #tpu.memory_space<vmem>>, vector<80x8xf32>
    %121 = arith.truncf %120 : vector<80x8xf32> to vector<80x8xbf16>
    %c1_83 = arith.constant 1 : index
    %c0_84 = arith.constant 0 : index
    %c0_85 = arith.constant 0 : index
    %122 = vector.load %arg5[%c1_83, %c0_84, %c0_85] : memref<9x8x16xbf16, #tpu.memory_space<vmem>>, vector<1x8x16xbf16>
    %123 = vector.shape_cast %122 : vector<1x8x16xbf16> to vector<8x16xbf16>
    %cst_86 = arith.constant dense<0.000000e+00> : vector<80x16xf32>
    %124 = tpu.matmul %121, %123, %cst_86 {dimension_numbers = #tpu.dot_dimension_numbers<[1], [0], [0], [1], [0, 0, 1, 1], [], []>} : vector<80x8xbf16>, vector<8x16xbf16>, vector<80x16xf32> -> vector<80x16xf32>
    %125 = arith.addf %119, %124 : vector<80x16xf32>
    %c2_87 = arith.constant 2 : index
    %c0_88 = arith.constant 0 : index
    %126 = vector.load %arg24[%c2_87, %c0_88] : memref<102x8xf32, #tpu.memory_space<vmem>>, vector<80x8xf32>
    %127 = arith.truncf %126 : vector<80x8xf32> to vector<80x8xbf16>
    %c2_89 = arith.constant 2 : index
    %c0_90 = arith.constant 0 : index
    %c0_91 = arith.constant 0 : index
    %128 = vector.load %arg5[%c2_89, %c0_90, %c0_91] : memref<9x8x16xbf16, #tpu.memory_space<vmem>>, vector<1x8x16xbf16>
    %129 = vector.shape_cast %128 : vector<1x8x16xbf16> to vector<8x16xbf16>
    %cst_92 = arith.constant dense<0.000000e+00> : vector<80x16xf32>
    %130 = tpu.matmul %127, %129, %cst_92 {dimension_numbers = #tpu.dot_dimension_numbers<[1], [0], [0], [1], [0, 0, 1, 1], [], []>} : vector<80x8xbf16>, vector<8x16xbf16>, vector<80x16xf32> -> vector<80x16xf32>
    %131 = arith.addf %125, %130 : vector<80x16xf32>
    %c10 = arith.constant 10 : index
    %c0_93 = arith.constant 0 : index
    %132 = vector.load %arg24[%c10, %c0_93] : memref<102x8xf32, #tpu.memory_space<vmem>>, vector<80x8xf32>
    %133 = arith.truncf %132 : vector<80x8xf32> to vector<80x8xbf16>
    %c3_94 = arith.constant 3 : index
    %c0_95 = arith.constant 0 : index
    %c0_96 = arith.constant 0 : index
    %134 = vector.load %arg5[%c3_94, %c0_95, %c0_96] : memref<9x8x16xbf16, #tpu.memory_space<vmem>>, vector<1x8x16xbf16>
    %135 = vector.shape_cast %134 : vector<1x8x16xbf16> to vector<8x16xbf16>
    %cst_97 = arith.constant dense<0.000000e+00> : vector<80x16xf32>
    %136 = tpu.matmul %133, %135, %cst_97 {dimension_numbers = #tpu.dot_dimension_numbers<[1], [0], [0], [1], [0, 0, 1, 1], [], []>} : vector<80x8xbf16>, vector<8x16xbf16>, vector<80x16xf32> -> vector<80x16xf32>
    %137 = arith.addf %131, %136 : vector<80x16xf32>
    %c11_98 = arith.constant 11 : index
    %c0_99 = arith.constant 0 : index
    %138 = vector.load %arg24[%c11_98, %c0_99] : memref<102x8xf32, #tpu.memory_space<vmem>>, vector<80x8xf32>
    %139 = arith.truncf %138 : vector<80x8xf32> to vector<80x8xbf16>
    %c4_100 = arith.constant 4 : index
    %c0_101 = arith.constant 0 : index
    %c0_102 = arith.constant 0 : index
    %140 = vector.load %arg5[%c4_100, %c0_101, %c0_102] : memref<9x8x16xbf16, #tpu.memory_space<vmem>>, vector<1x8x16xbf16>
    %141 = vector.shape_cast %140 : vector<1x8x16xbf16> to vector<8x16xbf16>
    %cst_103 = arith.constant dense<0.000000e+00> : vector<80x16xf32>
    %142 = tpu.matmul %139, %141, %cst_103 {dimension_numbers = #tpu.dot_dimension_numbers<[1], [0], [0], [1], [0, 0, 1, 1], [], []>} : vector<80x8xbf16>, vector<8x16xbf16>, vector<80x16xf32> -> vector<80x16xf32>
    %143 = arith.addf %137, %142 : vector<80x16xf32>
    %c12 = arith.constant 12 : index
    %c0_104 = arith.constant 0 : index
    %144 = vector.load %arg24[%c12, %c0_104] : memref<102x8xf32, #tpu.memory_space<vmem>>, vector<80x8xf32>
    %145 = arith.truncf %144 : vector<80x8xf32> to vector<80x8xbf16>
    %c5_105 = arith.constant 5 : index
    %c0_106 = arith.constant 0 : index
    %c0_107 = arith.constant 0 : index
    %146 = vector.load %arg5[%c5_105, %c0_106, %c0_107] : memref<9x8x16xbf16, #tpu.memory_space<vmem>>, vector<1x8x16xbf16>
    %147 = vector.shape_cast %146 : vector<1x8x16xbf16> to vector<8x16xbf16>
    %cst_108 = arith.constant dense<0.000000e+00> : vector<80x16xf32>
    %148 = tpu.matmul %145, %147, %cst_108 {dimension_numbers = #tpu.dot_dimension_numbers<[1], [0], [0], [1], [0, 0, 1, 1], [], []>} : vector<80x8xbf16>, vector<8x16xbf16>, vector<80x16xf32> -> vector<80x16xf32>
    %149 = arith.addf %143, %148 : vector<80x16xf32>
    %c20_109 = arith.constant 20 : index
    %c0_110 = arith.constant 0 : index
    %150 = vector.load %arg24[%c20_109, %c0_110] : memref<102x8xf32, #tpu.memory_space<vmem>>, vector<80x8xf32>
    %151 = arith.truncf %150 : vector<80x8xf32> to vector<80x8xbf16>
    %c6_111 = arith.constant 6 : index
    %c0_112 = arith.constant 0 : index
    %c0_113 = arith.constant 0 : index
    %152 = vector.load %arg5[%c6_111, %c0_112, %c0_113] : memref<9x8x16xbf16, #tpu.memory_space<vmem>>, vector<1x8x16xbf16>
    %153 = vector.shape_cast %152 : vector<1x8x16xbf16> to vector<8x16xbf16>
    %cst_114 = arith.constant dense<0.000000e+00> : vector<80x16xf32>
    %154 = tpu.matmul %151, %153, %cst_114 {dimension_numbers = #tpu.dot_dimension_numbers<[1], [0], [0], [1], [0, 0, 1, 1], [], []>} : vector<80x8xbf16>, vector<8x16xbf16>, vector<80x16xf32> -> vector<80x16xf32>
    %155 = arith.addf %149, %154 : vector<80x16xf32>
    %c21_115 = arith.constant 21 : index
    %c0_116 = arith.constant 0 : index
    %156 = vector.load %arg24[%c21_115, %c0_116] : memref<102x8xf32, #tpu.memory_space<vmem>>, vector<80x8xf32>
    %157 = arith.truncf %156 : vector<80x8xf32> to vector<80x8xbf16>
    %c7_117 = arith.constant 7 : index
    %c0_118 = arith.constant 0 : index
    %c0_119 = arith.constant 0 : index
    %158 = vector.load %arg5[%c7_117, %c0_118, %c0_119] : memref<9x8x16xbf16, #tpu.memory_space<vmem>>, vector<1x8x16xbf16>
    %159 = vector.shape_cast %158 : vector<1x8x16xbf16> to vector<8x16xbf16>
    %cst_120 = arith.constant dense<0.000000e+00> : vector<80x16xf32>
    %160 = tpu.matmul %157, %159, %cst_120 {dimension_numbers = #tpu.dot_dimension_numbers<[1], [0], [0], [1], [0, 0, 1, 1], [], []>} : vector<80x8xbf16>, vector<8x16xbf16>, vector<80x16xf32> -> vector<80x16xf32>
    %161 = arith.addf %155, %160 : vector<80x16xf32>
    %c22 = arith.constant 22 : index
    %c0_121 = arith.constant 0 : index
    %162 = vector.load %arg24[%c22, %c0_121] : memref<102x8xf32, #tpu.memory_space<vmem>>, vector<80x8xf32>
    %163 = arith.truncf %162 : vector<80x8xf32> to vector<80x8xbf16>
    %c8_122 = arith.constant 8 : index
    %c0_123 = arith.constant 0 : index
    %c0_124 = arith.constant 0 : index
    %164 = vector.load %arg5[%c8_122, %c0_123, %c0_124] : memref<9x8x16xbf16, #tpu.memory_space<vmem>>, vector<1x8x16xbf16>
    %165 = vector.shape_cast %164 : vector<1x8x16xbf16> to vector<8x16xbf16>
    %cst_125 = arith.constant dense<0.000000e+00> : vector<80x16xf32>
    %166 = tpu.matmul %163, %165, %cst_125 {dimension_numbers = #tpu.dot_dimension_numbers<[1], [0], [0], [1], [0, 0, 1, 1], [], []>} : vector<80x8xbf16>, vector<8x16xbf16>, vector<80x16xf32> -> vector<80x16xf32>
    %167 = arith.addf %161, %166 : vector<80x16xf32>
    %c0_126 = arith.constant 0 : index
    %c0_127 = arith.constant 0 : index
    %168 = vector.load %arg6[%c0_126, %c0_127] : memref<1x16xf32, #tpu.memory_space<vmem>>, vector<1x16xf32>
    %169 = vector.broadcast %168 : vector<1x16xf32> to vector<80x16xf32>
    %170 = arith.addf %167, %169 : vector<80x16xf32>
    %cst_128 = arith.constant 0.000000e+00 : f32
    %171 = vector.broadcast %cst_128 : f32 to vector<80x16xf32>
    %172 = arith.maximumf %170, %171 : vector<80x16xf32>
    %c0_129 = arith.constant 0 : index
    %c0_130 = arith.constant 0 : index
    %173 = vector.load %arg7[%c0_129, %c0_130] : memref<80x1xf32, #tpu.memory_space<vmem>>, vector<80x1xf32>
    %174 = vector.broadcast %173 : vector<80x1xf32> to vector<80x16xf32>
    %175 = arith.mulf %172, %174 : vector<80x16xf32>
    %cst_131 = arith.constant 0.000000e+00 : f32
    %176 = vector.broadcast %cst_131 : f32 to vector<11x16xf32>
    %c0_132 = arith.constant 0 : index
    %c0_133 = arith.constant 0 : index
    %177 = vector.load %arg22[%c0_132, %c0_133] : memref<102x16xf32, #tpu.memory_space<vmem>>, vector<11x16xf32>
    tpu.vector_store %arg22[%c0_132, %c0_133], %176 {strides = array<i32>} : memref<102x16xf32, #tpu.memory_space<vmem>>, vector<11x16xf32>,
    %c11_134 = arith.constant 11 : index
    %c0_135 = arith.constant 0 : index
    %178 = vector.load %arg22[%c11_134, %c0_135] : memref<102x16xf32, #tpu.memory_space<vmem>>, vector<80x16xf32>
    tpu.vector_store %arg22[%c11_134, %c0_135], %175 {strides = array<i32>} : memref<102x16xf32, #tpu.memory_space<vmem>>, vector<80x16xf32>,
    %c91 = arith.constant 91 : index
    %c0_136 = arith.constant 0 : index
    %179 = vector.load %arg22[%c91, %c0_136] : memref<102x16xf32, #tpu.memory_space<vmem>>, vector<11x16xf32>
    tpu.vector_store %arg22[%c91, %c0_136], %176 {strides = array<i32>} : memref<102x16xf32, #tpu.memory_space<vmem>>, vector<11x16xf32>,
    %c11_137 = arith.constant 11 : index
    %c0_138 = arith.constant 0 : index
    %180 = tpu.strided_load %arg22[%c11_137, %c0_138] {strides = array<i32: 2, 1>} : memref<102x16xf32, #tpu.memory_space<vmem>>, vector<40x16xf32>
    %c12_139 = arith.constant 12 : index
    %c0_140 = arith.constant 0 : index
    %181 = tpu.strided_load %arg22[%c12_139, %c0_140] {strides = array<i32: 2, 1>} : memref<102x16xf32, #tpu.memory_space<vmem>>, vector<40x16xf32>
    %182 = arith.maximumf %180, %181 : vector<40x16xf32>
    %cst_141 = arith.constant 0.000000e+00 : f32
    %183 = vector.broadcast %cst_141 : f32 to vector<38x16xf32>
    %c0_142 = arith.constant 0 : index
    %c0_143 = arith.constant 0 : index
    %184 = vector.load %arg25[%c0_142, %c0_143] : memref<38x16xf32, #tpu.memory_space<vmem>>, vector<38x16xf32>
    tpu.vector_store %arg25[%c0_142, %c0_143], %183 {strides = array<i32>} : memref<38x16xf32, #tpu.memory_space<vmem>>, vector<38x16xf32>,
    %185 = vector.extract_strided_slice %182 {offsets = [0, 0], sizes = [5, 16], strides = [1, 1]} : vector<40x16xf32> to vector<5x16xf32>
    %186 = vector.extract_strided_slice %182 {offsets = [5, 0], sizes = [5, 16], strides = [1, 1]} : vector<40x16xf32> to vector<5x16xf32>
    %187 = arith.maximumf %185, %186 : vector<5x16xf32>
    %c7_144 = arith.constant 7 : index
    %c0_145 = arith.constant 0 : index
    %188 = vector.load %arg25[%c7_144, %c0_145] : memref<38x16xf32, #tpu.memory_space<vmem>>, vector<5x16xf32>
    tpu.vector_store %arg25[%c7_144, %c0_145], %187 {strides = array<i32>} : memref<38x16xf32, #tpu.memory_space<vmem>>, vector<5x16xf32>,
    %189 = vector.extract_strided_slice %182 {offsets = [10, 0], sizes = [5, 16], strides = [1, 1]} : vector<40x16xf32> to vector<5x16xf32>
    %190 = vector.extract_strided_slice %182 {offsets = [15, 0], sizes = [5, 16], strides = [1, 1]} : vector<40x16xf32> to vector<5x16xf32>
    %191 = arith.maximumf %189, %190 : vector<5x16xf32>
    %c13 = arith.constant 13 : index
    %c0_146 = arith.constant 0 : index
    %192 = vector.load %arg25[%c13, %c0_146] : memref<38x16xf32, #tpu.memory_space<vmem>>, vector<5x16xf32>
    tpu.vector_store %arg25[%c13, %c0_146], %191 {strides = array<i32>} : memref<38x16xf32, #tpu.memory_space<vmem>>, vector<5x16xf32>,
    %193 = vector.extract_strided_slice %182 {offsets = [20, 0], sizes = [5, 16], strides = [1, 1]} : vector<40x16xf32> to vector<5x16xf32>
    %194 = vector.extract_strided_slice %182 {offsets = [25, 0], sizes = [5, 16], strides = [1, 1]} : vector<40x16xf32> to vector<5x16xf32>
    %195 = arith.maximumf %193, %194 : vector<5x16xf32>
    %c19_147 = arith.constant 19 : index
    %c0_148 = arith.constant 0 : index
    %196 = vector.load %arg25[%c19_147, %c0_148] : memref<38x16xf32, #tpu.memory_space<vmem>>, vector<5x16xf32>
    tpu.vector_store %arg25[%c19_147, %c0_148], %195 {strides = array<i32>} : memref<38x16xf32, #tpu.memory_space<vmem>>, vector<5x16xf32>,
    %197 = vector.extract_strided_slice %182 {offsets = [30, 0], sizes = [5, 16], strides = [1, 1]} : vector<40x16xf32> to vector<5x16xf32>
    %198 = vector.extract_strided_slice %182 {offsets = [35, 0], sizes = [5, 16], strides = [1, 1]} : vector<40x16xf32> to vector<5x16xf32>
    %199 = arith.maximumf %197, %198 : vector<5x16xf32>
    %c25 = arith.constant 25 : index
    %c0_149 = arith.constant 0 : index
    %200 = vector.load %arg25[%c25, %c0_149] : memref<38x16xf32, #tpu.memory_space<vmem>>, vector<5x16xf32>
    tpu.vector_store %arg25[%c25, %c0_149], %199 {strides = array<i32>} : memref<38x16xf32, #tpu.memory_space<vmem>>, vector<5x16xf32>,
    %cst_150 = arith.constant 0.000000e+00 : f32
    %201 = vector.broadcast %cst_150 : f32 to vector<24x32xf32>
    %c0_151 = arith.constant 0 : index
    %c0_152 = arith.constant 0 : index
    %202 = vector.load %arg25[%c0_151, %c0_152] : memref<38x16xf32, #tpu.memory_space<vmem>>, vector<24x16xf32>
    %203 = arith.truncf %202 : vector<24x16xf32> to vector<24x16xbf16>
    %c0_153 = arith.constant 0 : index
    %c0_154 = arith.constant 0 : index
    %c0_155 = arith.constant 0 : index
    %204 = vector.load %arg8[%c0_153, %c0_154, %c0_155] : memref<9x16x32xbf16, #tpu.memory_space<vmem>>, vector<1x16x32xbf16>
    %205 = vector.shape_cast %204 : vector<1x16x32xbf16> to vector<16x32xbf16>
    %cst_156 = arith.constant dense<0.000000e+00> : vector<24x32xf32>
    %206 = tpu.matmul %203, %205, %cst_156 {dimension_numbers = #tpu.dot_dimension_numbers<[1], [0], [0], [1], [0, 0, 1, 1], [], []>} : vector<24x16xbf16>, vector<16x32xbf16>, vector<24x32xf32> -> vector<24x32xf32>
    %207 = arith.addf %201, %206 : vector<24x32xf32>
    %c1_157 = arith.constant 1 : index
    %c0_158 = arith.constant 0 : index
    %208 = vector.load %arg25[%c1_157, %c0_158] : memref<38x16xf32, #tpu.memory_space<vmem>>, vector<24x16xf32>
    %209 = arith.truncf %208 : vector<24x16xf32> to vector<24x16xbf16>
    %c1_159 = arith.constant 1 : index
    %c0_160 = arith.constant 0 : index
    %c0_161 = arith.constant 0 : index
    %210 = vector.load %arg8[%c1_159, %c0_160, %c0_161] : memref<9x16x32xbf16, #tpu.memory_space<vmem>>, vector<1x16x32xbf16>
    %211 = vector.shape_cast %210 : vector<1x16x32xbf16> to vector<16x32xbf16>
    %cst_162 = arith.constant dense<0.000000e+00> : vector<24x32xf32>
    %212 = tpu.matmul %209, %211, %cst_162 {dimension_numbers = #tpu.dot_dimension_numbers<[1], [0], [0], [1], [0, 0, 1, 1], [], []>} : vector<24x16xbf16>, vector<16x32xbf16>, vector<24x32xf32> -> vector<24x32xf32>
    %213 = arith.addf %207, %212 : vector<24x32xf32>
    %c2_163 = arith.constant 2 : index
    %c0_164 = arith.constant 0 : index
    %214 = vector.load %arg25[%c2_163, %c0_164] : memref<38x16xf32, #tpu.memory_space<vmem>>, vector<24x16xf32>
    %215 = arith.truncf %214 : vector<24x16xf32> to vector<24x16xbf16>
    %c2_165 = arith.constant 2 : index
    %c0_166 = arith.constant 0 : index
    %c0_167 = arith.constant 0 : index
    %216 = vector.load %arg8[%c2_165, %c0_166, %c0_167] : memref<9x16x32xbf16, #tpu.memory_space<vmem>>, vector<1x16x32xbf16>
    %217 = vector.shape_cast %216 : vector<1x16x32xbf16> to vector<16x32xbf16>
    %cst_168 = arith.constant dense<0.000000e+00> : vector<24x32xf32>
    %218 = tpu.matmul %215, %217, %cst_168 {dimension_numbers = #tpu.dot_dimension_numbers<[1], [0], [0], [1], [0, 0, 1, 1], [], []>} : vector<24x16xbf16>, vector<16x32xbf16>, vector<24x32xf32> -> vector<24x32xf32>
    %219 = arith.addf %213, %218 : vector<24x32xf32>
    %c6_169 = arith.constant 6 : index
    %c0_170 = arith.constant 0 : index
    %220 = vector.load %arg25[%c6_169, %c0_170] : memref<38x16xf32, #tpu.memory_space<vmem>>, vector<24x16xf32>
    %221 = arith.truncf %220 : vector<24x16xf32> to vector<24x16xbf16>
    %c3_171 = arith.constant 3 : index
    %c0_172 = arith.constant 0 : index
    %c0_173 = arith.constant 0 : index
    %222 = vector.load %arg8[%c3_171, %c0_172, %c0_173] : memref<9x16x32xbf16, #tpu.memory_space<vmem>>, vector<1x16x32xbf16>
    %223 = vector.shape_cast %222 : vector<1x16x32xbf16> to vector<16x32xbf16>
    %cst_174 = arith.constant dense<0.000000e+00> : vector<24x32xf32>
    %224 = tpu.matmul %221, %223, %cst_174 {dimension_numbers = #tpu.dot_dimension_numbers<[1], [0], [0], [1], [0, 0, 1, 1], [], []>} : vector<24x16xbf16>, vector<16x32xbf16>, vector<24x32xf32> -> vector<24x32xf32>
    %225 = arith.addf %219, %224 : vector<24x32xf32>
    %c7_175 = arith.constant 7 : index
    %c0_176 = arith.constant 0 : index
    %226 = vector.load %arg25[%c7_175, %c0_176] : memref<38x16xf32, #tpu.memory_space<vmem>>, vector<24x16xf32>
    %227 = arith.truncf %226 : vector<24x16xf32> to vector<24x16xbf16>
    %c4_177 = arith.constant 4 : index
    %c0_178 = arith.constant 0 : index
    %c0_179 = arith.constant 0 : index
    %228 = vector.load %arg8[%c4_177, %c0_178, %c0_179] : memref<9x16x32xbf16, #tpu.memory_space<vmem>>, vector<1x16x32xbf16>
    %229 = vector.shape_cast %228 : vector<1x16x32xbf16> to vector<16x32xbf16>
    %cst_180 = arith.constant dense<0.000000e+00> : vector<24x32xf32>
    %230 = tpu.matmul %227, %229, %cst_180 {dimension_numbers = #tpu.dot_dimension_numbers<[1], [0], [0], [1], [0, 0, 1, 1], [], []>} : vector<24x16xbf16>, vector<16x32xbf16>, vector<24x32xf32> -> vector<24x32xf32>
    %231 = arith.addf %225, %230 : vector<24x32xf32>
    %c8_181 = arith.constant 8 : index
    %c0_182 = arith.constant 0 : index
    %232 = vector.load %arg25[%c8_181, %c0_182] : memref<38x16xf32, #tpu.memory_space<vmem>>, vector<24x16xf32>
    %233 = arith.truncf %232 : vector<24x16xf32> to vector<24x16xbf16>
    %c5_183 = arith.constant 5 : index
    %c0_184 = arith.constant 0 : index
    %c0_185 = arith.constant 0 : index
    %234 = vector.load %arg8[%c5_183, %c0_184, %c0_185] : memref<9x16x32xbf16, #tpu.memory_space<vmem>>, vector<1x16x32xbf16>
    %235 = vector.shape_cast %234 : vector<1x16x32xbf16> to vector<16x32xbf16>
    %cst_186 = arith.constant dense<0.000000e+00> : vector<24x32xf32>
    %236 = tpu.matmul %233, %235, %cst_186 {dimension_numbers = #tpu.dot_dimension_numbers<[1], [0], [0], [1], [0, 0, 1, 1], [], []>} : vector<24x16xbf16>, vector<16x32xbf16>, vector<24x32xf32> -> vector<24x32xf32>
    %237 = arith.addf %231, %236 : vector<24x32xf32>
    %c12_187 = arith.constant 12 : index
    %c0_188 = arith.constant 0 : index
    %238 = vector.load %arg25[%c12_187, %c0_188] : memref<38x16xf32, #tpu.memory_space<vmem>>, vector<24x16xf32>
    %239 = arith.truncf %238 : vector<24x16xf32> to vector<24x16xbf16>
    %c6_189 = arith.constant 6 : index
    %c0_190 = arith.constant 0 : index
    %c0_191 = arith.constant 0 : index
    %240 = vector.load %arg8[%c6_189, %c0_190, %c0_191] : memref<9x16x32xbf16, #tpu.memory_space<vmem>>, vector<1x16x32xbf16>
    %241 = vector.shape_cast %240 : vector<1x16x32xbf16> to vector<16x32xbf16>
    %cst_192 = arith.constant dense<0.000000e+00> : vector<24x32xf32>
    %242 = tpu.matmul %239, %241, %cst_192 {dimension_numbers = #tpu.dot_dimension_numbers<[1], [0], [0], [1], [0, 0, 1, 1], [], []>} : vector<24x16xbf16>, vector<16x32xbf16>, vector<24x32xf32> -> vector<24x32xf32>
    %243 = arith.addf %237, %242 : vector<24x32xf32>
    %c13_193 = arith.constant 13 : index
    %c0_194 = arith.constant 0 : index
    %244 = vector.load %arg25[%c13_193, %c0_194] : memref<38x16xf32, #tpu.memory_space<vmem>>, vector<24x16xf32>
    %245 = arith.truncf %244 : vector<24x16xf32> to vector<24x16xbf16>
    %c7_195 = arith.constant 7 : index
    %c0_196 = arith.constant 0 : index
    %c0_197 = arith.constant 0 : index
    %246 = vector.load %arg8[%c7_195, %c0_196, %c0_197] : memref<9x16x32xbf16, #tpu.memory_space<vmem>>, vector<1x16x32xbf16>
    %247 = vector.shape_cast %246 : vector<1x16x32xbf16> to vector<16x32xbf16>
    %cst_198 = arith.constant dense<0.000000e+00> : vector<24x32xf32>
    %248 = tpu.matmul %245, %247, %cst_198 {dimension_numbers = #tpu.dot_dimension_numbers<[1], [0], [0], [1], [0, 0, 1, 1], [], []>} : vector<24x16xbf16>, vector<16x32xbf16>, vector<24x32xf32> -> vector<24x32xf32>
    %249 = arith.addf %243, %248 : vector<24x32xf32>
    %c14 = arith.constant 14 : index
    %c0_199 = arith.constant 0 : index
    %250 = vector.load %arg25[%c14, %c0_199] : memref<38x16xf32, #tpu.memory_space<vmem>>, vector<24x16xf32>
    %251 = arith.truncf %250 : vector<24x16xf32> to vector<24x16xbf16>
    %c8_200 = arith.constant 8 : index
    %c0_201 = arith.constant 0 : index
    %c0_202 = arith.constant 0 : index
    %252 = vector.load %arg8[%c8_200, %c0_201, %c0_202] : memref<9x16x32xbf16, #tpu.memory_space<vmem>>, vector<1x16x32xbf16>
    %253 = vector.shape_cast %252 : vector<1x16x32xbf16> to vector<16x32xbf16>
    %cst_203 = arith.constant dense<0.000000e+00> : vector<24x32xf32>
    %254 = tpu.matmul %251, %253, %cst_203 {dimension_numbers = #tpu.dot_dimension_numbers<[1], [0], [0], [1], [0, 0, 1, 1], [], []>} : vector<24x16xbf16>, vector<16x32xbf16>, vector<24x32xf32> -> vector<24x32xf32>
    %255 = arith.addf %249, %254 : vector<24x32xf32>
    %c0_204 = arith.constant 0 : index
    %c0_205 = arith.constant 0 : index
    %256 = vector.load %arg9[%c0_204, %c0_205] : memref<1x32xf32, #tpu.memory_space<vmem>>, vector<1x32xf32>
    %257 = vector.broadcast %256 : vector<1x32xf32> to vector<24x32xf32>
    %258 = arith.addf %255, %257 : vector<24x32xf32>
    %cst_206 = arith.constant 0.000000e+00 : f32
    %259 = vector.broadcast %cst_206 : f32 to vector<24x32xf32>
    %260 = arith.maximumf %258, %259 : vector<24x32xf32>
    %c0_207 = arith.constant 0 : index
    %c0_208 = arith.constant 0 : index
    %261 = vector.load %arg10[%c0_207, %c0_208] : memref<24x1xf32, #tpu.memory_space<vmem>>, vector<24x1xf32>
    %262 = vector.broadcast %261 : vector<24x1xf32> to vector<24x32xf32>
    %263 = arith.mulf %260, %262 : vector<24x32xf32>
    %cst_209 = arith.constant 0.000000e+00 : f32
    %264 = vector.broadcast %cst_209 : f32 to vector<7x32xf32>
    %c0_210 = arith.constant 0 : index
    %c0_211 = arith.constant 0 : index
    %265 = vector.load %arg23[%c0_210, %c0_211] : memref<38x32xf32, #tpu.memory_space<vmem>>, vector<7x32xf32>
    tpu.vector_store %arg23[%c0_210, %c0_211], %264 {strides = array<i32>} : memref<38x32xf32, #tpu.memory_space<vmem>>, vector<7x32xf32>,
    %c7_212 = arith.constant 7 : index
    %c0_213 = arith.constant 0 : index
    %266 = vector.load %arg23[%c7_212, %c0_213] : memref<38x32xf32, #tpu.memory_space<vmem>>, vector<24x32xf32>
    tpu.vector_store %arg23[%c7_212, %c0_213], %263 {strides = array<i32>} : memref<38x32xf32, #tpu.memory_space<vmem>>, vector<24x32xf32>,
    %c31_214 = arith.constant 31 : index
    %c0_215 = arith.constant 0 : index
    %267 = vector.load %arg23[%c31_214, %c0_215] : memref<38x32xf32, #tpu.memory_space<vmem>>, vector<7x32xf32>
    tpu.vector_store %arg23[%c31_214, %c0_215], %264 {strides = array<i32>} : memref<38x32xf32, #tpu.memory_space<vmem>>, vector<7x32xf32>,
    %c7_216 = arith.constant 7 : index
    %c0_217 = arith.constant 0 : index
    %268 = tpu.strided_load %arg23[%c7_216, %c0_217] {strides = array<i32: 2, 1>} : memref<38x32xf32, #tpu.memory_space<vmem>>, vector<12x32xf32>
    %c8_218 = arith.constant 8 : index
    %c0_219 = arith.constant 0 : index
    %269 = tpu.strided_load %arg23[%c8_218, %c0_219] {strides = array<i32: 2, 1>} : memref<38x32xf32, #tpu.memory_space<vmem>>, vector<12x32xf32>
    %270 = arith.maximumf %268, %269 : vector<12x32xf32>
    %cst_220 = arith.constant 0.000000e+00 : f32
    %271 = vector.broadcast %cst_220 : f32 to vector<18x32xf32>
    %c0_221 = arith.constant 0 : index
    %c0_222 = arith.constant 0 : index
    %272 = vector.load %arg26[%c0_221, %c0_222] : memref<18x32xf32, #tpu.memory_space<vmem>>, vector<18x32xf32>
    tpu.vector_store %arg26[%c0_221, %c0_222], %271 {strides = array<i32>} : memref<18x32xf32, #tpu.memory_space<vmem>>, vector<18x32xf32>,
    %273 = vector.extract_strided_slice %270 {offsets = [0, 0], sizes = [3, 32], strides = [1, 1]} : vector<12x32xf32> to vector<3x32xf32>
    %274 = vector.extract_strided_slice %270 {offsets = [3, 0], sizes = [3, 32], strides = [1, 1]} : vector<12x32xf32> to vector<3x32xf32>
    %275 = arith.maximumf %273, %274 : vector<3x32xf32>
    %c5_223 = arith.constant 5 : index
    %c0_224 = arith.constant 0 : index
    %276 = vector.load %arg26[%c5_223, %c0_224] : memref<18x32xf32, #tpu.memory_space<vmem>>, vector<3x32xf32>
    tpu.vector_store %arg26[%c5_223, %c0_224], %275 {strides = array<i32>} : memref<18x32xf32, #tpu.memory_space<vmem>>, vector<3x32xf32>,
    %277 = vector.extract_strided_slice %270 {offsets = [6, 0], sizes = [3, 32], strides = [1, 1]} : vector<12x32xf32> to vector<3x32xf32>
    %278 = vector.extract_strided_slice %270 {offsets = [9, 0], sizes = [3, 32], strides = [1, 1]} : vector<12x32xf32> to vector<3x32xf32>
    %279 = arith.maximumf %277, %278 : vector<3x32xf32>
    %c9 = arith.constant 9 : index
    %c0_225 = arith.constant 0 : index
    %280 = vector.load %arg26[%c9, %c0_225] : memref<18x32xf32, #tpu.memory_space<vmem>>, vector<3x32xf32>
    tpu.vector_store %arg26[%c9, %c0_225], %279 {strides = array<i32>} : memref<18x32xf32, #tpu.memory_space<vmem>>, vector<3x32xf32>,
    %c0_226 = arith.constant 0 : index
    %c0_227 = arith.constant 0 : index
    %281 = vector.load %arg11[%c0_226, %c0_227] : memref<38x18xbf16, #tpu.memory_space<vmem>>, vector<38x18xbf16>
    %c0_228 = arith.constant 0 : index
    %c0_229 = arith.constant 0 : index
    %282 = vector.load %arg26[%c0_228, %c0_229] : memref<18x32xf32, #tpu.memory_space<vmem>>, vector<18x32xf32>
    %283 = arith.truncf %282 : vector<18x32xf32> to vector<18x32xbf16>
    %cst_230 = arith.constant dense<0.000000e+00> : vector<38x32xf32>
    %284 = tpu.matmul %281, %283, %cst_230 {dimension_numbers = #tpu.dot_dimension_numbers<[1], [0], [0], [1], [0, 0, 1, 1], [], []>} : vector<38x18xbf16>, vector<18x32xbf16>, vector<38x32xf32> -> vector<38x32xf32>
    %c0_231 = arith.constant 0 : index
    %c0_232 = arith.constant 0 : index
    %285 = vector.load %arg23[%c0_231, %c0_232] : memref<38x32xf32, #tpu.memory_space<vmem>>, vector<38x32xf32>
    %286 = arith.addf %284, %285 : vector<38x32xf32>
    %c0_233 = arith.constant 0 : index
    %c0_234 = arith.constant 0 : index
    %287 = vector.load %arg27[%c0_233, %c0_234] : memref<38x32xf32, #tpu.memory_space<vmem>>, vector<38x32xf32>
    tpu.vector_store %arg27[%c0_233, %c0_234], %286 {strides = array<i32>} : memref<38x32xf32, #tpu.memory_space<vmem>>, vector<38x32xf32>,
    %cst_235 = arith.constant 0.000000e+00 : f32
    %288 = vector.broadcast %cst_235 : f32 to vector<24x16xf32>
    %c0_236 = arith.constant 0 : index
    %c0_237 = arith.constant 0 : index
    %289 = vector.load %arg27[%c0_236, %c0_237] : memref<38x32xf32, #tpu.memory_space<vmem>>, vector<24x32xf32>
    %290 = arith.truncf %289 : vector<24x32xf32> to vector<24x32xbf16>
    %c0_238 = arith.constant 0 : index
    %c0_239 = arith.constant 0 : index
    %c0_240 = arith.constant 0 : index
    %291 = vector.load %arg12[%c0_238, %c0_239, %c0_240] : memref<9x32x16xbf16, #tpu.memory_space<vmem>>, vector<1x32x16xbf16>
    %292 = vector.shape_cast %291 : vector<1x32x16xbf16> to vector<32x16xbf16>
    %cst_241 = arith.constant dense<0.000000e+00> : vector<24x16xf32>
    %293 = tpu.matmul %290, %292, %cst_241 {dimension_numbers = #tpu.dot_dimension_numbers<[1], [0], [0], [1], [0, 0, 1, 1], [], []>} : vector<24x32xbf16>, vector<32x16xbf16>, vector<24x16xf32> -> vector<24x16xf32>
    %294 = arith.addf %288, %293 : vector<24x16xf32>
    %c1_242 = arith.constant 1 : index
    %c0_243 = arith.constant 0 : index
    %295 = vector.load %arg27[%c1_242, %c0_243] : memref<38x32xf32, #tpu.memory_space<vmem>>, vector<24x32xf32>
    %296 = arith.truncf %295 : vector<24x32xf32> to vector<24x32xbf16>
    %c1_244 = arith.constant 1 : index
    %c0_245 = arith.constant 0 : index
    %c0_246 = arith.constant 0 : index
    %297 = vector.load %arg12[%c1_244, %c0_245, %c0_246] : memref<9x32x16xbf16, #tpu.memory_space<vmem>>, vector<1x32x16xbf16>
    %298 = vector.shape_cast %297 : vector<1x32x16xbf16> to vector<32x16xbf16>
    %cst_247 = arith.constant dense<0.000000e+00> : vector<24x16xf32>
    %299 = tpu.matmul %296, %298, %cst_247 {dimension_numbers = #tpu.dot_dimension_numbers<[1], [0], [0], [1], [0, 0, 1, 1], [], []>} : vector<24x32xbf16>, vector<32x16xbf16>, vector<24x16xf32> -> vector<24x16xf32>
    %300 = arith.addf %294, %299 : vector<24x16xf32>
    %c2_248 = arith.constant 2 : index
    %c0_249 = arith.constant 0 : index
    %301 = vector.load %arg27[%c2_248, %c0_249] : memref<38x32xf32, #tpu.memory_space<vmem>>, vector<24x32xf32>
    %302 = arith.truncf %301 : vector<24x32xf32> to vector<24x32xbf16>
    %c2_250 = arith.constant 2 : index
    %c0_251 = arith.constant 0 : index
    %c0_252 = arith.constant 0 : index
    %303 = vector.load %arg12[%c2_250, %c0_251, %c0_252] : memref<9x32x16xbf16, #tpu.memory_space<vmem>>, vector<1x32x16xbf16>
    %304 = vector.shape_cast %303 : vector<1x32x16xbf16> to vector<32x16xbf16>
    %cst_253 = arith.constant dense<0.000000e+00> : vector<24x16xf32>
    %305 = tpu.matmul %302, %304, %cst_253 {dimension_numbers = #tpu.dot_dimension_numbers<[1], [0], [0], [1], [0, 0, 1, 1], [], []>} : vector<24x32xbf16>, vector<32x16xbf16>, vector<24x16xf32> -> vector<24x16xf32>
    %306 = arith.addf %300, %305 : vector<24x16xf32>
    %c6_254 = arith.constant 6 : index
    %c0_255 = arith.constant 0 : index
    %307 = vector.load %arg27[%c6_254, %c0_255] : memref<38x32xf32, #tpu.memory_space<vmem>>, vector<24x32xf32>
    %308 = arith.truncf %307 : vector<24x32xf32> to vector<24x32xbf16>
    %c3_256 = arith.constant 3 : index
    %c0_257 = arith.constant 0 : index
    %c0_258 = arith.constant 0 : index
    %309 = vector.load %arg12[%c3_256, %c0_257, %c0_258] : memref<9x32x16xbf16, #tpu.memory_space<vmem>>, vector<1x32x16xbf16>
    %310 = vector.shape_cast %309 : vector<1x32x16xbf16> to vector<32x16xbf16>
    %cst_259 = arith.constant dense<0.000000e+00> : vector<24x16xf32>
    %311 = tpu.matmul %308, %310, %cst_259 {dimension_numbers = #tpu.dot_dimension_numbers<[1], [0], [0], [1], [0, 0, 1, 1], [], []>} : vector<24x32xbf16>, vector<32x16xbf16>, vector<24x16xf32> -> vector<24x16xf32>
    %312 = arith.addf %306, %311 : vector<24x16xf32>
    %c7_260 = arith.constant 7 : index
    %c0_261 = arith.constant 0 : index
    %313 = vector.load %arg27[%c7_260, %c0_261] : memref<38x32xf32, #tpu.memory_space<vmem>>, vector<24x32xf32>
    %314 = arith.truncf %313 : vector<24x32xf32> to vector<24x32xbf16>
    %c4_262 = arith.constant 4 : index
    %c0_263 = arith.constant 0 : index
    %c0_264 = arith.constant 0 : index
    %315 = vector.load %arg12[%c4_262, %c0_263, %c0_264] : memref<9x32x16xbf16, #tpu.memory_space<vmem>>, vector<1x32x16xbf16>
    %316 = vector.shape_cast %315 : vector<1x32x16xbf16> to vector<32x16xbf16>
    %cst_265 = arith.constant dense<0.000000e+00> : vector<24x16xf32>
    %317 = tpu.matmul %314, %316, %cst_265 {dimension_numbers = #tpu.dot_dimension_numbers<[1], [0], [0], [1], [0, 0, 1, 1], [], []>} : vector<24x32xbf16>, vector<32x16xbf16>, vector<24x16xf32> -> vector<24x16xf32>
    %318 = arith.addf %312, %317 : vector<24x16xf32>
    %c8_266 = arith.constant 8 : index
    %c0_267 = arith.constant 0 : index
    %319 = vector.load %arg27[%c8_266, %c0_267] : memref<38x32xf32, #tpu.memory_space<vmem>>, vector<24x32xf32>
    %320 = arith.truncf %319 : vector<24x32xf32> to vector<24x32xbf16>
    %c5_268 = arith.constant 5 : index
    %c0_269 = arith.constant 0 : index
    %c0_270 = arith.constant 0 : index
    %321 = vector.load %arg12[%c5_268, %c0_269, %c0_270] : memref<9x32x16xbf16, #tpu.memory_space<vmem>>, vector<1x32x16xbf16>
    %322 = vector.shape_cast %321 : vector<1x32x16xbf16> to vector<32x16xbf16>
    %cst_271 = arith.constant dense<0.000000e+00> : vector<24x16xf32>
    %323 = tpu.matmul %320, %322, %cst_271 {dimension_numbers = #tpu.dot_dimension_numbers<[1], [0], [0], [1], [0, 0, 1, 1], [], []>} : vector<24x32xbf16>, vector<32x16xbf16>, vector<24x16xf32> -> vector<24x16xf32>
    %324 = arith.addf %318, %323 : vector<24x16xf32>
    %c12_272 = arith.constant 12 : index
    %c0_273 = arith.constant 0 : index
    %325 = vector.load %arg27[%c12_272, %c0_273] : memref<38x32xf32, #tpu.memory_space<vmem>>, vector<24x32xf32>
    %326 = arith.truncf %325 : vector<24x32xf32> to vector<24x32xbf16>
    %c6_274 = arith.constant 6 : index
    %c0_275 = arith.constant 0 : index
    %c0_276 = arith.constant 0 : index
    %327 = vector.load %arg12[%c6_274, %c0_275, %c0_276] : memref<9x32x16xbf16, #tpu.memory_space<vmem>>, vector<1x32x16xbf16>
    %328 = vector.shape_cast %327 : vector<1x32x16xbf16> to vector<32x16xbf16>
    %cst_277 = arith.constant dense<0.000000e+00> : vector<24x16xf32>
    %329 = tpu.matmul %326, %328, %cst_277 {dimension_numbers = #tpu.dot_dimension_numbers<[1], [0], [0], [1], [0, 0, 1, 1], [], []>} : vector<24x32xbf16>, vector<32x16xbf16>, vector<24x16xf32> -> vector<24x16xf32>
    %330 = arith.addf %324, %329 : vector<24x16xf32>
    %c13_278 = arith.constant 13 : index
    %c0_279 = arith.constant 0 : index
    %331 = vector.load %arg27[%c13_278, %c0_279] : memref<38x32xf32, #tpu.memory_space<vmem>>, vector<24x32xf32>
    %332 = arith.truncf %331 : vector<24x32xf32> to vector<24x32xbf16>
    %c7_280 = arith.constant 7 : index
    %c0_281 = arith.constant 0 : index
    %c0_282 = arith.constant 0 : index
    %333 = vector.load %arg12[%c7_280, %c0_281, %c0_282] : memref<9x32x16xbf16, #tpu.memory_space<vmem>>, vector<1x32x16xbf16>
    %334 = vector.shape_cast %333 : vector<1x32x16xbf16> to vector<32x16xbf16>
    %cst_283 = arith.constant dense<0.000000e+00> : vector<24x16xf32>
    %335 = tpu.matmul %332, %334, %cst_283 {dimension_numbers = #tpu.dot_dimension_numbers<[1], [0], [0], [1], [0, 0, 1, 1], [], []>} : vector<24x32xbf16>, vector<32x16xbf16>, vector<24x16xf32> -> vector<24x16xf32>
    %336 = arith.addf %330, %335 : vector<24x16xf32>
    %c14_284 = arith.constant 14 : index
    %c0_285 = arith.constant 0 : index
    %337 = vector.load %arg27[%c14_284, %c0_285] : memref<38x32xf32, #tpu.memory_space<vmem>>, vector<24x32xf32>
    %338 = arith.truncf %337 : vector<24x32xf32> to vector<24x32xbf16>
    %c8_286 = arith.constant 8 : index
    %c0_287 = arith.constant 0 : index
    %c0_288 = arith.constant 0 : index
    %339 = vector.load %arg12[%c8_286, %c0_287, %c0_288] : memref<9x32x16xbf16, #tpu.memory_space<vmem>>, vector<1x32x16xbf16>
    %340 = vector.shape_cast %339 : vector<1x32x16xbf16> to vector<32x16xbf16>
    %cst_289 = arith.constant dense<0.000000e+00> : vector<24x16xf32>
    %341 = tpu.matmul %338, %340, %cst_289 {dimension_numbers = #tpu.dot_dimension_numbers<[1], [0], [0], [1], [0, 0, 1, 1], [], []>} : vector<24x32xbf16>, vector<32x16xbf16>, vector<24x16xf32> -> vector<24x16xf32>
    %342 = arith.addf %336, %341 : vector<24x16xf32>
    %c0_290 = arith.constant 0 : index
    %c0_291 = arith.constant 0 : index
    %343 = vector.load %arg13[%c0_290, %c0_291] : memref<1x16xf32, #tpu.memory_space<vmem>>, vector<1x16xf32>
    %344 = vector.broadcast %343 : vector<1x16xf32> to vector<24x16xf32>
    %345 = arith.addf %342, %344 : vector<24x16xf32>
    %cst_292 = arith.constant 0.000000e+00 : f32
    %346 = vector.broadcast %cst_292 : f32 to vector<24x16xf32>
    %347 = arith.maximumf %345, %346 : vector<24x16xf32>
    %c0_293 = arith.constant 0 : index
    %c0_294 = arith.constant 0 : index
    %348 = vector.load %arg30[%c0_293, %c0_294] : memref<24x16xf32, #tpu.memory_space<vmem>>, vector<24x16xf32>
    tpu.vector_store %arg30[%c0_293, %c0_294], %347 {strides = array<i32>} : memref<24x16xf32, #tpu.memory_space<vmem>>, vector<24x16xf32>,
    %c0_295 = arith.constant 0 : index
    %c0_296 = arith.constant 0 : index
    %349 = vector.load %arg14[%c0_295, %c0_296] : memref<102x24xbf16, #tpu.memory_space<vmem>>, vector<102x24xbf16>
    %c0_297 = arith.constant 0 : index
    %c0_298 = arith.constant 0 : index
    %350 = vector.load %arg30[%c0_297, %c0_298] : memref<24x16xf32, #tpu.memory_space<vmem>>, vector<24x16xf32>
    %351 = arith.truncf %350 : vector<24x16xf32> to vector<24x16xbf16>
    %cst_299 = arith.constant dense<0.000000e+00> : vector<102x16xf32>
    %352 = tpu.matmul %349, %351, %cst_299 {dimension_numbers = #tpu.dot_dimension_numbers<[1], [0], [0], [1], [0, 0, 1, 1], [], []>} : vector<102x24xbf16>, vector<24x16xbf16>, vector<102x16xf32> -> vector<102x16xf32>
    %c0_300 = arith.constant 0 : index
    %c0_301 = arith.constant 0 : index
    %353 = vector.load %arg22[%c0_300, %c0_301] : memref<102x16xf32, #tpu.memory_space<vmem>>, vector<102x16xf32>
    %354 = arith.addf %352, %353 : vector<102x16xf32>
    %c0_302 = arith.constant 0 : index
    %c0_303 = arith.constant 0 : index
    %355 = vector.load %arg28[%c0_302, %c0_303] : memref<102x16xf32, #tpu.memory_space<vmem>>, vector<102x16xf32>
    tpu.vector_store %arg28[%c0_302, %c0_303], %354 {strides = array<i32>} : memref<102x16xf32, #tpu.memory_space<vmem>>, vector<102x16xf32>,
    %cst_304 = arith.constant 0.000000e+00 : f32
    %356 = vector.broadcast %cst_304 : f32 to vector<80x8xf32>
    %c0_305 = arith.constant 0 : index
    %c0_306 = arith.constant 0 : index
    %357 = vector.load %arg28[%c0_305, %c0_306] : memref<102x16xf32, #tpu.memory_space<vmem>>, vector<80x16xf32>
    %358 = arith.truncf %357 : vector<80x16xf32> to vector<80x16xbf16>
    %c0_307 = arith.constant 0 : index
    %c0_308 = arith.constant 0 : index
    %c0_309 = arith.constant 0 : index
    %359 = vector.load %arg15[%c0_307, %c0_308, %c0_309] : memref<9x16x8xbf16, #tpu.memory_space<vmem>>, vector<1x16x8xbf16>
    %360 = vector.shape_cast %359 : vector<1x16x8xbf16> to vector<16x8xbf16>
    %cst_310 = arith.constant dense<0.000000e+00> : vector<80x8xf32>
    %361 = tpu.matmul %358, %360, %cst_310 {dimension_numbers = #tpu.dot_dimension_numbers<[1], [0], [0], [1], [0, 0, 1, 1], [], []>} : vector<80x16xbf16>, vector<16x8xbf16>, vector<80x8xf32> -> vector<80x8xf32>
    %362 = arith.addf %356, %361 : vector<80x8xf32>
    %c1_311 = arith.constant 1 : index
    %c0_312 = arith.constant 0 : index
    %363 = vector.load %arg28[%c1_311, %c0_312] : memref<102x16xf32, #tpu.memory_space<vmem>>, vector<80x16xf32>
    %364 = arith.truncf %363 : vector<80x16xf32> to vector<80x16xbf16>
    %c1_313 = arith.constant 1 : index
    %c0_314 = arith.constant 0 : index
    %c0_315 = arith.constant 0 : index
    %365 = vector.load %arg15[%c1_313, %c0_314, %c0_315] : memref<9x16x8xbf16, #tpu.memory_space<vmem>>, vector<1x16x8xbf16>
    %366 = vector.shape_cast %365 : vector<1x16x8xbf16> to vector<16x8xbf16>
    %cst_316 = arith.constant dense<0.000000e+00> : vector<80x8xf32>
    %367 = tpu.matmul %364, %366, %cst_316 {dimension_numbers = #tpu.dot_dimension_numbers<[1], [0], [0], [1], [0, 0, 1, 1], [], []>} : vector<80x16xbf16>, vector<16x8xbf16>, vector<80x8xf32> -> vector<80x8xf32>
    %368 = arith.addf %362, %367 : vector<80x8xf32>
    %c2_317 = arith.constant 2 : index
    %c0_318 = arith.constant 0 : index
    %369 = vector.load %arg28[%c2_317, %c0_318] : memref<102x16xf32, #tpu.memory_space<vmem>>, vector<80x16xf32>
    %370 = arith.truncf %369 : vector<80x16xf32> to vector<80x16xbf16>
    %c2_319 = arith.constant 2 : index
    %c0_320 = arith.constant 0 : index
    %c0_321 = arith.constant 0 : index
    %371 = vector.load %arg15[%c2_319, %c0_320, %c0_321] : memref<9x16x8xbf16, #tpu.memory_space<vmem>>, vector<1x16x8xbf16>
    %372 = vector.shape_cast %371 : vector<1x16x8xbf16> to vector<16x8xbf16>
    %cst_322 = arith.constant dense<0.000000e+00> : vector<80x8xf32>
    %373 = tpu.matmul %370, %372, %cst_322 {dimension_numbers = #tpu.dot_dimension_numbers<[1], [0], [0], [1], [0, 0, 1, 1], [], []>} : vector<80x16xbf16>, vector<16x8xbf16>, vector<80x8xf32> -> vector<80x8xf32>
    %374 = arith.addf %368, %373 : vector<80x8xf32>
    %c10_323 = arith.constant 10 : index
    %c0_324 = arith.constant 0 : index
    %375 = vector.load %arg28[%c10_323, %c0_324] : memref<102x16xf32, #tpu.memory_space<vmem>>, vector<80x16xf32>
    %376 = arith.truncf %375 : vector<80x16xf32> to vector<80x16xbf16>
    %c3_325 = arith.constant 3 : index
    %c0_326 = arith.constant 0 : index
    %c0_327 = arith.constant 0 : index
    %377 = vector.load %arg15[%c3_325, %c0_326, %c0_327] : memref<9x16x8xbf16, #tpu.memory_space<vmem>>, vector<1x16x8xbf16>
    %378 = vector.shape_cast %377 : vector<1x16x8xbf16> to vector<16x8xbf16>
    %cst_328 = arith.constant dense<0.000000e+00> : vector<80x8xf32>
    %379 = tpu.matmul %376, %378, %cst_328 {dimension_numbers = #tpu.dot_dimension_numbers<[1], [0], [0], [1], [0, 0, 1, 1], [], []>} : vector<80x16xbf16>, vector<16x8xbf16>, vector<80x8xf32> -> vector<80x8xf32>
    %380 = arith.addf %374, %379 : vector<80x8xf32>
    %c11_329 = arith.constant 11 : index
    %c0_330 = arith.constant 0 : index
    %381 = vector.load %arg28[%c11_329, %c0_330] : memref<102x16xf32, #tpu.memory_space<vmem>>, vector<80x16xf32>
    %382 = arith.truncf %381 : vector<80x16xf32> to vector<80x16xbf16>
    %c4_331 = arith.constant 4 : index
    %c0_332 = arith.constant 0 : index
    %c0_333 = arith.constant 0 : index
    %383 = vector.load %arg15[%c4_331, %c0_332, %c0_333] : memref<9x16x8xbf16, #tpu.memory_space<vmem>>, vector<1x16x8xbf16>
    %384 = vector.shape_cast %383 : vector<1x16x8xbf16> to vector<16x8xbf16>
    %cst_334 = arith.constant dense<0.000000e+00> : vector<80x8xf32>
    %385 = tpu.matmul %382, %384, %cst_334 {dimension_numbers = #tpu.dot_dimension_numbers<[1], [0], [0], [1], [0, 0, 1, 1], [], []>} : vector<80x16xbf16>, vector<16x8xbf16>, vector<80x8xf32> -> vector<80x8xf32>
    %386 = arith.addf %380, %385 : vector<80x8xf32>
    %c12_335 = arith.constant 12 : index
    %c0_336 = arith.constant 0 : index
    %387 = vector.load %arg28[%c12_335, %c0_336] : memref<102x16xf32, #tpu.memory_space<vmem>>, vector<80x16xf32>
    %388 = arith.truncf %387 : vector<80x16xf32> to vector<80x16xbf16>
    %c5_337 = arith.constant 5 : index
    %c0_338 = arith.constant 0 : index
    %c0_339 = arith.constant 0 : index
    %389 = vector.load %arg15[%c5_337, %c0_338, %c0_339] : memref<9x16x8xbf16, #tpu.memory_space<vmem>>, vector<1x16x8xbf16>
    %390 = vector.shape_cast %389 : vector<1x16x8xbf16> to vector<16x8xbf16>
    %cst_340 = arith.constant dense<0.000000e+00> : vector<80x8xf32>
    %391 = tpu.matmul %388, %390, %cst_340 {dimension_numbers = #tpu.dot_dimension_numbers<[1], [0], [0], [1], [0, 0, 1, 1], [], []>} : vector<80x16xbf16>, vector<16x8xbf16>, vector<80x8xf32> -> vector<80x8xf32>
    %392 = arith.addf %386, %391 : vector<80x8xf32>
    %c20_341 = arith.constant 20 : index
    %c0_342 = arith.constant 0 : index
    %393 = vector.load %arg28[%c20_341, %c0_342] : memref<102x16xf32, #tpu.memory_space<vmem>>, vector<80x16xf32>
    %394 = arith.truncf %393 : vector<80x16xf32> to vector<80x16xbf16>
    %c6_343 = arith.constant 6 : index
    %c0_344 = arith.constant 0 : index
    %c0_345 = arith.constant 0 : index
    %395 = vector.load %arg15[%c6_343, %c0_344, %c0_345] : memref<9x16x8xbf16, #tpu.memory_space<vmem>>, vector<1x16x8xbf16>
    %396 = vector.shape_cast %395 : vector<1x16x8xbf16> to vector<16x8xbf16>
    %cst_346 = arith.constant dense<0.000000e+00> : vector<80x8xf32>
    %397 = tpu.matmul %394, %396, %cst_346 {dimension_numbers = #tpu.dot_dimension_numbers<[1], [0], [0], [1], [0, 0, 1, 1], [], []>} : vector<80x16xbf16>, vector<16x8xbf16>, vector<80x8xf32> -> vector<80x8xf32>
    %398 = arith.addf %392, %397 : vector<80x8xf32>
    %c21_347 = arith.constant 21 : index
    %c0_348 = arith.constant 0 : index
    %399 = vector.load %arg28[%c21_347, %c0_348] : memref<102x16xf32, #tpu.memory_space<vmem>>, vector<80x16xf32>
    %400 = arith.truncf %399 : vector<80x16xf32> to vector<80x16xbf16>
    %c7_349 = arith.constant 7 : index
    %c0_350 = arith.constant 0 : index
    %c0_351 = arith.constant 0 : index
    %401 = vector.load %arg15[%c7_349, %c0_350, %c0_351] : memref<9x16x8xbf16, #tpu.memory_space<vmem>>, vector<1x16x8xbf16>
    %402 = vector.shape_cast %401 : vector<1x16x8xbf16> to vector<16x8xbf16>
    %cst_352 = arith.constant dense<0.000000e+00> : vector<80x8xf32>
    %403 = tpu.matmul %400, %402, %cst_352 {dimension_numbers = #tpu.dot_dimension_numbers<[1], [0], [0], [1], [0, 0, 1, 1], [], []>} : vector<80x16xbf16>, vector<16x8xbf16>, vector<80x8xf32> -> vector<80x8xf32>
    %404 = arith.addf %398, %403 : vector<80x8xf32>
    %c22_353 = arith.constant 22 : index
    %c0_354 = arith.constant 0 : index
    %405 = vector.load %arg28[%c22_353, %c0_354] : memref<102x16xf32, #tpu.memory_space<vmem>>, vector<80x16xf32>
    %406 = arith.truncf %405 : vector<80x16xf32> to vector<80x16xbf16>
    %c8_355 = arith.constant 8 : index
    %c0_356 = arith.constant 0 : index
    %c0_357 = arith.constant 0 : index
    %407 = vector.load %arg15[%c8_355, %c0_356, %c0_357] : memref<9x16x8xbf16, #tpu.memory_space<vmem>>, vector<1x16x8xbf16>
    %408 = vector.shape_cast %407 : vector<1x16x8xbf16> to vector<16x8xbf16>
    %cst_358 = arith.constant dense<0.000000e+00> : vector<80x8xf32>
    %409 = tpu.matmul %406, %408, %cst_358 {dimension_numbers = #tpu.dot_dimension_numbers<[1], [0], [0], [1], [0, 0, 1, 1], [], []>} : vector<80x16xbf16>, vector<16x8xbf16>, vector<80x8xf32> -> vector<80x8xf32>
    %410 = arith.addf %404, %409 : vector<80x8xf32>
    %c0_359 = arith.constant 0 : index
    %c0_360 = arith.constant 0 : index
    %411 = vector.load %arg16[%c0_359, %c0_360] : memref<1x8xf32, #tpu.memory_space<vmem>>, vector<1x8xf32>
    %412 = vector.broadcast %411 : vector<1x8xf32> to vector<80x8xf32>
    %413 = arith.addf %410, %412 : vector<80x8xf32>
    %cst_361 = arith.constant 0.000000e+00 : f32
    %414 = vector.broadcast %cst_361 : f32 to vector<80x8xf32>
    %415 = arith.maximumf %413, %414 : vector<80x8xf32>
    %c0_362 = arith.constant 0 : index
    %c0_363 = arith.constant 0 : index
    %416 = vector.load %arg31[%c0_362, %c0_363] : memref<80x8xf32, #tpu.memory_space<vmem>>, vector<80x8xf32>
    tpu.vector_store %arg31[%c0_362, %c0_363], %415 {strides = array<i32>} : memref<80x8xf32, #tpu.memory_space<vmem>>, vector<80x8xf32>,
    %c0_364 = arith.constant 0 : index
    %c0_365 = arith.constant 0 : index
    %417 = vector.load %arg17[%c0_364, %c0_365] : memref<326x80xbf16, #tpu.memory_space<vmem>>, vector<326x80xbf16>
    %c0_366 = arith.constant 0 : index
    %c0_367 = arith.constant 0 : index
    %418 = vector.load %arg31[%c0_366, %c0_367] : memref<80x8xf32, #tpu.memory_space<vmem>>, vector<80x8xf32>
    %419 = arith.truncf %418 : vector<80x8xf32> to vector<80x8xbf16>
    %cst_368 = arith.constant dense<0.000000e+00> : vector<326x8xf32>
    %420 = tpu.matmul %417, %419, %cst_368 {dimension_numbers = #tpu.dot_dimension_numbers<[1], [0], [0], [1], [0, 0, 1, 1], [], []>} : vector<326x80xbf16>, vector<80x8xbf16>, vector<326x8xf32> -> vector<326x8xf32>
    %c0_369 = arith.constant 0 : index
    %c0_370 = arith.constant 0 : index
    %421 = vector.load %arg21[%c0_369, %c0_370] : memref<326x8xf32, #tpu.memory_space<vmem>>, vector<326x8xf32>
    %422 = arith.addf %420, %421 : vector<326x8xf32>
    %c0_371 = arith.constant 0 : index
    %c0_372 = arith.constant 0 : index
    %423 = vector.load %arg29[%c0_371, %c0_372] : memref<326x8xf32, #tpu.memory_space<vmem>>, vector<326x8xf32>
    tpu.vector_store %arg29[%c0_371, %c0_372], %422 {strides = array<i32>} : memref<326x8xf32, #tpu.memory_space<vmem>>, vector<326x8xf32>,
    %cst_373 = arith.constant 0.000000e+00 : f32
    %424 = vector.broadcast %cst_373 : f32 to vector<288x3xf32>
    %c0_374 = arith.constant 0 : index
    %c0_375 = arith.constant 0 : index
    %425 = vector.load %arg29[%c0_374, %c0_375] : memref<326x8xf32, #tpu.memory_space<vmem>>, vector<288x8xf32>
    %426 = arith.truncf %425 : vector<288x8xf32> to vector<288x8xbf16>
    %c0_376 = arith.constant 0 : index
    %c0_377 = arith.constant 0 : index
    %c0_378 = arith.constant 0 : index
    %427 = vector.load %arg18[%c0_376, %c0_377, %c0_378] : memref<9x8x3xbf16, #tpu.memory_space<vmem>>, vector<1x8x3xbf16>
    %428 = vector.shape_cast %427 : vector<1x8x3xbf16> to vector<8x3xbf16>
    %cst_379 = arith.constant dense<0.000000e+00> : vector<288x3xf32>
    %429 = tpu.matmul %426, %428, %cst_379 {dimension_numbers = #tpu.dot_dimension_numbers<[1], [0], [0], [1], [0, 0, 1, 1], [], []>} : vector<288x8xbf16>, vector<8x3xbf16>, vector<288x3xf32> -> vector<288x3xf32>
    %430 = arith.addf %424, %429 : vector<288x3xf32>
    %c1_380 = arith.constant 1 : index
    %c0_381 = arith.constant 0 : index
    %431 = vector.load %arg29[%c1_380, %c0_381] : memref<326x8xf32, #tpu.memory_space<vmem>>, vector<288x8xf32>
    %432 = arith.truncf %431 : vector<288x8xf32> to vector<288x8xbf16>
    %c1_382 = arith.constant 1 : index
    %c0_383 = arith.constant 0 : index
    %c0_384 = arith.constant 0 : index
    %433 = vector.load %arg18[%c1_382, %c0_383, %c0_384] : memref<9x8x3xbf16, #tpu.memory_space<vmem>>, vector<1x8x3xbf16>
    %434 = vector.shape_cast %433 : vector<1x8x3xbf16> to vector<8x3xbf16>
    %cst_385 = arith.constant dense<0.000000e+00> : vector<288x3xf32>
    %435 = tpu.matmul %432, %434, %cst_385 {dimension_numbers = #tpu.dot_dimension_numbers<[1], [0], [0], [1], [0, 0, 1, 1], [], []>} : vector<288x8xbf16>, vector<8x3xbf16>, vector<288x3xf32> -> vector<288x3xf32>
    %436 = arith.addf %430, %435 : vector<288x3xf32>
    %c2_386 = arith.constant 2 : index
    %c0_387 = arith.constant 0 : index
    %437 = vector.load %arg29[%c2_386, %c0_387] : memref<326x8xf32, #tpu.memory_space<vmem>>, vector<288x8xf32>
    %438 = arith.truncf %437 : vector<288x8xf32> to vector<288x8xbf16>
    %c2_388 = arith.constant 2 : index
    %c0_389 = arith.constant 0 : index
    %c0_390 = arith.constant 0 : index
    %439 = vector.load %arg18[%c2_388, %c0_389, %c0_390] : memref<9x8x3xbf16, #tpu.memory_space<vmem>>, vector<1x8x3xbf16>
    %440 = vector.shape_cast %439 : vector<1x8x3xbf16> to vector<8x3xbf16>
    %cst_391 = arith.constant dense<0.000000e+00> : vector<288x3xf32>
    %441 = tpu.matmul %438, %440, %cst_391 {dimension_numbers = #tpu.dot_dimension_numbers<[1], [0], [0], [1], [0, 0, 1, 1], [], []>} : vector<288x8xbf16>, vector<8x3xbf16>, vector<288x3xf32> -> vector<288x3xf32>
    %442 = arith.addf %436, %441 : vector<288x3xf32>
    %c18_392 = arith.constant 18 : index
    %c0_393 = arith.constant 0 : index
    %443 = vector.load %arg29[%c18_392, %c0_393] : memref<326x8xf32, #tpu.memory_space<vmem>>, vector<288x8xf32>
    %444 = arith.truncf %443 : vector<288x8xf32> to vector<288x8xbf16>
    %c3_394 = arith.constant 3 : index
    %c0_395 = arith.constant 0 : index
    %c0_396 = arith.constant 0 : index
    %445 = vector.load %arg18[%c3_394, %c0_395, %c0_396] : memref<9x8x3xbf16, #tpu.memory_space<vmem>>, vector<1x8x3xbf16>
    %446 = vector.shape_cast %445 : vector<1x8x3xbf16> to vector<8x3xbf16>
    %cst_397 = arith.constant dense<0.000000e+00> : vector<288x3xf32>
    %447 = tpu.matmul %444, %446, %cst_397 {dimension_numbers = #tpu.dot_dimension_numbers<[1], [0], [0], [1], [0, 0, 1, 1], [], []>} : vector<288x8xbf16>, vector<8x3xbf16>, vector<288x3xf32> -> vector<288x3xf32>
    %448 = arith.addf %442, %447 : vector<288x3xf32>
    %c19_398 = arith.constant 19 : index
    %c0_399 = arith.constant 0 : index
    %449 = vector.load %arg29[%c19_398, %c0_399] : memref<326x8xf32, #tpu.memory_space<vmem>>, vector<288x8xf32>
    %450 = arith.truncf %449 : vector<288x8xf32> to vector<288x8xbf16>
    %c4_400 = arith.constant 4 : index
    %c0_401 = arith.constant 0 : index
    %c0_402 = arith.constant 0 : index
    %451 = vector.load %arg18[%c4_400, %c0_401, %c0_402] : memref<9x8x3xbf16, #tpu.memory_space<vmem>>, vector<1x8x3xbf16>
    %452 = vector.shape_cast %451 : vector<1x8x3xbf16> to vector<8x3xbf16>
    %cst_403 = arith.constant dense<0.000000e+00> : vector<288x3xf32>
    %453 = tpu.matmul %450, %452, %cst_403 {dimension_numbers = #tpu.dot_dimension_numbers<[1], [0], [0], [1], [0, 0, 1, 1], [], []>} : vector<288x8xbf16>, vector<8x3xbf16>, vector<288x3xf32> -> vector<288x3xf32>
    %454 = arith.addf %448, %453 : vector<288x3xf32>
    %c20_404 = arith.constant 20 : index
    %c0_405 = arith.constant 0 : index
    %455 = vector.load %arg29[%c20_404, %c0_405] : memref<326x8xf32, #tpu.memory_space<vmem>>, vector<288x8xf32>
    %456 = arith.truncf %455 : vector<288x8xf32> to vector<288x8xbf16>
    %c5_406 = arith.constant 5 : index
    %c0_407 = arith.constant 0 : index
    %c0_408 = arith.constant 0 : index
    %457 = vector.load %arg18[%c5_406, %c0_407, %c0_408] : memref<9x8x3xbf16, #tpu.memory_space<vmem>>, vector<1x8x3xbf16>
    %458 = vector.shape_cast %457 : vector<1x8x3xbf16> to vector<8x3xbf16>
    %cst_409 = arith.constant dense<0.000000e+00> : vector<288x3xf32>
    %459 = tpu.matmul %456, %458, %cst_409 {dimension_numbers = #tpu.dot_dimension_numbers<[1], [0], [0], [1], [0, 0, 1, 1], [], []>} : vector<288x8xbf16>, vector<8x3xbf16>, vector<288x3xf32> -> vector<288x3xf32>
    %460 = arith.addf %454, %459 : vector<288x3xf32>
    %c36_410 = arith.constant 36 : index
    %c0_411 = arith.constant 0 : index
    %461 = vector.load %arg29[%c36_410, %c0_411] : memref<326x8xf32, #tpu.memory_space<vmem>>, vector<288x8xf32>
    %462 = arith.truncf %461 : vector<288x8xf32> to vector<288x8xbf16>
    %c6_412 = arith.constant 6 : index
    %c0_413 = arith.constant 0 : index
    %c0_414 = arith.constant 0 : index
    %463 = vector.load %arg18[%c6_412, %c0_413, %c0_414] : memref<9x8x3xbf16, #tpu.memory_space<vmem>>, vector<1x8x3xbf16>
    %464 = vector.shape_cast %463 : vector<1x8x3xbf16> to vector<8x3xbf16>
    %cst_415 = arith.constant dense<0.000000e+00> : vector<288x3xf32>
    %465 = tpu.matmul %462, %464, %cst_415 {dimension_numbers = #tpu.dot_dimension_numbers<[1], [0], [0], [1], [0, 0, 1, 1], [], []>} : vector<288x8xbf16>, vector<8x3xbf16>, vector<288x3xf32> -> vector<288x3xf32>
    %466 = arith.addf %460, %465 : vector<288x3xf32>
    %c37_416 = arith.constant 37 : index
    %c0_417 = arith.constant 0 : index
    %467 = vector.load %arg29[%c37_416, %c0_417] : memref<326x8xf32, #tpu.memory_space<vmem>>, vector<288x8xf32>
    %468 = arith.truncf %467 : vector<288x8xf32> to vector<288x8xbf16>
    %c7_418 = arith.constant 7 : index
    %c0_419 = arith.constant 0 : index
    %c0_420 = arith.constant 0 : index
    %469 = vector.load %arg18[%c7_418, %c0_419, %c0_420] : memref<9x8x3xbf16, #tpu.memory_space<vmem>>, vector<1x8x3xbf16>
    %470 = vector.shape_cast %469 : vector<1x8x3xbf16> to vector<8x3xbf16>
    %cst_421 = arith.constant dense<0.000000e+00> : vector<288x3xf32>
    %471 = tpu.matmul %468, %470, %cst_421 {dimension_numbers = #tpu.dot_dimension_numbers<[1], [0], [0], [1], [0, 0, 1, 1], [], []>} : vector<288x8xbf16>, vector<8x3xbf16>, vector<288x3xf32> -> vector<288x3xf32>
    %472 = arith.addf %466, %471 : vector<288x3xf32>
    %c38_422 = arith.constant 38 : index
    %c0_423 = arith.constant 0 : index
    %473 = vector.load %arg29[%c38_422, %c0_423] : memref<326x8xf32, #tpu.memory_space<vmem>>, vector<288x8xf32>
    %474 = arith.truncf %473 : vector<288x8xf32> to vector<288x8xbf16>
    %c8_424 = arith.constant 8 : index
    %c0_425 = arith.constant 0 : index
    %c0_426 = arith.constant 0 : index
    %475 = vector.load %arg18[%c8_424, %c0_425, %c0_426] : memref<9x8x3xbf16, #tpu.memory_space<vmem>>, vector<1x8x3xbf16>
    %476 = vector.shape_cast %475 : vector<1x8x3xbf16> to vector<8x3xbf16>
    %cst_427 = arith.constant dense<0.000000e+00> : vector<288x3xf32>
    %477 = tpu.matmul %474, %476, %cst_427 {dimension_numbers = #tpu.dot_dimension_numbers<[1], [0], [0], [1], [0, 0, 1, 1], [], []>} : vector<288x8xbf16>, vector<8x3xbf16>, vector<288x3xf32> -> vector<288x3xf32>
    %478 = arith.addf %472, %477 : vector<288x3xf32>
    %c0_428 = arith.constant 0 : index
    %c0_429 = arith.constant 0 : index
    %479 = vector.load %arg19[%c0_428, %c0_429] : memref<1x3xf32, #tpu.memory_space<vmem>>, vector<1x3xf32>
    %480 = vector.broadcast %479 : vector<1x3xf32> to vector<288x3xf32>
    %481 = arith.addf %478, %480 : vector<288x3xf32>
    %c0_430 = arith.constant 0 : index
    %c0_431 = arith.constant 0 : index
    %c0_432 = arith.constant 0 : index
    %482 = vector.load %arg20[%c0_430, %c0_431, %c0_432] : memref<1x288x3xf32, #tpu.memory_space<vmem>>, vector<1x288x3xf32>
    %483 = vector.shape_cast %482 : vector<1x288x3xf32> to vector<288x3xf32>
    %484 = vector.shape_cast %481 : vector<288x3xf32> to vector<1x288x3xf32>
    tpu.vector_store %arg20[%c0_430, %c0_431, %c0_432], %484 {strides = array<i32>} : memref<1x288x3xf32, #tpu.memory_space<vmem>>, vector<1x288x3xf32>,
    return
  }
  func.func @transform_0(%arg0: i32) -> (i32, i32, i32) {
    %c0_i32 = arith.constant 0 : i32
    %c0_i32_0 = arith.constant 0 : i32
    %c0_i32_1 = arith.constant 0 : i32
    return %arg0, %c0_i32, %c0_i32_0 : i32, i32, i32
  }
  func.func @transform_1(%arg0: i32) -> (i32, i32, i32) {
    %c0_i32 = arith.constant 0 : i32
    %c0_i32_0 = arith.constant 0 : i32
    %c0_i32_1 = arith.constant 0 : i32
    %c0_i32_2 = arith.constant 0 : i32
    return %c0_i32, %c0_i32_0, %c0_i32_1 : i32, i32, i32
  }
  func.func @transform_2(%arg0: i32) -> (i32, i32) {
    %c0_i32 = arith.constant 0 : i32
    %c0_i32_0 = arith.constant 0 : i32
    %c0_i32_1 = arith.constant 0 : i32
    return %c0_i32, %c0_i32_0 : i32, i32
  }
  func.func @transform_3(%arg0: i32) -> (i32, i32) {
    %c0_i32 = arith.constant 0 : i32
    %c0_i32_0 = arith.constant 0 : i32
    %c0_i32_1 = arith.constant 0 : i32
    return %c0_i32, %c0_i32_0 : i32, i32
  }
  func.func @transform_4(%arg0: i32) -> (i32, i32, i32) {
    %c0_i32 = arith.constant 0 : i32
    %c0_i32_0 = arith.constant 0 : i32
    %c0_i32_1 = arith.constant 0 : i32
    %c0_i32_2 = arith.constant 0 : i32
    return %c0_i32, %c0_i32_0, %c0_i32_1 : i32, i32, i32
  }
  func.func @transform_5(%arg0: i32) -> (i32, i32) {
    %c0_i32 = arith.constant 0 : i32
    %c0_i32_0 = arith.constant 0 : i32
    %c0_i32_1 = arith.constant 0 : i32
    return %c0_i32, %c0_i32_0 : i32, i32
  }
  func.func @transform_6(%arg0: i32) -> (i32, i32) {
    %c0_i32 = arith.constant 0 : i32
    %c0_i32_0 = arith.constant 0 : i32
    %c0_i32_1 = arith.constant 0 : i32
    return %c0_i32, %c0_i32_0 : i32, i32
  }
  func.func @transform_7(%arg0: i32) -> (i32, i32, i32) {
    %c0_i32 = arith.constant 0 : i32
    %c0_i32_0 = arith.constant 0 : i32
    %c0_i32_1 = arith.constant 0 : i32
    %c0_i32_2 = arith.constant 0 : i32
    return %c0_i32, %c0_i32_0, %c0_i32_1 : i32, i32, i32
  }
  func.func @transform_8(%arg0: i32) -> (i32, i32) {
    %c0_i32 = arith.constant 0 : i32
    %c0_i32_0 = arith.constant 0 : i32
    %c0_i32_1 = arith.constant 0 : i32
    return %c0_i32, %c0_i32_0 : i32, i32
  }
  func.func @transform_9(%arg0: i32) -> (i32, i32) {
    %c0_i32 = arith.constant 0 : i32
    %c0_i32_0 = arith.constant 0 : i32
    %c0_i32_1 = arith.constant 0 : i32
    return %c0_i32, %c0_i32_0 : i32, i32
  }
  func.func @transform_10(%arg0: i32) -> (i32, i32) {
    %c0_i32 = arith.constant 0 : i32
    %c0_i32_0 = arith.constant 0 : i32
    %c0_i32_1 = arith.constant 0 : i32
    return %c0_i32, %c0_i32_0 : i32, i32
  }
  func.func @transform_11(%arg0: i32) -> (i32, i32, i32) {
    %c0_i32 = arith.constant 0 : i32
    %c0_i32_0 = arith.constant 0 : i32
    %c0_i32_1 = arith.constant 0 : i32
    %c0_i32_2 = arith.constant 0 : i32
    return %c0_i32, %c0_i32_0, %c0_i32_1 : i32, i32, i32
  }
  func.func @transform_12(%arg0: i32) -> (i32, i32) {
    %c0_i32 = arith.constant 0 : i32
    %c0_i32_0 = arith.constant 0 : i32
    %c0_i32_1 = arith.constant 0 : i32
    return %c0_i32, %c0_i32_0 : i32, i32
  }
  func.func @transform_13(%arg0: i32) -> (i32, i32) {
    %c0_i32 = arith.constant 0 : i32
    %c0_i32_0 = arith.constant 0 : i32
    %c0_i32_1 = arith.constant 0 : i32
    return %c0_i32, %c0_i32_0 : i32, i32
  }
  func.func @transform_14(%arg0: i32) -> (i32, i32, i32) {
    %c0_i32 = arith.constant 0 : i32
    %c0_i32_0 = arith.constant 0 : i32
    %c0_i32_1 = arith.constant 0 : i32
    %c0_i32_2 = arith.constant 0 : i32
    return %c0_i32, %c0_i32_0, %c0_i32_1 : i32, i32, i32
  }
  func.func @transform_15(%arg0: i32) -> (i32, i32) {
    %c0_i32 = arith.constant 0 : i32
    %c0_i32_0 = arith.constant 0 : i32
    %c0_i32_1 = arith.constant 0 : i32
    return %c0_i32, %c0_i32_0 : i32, i32
  }
  func.func @transform_16(%arg0: i32) -> (i32, i32) {
    %c0_i32 = arith.constant 0 : i32
    %c0_i32_0 = arith.constant 0 : i32
    %c0_i32_1 = arith.constant 0 : i32
    return %c0_i32, %c0_i32_0 : i32, i32
  }
  func.func @transform_17(%arg0: i32) -> (i32, i32, i32) {
    %c0_i32 = arith.constant 0 : i32
    %c0_i32_0 = arith.constant 0 : i32
    %c0_i32_1 = arith.constant 0 : i32
    %c0_i32_2 = arith.constant 0 : i32
    return %c0_i32, %c0_i32_0, %c0_i32_1 : i32, i32, i32
  }
  func.func @transform_18(%arg0: i32) -> (i32, i32) {
    %c0_i32 = arith.constant 0 : i32
    %c0_i32_0 = arith.constant 0 : i32
    %c0_i32_1 = arith.constant 0 : i32
    return %c0_i32, %c0_i32_0 : i32, i32
  }
  func.func @transform_19(%arg0: i32) -> (i32, i32, i32) {
    %c0_i32 = arith.constant 0 : i32
    %c0_i32_0 = arith.constant 0 : i32
    %c0_i32_1 = arith.constant 0 : i32
    return %arg0, %c0_i32, %c0_i32_0 : i32, i32, i32
  }
}

</mosaic_0001>

<llo_original>
// kernel: unet_forward.1
$region0: #{unet_forward.1}
  #allocation0 [shape = 'u32[]', space=smem, size = 0x4, offset = 0x4, fixed_abs, tag = 'smem constant byte address 0x4 - core index']
  #allocation1 [shape = 'u32[72,128]{1,0:T(1,128)}', space=vmem, size = 0x9000, scoped, tag = 'internal scratch']
  #allocation2 [shape = 'f32[326,8]{1,0:T(8,128)}', space=vmem, size = 0x29000, scoped, tag = 'scratch operand']
  #allocation3 [shape = 'f32[102,16]{1,0:T(8,128)}', space=vmem, size = 0xd000, scoped, tag = 'scratch operand']
  #allocation4 [shape = 'f32[38,32]{1,0:T(8,128)}', space=vmem, size = 0x5000, scoped, tag = 'scratch operand']
  #allocation5 [shape = 'f32[102,8]{1,0:T(8,128)}', space=vmem, size = 0xd000, scoped, tag = 'scratch operand']
  #allocation6 [shape = 'f32[38,16]{1,0:T(8,128)}', space=vmem, size = 0x5000, scoped, tag = 'scratch operand']
  #allocation7 [shape = 'f32[18,32]{1,0:T(8,128)}', space=vmem, size = 0x3000, scoped, tag = 'scratch operand']
  #allocation8 [shape = 'f32[38,32]{1,0:T(8,128)}', space=vmem, size = 0x5000, scoped, tag = 'scratch operand']
  #allocation9 [shape = 'f32[102,16]{1,0:T(8,128)}', space=vmem, size = 0xd000, scoped, tag = 'scratch operand']
  #allocation10 [shape = 'f32[326,8]{1,0:T(8,128)}', space=vmem, size = 0x29000, scoped, tag = 'scratch operand']
  #allocation11 [shape = 'f32[24,16]{1,0:T(8,128)}', space=vmem, size = 0x3000, scoped, tag = 'scratch operand']
  #allocation12 [shape = 'f32[80,8]{1,0:T(8,128)}', space=vmem, size = 0xa000, scoped, tag = 'scratch operand']
  %s0 = inlined_call_operand.vmem [shape: f32[2,326,3], index: 0, kind: input, shape index: {}]
  %s1 = inlined_call_operand.vmem [shape: bf16[9,3,8], index: 1, kind: input, shape index: {}]
  %s2 = inlined_call_operand.vmem [shape: f32[1,8], index: 2, kind: input, shape index: {}]
  %s3 = inlined_call_operand.vmem [shape: f32[288,1], index: 3, kind: input, shape index: {}]
  %s4 = inlined_call_operand.vmem [shape: bf16[9,8,16], index: 4, kind: input, shape index: {}]
  %s5 = inlined_call_operand.vmem [shape: f32[1,16], index: 5, kind: input, shape index: {}]
  %s6 = inlined_call_operand.vmem [shape: f32[80,1], index: 6, kind: input, shape index: {}]
  %s7 = inlined_call_operand.vmem [shape: bf16[9,16,32], index: 7, kind: input, shape index: {}]
  %s8 = inlined_call_operand.vmem [shape: f32[1,32], index: 8, kind: input, shape index: {}]
  %s9 = inlined_call_operand.vmem [shape: f32[24,1], index: 9, kind: input, shape index: {}]
  %s10 = inlined_call_operand.vmem [shape: bf16[38,18], index: 10, kind: input, shape index: {}]
  %s11 = inlined_call_operand.vmem [shape: bf16[9,32,16], index: 11, kind: input, shape index: {}]
  %s12 = inlined_call_operand.vmem [shape: f32[1,16], index: 12, kind: input, shape index: {}]
  %s13 = inlined_call_operand.vmem [shape: bf16[102,24], index: 13, kind: input, shape index: {}]
  %s14 = inlined_call_operand.vmem [shape: bf16[9,16,8], index: 14, kind: input, shape index: {}]
  %s15 = inlined_call_operand.vmem [shape: f32[1,8], index: 15, kind: input, shape index: {}]
  %s16 = inlined_call_operand.vmem [shape: bf16[326,80], index: 16, kind: input, shape index: {}]
  %s17 = inlined_call_operand.vmem [shape: bf16[9,8,3], index: 17, kind: input, shape index: {}]
  %s18 = inlined_call_operand.vmem [shape: f32[1,3], index: 18, kind: input, shape index: {}]
  %s19 = inlined_call_operand.vmem [shape: f32[2,288,3], index: 19, kind: output, shape index: {}]
  %s20 = sld [smem:[#allocation0]]
  $region109: #{unet_forward.1} parent=0
    _
  %s22 = ssub.s32 1, %s20
  %s23 = scalar_select 0, %s22, %s20
  loop: start=0, step=1, limit=4
  $region2: #{unet_forward.1} parent=0 // loop_pre_header
    _
  $region3: #{unet_forward.1} parent=0 // loop_header
    %s25 = sphi 0, %s29
    %p26 = scmp.ge.s32.totalorder %s25, 4
    %s35 = sphi 0, %s37
    %s38 = sphi 0, %s35
    %s39 = sphi 0, %s38
    %s55 = sphi 0, %s39
    %s59 = sphi 0, %s59
    %s61 = sphi 0, %s59
    %s62 = sphi 0, %s61
    %s76 = sphi 0, %s62
    %s80 = sphi 0, %s80
    %s82 = sphi 0, %s80
    %s83 = sphi 0, %s82
    %s97 = sphi 0, %s83
    %s101 = sphi 0, %s101
    %s103 = sphi 0, %s101
    %s104 = sphi 0, %s103
    %s118 = sphi 0, %s104
    %s122 = sphi 0, %s122
    %s124 = sphi 0, %s122
    %s125 = sphi 0, %s124
    %s139 = sphi 0, %s125
    %s143 = sphi 0, %s143
    %s145 = sphi 0, %s143
    %s146 = sphi 0, %s145
    %s160 = sphi 0, %s146
    %s164 = sphi 0, %s164
    %s166 = sphi 0, %s164
    %s167 = sphi 0, %s166
    %s181 = sphi 0, %s167
    %s185 = sphi 0, %s185
    %s187 = sphi 0, %s185
    %s188 = sphi 0, %s187
    %s202 = sphi 0, %s188
    %s206 = sphi 0, %s206
    %s208 = sphi 0, %s206
    %s209 = sphi 0, %s208
    %s223 = sphi 0, %s209
    %s227 = sphi 0, %s227
    %s229 = sphi 0, %s227
    %s230 = sphi 0, %s229
    %s244 = sphi 0, %s230
    %s248 = sphi 0, %s248
    %s250 = sphi 0, %s248
    %s251 = sphi 0, %s250
    %s265 = sphi 0, %s251
    %s269 = sphi 0, %s269
    %s271 = sphi 0, %s269
    %s272 = sphi 0, %s271
    %s286 = sphi 0, %s272
    %s290 = sphi 0, %s290
    %s292 = sphi 0, %s290
    %s293 = sphi 0, %s292
    %s307 = sphi 0, %s293
    %s311 = sphi 0, %s311
    %s313 = sphi 0, %s311
    %s314 = sphi 0, %s313
    %s328 = sphi 0, %s314
    %s332 = sphi 0, %s332
    %s334 = sphi 0, %s332
    %s335 = sphi 0, %s334
    %s349 = sphi 0, %s335
    %s353 = sphi 0, %s353
    %s355 = sphi 0, %s353
    %s356 = sphi 0, %s355
    %s370 = sphi 0, %s356
    %s374 = sphi 0, %s374
    %s376 = sphi 0, %s374
    %s377 = sphi 0, %s376
    %s391 = sphi 0, %s377
    %s395 = sphi 0, %s395
    %s397 = sphi 0, %s395
    %s398 = sphi 0, %s397
    %s412 = sphi 0, %s398
    %s416 = sphi 0, %s416
    %s418 = sphi 0, %s416
    %s419 = sphi 0, %s418
    %s433 = sphi 0, %s419
    %s439 = sphi 0, %s441
    %s442 = sphi 0, %s439
    %s443 = sphi 0, %s442
    %s459 = sphi 0, %s443
  $region4: #{unet_forward.1} parent=0 // loop_header_branch
    %28 = sbr.rel (%p26) target = $region8
  $region5: #{unet_forward.1} parent=0 // loop_body
    %s30 = ssub.s32 %s25, 1
    %s31 = ssub.s32 %s25, 2
    %s32 = sadd.s32 %s25, 1
    %s33 = ssub.s32 %s25, %s32
    %p34 = scmp.eq.s32.totalorder %s33, 0
    %s36 = sadd.s32 %s35, 1
    %s37 = scalar_select %p34, %s35, %s36
    %p40 = pneg %p34
    %p41 = scmp.eq.s32.totalorder %s25, 1
    %p42 = por %p40, %p41
    %p43 = scmp.ne.s32.totalorder %s35, %s38
    %p44 = scmp.eq.s32.totalorder %s25, 0
    %p45 = por %p43, %p44
    %p46 = scmp.ne.s32.totalorder %s35, %s38
    %p47 = scmp.eq.s32.totalorder %s30, 1
    %p48 = por %p46, %p47
    %p49 = scmp.ne.s32.totalorder %s38, %s39
    %p50 = scmp.eq.s32.totalorder %s30, 0
    %p51 = por %p49, %p50
    %p52 = scmp.ne.s32.totalorder %s38, %s39
    %p53 = scmp.eq.s32.totalorder %s31, 1
    %p54 = por %p52, %p53
    %p56 = scmp.ne.s32.totalorder %s39, %s55
    %p57 = scmp.eq.s32.totalorder %s31, 0
    %p58 = por %p56, %p57
    %s60 = sadd.s32 %s59, 1
    %p63 = scmp.eq.s32.totalorder %s25, 1
    %p64 = scmp.ne.s32.totalorder %s59, %s61
    %p65 = scmp.eq.s32.totalorder %s25, 0
    %p66 = por %p64, %p65
    %p67 = scmp.ne.s32.totalorder %s59, %s61
    %p68 = scmp.eq.s32.totalorder %s30, 1
    %p69 = por %p67, %p68
    %p70 = scmp.ne.s32.totalorder %s61, %s62
    %p71 = scmp.eq.s32.totalorder %s30, 0
    %p72 = por %p70, %p71
    %p73 = scmp.ne.s32.totalorder %s61, %s62
    %p74 = scmp.eq.s32.totalorder %s31, 1
    %p75 = por %p73, %p74
    %p77 = scmp.ne.s32.totalorder %s62, %s76
    %p78 = scmp.eq.s32.totalorder %s31, 0
    %p79 = por %p77, %p78
    %s81 = sadd.s32 %s80, 1
    %p84 = scmp.eq.s32.totalorder %s25, 1
    %p85 = scmp.ne.s32.totalorder %s80, %s82
    %p86 = scmp.eq.s32.totalorder %s25, 0
    %p87 = por %p85, %p86
    %p88 = scmp.ne.s32.totalorder %s80, %s82
    %p89 = scmp.eq.s32.totalorder %s30, 1
    %p90 = por %p88, %p89
    %p91 = scmp.ne.s32.totalorder %s82, %s83
    %p92 = scmp.eq.s32.totalorder %s30, 0
    %p93 = por %p91, %p92
    %p94 = scmp.ne.s32.totalorder %s82, %s83
    %p95 = scmp.eq.s32.totalorder %s31, 1
    %p96 = por %p94, %p95
    %p98 = scmp.ne.s32.totalorder %s83, %s97
    %p99 = scmp.eq.s32.totalorder %s31, 0
    %p100 = por %p98, %p99
    %s102 = sadd.s32 %s101, 1
    %p105 = scmp.eq.s32.totalorder %s25, 1
    %p106 = scmp.ne.s32.totalorder %s101, %s103
    %p107 = scmp.eq.s32.totalorder %s25, 0
    %p108 = por %p106, %p107
    %p109 = scmp.ne.s32.totalorder %s101, %s103
    %p110 = scmp.eq.s32.totalorder %s30, 1
    %p111 = por %p109, %p110
    %p112 = scmp.ne.s32.totalorder %s103, %s104
    %p113 = scmp.eq.s32.totalorder %s30, 0
    %p114 = por %p112, %p113
    %p115 = scmp.ne.s32.totalorder %s103, %s104
    %p116 = scmp.eq.s32.totalorder %s31, 1
    %p117 = por %p115, %p116
    %p119 = scmp.ne.s32.totalorder %s104, %s118
    %p120 = scmp.eq.s32.totalorder %s31, 0
    %p121 = por %p119, %p120
    %s123 = sadd.s32 %s122, 1
    %p126 = scmp.eq.s32.totalorder %s25, 1
    %p127 = scmp.ne.s32.totalorder %s122, %s124
    %p128 = scmp.eq.s32.totalorder %s25, 0
    %p129 = por %p127, %p128
    %p130 = scmp.ne.s32.totalorder %s122, %s124
    %p131 = scmp.eq.s32.totalorder %s30, 1
    %p132 = por %p130, %p131
    %p133 = scmp.ne.s32.totalorder %s124, %s125
    %p134 = scmp.eq.s32.totalorder %s30, 0
    %p135 = por %p133, %p134
    %p136 = scmp.ne.s32.totalorder %s124, %s125
    %p137 = scmp.eq.s32.totalorder %s31, 1
    %p138 = por %p136, %p137
    %p140 = scmp.ne.s32.totalorder %s125, %s139
    %p141 = scmp.eq.s32.totalorder %s31, 0
    %p142 = por %p140, %p141
    %s144 = sadd.s32 %s143, 1
    %p147 = scmp.eq.s32.totalorder %s25, 1
    %p148 = scmp.ne.s32.totalorder %s143, %s145
    %p149 = scmp.eq.s32.totalorder %s25, 0
    %p150 = por %p148, %p149
    %p151 = scmp.ne.s32.totalorder %s143, %s145
    %p152 = scmp.eq.s32.totalorder %s30, 1
    %p153 = por %p151, %p152
    %p154 = scmp.ne.s32.totalorder %s145, %s146
    %p155 = scmp.eq.s32.totalorder %s30, 0
    %p156 = por %p154, %p155
    %p157 = scmp.ne.s32.totalorder %s145, %s146
    %p158 = scmp.eq.s32.totalorder %s31, 1
    %p159 = por %p157, %p158
    %p161 = scmp.ne.s32.totalorder %s146, %s160
    %p162 = scmp.eq.s32.totalorder %s31, 0
    %p163 = por %p161, %p162
    %s165 = sadd.s32 %s164, 1
    %p168 = scmp.eq.s32.totalorder %s25, 1
    %p169 = scmp.ne.s32.totalorder %s164, %s166
    %p170 = scmp.eq.s32.totalorder %s25, 0
    %p171 = por %p169, %p170
    %p172 = scmp.ne.s32.totalorder %s164, %s166
    %p173 = scmp.eq.s32.totalorder %s30, 1
    %p174 = por %p172, %p173
    %p175 = scmp.ne.s32.totalorder %s166, %s167
    %p176 = scmp.eq.s32.totalorder %s30, 0
    %p177 = por %p175, %p176
    %p178 = scmp.ne.s32.totalorder %s166, %s167
    %p179 = scmp.eq.s32.totalorder %s31, 1
    %p180 = por %p178, %p179
    %p182 = scmp.ne.s32.totalorder %s167, %s181
    %p183 = scmp.eq.s32.totalorder %s31, 0
    %p184 = por %p182, %p183
    %s186 = sadd.s32 %s185, 1
    %p189 = scmp.eq.s32.totalorder %s25, 1
    %p190 = scmp.ne.s32.totalorder %s185, %s187
    %p191 = scmp.eq.s32.totalorder %s25, 0
    %p192 = por %p190, %p191
    %p193 = scmp.ne.s32.totalorder %s185, %s187
    %p194 = scmp.eq.s32.totalorder %s30, 1
    %p195 = por %p193, %p194
    %p196 = scmp.ne.s32.totalorder %s187, %s188
    %p197 = scmp.eq.s32.totalorder %s30, 0
    %p198 = por %p196, %p197
    %p199 = scmp.ne.s32.totalorder %s187, %s188
    %p200 = scmp.eq.s32.totalorder %s31, 1
    %p201 = por %p199, %p200
    %p203 = scmp.ne.s32.totalorder %s188, %s202
    %p204 = scmp.eq.s32.totalorder %s31, 0
    %p205 = por %p203, %p204
    %s207 = sadd.s32 %s206, 1
    %p210 = scmp.eq.s32.totalorder %s25, 1
    %p211 = scmp.ne.s32.totalorder %s206, %s208
    %p212 = scmp.eq.s32.totalorder %s25, 0
    %p213 = por %p211, %p212
    %p214 = scmp.ne.s32.totalorder %s206, %s208
    %p215 = scmp.eq.s32.totalorder %s30, 1
    %p216 = por %p214, %p215
    %p217 = scmp.ne.s32.totalorder %s208, %s209
    %p218 = scmp.eq.s32.totalorder %s30, 0
    %p219 = por %p217, %p218
    %p220 = scmp.ne.s32.totalorder %s208, %s209
    %p221 = scmp.eq.s32.totalorder %s31, 1
    %p222 = por %p220, %p221
    %p224 = scmp.ne.s32.totalorder %s209, %s223
    %p225 = scmp.eq.s32.totalorder %s31, 0
    %p226 = por %p224, %p225
    %s228 = sadd.s32 %s227, 1
    %p231 = scmp.eq.s32.totalorder %s25, 1
    %p232 = scmp.ne.s32.totalorder %s227, %s229
    %p233 = scmp.eq.s32.totalorder %s25, 0
    %p234 = por %p232, %p233
    %p235 = scmp.ne.s32.totalorder %s227, %s229
    %p236 = scmp.eq.s32.totalorder %s30, 1
    %p237 = por %p235, %p236
    %p238 = scmp.ne.s32.totalorder %s229, %s230
    %p239 = scmp.eq.s32.totalorder %s30, 0
    %p240 = por %p238, %p239
    %p241 = scmp.ne.s32.totalorder %s229, %s230
    %p242 = scmp.eq.s32.totalorder %s31, 1
    %p243 = por %p241, %p242
    %p245 = scmp.ne.s32.totalorder %s230, %s244
    %p246 = scmp.eq.s32.totalorder %s31, 0
    %p247 = por %p245, %p246
    %s249 = sadd.s32 %s248, 1
    %p252 = scmp.eq.s32.totalorder %s25, 1
    %p253 = scmp.ne.s32.totalorder %s248, %s250
    %p254 = scmp.eq.s32.totalorder %s25, 0
    %p255 = por %p253, %p254
    %p256 = scmp.ne.s32.totalorder %s248, %s250
    %p257 = scmp.eq.s32.totalorder %s30, 1
    %p258 = por %p256, %p257
    %p259 = scmp.ne.s32.totalorder %s250, %s251
    %p260 = scmp.eq.s32.totalorder %s30, 0
    %p261 = por %p259, %p260
    %p262 = scmp.ne.s32.totalorder %s250, %s251
    %p263 = scmp.eq.s32.totalorder %s31, 1
    %p264 = por %p262, %p263
    %p266 = scmp.ne.s32.totalorder %s251, %s265
    %p267 = scmp.eq.s32.totalorder %s31, 0
    %p268 = por %p266, %p267
    %s270 = sadd.s32 %s269, 1
    %p273 = scmp.eq.s32.totalorder %s25, 1
    %p274 = scmp.ne.s32.totalorder %s269, %s271
    %p275 = scmp.eq.s32.totalorder %s25, 0
    %p276 = por %p274, %p275
    %p277 = scmp.ne.s32.totalorder %s269, %s271
    %p278 = scmp.eq.s32.totalorder %s30, 1
    %p279 = por %p277, %p278
    %p280 = scmp.ne.s32.totalorder %s271, %s272
    %p281 = scmp.eq.s32.totalorder %s30, 0
    %p282 = por %p280, %p281
    %p283 = scmp.ne.s32.totalorder %s271, %s272
    %p284 = scmp.eq.s32.totalorder %s31, 1
    %p285 = por %p283, %p284
    %p287 = scmp.ne.s32.totalorder %s272, %s286
    %p288 = scmp.eq.s32.totalorder %s31, 0
    %p289 = por %p287, %p288
    %s291 = sadd.s32 %s290, 1
    %p294 = scmp.eq.s32.totalorder %s25, 1
    %p295 = scmp.ne.s32.totalorder %s290, %s292
    %p296 = scmp.eq.s32.totalorder %s25, 0
    %p297 = por %p295, %p296
    %p298 = scmp.ne.s32.totalorder %s290, %s292
    %p299 = scmp.eq.s32.totalorder %s30, 1
    %p300 = por %p298, %p299
    %p301 = scmp.ne.s32.totalorder %s292, %s293
    %p302 = scmp.eq.s32.totalorder %s30, 0
    %p303 = por %p301, %p302
    %p304 = scmp.ne.s32.totalorder %s292, %s293
    %p305 = scmp.eq.s32.totalorder %s31, 1
    %p306 = por %p304, %p305
    %p308 = scmp.ne.s32.totalorder %s293, %s307
    %p309 = scmp.eq.s32.totalorder %s31, 0
    %p310 = por %p308, %p309
    %s312 = sadd.s32 %s311, 1
    %p315 = scmp.eq.s32.totalorder %s25, 1
    %p316 = scmp.ne.s32.totalorder %s311, %s313
    %p317 = scmp.eq.s32.totalorder %s25, 0
    %p318 = por %p316, %p317
    %p319 = scmp.ne.s32.totalorder %s311, %s313
    %p320 = scmp.eq.s32.totalorder %s30, 1
    %p321 = por %p319, %p320
    %p322 = scmp.ne.s32.totalorder %s313, %s314
    %p323 = scmp.eq.s32.totalorder %s30, 0
    %p324 = por %p322, %p323
    %p325 = scmp.ne.s32.totalorder %s313, %s314
    %p326 = scmp.eq.s32.totalorder %s31, 1
    %p327 = por %p325, %p326
    %p329 = scmp.ne.s32.totalorder %s314, %s328
    %p330 = scmp.eq.s32.totalorder %s31, 0
    %p331 = por %p329, %p330
    %s333 = sadd.s32 %s332, 1
    %p336 = scmp.eq.s32.totalorder %s25, 1
    %p337 = scmp.ne.s32.totalorder %s332, %s334
    %p338 = scmp.eq.s32.totalorder %s25, 0
    %p339 = por %p337, %p338
    %p340 = scmp.ne.s32.totalorder %s332, %s334
    %p341 = scmp.eq.s32.totalorder %s30, 1
    %p342 = por %p340, %p341
    %p343 = scmp.ne.s32.totalorder %s334, %s335
    %p344 = scmp.eq.s32.totalorder %s30, 0
    %p345 = por %p343, %p344
    %p346 = scmp.ne.s32.totalorder %s334, %s335
    %p347 = scmp.eq.s32.totalorder %s31, 1
    %p348 = por %p346, %p347
    %p350 = scmp.ne.s32.totalorder %s335, %s349
    %p351 = scmp.eq.s32.totalorder %s31, 0
    %p352 = por %p350, %p351
    %s354 = sadd.s32 %s353, 1
    %p357 = scmp.eq.s32.totalorder %s25, 1
    %p358 = scmp.ne.s32.totalorder %s353, %s355
    %p359 = scmp.eq.s32.totalorder %s25, 0
    %p360 = por %p358, %p359
    %p361 = scmp.ne.s32.totalorder %s353, %s355
    %p362 = scmp.eq.s32.totalorder %s30, 1
    %p363 = por %p361, %p362
    %p364 = scmp.ne.s32.totalorder %s355, %s356
    %p365 = scmp.eq.s32.totalorder %s30, 0
    %p366 = por %p364, %p365
    %p367 = scmp.ne.s32.totalorder %s355, %s356
    %p368 = scmp.eq.s32.totalorder %s31, 1
    %p369 = por %p367, %p368
    %p371 = scmp.ne.s32.totalorder %s356, %s370
    %p372 = scmp.eq.s32.totalorder %s31, 0
    %p373 = por %p371, %p372
    %s375 = sadd.s32 %s374, 1
    %p378 = scmp.eq.s32.totalorder %s25, 1
    %p379 = scmp.ne.s32.totalorder %s374, %s376
    %p380 = scmp.eq.s32.totalorder %s25, 0
    %p381 = por %p379, %p380
    %p382 = scmp.ne.s32.totalorder %s374, %s376
    %p383 = scmp.eq.s32.totalorder %s30, 1
    %p384 = por %p382, %p383
    %p385 = scmp.ne.s32.totalorder %s376, %s377
    %p386 = scmp.eq.s32.totalorder %s30, 0
    %p387 = por %p385, %p386
    %p388 = scmp.ne.s32.totalorder %s376, %s377
    %p389 = scmp.eq.s32.totalorder %s31, 1
    %p390 = por %p388, %p389
    %p392 = scmp.ne.s32.totalorder %s377, %s391
    %p393 = scmp.eq.s32.totalorder %s31, 0
    %p394 = por %p392, %p393
    %s396 = sadd.s32 %s395, 1
    %p399 = scmp.eq.s32.totalorder %s25, 1
    %p400 = scmp.ne.s32.totalorder %s395, %s397
    %p401 = scmp.eq.s32.totalorder %s25, 0
    %p402 = por %p400, %p401
    %p403 = scmp.ne.s32.totalorder %s395, %s397
    %p404 = scmp.eq.s32.totalorder %s30, 1
    %p405 = por %p403, %p404
    %p406 = scmp.ne.s32.totalorder %s397, %s398
    %p407 = scmp.eq.s32.totalorder %s30, 0
    %p408 = por %p406, %p407
    %p409 = scmp.ne.s32.totalorder %s397, %s398
    %p410 = scmp.eq.s32.totalorder %s31, 1
    %p411 = por %p409, %p410
    %p413 = scmp.ne.s32.totalorder %s398, %s412
    %p414 = scmp.eq.s32.totalorder %s31, 0
    %p415 = por %p413, %p414
    %s417 = sadd.s32 %s416, 1
    %p420 = scmp.eq.s32.totalorder %s25, 1
    %p421 = scmp.ne.s32.totalorder %s416, %s418
    %p422 = scmp.eq.s32.totalorder %s25, 0
    %p423 = por %p421, %p422
    %p424 = scmp.ne.s32.totalorder %s416, %s418
    %p425 = scmp.eq.s32.totalorder %s30, 1
    %p426 = por %p424, %p425
    %p427 = scmp.ne.s32.totalorder %s418, %s419
    %p428 = scmp.eq.s32.totalorder %s30, 0
    %p429 = por %p427, %p428
    %p430 = scmp.ne.s32.totalorder %s418, %s419
    %p431 = scmp.eq.s32.totalorder %s31, 1
    %p432 = por %p430, %p431
    %p434 = scmp.ne.s32.totalorder %s419, %s433
    %p435 = scmp.eq.s32.totalorder %s31, 0
    %p436 = por %p434, %p435
    %s437 = ssub.s32 %s25, %s32
    %p438 = scmp.eq.s32.totalorder %s437, 0
    %s440 = sadd.s32 %s439, 1
    %s441 = scalar_select %p438, %s439, %s440
    %p444 = pneg %p438
    %p445 = scmp.eq.s32.totalorder %s25, 1
    %p446 = por %p444, %p445
    %p447 = scmp.ne.s32.totalorder %s439, %s442
    %p448 = scmp.eq.s32.totalorder %s25, 0
    %p449 = por %p447, %p448
    %p450 = scmp.ne.s32.totalorder %s439, %s442
    %p451 = scmp.eq.s32.totalorder %s30, 1
    %p452 = por %p450, %p451
    %p453 = scmp.ne.s32.totalorder %s442, %s443
    %p454 = scmp.eq.s32.totalorder %s30, 0
    %p455 = por %p453, %p454
    %p456 = scmp.ne.s32.totalorder %s442, %s443
    %p457 = scmp.eq.s32.totalorder %s31, 1
    %p458 = por %p456, %p457
    %p460 = scmp.ne.s32.totalorder %s443, %s459
    %p461 = scmp.eq.s32.totalorder %s31, 0
    %p462 = por %p460, %p461
    %p463 = scmp.le.s32.totalorder 1, %s25
    %p464 = scmp.lt.s32.totalorder %s25, 3
    %p465 = pnand %p463, %p464
    %p466 = pneg %p465
    // Predicated region
    $region9: #{unet_forward.1} parent=5 // pred_check
      _
    $region10: #{unet_forward.1} parent=5 // pred_check_branch
      %468 = sbr.rel (%p465) target = $region12
    $region11: #{unet_forward.1} parent=5 // pred_region
      %s469 = ssub.s32 %s25, 1
      // Predicated region
      $region13: #{unet_forward.1} parent=11 // pred_check
        %p470 = pneg %p72
      $region14: #{unet_forward.1} parent=11 // pred_check_branch
        %472 = sbr.rel (%p470) target = $region16
      $region15: #{unet_forward.1} parent=11 // pred_region
        _
      $region16: #{unet_forward.1} parent=11 // pred_fallthru
        _
      // Predicated region
      $region17: #{unet_forward.1} parent=11 // pred_check
        %p473 = pneg %p93
      $region18: #{unet_forward.1} parent=11 // pred_check_branch
        %475 = sbr.rel (%p473) target = $region20
      $region19: #{unet_forward.1} parent=11 // pred_region
        _
      $region20: #{unet_forward.1} parent=11 // pred_fallthru
        _
      // Predicated region
      $region21: #{unet_forward.1} parent=11 // pred_check
        %p476 = pneg %p114
      $region22: #{unet_forward.1} parent=11 // pred_check_branch
        %478 = sbr.rel (%p476) target = $region24
      $region23: #{unet_forward.1} parent=11 // pred_region
        _
      $region24: #{unet_forward.1} parent=11 // pred_fallthru
        _
      // Predicated region
      $region25: #{unet_forward.1} parent=11 // pred_check
        %p479 = pneg %p135
      $region26: #{unet_forward.1} parent=11 // pred_check_branch
        %481 = sbr.rel (%p479) target = $region28
      $region27: #{unet_forward.1} parent=11 // pred_region
        _
      $region28: #{unet_forward.1} parent=11 // pred_fallthru
        _
      // Predicated region
      $region29: #{unet_forward.1} parent=11 // pred_check
        %p482 = pneg %p156
      $region30: #{unet_forward.1} parent=11 // pred_check_branch
        %484 = sbr.rel (%p482) target = $region32
      $region31: #{unet_forward.1} parent=11 // pred_region
        _
      $region32: #{unet_forward.1} parent=11 // pred_fallthru
        _
      // Predicated region
      $region33: #{unet_forward.1} parent=11 // pred_check
        %p485 = pneg %p177
      $region34: #{unet_forward.1} parent=11 // pred_check_branch
        %487 = sbr.rel (%p485) target = $region36
      $region35: #{unet_forward.1} parent=11 // pred_region
        _
      $region36: #{unet_forward.1} parent=11 // pred_fallthru
        _
      // Predicated region
      $region37: #{unet_forward.1} parent=11 // pred_check
        %p488 = pneg %p198
      $region38: #{unet_forward.1} parent=11 // pred_check_branch
        %490 = sbr.rel (%p488) target = $region40
      $region39: #{unet_forward.1} parent=11 // pred_region
        _
      $region40: #{unet_forward.1} parent=11 // pred_fallthru
        _
      // Predicated region
      $region41: #{unet_forward.1} parent=11 // pred_check
        %p491 = pneg %p219
      $region42: #{unet_forward.1} parent=11 // pred_check_branch
        %493 = sbr.rel (%p491) target = $region44
      $region43: #{unet_forward.1} parent=11 // pred_region
        _
      $region44: #{unet_forward.1} parent=11 // pred_fallthru
        _
      // Predicated region
      $region45: #{unet_forward.1} parent=11 // pred_check
        %p494 = pneg %p240
      $region46: #{unet_forward.1} parent=11 // pred_check_branch
        %496 = sbr.rel (%p494) target = $region48
      $region47: #{unet_forward.1} parent=11 // pred_region
        _
      $region48: #{unet_forward.1} parent=11 // pred_fallthru
        _
      // Predicated region
      $region49: #{unet_forward.1} parent=11 // pred_check
        %p497 = pneg %p261
      $region50: #{unet_forward.1} parent=11 // pred_check_branch
        %499 = sbr.rel (%p497) target = $region52
      $region51: #{unet_forward.1} parent=11 // pred_region
        _
      $region52: #{unet_forward.1} parent=11 // pred_fallthru
        _
      // Predicated region
      $region53: #{unet_forward.1} parent=11 // pred_check
        %p500 = pneg %p282
      $region54: #{unet_forward.1} parent=11 // pred_check_branch
        %502 = sbr.rel (%p500) target = $region56
      $region55: #{unet_forward.1} parent=11 // pred_region
        _
      $region56: #{unet_forward.1} parent=11 // pred_fallthru
        _
      // Predicated region
      $region57: #{unet_forward.1} parent=11 // pred_check
        %p503 = pneg %p303
      $region58: #{unet_forward.1} parent=11 // pred_check_branch
        %505 = sbr.rel (%p503) target = $region60
      $region59: #{unet_forward.1} parent=11 // pred_region
        _
      $region60: #{unet_forward.1} parent=11 // pred_fallthru
        _
      // Predicated region
      $region61: #{unet_forward.1} parent=11 // pred_check
        %p506 = pneg %p324
      $region62: #{unet_forward.1} parent=11 // pred_check_branch
        %508 = sbr.rel (%p506) target = $region64
      $region63: #{unet_forward.1} parent=11 // pred_region
        _
      $region64: #{unet_forward.1} parent=11 // pred_fallthru
        _
      // Predicated region
      $region65: #{unet_forward.1} parent=11 // pred_check
        %p509 = pneg %p345
      $region66: #{unet_forward.1} parent=11 // pred_check_branch
        %511 = sbr.rel (%p509) target = $region68
      $region67: #{unet_forward.1} parent=11 // pred_region
        _
      $region68: #{unet_forward.1} parent=11 // pred_fallthru
        _
      // Predicated region
      $region69: #{unet_forward.1} parent=11 // pred_check
        %p512 = pneg %p366
      $region70: #{unet_forward.1} parent=11 // pred_check_branch
        %514 = sbr.rel (%p512) target = $region72
      $region71: #{unet_forward.1} parent=11 // pred_region
        _
      $region72: #{unet_forward.1} parent=11 // pred_fallthru
        _
      // Predicated region
      $region73: #{unet_forward.1} parent=11 // pred_check
        %p515 = pneg %p387
      $region74: #{unet_forward.1} parent=11 // pred_check_branch
        %517 = sbr.rel (%p515) target = $region76
      $region75: #{unet_forward.1} parent=11 // pred_region
        _
      $region76: #{unet_forward.1} parent=11 // pred_fallthru
        _
      // Predicated region
      $region77: #{unet_forward.1} parent=11 // pred_check
        %p518 = pneg %p408
      $region78: #{unet_forward.1} parent=11 // pred_check_branch
        %520 = sbr.rel (%p518) target = $region80
      $region79: #{unet_forward.1} parent=11 // pred_region
        _
      $region80: #{unet_forward.1} parent=11 // pred_fallthru
        _
      // Predicated region
      $region81: #{unet_forward.1} parent=11 // pred_check
        %p521 = pneg %p429
      $region82: #{unet_forward.1} parent=11 // pred_check_branch
        %523 = sbr.rel (%p521) target = $region84
      $region83: #{unet_forward.1} parent=11 // pred_region
        _
      $region84: #{unet_forward.1} parent=11 // pred_fallthru
        _
    $region12: #{unet_forward.1} parent=5 // pred_fallthru
      _
    %p524 = scmp.lt.s32.totalorder %s25, 2
    // Predicated region
    $region85: #{unet_forward.1} parent=5 // pred_check
      %p525 = pneg %p524
    $region86: #{unet_forward.1} parent=5 // pred_check_branch
      %527 = sbr.rel (%p525) target = $region88
    $region87: #{unet_forward.1} parent=5 // pred_region
      // Predicated region
      $region89: #{unet_forward.1} parent=87 // pred_check
        %p528 = pneg %p45
      $region90: #{unet_forward.1} parent=87 // pred_check_branch
        %530 = sbr.rel (%p528) target = $region92
      $region91: #{unet_forward.1} parent=87 // pred_region
        %p531 = scmp.lt.s32.totalorder %s25, 1
        %s532 = scalar_select %p531, %s25, 1
        %s533 = smul.addr %s532, 41
        %s534 = smul.addr %s533, 8
        %s535 = scalar_lea.vmem %s0, %s534
      $region92: #{unet_forward.1} parent=87 // pred_fallthru
        _
    $region88: #{unet_forward.1} parent=5 // pred_fallthru
      _
    %p536 = scmp.le.s32.totalorder 1, %s25
    %p537 = scmp.lt.s32.totalorder %s25, 3
    %p538 = pnand %p536, %p537
    %p539 = pneg %p538
    // Predicated region
    $region93: #{unet_forward.1} parent=5 // pred_check
      _
    $region94: #{unet_forward.1} parent=5 // pred_check_branch
      %541 = sbr.rel (%p538) target = $region96
    $region95: #{unet_forward.1} parent=5 // pred_region
      %s542 = ssub.s32 %s25, 1
      %p543 = scmp.lt.s32.totalorder %s30, 1
      %s544 = scalar_select %p543, %s30, 1
      %s545 = smul.addr %s544, 41
      %s546 = smul.addr %s545, 8
      %s547 = scalar_lea.vmem %s0, %s546
      %p548 = pneg %p51
      %p549 = pneg %p48
      %p550 = pneg %p72
      %p551 = pneg %p69
      %p552 = pneg %p93
      %p553 = pneg %p90
      %p554 = pneg %p114
      %p555 = pneg %p111
      %p556 = pneg %p135
      %p557 = pneg %p132
      %p558 = pneg %p156
      %p559 = pneg %p153
      %p560 = pneg %p177
      %p561 = pneg %p174
      %p562 = pneg %p198
      %p563 = pneg %p195
      %p564 = pneg %p219
      %p565 = pneg %p216
      %p566 = pneg %p240
      %p567 = pneg %p237
      %p568 = pneg %p261
      %p569 = pneg %p258
      %p570 = pneg %p282
      %p571 = pneg %p279
      %p572 = pneg %p303
      %p573 = pneg %p300
      %p574 = pneg %p324
      %p575 = pneg %p321
      %p576 = pneg %p345
      %p577 = pneg %p342
      %p578 = pneg %p366
      %p579 = pneg %p363
      %p580 = pneg %p387
      %p581 = pneg %p384
      %p582 = pneg %p408
      %p583 = pneg %p405
      %p584 = pneg %p429
      %p585 = pneg %p426
      %p586 = pneg %p455
      %p587 = pneg %p452
      %p588 = scmp.lt.s32.totalorder %s30, 1
      %s589 = scalar_select %p588, %s30, 1
      %s590 = smul.addr %s589, 36
      %s591 = smul.addr %s590, 8
      %s592 = scalar_lea.vmem %s19, %s591
      %p593 = scmp.lt.s32.totalorder %s30, 1
      %s594 = scalar_select %p593, %s30, 1
      %s595 = smul.addr %s594, 41
      %s596 = smul.addr %s595, 8
      %s597 = scalar_lea.vmem %s0, %s596
      %p598 = scmp.lt.s32.totalorder %s30, 1
      %s599 = scalar_select %p598, %s30, 1
      %s600 = smul.addr %s599, 36
      %s601 = smul.addr %s600, 8
      %s602 = scalar_lea.vmem %s19, %s601
      %v604 = vld [vmem:[%s597] sm:$0xff]
      %v605 = vld [vmem:[%s597 + $0x8] sm:$0xff]
      %v606 = vld [vmem:[%s597 + $0x10] sm:$0xff]
      %v607 = vld [vmem:[%s597 + $0x18] sm:$0xff]
      %v608 = vld [vmem:[%s597 + $0x20] sm:$0xff]
      %v609 = vld [vmem:[%s597 + $0x28] sm:$0xff]
      %v610 = vld [vmem:[%s597 + $0x30] sm:$0xff]
      %v611 = vld [vmem:[%s597 + $0x38] sm:$0xff]
      %v612 = vld [vmem:[%s597 + $0x40] sm:$0xff]
      %v613 = vld [vmem:[%s597 + $0x48] sm:$0xff]
      %v614 = vld [vmem:[%s597 + $0x50] sm:$0xff]
      %v615 = vld [vmem:[%s597 + $0x58] sm:$0xff]
      %v616 = vld [vmem:[%s597 + $0x60] sm:$0xff]
      %v617 = vld [vmem:[%s597 + $0x68] sm:$0xff]
      %v618 = vld [vmem:[%s597 + $0x70] sm:$0xff]
      %v619 = vld [vmem:[%s597 + $0x78] sm:$0xff]
      %v620 = vld [vmem:[%s597 + $0x80] sm:$0xff]
      %v621 = vld [vmem:[%s597 + $0x88] sm:$0xff]
      %v622 = vld [vmem:[%s597 + $0x90] sm:$0xff]
      %v623 = vld [vmem:[%s597 + $0x98] sm:$0xff]
      %v624 = vld [vmem:[%s597 + $0xa0] sm:$0xff]
      %v625 = vld [vmem:[%s597 + $0xa8] sm:$0xff]
      %v626 = vld [vmem:[%s597 + $0xb0] sm:$0xff]
      %v627 = vld [vmem:[%s597 + $0xb8] sm:$0xff]
      %v628 = vld [vmem:[%s597 + $0xc0] sm:$0xff]
      %v629 = vld [vmem:[%s597 + $0xc8] sm:$0xff]
      %v630 = vld [vmem:[%s597 + $0xd0] sm:$0xff]
      %v631 = vld [vmem:[%s597 + $0xd8] sm:$0xff]
      %v632 = vld [vmem:[%s597 + $0xe0] sm:$0xff]
      %v633 = vld [vmem:[%s597 + $0xe8] sm:$0xff]
      %v634 = vld [vmem:[%s597 + $0xf0] sm:$0xff]
      %v635 = vld [vmem:[%s597 + $0xf8] sm:$0xff]
      %v636 = vld [vmem:[%s597 + $0x100] sm:$0xff]
      %v637 = vld [vmem:[%s597 + $0x108] sm:$0xff]
      %v638 = vld [vmem:[%s597 + $0x110] sm:$0xff]
      %v639 = vld [vmem:[%s597 + $0x118] sm:$0xff]
      %v640 = vpack.c.bf16 %v605, %v604
      %v641 = vpack.c.bf16 %v607, %v606
      %v642 = vpack.c.bf16 %v609, %v608
      %v643 = vpack.c.bf16 %v611, %v610
      %v644 = vpack.c.bf16 %v613, %v612
      %v645 = vpack.c.bf16 %v615, %v614
      %v646 = vpack.c.bf16 %v617, %v616
      %v647 = vpack.c.bf16 %v619, %v618
      %v648 = vpack.c.bf16 %v621, %v620
      %v649 = vpack.c.bf16 %v623, %v622
      %v650 = vpack.c.bf16 %v625, %v624
      %v651 = vpack.c.bf16 %v627, %v626
      %v652 = vpack.c.bf16 %v629, %v628
      %v653 = vpack.c.bf16 %v631, %v630
      %v654 = vpack.c.bf16 %v633, %v632
      %v655 = vpack.c.bf16 %v635, %v634
      %v656 = vpack.c.bf16 %v637, %v636
      %v657 = vpack.c.bf16 %v639, %v638
      %v658 = vld [vmem:[%s1] sm:$0x3]
      %v659 = vld [vmem:[%s597 + $0x1] sm:$0xff]
      %v660 = vld [vmem:[%s597 + $0x9] sm:$0xff]
      %v661 = vld [vmem:[%s597 + $0x11] sm:$0xff]
      %v662 = vld [vmem:[%s597 + $0x19] sm:$0xff]
      %v663 = vld [vmem:[%s597 + $0x21] sm:$0xff]
      %v664 = vld [vmem:[%s597 + $0x29] sm:$0xff]
      %v665 = vld [vmem:[%s597 + $0x31] sm:$0xff]
      %v666 = vld [vmem:[%s597 + $0x39] sm:$0xff]
      %v667 = vld [vmem:[%s597 + $0x41] sm:$0xff]
      %v668 = vld [vmem:[%s597 + $0x49] sm:$0xff]
      %v669 = vld [vmem:[%s597 + $0x51] sm:$0xff]
      %v670 = vld [vmem:[%s597 + $0x59] sm:$0xff]
      %v671 = vld [vmem:[%s597 + $0x61] sm:$0xff]
      %v672 = vld [vmem:[%s597 + $0x69] sm:$0xff]
      %v673 = vld [vmem:[%s597 + $0x71] sm:$0xff]
      %v674 = vld [vmem:[%s597 + $0x79] sm:$0xff]
      %v675 = vld [vmem:[%s597 + $0x81] sm:$0xff]
      %v676 = vld [vmem:[%s597 + $0x89] sm:$0xff]
      %v677 = vld [vmem:[%s597 + $0x91] sm:$0xff]
      %v678 = vld [vmem:[%s597 + $0x99] sm:$0xff]
      %v679 = vld [vmem:[%s597 + $0xa1] sm:$0xff]
      %v680 = vld [vmem:[%s597 + $0xa9] sm:$0xff]
      %v681 = vld [vmem:[%s597 + $0xb1] sm:$0xff]
      %v682 = vld [vmem:[%s597 + $0xb9] sm:$0xff]
      %v683 = vld [vmem:[%s597 + $0xc1] sm:$0xff]
      %v684 = vld [vmem:[%s597 + $0xc9] sm:$0xff]
      %v685 = vld [vmem:[%s597 + $0xd1] sm:$0xff]
      %v686 = vld [vmem:[%s597 + $0xd9] sm:$0xff]
      %v687 = vld [vmem:[%s597 + $0xe1] sm:$0xff]
      %v688 = vld [vmem:[%s597 + $0xe9] sm:$0xff]
      %v689 = vld [vmem:[%s597 + $0xf1] sm:$0xff]
      %v690 = vld [vmem:[%s597 + $0xf9] sm:$0xff]
      %v691 = vld [vmem:[%s597 + $0x101] sm:$0xff]
      %v692 = vld [vmem:[%s597 + $0x109] sm:$0xff]
      %v693 = vld [vmem:[%s597 + $0x111] sm:$0xff]
      %v694 = vld [vmem:[%s597 + $0x119] sm:$0xff]
      %v695 = vpack.c.bf16 %v660, %v659
      %v696 = vpack.c.bf16 %v662, %v661
      %v697 = vpack.c.bf16 %v664, %v663
      %v698 = vpack.c.bf16 %v666, %v665
      %v699 = vpack.c.bf16 %v668, %v667
      %v700 = vpack.c.bf16 %v670, %v669
      %v701 = vpack.c.bf16 %v672, %v671
      %v702 = vpack.c.bf16 %v674, %v673
      %v703 = vpack.c.bf16 %v676, %v675
      %v704 = vpack.c.bf16 %v678, %v677
      %v705 = vpack.c.bf16 %v680, %v679
      %v706 = vpack.c.bf16 %v682, %v681
      %v707 = vpack.c.bf16 %v684, %v683
      %v708 = vpack.c.bf16 %v686, %v685
      %v709 = vpack.c.bf16 %v688, %v687
      %v710 = vpack.c.bf16 %v690, %v689
      %v711 = vpack.c.bf16 %v692, %v691
      %v712 = vpack.c.bf16 %v694, %v693
      %s713 = scalar_lea.vmem %s1, 2
      %v714 = vld [vmem:[%s713] sm:$0x3]
      %vm715 = vcmask 23552
      %v717 = vsel %vm715, %v695, 0
      %v720 = vsel %vm715, %v696, 0
      %v723 = vsel %vm715, %v697, 0
      %v726 = vsel %vm715, %v698, 0
      %v729 = vsel %vm715, %v699, 0
      %v732 = vsel %vm715, %v700, 0
      %v735 = vsel %vm715, %v701, 0
      %v738 = vsel %vm715, %v702, 0
      %v741 = vsel %vm715, %v703, 0
      %v744 = vsel %vm715, %v704, 0
      %v747 = vsel %vm715, %v705, 0
      %v750 = vsel %vm715, %v706, 0
      %v753 = vsel %vm715, %v707, 0
      %v756 = vsel %vm715, %v708, 0
      %v759 = vsel %vm715, %v709, 0
      %v762 = vsel %vm715, %v710, 0
      %v765 = vsel %vm715, %v711, 0
      %v768 = vsel %vm715, %v712, 0
      %vm770 = vcmask 1040384
      %vm771 = vcmask 1041408
      %v772 = vsel %vm770, 4294967295, 65535
      %v773 = vsel %vm771, %v772, 0
      %v775 = vand.u32 %v714, %v773
      %777 = vmatpush.bf16.msra.mxu0 0
      %778 = vmatpush.bf16.msra.mxu0 0
      %779 = vmatpush.bf16.msra.mxu0 0
      %780 = vmatpush.bf16.msra.mxu0 0
      %781 = vmatpush.bf16.msra.mxu0 0
      %782 = vmatpush.bf16.msra.mxu0 0
      %783 = vmatpush.bf16.msra.mxu0 0
      %784 = vmatpush.bf16.msra.mxu0 %v775
      %785 = vmatmul.bf16.gmra.mxu0 %v717
      %v786 = vpop.f32.mrf.mxu0
      %v787 = vadd.f32 0.0, %v786
      %v788 = vpop.f32.mrf.mxu0
      %v789 = vadd.f32 0.0, %v788
      %790 = vmatmul.bf16.gmra.mxu0 %v720
      %v791 = vpop.f32.mrf.mxu0
      %v792 = vadd.f32 0.0, %v791
      %v793 = vpop.f32.mrf.mxu0
      %v794 = vadd.f32 0.0, %v793
      %795 = vmatmul.bf16.gmra.mxu0 %v723
      %v796 = vpop.f32.mrf.mxu0
      %v797 = vadd.f32 0.0, %v796
      %v798 = vpop.f32.mrf.mxu0
      %v799 = vadd.f32 0.0, %v798
      %800 = vmatmul.bf16.gmra.mxu0 %v726
      %v801 = vpop.f32.mrf.mxu0
      %v802 = vadd.f32 0.0, %v801
      %v803 = vpop.f32.mrf.mxu0
      %v804 = vadd.f32 0.0, %v803
      %805 = vmatmul.bf16.gmra.mxu0 %v729
      %v806 = vpop.f32.mrf.mxu0
      %v807 = vadd.f32 0.0, %v806
      %v808 = vpop.f32.mrf.mxu0
      %v809 = vadd.f32 0.0, %v808
      %810 = vmatmul.bf16.gmra.mxu0 %v732
      %v811 = vpop.f32.mrf.mxu0
      %v812 = vadd.f32 0.0, %v811
      %v813 = vpop.f32.mrf.mxu0
      %v814 = vadd.f32 0.0, %v813
      %815 = vmatmul.bf16.gmra.mxu0 %v735
      %v816 = vpop.f32.mrf.mxu0
      %v817 = vadd.f32 0.0, %v816
      %v818 = vpop.f32.mrf.mxu0
      %v819 = vadd.f32 0.0, %v818
      %820 = vmatmul.bf16.gmra.mxu0 %v738
      %v821 = vpop.f32.mrf.mxu0
      %v822 = vadd.f32 0.0, %v821
      %v823 = vpop.f32.mrf.mxu0
      %v824 = vadd.f32 0.0, %v823
      %825 = vmatmul.bf16.gmra.mxu0 %v741
      %v826 = vpop.f32.mrf.mxu0
      %v827 = vadd.f32 0.0, %v826
      %v828 = vpop.f32.mrf.mxu0
      %v829 = vadd.f32 0.0, %v828
      %830 = vmatmul.bf16.gmra.mxu0 %v744
      %v831 = vpop.f32.mrf.mxu0
      %v832 = vadd.f32 0.0, %v831
      %v833 = vpop.f32.mrf.mxu0
      %v834 = vadd.f32 0.0, %v833
      %835 = vmatmul.bf16.gmra.mxu0 %v747
      %v836 = vpop.f32.mrf.mxu0
      %v837 = vadd.f32 0.0, %v836
      %v838 = vpop.f32.mrf.mxu0
      %v839 = vadd.f32 0.0, %v838
      %840 = vmatmul.bf16.gmra.mxu0 %v750
      %v841 = vpop.f32.mrf.mxu0
      %v842 = vadd.f32 0.0, %v841
      %v843 = vpop.f32.mrf.mxu0
      %v844 = vadd.f32 0.0, %v843
      %845 = vmatmul.bf16.gmra.mxu0 %v753
      %v846 = vpop.f32.mrf.mxu0
      %v847 = vadd.f32 0.0, %v846
      %v848 = vpop.f32.mrf.mxu0
      %v849 = vadd.f32 0.0, %v848
      %850 = vmatmul.bf16.gmra.mxu0 %v756
      %v851 = vpop.f32.mrf.mxu0
      %v852 = vadd.f32 0.0, %v851
      %v853 = vpop.f32.mrf.mxu0
      %v854 = vadd.f32 0.0, %v853
      %855 = vmatmul.bf16.gmra.mxu0 %v759
      %v856 = vpop.f32.mrf.mxu0
      %v857 = vadd.f32 0.0, %v856
      %v858 = vpop.f32.mrf.mxu0
      %v859 = vadd.f32 0.0, %v858
      %860 = vmatmul.bf16.gmra.mxu0 %v762
      %v861 = vpop.f32.mrf.mxu0
      %v862 = vadd.f32 0.0, %v861
      %v863 = vpop.f32.mrf.mxu0
      %v864 = vadd.f32 0.0, %v863
      %865 = vmatmul.bf16.gmra.mxu0 %v765
      %v866 = vpop.f32.mrf.mxu0
      %v867 = vadd.f32 0.0, %v866
      %v868 = vpop.f32.mrf.mxu0
      %v869 = vadd.f32 0.0, %v868
      %870 = vmatmul.bf16.gmra.mxu0 %v768
      %v871 = vpop.f32.mrf.mxu0
      %v872 = vadd.f32 0.0, %v871
      %v873 = vpop.f32.mrf.mxu0
      %v874 = vadd.f32 0.0, %v873
      %875 = vdwg.mxu0
      %v877 = vsel %vm715, %v640, 0
      %v880 = vsel %vm715, %v641, 0
      %v883 = vsel %vm715, %v642, 0
      %v886 = vsel %vm715, %v643, 0
      %v889 = vsel %vm715, %v644, 0
      %v892 = vsel %vm715, %v645, 0
      %v895 = vsel %vm715, %v646, 0
      %v898 = vsel %vm715, %v647, 0
      %v901 = vsel %vm715, %v648, 0
      %v904 = vsel %vm715, %v649, 0
      %v907 = vsel %vm715, %v650, 0
      %v910 = vsel %vm715, %v651, 0
      %v913 = vsel %vm715, %v652, 0
      %v916 = vsel %vm715, %v653, 0
      %v919 = vsel %vm715, %v654, 0
      %v922 = vsel %vm715, %v655, 0
      %v925 = vsel %vm715, %v656, 0
      %v928 = vsel %vm715, %v657, 0
      %v931 = vand.u32 %v658, %v773
      %933 = vmatpush.bf16.msra.mxu0 0
      %934 = vmatpush.bf16.msra.mxu0 0
      %935 = vmatpush.bf16.msra.mxu0 0
      %936 = vmatpush.bf16.msra.mxu0 0
      %937 = vmatpush.bf16.msra.mxu0 0
      %938 = vmatpush.bf16.msra.mxu0 0
      %939 = vmatpush.bf16.msra.mxu0 0
      %940 = vmatpush.bf16.msra.mxu0 %v931
      %941 = vmatmul.bf16.gmra.mxu0 %v877
      %v942 = vpop.f32.mrf.mxu0
      %v943 = vadd.f32 %v787, %v942
      %v944 = vpop.f32.mrf.mxu0
      %v945 = vadd.f32 %v789, %v944
      %946 = vmatmul.bf16.gmra.mxu0 %v880
      %v947 = vpop.f32.mrf.mxu0
      %v948 = vadd.f32 %v792, %v947
      %v949 = vpop.f32.mrf.mxu0
      %v950 = vadd.f32 %v794, %v949
      %951 = vmatmul.bf16.gmra.mxu0 %v883
      %v952 = vpop.f32.mrf.mxu0
      %v953 = vadd.f32 %v797, %v952
      %v954 = vpop.f32.mrf.mxu0
      %v955 = vadd.f32 %v799, %v954
      %956 = vmatmul.bf16.gmra.mxu0 %v886
      %v957 = vpop.f32.mrf.mxu0
      %v958 = vadd.f32 %v802, %v957
      %v959 = vpop.f32.mrf.mxu0
      %v960 = vadd.f32 %v804, %v959
      %961 = vmatmul.bf16.gmra.mxu0 %v889
      %v962 = vpop.f32.mrf.mxu0
      %v963 = vadd.f32 %v807, %v962
      %v964 = vpop.f32.mrf.mxu0
      %v965 = vadd.f32 %v809, %v964
      %966 = vmatmul.bf16.gmra.mxu0 %v892
      %v967 = vpop.f32.mrf.mxu0
      %v968 = vadd.f32 %v812, %v967
      %v969 = vpop.f32.mrf.mxu0
      %v970 = vadd.f32 %v814, %v969
      %971 = vmatmul.bf16.gmra.mxu0 %v895
      %v972 = vpop.f32.mrf.mxu0
      %v973 = vadd.f32 %v817, %v972
      %v974 = vpop.f32.mrf.mxu0
      %v975 = vadd.f32 %v819, %v974
      %976 = vmatmul.bf16.gmra.mxu0 %v898
      %v977 = vpop.f32.mrf.mxu0
      %v978 = vadd.f32 %v822, %v977
      %v979 = vpop.f32.mrf.mxu0
      %v980 = vadd.f32 %v824, %v979
      %981 = vmatmul.bf16.gmra.mxu0 %v901
      %v982 = vpop.f32.mrf.mxu0
      %v983 = vadd.f32 %v827, %v982
      %v984 = vpop.f32.mrf.mxu0
      %v985 = vadd.f32 %v829, %v984
      %986 = vmatmul.bf16.gmra.mxu0 %v904
      %v987 = vpop.f32.mrf.mxu0
      %v988 = vadd.f32 %v832, %v987
      %v989 = vpop.f32.mrf.mxu0
      %v990 = vadd.f32 %v834, %v989
      %991 = vmatmul.bf16.gmra.mxu0 %v907
      %v992 = vpop.f32.mrf.mxu0
      %v993 = vadd.f32 %v837, %v992
      %v994 = vpop.f32.mrf.mxu0
      %v995 = vadd.f32 %v839, %v994
      %996 = vmatmul.bf16.gmra.mxu0 %v910
      %v997 = vpop.f32.mrf.mxu0
      %v998 = vadd.f32 %v842, %v997
      %v999 = vpop.f32.mrf.mxu0
      %v1000 = vadd.f32 %v844, %v999
      %1001 = vmatmul.bf16.gmra.mxu0 %v913
      %v1002 = vpop.f32.mrf.mxu0
      %v1003 = vadd.f32 %v847, %v1002
      %v1004 = vpop.f32.mrf.mxu0
      %v1005 = vadd.f32 %v849, %v1004
      %1006 = vmatmul.bf16.gmra.mxu0 %v916
      %v1007 = vpop.f32.mrf.mxu0
      %v1008 = vadd.f32 %v852, %v1007
      %v1009 = vpop.f32.mrf.mxu0
      %v1010 = vadd.f32 %v854, %v1009
      %1011 = vmatmul.bf16.gmra.mxu0 %v919
      %v1012 = vpop.f32.mrf.mxu0
      %v1013 = vadd.f32 %v857, %v1012
      %v1014 = vpop.f32.mrf.mxu0
      %v1015 = vadd.f32 %v859, %v1014
      %1016 = vmatmul.bf16.gmra.mxu0 %v922
      %v1017 = vpop.f32.mrf.mxu0
      %v1018 = vadd.f32 %v862, %v1017
      %v1019 = vpop.f32.mrf.mxu0
      %v1020 = vadd.f32 %v864, %v1019
      %1021 = vmatmul.bf16.gmra.mxu0 %v925
      %v1022 = vpop.f32.mrf.mxu0
      %v1023 = vadd.f32 %v867, %v1022
      %v1024 = vpop.f32.mrf.mxu0
      %v1025 = vadd.f32 %v869, %v1024
      %1026 = vmatmul.bf16.gmra.mxu0 %v928
      %v1027 = vpop.f32.mrf.mxu0
      %v1028 = vadd.f32 %v872, %v1027
      %v1029 = vpop.f32.mrf.mxu0
      %v1030 = vadd.f32 %v874, %v1029
      %1031 = vdwg.mxu0
      %v1032 = vld [vmem:[%s597 + $0x2] sm:$0xff]
      %v1033 = vld [vmem:[%s597 + $0xa] sm:$0xff]
      %v1034 = vld [vmem:[%s597 + $0x12] sm:$0xff]
      %v1035 = vld [vmem:[%s597 + $0x1a] sm:$0xff]
      %v1036 = vld [vmem:[%s597 + $0x22] sm:$0xff]
      %v1037 = vld [vmem:[%s597 + $0x2a] sm:$0xff]
      %v1038 = vld [vmem:[%s597 + $0x32] sm:$0xff]
      %v1039 = vld [vmem:[%s597 + $0x3a] sm:$0xff]
      %v1040 = vld [vmem:[%s597 + $0x42] sm:$0xff]
      %v1041 = vld [vmem:[%s597 + $0x4a] sm:$0xff]
      %v1042 = vld [vmem:[%s597 + $0x52] sm:$0xff]
      %v1043 = vld [vmem:[%s597 + $0x5a] sm:$0xff]
      %v1044 = vld [vmem:[%s597 + $0x62] sm:$0xff]
      %v1045 = vld [vmem:[%s597 + $0x6a] sm:$0xff]
      %v1046 = vld [vmem:[%s597 + $0x72] sm:$0xff]
      %v1047 = vld [vmem:[%s597 + $0x7a] sm:$0xff]
      %v1048 = vld [vmem:[%s597 + $0x82] sm:$0xff]
      %v1049 = vld [vmem:[%s597 + $0x8a] sm:$0xff]
      %v1050 = vld [vmem:[%s597 + $0x92] sm:$0xff]
      %v1051 = vld [vmem:[%s597 + $0x9a] sm:$0xff]
      %v1052 = vld [vmem:[%s597 + $0xa2] sm:$0xff]
      %v1053 = vld [vmem:[%s597 + $0xaa] sm:$0xff]
      %v1054 = vld [vmem:[%s597 + $0xb2] sm:$0xff]
      %v1055 = vld [vmem:[%s597 + $0xba] sm:$0xff]
      %v1056 = vld [vmem:[%s597 + $0xc2] sm:$0xff]
      %v1057 = vld [vmem:[%s597 + $0xca] sm:$0xff]
      %v1058 = vld [vmem:[%s597 + $0xd2] sm:$0xff]
      %v1059 = vld [vmem:[%s597 + $0xda] sm:$0xff]
      %v1060 = vld [vmem:[%s597 + $0xe2] sm:$0xff]
      %v1061 = vld [vmem:[%s597 + $0xea] sm:$0xff]
      %v1062 = vld [vmem:[%s597 + $0xf2] sm:$0xff]
      %v1063 = vld [vmem:[%s597 + $0xfa] sm:$0xff]
      %v1064 = vld [vmem:[%s597 + $0x102] sm:$0xff]
      %v1065 = vld [vmem:[%s597 + $0x10a] sm:$0xff]
      %v1066 = vld [vmem:[%s597 + $0x112] sm:$0xff]
      %v1067 = vld [vmem:[%s597 + $0x11a] sm:$0xff]
      %v1068 = vpack.c.bf16 %v1033, %v1032
      %v1069 = vpack.c.bf16 %v1035, %v1034
      %v1070 = vpack.c.bf16 %v1037, %v1036
      %v1071 = vpack.c.bf16 %v1039, %v1038
      %v1072 = vpack.c.bf16 %v1041, %v1040
      %v1073 = vpack.c.bf16 %v1043, %v1042
      %v1074 = vpack.c.bf16 %v1045, %v1044
      %v1075 = vpack.c.bf16 %v1047, %v1046
      %v1076 = vpack.c.bf16 %v1049, %v1048
      %v1077 = vpack.c.bf16 %v1051, %v1050
      %v1078 = vpack.c.bf16 %v1053, %v1052
      %v1079 = vpack.c.bf16 %v1055, %v1054
      %v1080 = vpack.c.bf16 %v1057, %v1056
      %v1081 = vpack.c.bf16 %v1059, %v1058
      %v1082 = vpack.c.bf16 %v1061, %v1060
      %v1083 = vpack.c.bf16 %v1063, %v1062
      %v1084 = vpack.c.bf16 %v1065, %v1064
      %v1085 = vpack.c.bf16 %v1067, %v1066
      %s1086 = scalar_lea.vmem %s1, 4
      %v1087 = vld [vmem:[%s1086] sm:$0x3]
      %v1089 = vsel %vm715, %v1068, 0
      %v1092 = vsel %vm715, %v1069, 0
      %v1095 = vsel %vm715, %v1070, 0
      %v1098 = vsel %vm715, %v1071, 0
      %v1101 = vsel %vm715, %v1072, 0
      %v1104 = vsel %vm715, %v1073, 0
      %v1107 = vsel %vm715, %v1074, 0
      %v1110 = vsel %vm715, %v1075, 0
      %v1113 = vsel %vm715, %v1076, 0
      %v1116 = vsel %vm715, %v1077, 0
      %v1119 = vsel %vm715, %v1078, 0
      %v1122 = vsel %vm715, %v1079, 0
      %v1125 = vsel %vm715, %v1080, 0
      %v1128 = vsel %vm715, %v1081, 0
      %v1131 = vsel %vm715, %v1082, 0
      %v1134 = vsel %vm715, %v1083, 0
      %v1137 = vsel %vm715, %v1084, 0
      %v1140 = vsel %vm715, %v1085, 0
      %v1143 = vand.u32 %v1087, %v773
      %1145 = vmatpush.bf16.msra.mxu0 0
      %1146 = vmatpush.bf16.msra.mxu0 0
      %1147 = vmatpush.bf16.msra.mxu0 0
      %1148 = vmatpush.bf16.msra.mxu0 0
      %1149 = vmatpush.bf16.msra.mxu0 0
      %1150 = vmatpush.bf16.msra.mxu0 0
      %1151 = vmatpush.bf16.msra.mxu0 0
      %1152 = vmatpush.bf16.msra.mxu0 %v1143
      %1153 = vmatmul.bf16.gmra.mxu0 %v1089
      %v1154 = vpop.f32.mrf.mxu0
      %v1155 = vadd.f32 0.0, %v1154
      %v1156 = vpop.f32.mrf.mxu0
      %v1157 = vadd.f32 0.0, %v1156
      %1158 = vmatmul.bf16.gmra.mxu0 %v1092
      %v1159 = vpop.f32.mrf.mxu0
      %v1160 = vadd.f32 0.0, %v1159
      %v1161 = vpop.f32.mrf.mxu0
      %v1162 = vadd.f32 0.0, %v1161
      %1163 = vmatmul.bf16.gmra.mxu0 %v1095
      %v1164 = vpop.f32.mrf.mxu0
      %v1165 = vadd.f32 0.0, %v1164
      %v1166 = vpop.f32.mrf.mxu0
      %v1167 = vadd.f32 0.0, %v1166
      %1168 = vmatmul.bf16.gmra.mxu0 %v1098
      %v1169 = vpop.f32.mrf.mxu0
      %v1170 = vadd.f32 0.0, %v1169
      %v1171 = vpop.f32.mrf.mxu0
      %v1172 = vadd.f32 0.0, %v1171
      %1173 = vmatmul.bf16.gmra.mxu0 %v1101
      %v1174 = vpop.f32.mrf.mxu0
      %v1175 = vadd.f32 0.0, %v1174
      %v1176 = vpop.f32.mrf.mxu0
      %v1177 = vadd.f32 0.0, %v1176
      %1178 = vmatmul.bf16.gmra.mxu0 %v1104
      %v1179 = vpop.f32.mrf.mxu0
      %v1180 = vadd.f32 0.0, %v1179
      %v1181 = vpop.f32.mrf.mxu0
      %v1182 = vadd.f32 0.0, %v1181
      %1183 = vmatmul.bf16.gmra.mxu0 %v1107
      %v1184 = vpop.f32.mrf.mxu0
      %v1185 = vadd.f32 0.0, %v1184
      %v1186 = vpop.f32.mrf.mxu0
      %v1187 = vadd.f32 0.0, %v1186
      %1188 = vmatmul.bf16.gmra.mxu0 %v1110
      %v1189 = vpop.f32.mrf.mxu0
      %v1190 = vadd.f32 0.0, %v1189
      %v1191 = vpop.f32.mrf.mxu0
      %v1192 = vadd.f32 0.0, %v1191
      %1193 = vmatmul.bf16.gmra.mxu0 %v1113
      %v1194 = vpop.f32.mrf.mxu0
      %v1195 = vadd.f32 0.0, %v1194
      %v1196 = vpop.f32.mrf.mxu0
      %v1197 = vadd.f32 0.0, %v1196
      %1198 = vmatmul.bf16.gmra.mxu0 %v1116
      %v1199 = vpop.f32.mrf.mxu0
      %v1200 = vadd.f32 0.0, %v1199
      %v1201 = vpop.f32.mrf.mxu0
      %v1202 = vadd.f32 0.0, %v1201
      %1203 = vmatmul.bf16.gmra.mxu0 %v1119
      %v1204 = vpop.f32.mrf.mxu0
      %v1205 = vadd.f32 0.0, %v1204
      %v1206 = vpop.f32.mrf.mxu0
      %v1207 = vadd.f32 0.0, %v1206
      %1208 = vmatmul.bf16.gmra.mxu0 %v1122
      %v1209 = vpop.f32.mrf.mxu0
      %v1210 = vadd.f32 0.0, %v1209
      %v1211 = vpop.f32.mrf.mxu0
      %v1212 = vadd.f32 0.0, %v1211
      %1213 = vmatmul.bf16.gmra.mxu0 %v1125
      %v1214 = vpop.f32.mrf.mxu0
      %v1215 = vadd.f32 0.0, %v1214
      %v1216 = vpop.f32.mrf.mxu0
      %v1217 = vadd.f32 0.0, %v1216
      %1218 = vmatmul.bf16.gmra.mxu0 %v1128
      %v1219 = vpop.f32.mrf.mxu0
      %v1220 = vadd.f32 0.0, %v1219
      %v1221 = vpop.f32.mrf.mxu0
      %v1222 = vadd.f32 0.0, %v1221
      %1223 = vmatmul.bf16.gmra.mxu0 %v1131
      %v1224 = vpop.f32.mrf.mxu0
      %v1225 = vadd.f32 0.0, %v1224
      %v1226 = vpop.f32.mrf.mxu0
      %v1227 = vadd.f32 0.0, %v1226
      %1228 = vmatmul.bf16.gmra.mxu0 %v1134
      %v1229 = vpop.f32.mrf.mxu0
      %v1230 = vadd.f32 0.0, %v1229
      %v1231 = vpop.f32.mrf.mxu0
      %v1232 = vadd.f32 0.0, %v1231
      %1233 = vmatmul.bf16.gmra.mxu0 %v1137
      %v1234 = vpop.f32.mrf.mxu0
      %v1235 = vadd.f32 0.0, %v1234
      %v1236 = vpop.f32.mrf.mxu0
      %v1237 = vadd.f32 0.0, %v1236
      %1238 = vmatmul.bf16.gmra.mxu0 %v1140
      %v1239 = vpop.f32.mrf.mxu0
      %v1240 = vadd.f32 0.0, %v1239
      %v1241 = vpop.f32.mrf.mxu0
      %v1242 = vadd.f32 0.0, %v1241
      %1243 = vdwg.mxu0
      %v1244 = vadd.f32 %v943, %v1155
      %v1245 = vadd.f32 %v945, %v1157
      %v1246 = vadd.f32 %v948, %v1160
      %v1247 = vadd.f32 %v950, %v1162
      %v1248 = vadd.f32 %v953, %v1165
      %v1249 = vadd.f32 %v955, %v1167
      %v1250 = vadd.f32 %v958, %v1170
      %v1251 = vadd.f32 %v960, %v1172
      %v1252 = vadd.f32 %v963, %v1175
      %v1253 = vadd.f32 %v965, %v1177
      %v1254 = vadd.f32 %v968, %v1180
      %v1255 = vadd.f32 %v970, %v1182
      %v1256 = vadd.f32 %v973, %v1185
      %v1257 = vadd.f32 %v975, %v1187
      %v1258 = vadd.f32 %v978, %v1190
      %v1259 = vadd.f32 %v980, %v1192
      %v1260 = vadd.f32 %v983, %v1195
      %v1261 = vadd.f32 %v985, %v1197
      %v1262 = vadd.f32 %v988, %v1200
      %v1263 = vadd.f32 %v990, %v1202
      %v1264 = vadd.f32 %v993, %v1205
      %v1265 = vadd.f32 %v995, %v1207
      %v1266 = vadd.f32 %v998, %v1210
      %v1267 = vadd.f32 %v1000, %v1212
      %v1268 = vadd.f32 %v1003, %v1215
      %v1269 = vadd.f32 %v1005, %v1217
      %v1270 = vadd.f32 %v1008, %v1220
      %v1271 = vadd.f32 %v1010, %v1222
      %v1272 = vadd.f32 %v1013, %v1225
      %v1273 = vadd.f32 %v1015, %v1227
      %v1274 = vadd.f32 %v1018, %v1230
      %v1275 = vadd.f32 %v1020, %v1232
      %v1276 = vadd.f32 %v1023, %v1235
      %v1277 = vadd.f32 %v1025, %v1237
      %v1278 = vadd.f32 %v1028, %v1240
      %v1279 = vadd.f32 %v1030, %v1242
      %v1280 = vld [vmem:[%s597 + $0x12] sm:$0xff]
      %v1281 = vld [vmem:[%s597 + $0x1a] sm:$0xff]
      %v1282 = vld [vmem:[%s597 + $0x22] sm:$0xff]
      %v1283 = vld [vmem:[%s597 + $0x2a] sm:$0xff]
      %v1284 = vld [vmem:[%s597 + $0x32] sm:$0xff]
      %v1285 = vld [vmem:[%s597 + $0x3a] sm:$0xff]
      %v1286 = vld [vmem:[%s597 + $0x42] sm:$0xff]
      %v1287 = vld [vmem:[%s597 + $0x4a] sm:$0xff]
      %v1288 = vld [vmem:[%s597 + $0x52] sm:$0xff]
      %v1289 = vld [vmem:[%s597 + $0x5a] sm:$0xff]
      %v1290 = vld [vmem:[%s597 + $0x62] sm:$0xff]
      %v1291 = vld [vmem:[%s597 + $0x6a] sm:$0xff]
      %v1292 = vld [vmem:[%s597 + $0x72] sm:$0xff]
      %v1293 = vld [vmem:[%s597 + $0x7a] sm:$0xff]
      %v1294 = vld [vmem:[%s597 + $0x82] sm:$0xff]
      %v1295 = vld [vmem:[%s597 + $0x8a] sm:$0xff]
      %v1296 = vld [vmem:[%s597 + $0x92] sm:$0xff]
      %v1297 = vld [vmem:[%s597 + $0x9a] sm:$0xff]
      %v1298 = vld [vmem:[%s597 + $0xa2] sm:$0xff]
      %v1299 = vld [vmem:[%s597 + $0xaa] sm:$0xff]
      %v1300 = vld [vmem:[%s597 + $0xb2] sm:$0xff]
      %v1301 = vld [vmem:[%s597 + $0xba] sm:$0xff]
      %v1302 = vld [vmem:[%s597 + $0xc2] sm:$0xff]
      %v1303 = vld [vmem:[%s597 + $0xca] sm:$0xff]
      %v1304 = vld [vmem:[%s597 + $0xd2] sm:$0xff]
      %v1305 = vld [vmem:[%s597 + $0xda] sm:$0xff]
      %v1306 = vld [vmem:[%s597 + $0xe2] sm:$0xff]
      %v1307 = vld [vmem:[%s597 + $0xea] sm:$0xff]
      %v1308 = vld [vmem:[%s597 + $0xf2] sm:$0xff]
      %v1309 = vld [vmem:[%s597 + $0xfa] sm:$0xff]
      %v1310 = vld [vmem:[%s597 + $0x102] sm:$0xff]
      %v1311 = vld [vmem:[%s597 + $0x10a] sm:$0xff]
      %v1312 = vld [vmem:[%s597 + $0x112] sm:$0xff]
      %v1313 = vld [vmem:[%s597 + $0x11a] sm:$0xff]
      %v1314 = vld [vmem:[%s597 + $0x122] sm:$0xff]
      %v1315 = vld [vmem:[%s597 + $0x12a] sm:$0xff]
      %v1316 = vpack.c.bf16 %v1281, %v1280
      %v1317 = vpack.c.bf16 %v1283, %v1282
      %v1318 = vpack.c.bf16 %v1285, %v1284
      %v1319 = vpack.c.bf16 %v1287, %v1286
      %v1320 = vpack.c.bf16 %v1289, %v1288
      %v1321 = vpack.c.bf16 %v1291, %v1290
      %v1322 = vpack.c.bf16 %v1293, %v1292
      %v1323 = vpack.c.bf16 %v1295, %v1294
      %v1324 = vpack.c.bf16 %v1297, %v1296
      %v1325 = vpack.c.bf16 %v1299, %v1298
      %v1326 = vpack.c.bf16 %v1301, %v1300
      %v1327 = vpack.c.bf16 %v1303, %v1302
      %v1328 = vpack.c.bf16 %v1305, %v1304
      %v1329 = vpack.c.bf16 %v1307, %v1306
      %v1330 = vpack.c.bf16 %v1309, %v1308
      %v1331 = vpack.c.bf16 %v1311, %v1310
      %v1332 = vpack.c.bf16 %v1313, %v1312
      %v1333 = vpack.c.bf16 %v1315, %v1314
      %s1334 = scalar_lea.vmem %s1, 6
      %v1335 = vld [vmem:[%s1334] sm:$0x3]
      %v1337 = vsel %vm715, %v1316, 0
      %v1340 = vsel %vm715, %v1317, 0
      %v1343 = vsel %vm715, %v1318, 0
      %v1346 = vsel %vm715, %v1319, 0
      %v1349 = vsel %vm715, %v1320, 0
      %v1352 = vsel %vm715, %v1321, 0
      %v1355 = vsel %vm715, %v1322, 0
      %v1358 = vsel %vm715, %v1323, 0
      %v1361 = vsel %vm715, %v1324, 0
      %v1364 = vsel %vm715, %v1325, 0
      %v1367 = vsel %vm715, %v1326, 0
      %v1370 = vsel %vm715, %v1327, 0
      %v1373 = vsel %vm715, %v1328, 0
      %v1376 = vsel %vm715, %v1329, 0
      %v1379 = vsel %vm715, %v1330, 0
      %v1382 = vsel %vm715, %v1331, 0
      %v1385 = vsel %vm715, %v1332, 0
      %v1388 = vsel %vm715, %v1333, 0
      %v1391 = vand.u32 %v1335, %v773
      %1393 = vmatpush.bf16.msra.mxu0 0
      %1394 = vmatpush.bf16.msra.mxu0 0
      %1395 = vmatpush.bf16.msra.mxu0 0
      %1396 = vmatpush.bf16.msra.mxu0 0
      %1397 = vmatpush.bf16.msra.mxu0 0
      %1398 = vmatpush.bf16.msra.mxu0 0
      %1399 = vmatpush.bf16.msra.mxu0 0
      %1400 = vmatpush.bf16.msra.mxu0 %v1391
      %1401 = vmatmul.bf16.gmra.mxu0 %v1337
      %v1402 = vpop.f32.mrf.mxu0
      %v1403 = vadd.f32 0.0, %v1402
      %v1404 = vpop.f32.mrf.mxu0
      %v1405 = vadd.f32 0.0, %v1404
      %1406 = vmatmul.bf16.gmra.mxu0 %v1340
      %v1407 = vpop.f32.mrf.mxu0
      %v1408 = vadd.f32 0.0, %v1407
      %v1409 = vpop.f32.mrf.mxu0
      %v1410 = vadd.f32 0.0, %v1409
      %1411 = vmatmul.bf16.gmra.mxu0 %v1343
      %v1412 = vpop.f32.mrf.mxu0
      %v1413 = vadd.f32 0.0, %v1412
      %v1414 = vpop.f32.mrf.mxu0
      %v1415 = vadd.f32 0.0, %v1414
      %1416 = vmatmul.bf16.gmra.mxu0 %v1346
      %v1417 = vpop.f32.mrf.mxu0
      %v1418 = vadd.f32 0.0, %v1417
      %v1419 = vpop.f32.mrf.mxu0
      %v1420 = vadd.f32 0.0, %v1419
      %1421 = vmatmul.bf16.gmra.mxu0 %v1349
      %v1422 = vpop.f32.mrf.mxu0
      %v1423 = vadd.f32 0.0, %v1422
      %v1424 = vpop.f32.mrf.mxu0
      %v1425 = vadd.f32 0.0, %v1424
      %1426 = vmatmul.bf16.gmra.mxu0 %v1352
      %v1427 = vpop.f32.mrf.mxu0
      %v1428 = vadd.f32 0.0, %v1427
      %v1429 = vpop.f32.mrf.mxu0
      %v1430 = vadd.f32 0.0, %v1429
      %1431 = vmatmul.bf16.gmra.mxu0 %v1355
      %v1432 = vpop.f32.mrf.mxu0
      %v1433 = vadd.f32 0.0, %v1432
      %v1434 = vpop.f32.mrf.mxu0
      %v1435 = vadd.f32 0.0, %v1434
      %1436 = vmatmul.bf16.gmra.mxu0 %v1358
      %v1437 = vpop.f32.mrf.mxu0
      %v1438 = vadd.f32 0.0, %v1437
      %v1439 = vpop.f32.mrf.mxu0
      %v1440 = vadd.f32 0.0, %v1439
      %1441 = vmatmul.bf16.gmra.mxu0 %v1361
      %v1442 = vpop.f32.mrf.mxu0
      %v1443 = vadd.f32 0.0, %v1442
      %v1444 = vpop.f32.mrf.mxu0
      %v1445 = vadd.f32 0.0, %v1444
      %1446 = vmatmul.bf16.gmra.mxu0 %v1364
      %v1447 = vpop.f32.mrf.mxu0
      %v1448 = vadd.f32 0.0, %v1447
      %v1449 = vpop.f32.mrf.mxu0
      %v1450 = vadd.f32 0.0, %v1449
      %1451 = vmatmul.bf16.gmra.mxu0 %v1367
      %v1452 = vpop.f32.mrf.mxu0
      %v1453 = vadd.f32 0.0, %v1452
      %v1454 = vpop.f32.mrf.mxu0
      %v1455 = vadd.f32 0.0, %v1454
      %1456 = vmatmul.bf16.gmra.mxu0 %v1370
      %v1457 = vpop.f32.mrf.mxu0
      %v1458 = vadd.f32 0.0, %v1457
      %v1459 = vpop.f32.mrf.mxu0
      %v1460 = vadd.f32 0.0, %v1459
      %1461 = vmatmul.bf16.gmra.mxu0 %v1373
      %v1462 = vpop.f32.mrf.mxu0
      %v1463 = vadd.f32 0.0, %v1462
      %v1464 = vpop.f32.mrf.mxu0
      %v1465 = vadd.f32 0.0, %v1464
      %1466 = vmatmul.bf16.gmra.mxu0 %v1376
      %v1467 = vpop.f32.mrf.mxu0
      %v1468 = vadd.f32 0.0, %v1467
      %v1469 = vpop.f32.mrf.mxu0
      %v1470 = vadd.f32 0.0, %v1469
      %1471 = vmatmul.bf16.gmra.mxu0 %v1379
      %v1472 = vpop.f32.mrf.mxu0
      %v1473 = vadd.f32 0.0, %v1472
      %v1474 = vpop.f32.mrf.mxu0
      %v1475 = vadd.f32 0.0, %v1474
      %1476 = vmatmul.bf16.gmra.mxu0 %v1382
      %v1477 = vpop.f32.mrf.mxu0
      %v1478 = vadd.f32 0.0, %v1477
      %v1479 = vpop.f32.mrf.mxu0
      %v1480 = vadd.f32 0.0, %v1479
      %1481 = vmatmul.bf16.gmra.mxu0 %v1385
      %v1482 = vpop.f32.mrf.mxu0
      %v1483 = vadd.f32 0.0, %v1482
      %v1484 = vpop.f32.mrf.mxu0
      %v1485 = vadd.f32 0.0, %v1484
      %1486 = vmatmul.bf16.gmra.mxu0 %v1388
      %v1487 = vpop.f32.mrf.mxu0
      %v1488 = vadd.f32 0.0, %v1487
      %v1489 = vpop.f32.mrf.mxu0
      %v1490 = vadd.f32 0.0, %v1489
      %1491 = vdwg.mxu0
      %v1492 = vadd.f32 %v1244, %v1403
      %v1493 = vadd.f32 %v1245, %v1405
      %v1494 = vadd.f32 %v1246, %v1408
      %v1495 = vadd.f32 %v1247, %v1410
      %v1496 = vadd.f32 %v1248, %v1413
      %v1497 = vadd.f32 %v1249, %v1415
      %v1498 = vadd.f32 %v1250, %v1418
      %v1499 = vadd.f32 %v1251, %v1420
      %v1500 = vadd.f32 %v1252, %v1423
      %v1501 = vadd.f32 %v1253, %v1425
      %v1502 = vadd.f32 %v1254, %v1428
      %v1503 = vadd.f32 %v1255, %v1430
      %v1504 = vadd.f32 %v1256, %v1433
      %v1505 = vadd.f32 %v1257, %v1435
      %v1506 = vadd.f32 %v1258, %v1438
      %v1507 = vadd.f32 %v1259, %v1440
      %v1508 = vadd.f32 %v1260, %v1443
      %v1509 = vadd.f32 %v1261, %v1445
      %v1510 = vadd.f32 %v1262, %v1448
      %v1511 = vadd.f32 %v1263, %v1450
      %v1512 = vadd.f32 %v1264, %v1453
      %v1513 = vadd.f32 %v1265, %v1455
      %v1514 = vadd.f32 %v1266, %v1458
      %v1515 = vadd.f32 %v1267, %v1460
      %v1516 = vadd.f32 %v1268, %v1463
      %v1517 = vadd.f32 %v1269, %v1465
      %v1518 = vadd.f32 %v1270, %v1468
      %v1519 = vadd.f32 %v1271, %v1470
      %v1520 = vadd.f32 %v1272, %v1473
      %v1521 = vadd.f32 %v1273, %v1475
      %v1522 = vadd.f32 %v1274, %v1478
      %v1523 = vadd.f32 %v1275, %v1480
      %v1524 = vadd.f32 %v1276, %v1483
      %v1525 = vadd.f32 %v1277, %v1485
      %v1526 = vadd.f32 %v1278, %v1488
      %v1527 = vadd.f32 %v1279, %v1490
      %v1528 = vld [vmem:[%s597 + $0x13] sm:$0xff]
      %v1529 = vld [vmem:[%s597 + $0x1b] sm:$0xff]
      %v1530 = vld [vmem:[%s597 + $0x23] sm:$0xff]
      %v1531 = vld [vmem:[%s597 + $0x2b] sm:$0xff]
      %v1532 = vld [vmem:[%s597 + $0x33] sm:$0xff]
      %v1533 = vld [vmem:[%s597 + $0x3b] sm:$0xff]
      %v1534 = vld [vmem:[%s597 + $0x43] sm:$0xff]
      %v1535 = vld [vmem:[%s597 + $0x4b] sm:$0xff]
      %v1536 = vld [vmem:[%s597 + $0x53] sm:$0xff]
      %v1537 = vld [vmem:[%s597 + $0x5b] sm:$0xff]
      %v1538 = vld [vmem:[%s597 + $0x63] sm:$0xff]
      %v1539 = vld [vmem:[%s597 + $0x6b] sm:$0xff]
      %v1540 = vld [vmem:[%s597 + $0x73] sm:$0xff]
      %v1541 = vld [vmem:[%s597 + $0x7b] sm:$0xff]
      %v1542 = vld [vmem:[%s597 + $0x83] sm:$0xff]
      %v1543 = vld [vmem:[%s597 + $0x8b] sm:$0xff]
      %v1544 = vld [vmem:[%s597 + $0x93] sm:$0xff]
      %v1545 = vld [vmem:[%s597 + $0x9b] sm:$0xff]
      %v1546 = vld [vmem:[%s597 + $0xa3] sm:$0xff]
      %v1547 = vld [vmem:[%s597 + $0xab] sm:$0xff]
      %v1548 = vld [vmem:[%s597 + $0xb3] sm:$0xff]
      %v1549 = vld [vmem:[%s597 + $0xbb] sm:$0xff]
      %v1550 = vld [vmem:[%s597 + $0xc3] sm:$0xff]
      %v1551 = vld [vmem:[%s597 + $0xcb] sm:$0xff]
      %v1552 = vld [vmem:[%s597 + $0xd3] sm:$0xff]
      %v1553 = vld [vmem:[%s597 + $0xdb] sm:$0xff]
      %v1554 = vld [vmem:[%s597 + $0xe3] sm:$0xff]
      %v1555 = vld [vmem:[%s597 + $0xeb] sm:$0xff]
      %v1556 = vld [vmem:[%s597 + $0xf3] sm:$0xff]
      %v1557 = vld [vmem:[%s597 + $0xfb] sm:$0xff]
      %v1558 = vld [vmem:[%s597 + $0x103] sm:$0xff]
      %v1559 = vld [vmem:[%s597 + $0x10b] sm:$0xff]
      %v1560 = vld [vmem:[%s597 + $0x113] sm:$0xff]
      %v1561 = vld [vmem:[%s597 + $0x11b] sm:$0xff]
      %v1562 = vld [vmem:[%s597 + $0x123] sm:$0xff]
      %v1563 = vld [vmem:[%s597 + $0x12b] sm:$0xff]
      %v1564 = vpack.c.bf16 %v1529, %v1528
      %v1565 = vpack.c.bf16 %v1531, %v1530
      %v1566 = vpack.c.bf16 %v1533, %v1532
      %v1567 = vpack.c.bf16 %v1535, %v1534
      %v1568 = vpack.c.bf16 %v1537, %v1536
      %v1569 = vpack.c.bf16 %v1539, %v1538
      %v1570 = vpack.c.bf16 %v1541, %v1540
      %v1571 = vpack.c.bf16 %v1543, %v1542
      %v1572 = vpack.c.bf16 %v1545, %v1544
      %v1573 = vpack.c.bf16 %v1547, %v1546
      %v1574 = vpack.c.bf16 %v1549, %v1548
      %v1575 = vpack.c.bf16 %v1551, %v1550
      %v1576 = vpack.c.bf16 %v1553, %v1552
      %v1577 = vpack.c.bf16 %v1555, %v1554
      %v1578 = vpack.c.bf16 %v1557, %v1556
      %v1579 = vpack.c.bf16 %v1559, %v1558
      %v1580 = vpack.c.bf16 %v1561, %v1560
      %v1581 = vpack.c.bf16 %v1563, %v1562
      %s1582 = scalar_lea.vmem %s1, 8
      %v1583 = vld [vmem:[%s1582] sm:$0x3]
      %v1585 = vsel %vm715, %v1564, 0
      %v1588 = vsel %vm715, %v1565, 0
      %v1591 = vsel %vm715, %v1566, 0
      %v1594 = vsel %vm715, %v1567, 0
      %v1597 = vsel %vm715, %v1568, 0
      %v1600 = vsel %vm715, %v1569, 0
      %v1603 = vsel %vm715, %v1570, 0
      %v1606 = vsel %vm715, %v1571, 0
      %v1609 = vsel %vm715, %v1572, 0
      %v1612 = vsel %vm715, %v1573, 0
      %v1615 = vsel %vm715, %v1574, 0
      %v1618 = vsel %vm715, %v1575, 0
      %v1621 = vsel %vm715, %v1576, 0
      %v1624 = vsel %vm715, %v1577, 0
      %v1627 = vsel %vm715, %v1578, 0
      %v1630 = vsel %vm715, %v1579, 0
      %v1633 = vsel %vm715, %v1580, 0
      %v1636 = vsel %vm715, %v1581, 0
      %v1639 = vand.u32 %v1583, %v773
      %1641 = vmatpush.bf16.msra.mxu0 0
      %1642 = vmatpush.bf16.msra.mxu0 0
      %1643 = vmatpush.bf16.msra.mxu0 0
      %1644 = vmatpush.bf16.msra.mxu0 0
      %1645 = vmatpush.bf16.msra.mxu0 0
      %1646 = vmatpush.bf16.msra.mxu0 0
      %1647 = vmatpush.bf16.msra.mxu0 0
      %1648 = vmatpush.bf16.msra.mxu0 %v1639
      %1649 = vmatmul.bf16.gmra.mxu0 %v1585
      %v1650 = vpop.f32.mrf.mxu0
      %v1651 = vadd.f32 0.0, %v1650
      %v1652 = vpop.f32.mrf.mxu0
      %v1653 = vadd.f32 0.0, %v1652
      %1654 = vmatmul.bf16.gmra.mxu0 %v1588
      %v1655 = vpop.f32.mrf.mxu0
      %v1656 = vadd.f32 0.0, %v1655
      %v1657 = vpop.f32.mrf.mxu0
      %v1658 = vadd.f32 0.0, %v1657
      %1659 = vmatmul.bf16.gmra.mxu0 %v1591
      %v1660 = vpop.f32.mrf.mxu0
      %v1661 = vadd.f32 0.0, %v1660
      %v1662 = vpop.f32.mrf.mxu0
      %v1663 = vadd.f32 0.0, %v1662
      %1664 = vmatmul.bf16.gmra.mxu0 %v1594
      %v1665 = vpop.f32.mrf.mxu0
      %v1666 = vadd.f32 0.0, %v1665
      %v1667 = vpop.f32.mrf.mxu0
      %v1668 = vadd.f32 0.0, %v1667
      %1669 = vmatmul.bf16.gmra.mxu0 %v1597
      %v1670 = vpop.f32.mrf.mxu0
      %v1671 = vadd.f32 0.0, %v1670
      %v1672 = vpop.f32.mrf.mxu0
      %v1673 = vadd.f32 0.0, %v1672
      %1674 = vmatmul.bf16.gmra.mxu0 %v1600
      %v1675 = vpop.f32.mrf.mxu0
      %v1676 = vadd.f32 0.0, %v1675
      %v1677 = vpop.f32.mrf.mxu0
      %v1678 = vadd.f32 0.0, %v1677
      %1679 = vmatmul.bf16.gmra.mxu0 %v1603
      %v1680 = vpop.f32.mrf.mxu0
      %v1681 = vadd.f32 0.0, %v1680
      %v1682 = vpop.f32.mrf.mxu0
      %v1683 = vadd.f32 0.0, %v1682
      %1684 = vmatmul.bf16.gmra.mxu0 %v1606
      %v1685 = vpop.f32.mrf.mxu0
      %v1686 = vadd.f32 0.0, %v1685
      %v1687 = vpop.f32.mrf.mxu0
      %v1688 = vadd.f32 0.0, %v1687
      %1689 = vmatmul.bf16.gmra.mxu0 %v1609
      %v1690 = vpop.f32.mrf.mxu0
      %v1691 = vadd.f32 0.0, %v1690
      %v1692 = vpop.f32.mrf.mxu0
      %v1693 = vadd.f32 0.0, %v1692
      %1694 = vmatmul.bf16.gmra.mxu0 %v1612
      %v1695 = vpop.f32.mrf.mxu0
      %v1696 = vadd.f32 0.0, %v1695
      %v1697 = vpop.f32.mrf.mxu0
      %v1698 = vadd.f32 0.0, %v1697
      %1699 = vmatmul.bf16.gmra.mxu0 %v1615
      %v1700 = vpop.f32.mrf.mxu0
      %v1701 = vadd.f32 0.0, %v1700
      %v1702 = vpop.f32.mrf.mxu0
      %v1703 = vadd.f32 0.0, %v1702
      %1704 = vmatmul.bf16.gmra.mxu0 %v1618
      %v1705 = vpop.f32.mrf.mxu0
      %v1706 = vadd.f32 0.0, %v1705
      %v1707 = vpop.f32.mrf.mxu0
      %v1708 = vadd.f32 0.0, %v1707
      %1709 = vmatmul.bf16.gmra.mxu0 %v1621
      %v1710 = vpop.f32.mrf.mxu0
      %v1711 = vadd.f32 0.0, %v1710
      %v1712 = vpop.f32.mrf.mxu0
      %v1713 = vadd.f32 0.0, %v1712
      %1714 = vmatmul.bf16.gmra.mxu0 %v1624
      %v1715 = vpop.f32.mrf.mxu0
      %v1716 = vadd.f32 0.0, %v1715
      %v1717 = vpop.f32.mrf.mxu0
      %v1718 = vadd.f32 0.0, %v1717
      %1719 = vmatmul.bf16.gmra.mxu0 %v1627
      %v1720 = vpop.f32.mrf.mxu0
      %v1721 = vadd.f32 0.0, %v1720
      %v1722 = vpop.f32.mrf.mxu0
      %v1723 = vadd.f32 0.0, %v1722
      %1724 = vmatmul.bf16.gmra.mxu0 %v1630
      %v1725 = vpop.f32.mrf.mxu0
      %v1726 = vadd.f32 0.0, %v1725
      %v1727 = vpop.f32.mrf.mxu0
      %v1728 = vadd.f32 0.0, %v1727
      %1729 = vmatmul.bf16.gmra.mxu0 %v1633
      %v1730 = vpop.f32.mrf.mxu0
      %v1731 = vadd.f32 0.0, %v1730
      %v1732 = vpop.f32.mrf.mxu0
      %v1733 = vadd.f32 0.0, %v1732
      %1734 = vmatmul.bf16.gmra.mxu0 %v1636
      %v1735 = vpop.f32.mrf.mxu0
      %v1736 = vadd.f32 0.0, %v1735
      %v1737 = vpop.f32.mrf.mxu0
      %v1738 = vadd.f32 0.0, %v1737
      %1739 = vdwg.mxu0
      %v1740 = vadd.f32 %v1492, %v1651
      %v1741 = vadd.f32 %v1493, %v1653
      %v1742 = vadd.f32 %v1494, %v1656
      %v1743 = vadd.f32 %v1495, %v1658
      %v1744 = vadd.f32 %v1496, %v1661
      %v1745 = vadd.f32 %v1497, %v1663
      %v1746 = vadd.f32 %v1498, %v1666
      %v1747 = vadd.f32 %v1499, %v1668
      %v1748 = vadd.f32 %v1500, %v1671
      %v1749 = vadd.f32 %v1501, %v1673
      %v1750 = vadd.f32 %v1502, %v1676
      %v1751 = vadd.f32 %v1503, %v1678
      %v1752 = vadd.f32 %v1504, %v1681
      %v1753 = vadd.f32 %v1505, %v1683
      %v1754 = vadd.f32 %v1506, %v1686
      %v1755 = vadd.f32 %v1507, %v1688
      %v1756 = vadd.f32 %v1508, %v1691
      %v1757 = vadd.f32 %v1509, %v1693
      %v1758 = vadd.f32 %v1510, %v1696
      %v1759 = vadd.f32 %v1511, %v1698
      %v1760 = vadd.f32 %v1512, %v1701
      %v1761 = vadd.f32 %v1513, %v1703
      %v1762 = vadd.f32 %v1514, %v1706
      %v1763 = vadd.f32 %v1515, %v1708
      %v1764 = vadd.f32 %v1516, %v1711
      %v1765 = vadd.f32 %v1517, %v1713
      %v1766 = vadd.f32 %v1518, %v1716
      %v1767 = vadd.f32 %v1519, %v1718
      %v1768 = vadd.f32 %v1520, %v1721
      %v1769 = vadd.f32 %v1521, %v1723
      %v1770 = vadd.f32 %v1522, %v1726
      %v1771 = vadd.f32 %v1523, %v1728
      %v1772 = vadd.f32 %v1524, %v1731
      %v1773 = vadd.f32 %v1525, %v1733
      %v1774 = vadd.f32 %v1526, %v1736
      %v1775 = vadd.f32 %v1527, %v1738
      %v1776 = vld [vmem:[%s597 + $0x14] sm:$0xff]
      %v1777 = vld [vmem:[%s597 + $0x1c] sm:$0xff]
      %v1778 = vld [vmem:[%s597 + $0x24] sm:$0xff]
      %v1779 = vld [vmem:[%s597 + $0x2c] sm:$0xff]
      %v1780 = vld [vmem:[%s597 + $0x34] sm:$0xff]
      %v1781 = vld [vmem:[%s597 + $0x3c] sm:$0xff]
      %v1782 = vld [vmem:[%s597 + $0x44] sm:$0xff]
      %v1783 = vld [vmem:[%s597 + $0x4c] sm:$0xff]
      %v1784 = vld [vmem:[%s597 + $0x54] sm:$0xff]
      %v1785 = vld [vmem:[%s597 + $0x5c] sm:$0xff]
      %v1786 = vld [vmem:[%s597 + $0x64] sm:$0xff]
      %v1787 = vld [vmem:[%s597 + $0x6c] sm:$0xff]
      %v1788 = vld [vmem:[%s597 + $0x74] sm:$0xff]
      %v1789 = vld [vmem:[%s597 + $0x7c] sm:$0xff]
      %v1790 = vld [vmem:[%s597 + $0x84] sm:$0xff]
      %v1791 = vld [vmem:[%s597 + $0x8c] sm:$0xff]
      %v1792 = vld [vmem:[%s597 + $0x94] sm:$0xff]
      %v1793 = vld [vmem:[%s597 + $0x9c] sm:$0xff]
      %v1794 = vld [vmem:[%s597 + $0xa4] sm:$0xff]
      %v1795 = vld [vmem:[%s597 + $0xac] sm:$0xff]
      %v1796 = vld [vmem:[%s597 + $0xb4] sm:$0xff]
      %v1797 = vld [vmem:[%s597 + $0xbc] sm:$0xff]
      %v1798 = vld [vmem:[%s597 + $0xc4] sm:$0xff]
      %v1799 = vld [vmem:[%s597 + $0xcc] sm:$0xff]
      %v1800 = vld [vmem:[%s597 + $0xd4] sm:$0xff]
      %v1801 = vld [vmem:[%s597 + $0xdc] sm:$0xff]
      %v1802 = vld [vmem:[%s597 + $0xe4] sm:$0xff]
      %v1803 = vld [vmem:[%s597 + $0xec] sm:$0xff]
      %v1804 = vld [vmem:[%s597 + $0xf4] sm:$0xff]
      %v1805 = vld [vmem:[%s597 + $0xfc] sm:$0xff]
      %v1806 = vld [vmem:[%s597 + $0x104] sm:$0xff]
      %v1807 = vld [vmem:[%s597 + $0x10c] sm:$0xff]
      %v1808 = vld [vmem:[%s597 + $0x114] sm:$0xff]
      %v1809 = vld [vmem:[%s597 + $0x11c] sm:$0xff]
      %v1810 = vld [vmem:[%s597 + $0x124] sm:$0xff]
      %v1811 = vld [vmem:[%s597 + $0x12c] sm:$0xff]
      %v1812 = vpack.c.bf16 %v1777, %v1776
      %v1813 = vpack.c.bf16 %v1779, %v1778
      %v1814 = vpack.c.bf16 %v1781, %v1780
      %v1815 = vpack.c.bf16 %v1783, %v1782
      %v1816 = vpack.c.bf16 %v1785, %v1784
      %v1817 = vpack.c.bf16 %v1787, %v1786
      %v1818 = vpack.c.bf16 %v1789, %v1788
      %v1819 = vpack.c.bf16 %v1791, %v1790
      %v1820 = vpack.c.bf16 %v1793, %v1792
      %v1821 = vpack.c.bf16 %v1795, %v1794
      %v1822 = vpack.c.bf16 %v1797, %v1796
      %v1823 = vpack.c.bf16 %v1799, %v1798
      %v1824 = vpack.c.bf16 %v1801, %v1800
      %v1825 = vpack.c.bf16 %v1803, %v1802
      %v1826 = vpack.c.bf16 %v1805, %v1804
      %v1827 = vpack.c.bf16 %v1807, %v1806
      %v1828 = vpack.c.bf16 %v1809, %v1808
      %v1829 = vpack.c.bf16 %v1811, %v1810
      %s1830 = scalar_lea.vmem %s1, 10
      %v1831 = vld [vmem:[%s1830] sm:$0x3]
      %v1833 = vsel %vm715, %v1812, 0
      %v1836 = vsel %vm715, %v1813, 0
      %v1839 = vsel %vm715, %v1814, 0
      %v1842 = vsel %vm715, %v1815, 0
      %v1845 = vsel %vm715, %v1816, 0
      %v1848 = vsel %vm715, %v1817, 0
      %v1851 = vsel %vm715, %v1818, 0
      %v1854 = vsel %vm715, %v1819, 0
      %v1857 = vsel %vm715, %v1820, 0
      %v1860 = vsel %vm715, %v1821, 0
      %v1863 = vsel %vm715, %v1822, 0
      %v1866 = vsel %vm715, %v1823, 0
      %v1869 = vsel %vm715, %v1824, 0
      %v1872 = vsel %vm715, %v1825, 0
      %v1875 = vsel %vm715, %v1826, 0
      %v1878 = vsel %vm715, %v1827, 0
      %v1881 = vsel %vm715, %v1828, 0
      %v1884 = vsel %vm715, %v1829, 0
      %v1887 = vand.u32 %v1831, %v773
      %1889 = vmatpush.bf16.msra.mxu0 0
      %1890 = vmatpush.bf16.msra.mxu0 0
      %1891 = vmatpush.bf16.msra.mxu0 0
      %1892 = vmatpush.bf16.msra.mxu0 0
      %1893 = vmatpush.bf16.msra.mxu0 0
      %1894 = vmatpush.bf16.msra.mxu0 0
      %1895 = vmatpush.bf16.msra.mxu0 0
      %1896 = vmatpush.bf16.msra.mxu0 %v1887
      %1897 = vmatmul.bf16.gmra.mxu0 %v1833
      %v1898 = vpop.f32.mrf.mxu0
      %v1899 = vadd.f32 0.0, %v1898
      %v1900 = vpop.f32.mrf.mxu0
      %v1901 = vadd.f32 0.0, %v1900
      %1902 = vmatmul.bf16.gmra.mxu0 %v1836
      %v1903 = vpop.f32.mrf.mxu0
      %v1904 = vadd.f32 0.0, %v1903
      %v1905 = vpop.f32.mrf.mxu0
      %v1906 = vadd.f32 0.0, %v1905
      %1907 = vmatmul.bf16.gmra.mxu0 %v1839
      %v1908 = vpop.f32.mrf.mxu0
      %v1909 = vadd.f32 0.0, %v1908
      %v1910 = vpop.f32.mrf.mxu0
      %v1911 = vadd.f32 0.0, %v1910
      %1912 = vmatmul.bf16.gmra.mxu0 %v1842
      %v1913 = vpop.f32.mrf.mxu0
      %v1914 = vadd.f32 0.0, %v1913
      %v1915 = vpop.f32.mrf.mxu0
      %v1916 = vadd.f32 0.0, %v1915
      %1917 = vmatmul.bf16.gmra.mxu0 %v1845
      %v1918 = vpop.f32.mrf.mxu0
      %v1919 = vadd.f32 0.0, %v1918
      %v1920 = vpop.f32.mrf.mxu0
      %v1921 = vadd.f32 0.0, %v1920
      %1922 = vmatmul.bf16.gmra.mxu0 %v1848
      %v1923 = vpop.f32.mrf.mxu0
      %v1924 = vadd.f32 0.0, %v1923
      %v1925 = vpop.f32.mrf.mxu0
      %v1926 = vadd.f32 0.0, %v1925
      %1927 = vmatmul.bf16.gmra.mxu0 %v1851
      %v1928 = vpop.f32.mrf.mxu0
      %v1929 = vadd.f32 0.0, %v1928
      %v1930 = vpop.f32.mrf.mxu0
      %v1931 = vadd.f32 0.0, %v1930
      %1932 = vmatmul.bf16.gmra.mxu0 %v1854
      %v1933 = vpop.f32.mrf.mxu0
      %v1934 = vadd.f32 0.0, %v1933
      %v1935 = vpop.f32.mrf.mxu0
      %v1936 = vadd.f32 0.0, %v1935
      %1937 = vmatmul.bf16.gmra.mxu0 %v1857
      %v1938 = vpop.f32.mrf.mxu0
      %v1939 = vadd.f32 0.0, %v1938
      %v1940 = vpop.f32.mrf.mxu0
      %v1941 = vadd.f32 0.0, %v1940
      %1942 = vmatmul.bf16.gmra.mxu0 %v1860
      %v1943 = vpop.f32.mrf.mxu0
      %v1944 = vadd.f32 0.0, %v1943
      %v1945 = vpop.f32.mrf.mxu0
      %v1946 = vadd.f32 0.0, %v1945
      %1947 = vmatmul.bf16.gmra.mxu0 %v1863
      %v1948 = vpop.f32.mrf.mxu0
      %v1949 = vadd.f32 0.0, %v1948
      %v1950 = vpop.f32.mrf.mxu0
      %v1951 = vadd.f32 0.0, %v1950
      %1952 = vmatmul.bf16.gmra.mxu0 %v1866
      %v1953 = vpop.f32.mrf.mxu0
      %v1954 = vadd.f32 0.0, %v1953
      %v1955 = vpop.f32.mrf.mxu0
      %v1956 = vadd.f32 0.0, %v1955
      %1957 = vmatmul.bf16.gmra.mxu0 %v1869
      %v1958 = vpop.f32.mrf.mxu0
      %v1959 = vadd.f32 0.0, %v1958
      %v1960 = vpop.f32.mrf.mxu0
      %v1961 = vadd.f32 0.0, %v1960
      %1962 = vmatmul.bf16.gmra.mxu0 %v1872
      %v1963 = vpop.f32.mrf.mxu0
      %v1964 = vadd.f32 0.0, %v1963
      %v1965 = vpop.f32.mrf.mxu0
      %v1966 = vadd.f32 0.0, %v1965
      %1967 = vmatmul.bf16.gmra.mxu0 %v1875
      %v1968 = vpop.f32.mrf.mxu0
      %v1969 = vadd.f32 0.0, %v1968
      %v1970 = vpop.f32.mrf.mxu0
      %v1971 = vadd.f32 0.0, %v1970
      %1972 = vmatmul.bf16.gmra.mxu0 %v1878
      %v1973 = vpop.f32.mrf.mxu0
      %v1974 = vadd.f32 0.0, %v1973
      %v1975 = vpop.f32.mrf.mxu0
      %v1976 = vadd.f32 0.0, %v1975
      %1977 = vmatmul.bf16.gmra.mxu0 %v1881
      %v1978 = vpop.f32.mrf.mxu0
      %v1979 = vadd.f32 0.0, %v1978
      %v1980 = vpop.f32.mrf.mxu0
      %v1981 = vadd.f32 0.0, %v1980
      %1982 = vmatmul.bf16.gmra.mxu0 %v1884
      %v1983 = vpop.f32.mrf.mxu0
      %v1984 = vadd.f32 0.0, %v1983
      %v1985 = vpop.f32.mrf.mxu0
      %v1986 = vadd.f32 0.0, %v1985
      %1987 = vdwg.mxu0
      %v1988 = vadd.f32 %v1740, %v1899
      %v1989 = vadd.f32 %v1741, %v1901
      %v1990 = vadd.f32 %v1742, %v1904
      %v1991 = vadd.f32 %v1743, %v1906
      %v1992 = vadd.f32 %v1744, %v1909
      %v1993 = vadd.f32 %v1745, %v1911
      %v1994 = vadd.f32 %v1746, %v1914
      %v1995 = vadd.f32 %v1747, %v1916
      %v1996 = vadd.f32 %v1748, %v1919
      %v1997 = vadd.f32 %v1749, %v1921
      %v1998 = vadd.f32 %v1750, %v1924
      %v1999 = vadd.f32 %v1751, %v1926
      %v2000 = vadd.f32 %v1752, %v1929
      %v2001 = vadd.f32 %v1753, %v1931
      %v2002 = vadd.f32 %v1754, %v1934
      %v2003 = vadd.f32 %v1755, %v1936
      %v2004 = vadd.f32 %v1756, %v1939
      %v2005 = vadd.f32 %v1757, %v1941
      %v2006 = vadd.f32 %v1758, %v1944
      %v2007 = vadd.f32 %v1759, %v1946
      %v2008 = vadd.f32 %v1760, %v1949
      %v2009 = vadd.f32 %v1761, %v1951
      %v2010 = vadd.f32 %v1762, %v1954
      %v2011 = vadd.f32 %v1763, %v1956
      %v2012 = vadd.f32 %v1764, %v1959
      %v2013 = vadd.f32 %v1765, %v1961
      %v2014 = vadd.f32 %v1766, %v1964
      %v2015 = vadd.f32 %v1767, %v1966
      %v2016 = vadd.f32 %v1768, %v1969
      %v2017 = vadd.f32 %v1769, %v1971
      %v2018 = vadd.f32 %v1770, %v1974
      %v2019 = vadd.f32 %v1771, %v1976
      %v2020 = vadd.f32 %v1772, %v1979
      %v2021 = vadd.f32 %v1773, %v1981
      %v2022 = vadd.f32 %v1774, %v1984
      %v2023 = vadd.f32 %v1775, %v1986
      %v2024 = vld [vmem:[%s597 + $0x24] sm:$0xff]
      %v2025 = vld [vmem:[%s597 + $0x2c] sm:$0xff]
      %v2026 = vld [vmem:[%s597 + $0x34] sm:$0xff]
      %v2027 = vld [vmem:[%s597 + $0x3c] sm:$0xff]
      %v2028 = vld [vmem:[%s597 + $0x44] sm:$0xff]
      %v2029 = vld [vmem:[%s597 + $0x4c] sm:$0xff]
      %v2030 = vld [vmem:[%s597 + $0x54] sm:$0xff]
      %v2031 = vld [vmem:[%s597 + $0x5c] sm:$0xff]
      %v2032 = vld [vmem:[%s597 + $0x64] sm:$0xff]
      %v2033 = vld [vmem:[%s597 + $0x6c] sm:$0xff]
      %v2034 = vld [vmem:[%s597 + $0x74] sm:$0xff]
      %v2035 = vld [vmem:[%s597 + $0x7c] sm:$0xff]
      %v2036 = vld [vmem:[%s597 + $0x84] sm:$0xff]
      %v2037 = vld [vmem:[%s597 + $0x8c] sm:$0xff]
      %v2038 = vld [vmem:[%s597 + $0x94] sm:$0xff]
      %v2039 = vld [vmem:[%s597 + $0x9c] sm:$0xff]
      %v2040 = vld [vmem:[%s597 + $0xa4] sm:$0xff]
      %v2041 = vld [vmem:[%s597 + $0xac] sm:$0xff]
      %v2042 = vld [vmem:[%s597 + $0xb4] sm:$0xff]
      %v2043 = vld [vmem:[%s597 + $0xbc] sm:$0xff]
      %v2044 = vld [vmem:[%s597 + $0xc4] sm:$0xff]
      %v2045 = vld [vmem:[%s597 + $0xcc] sm:$0xff]
      %v2046 = vld [vmem:[%s597 + $0xd4] sm:$0xff]
      %v2047 = vld [vmem:[%s597 + $0xdc] sm:$0xff]
      %v2048 = vld [vmem:[%s597 + $0xe4] sm:$0xff]
      %v2049 = vld [vmem:[%s597 + $0xec] sm:$0xff]
      %v2050 = vld [vmem:[%s597 + $0xf4] sm:$0xff]
      %v2051 = vld [vmem:[%s597 + $0xfc] sm:$0xff]
      %v2052 = vld [vmem:[%s597 + $0x104] sm:$0xff]
      %v2053 = vld [vmem:[%s597 + $0x10c] sm:$0xff]
      %v2054 = vld [vmem:[%s597 + $0x114] sm:$0xff]
      %v2055 = vld [vmem:[%s597 + $0x11c] sm:$0xff]
      %v2056 = vld [vmem:[%s597 + $0x124] sm:$0xff]
      %v2057 = vld [vmem:[%s597 + $0x12c] sm:$0xff]
      %v2058 = vld [vmem:[%s597 + $0x134] sm:$0xff]
      %v2059 = vld [vmem:[%s597 + $0x13c] sm:$0xff]
      %v2060 = vpack.c.bf16 %v2025, %v2024
      %v2061 = vpack.c.bf16 %v2027, %v2026
      %v2062 = vpack.c.bf16 %v2029, %v2028
      %v2063 = vpack.c.bf16 %v2031, %v2030
      %v2064 = vpack.c.bf16 %v2033, %v2032
      %v2065 = vpack.c.bf16 %v2035, %v2034
      %v2066 = vpack.c.bf16 %v2037, %v2036
      %v2067 = vpack.c.bf16 %v2039, %v2038
      %v2068 = vpack.c.bf16 %v2041, %v2040
      %v2069 = vpack.c.bf16 %v2043, %v2042
      %v2070 = vpack.c.bf16 %v2045, %v2044
      %v2071 = vpack.c.bf16 %v2047, %v2046
      %v2072 = vpack.c.bf16 %v2049, %v2048
      %v2073 = vpack.c.bf16 %v2051, %v2050
      %v2074 = vpack.c.bf16 %v2053, %v2052
      %v2075 = vpack.c.bf16 %v2055, %v2054
      %v2076 = vpack.c.bf16 %v2057, %v2056
      %v2077 = vpack.c.bf16 %v2059, %v2058
      %s2078 = scalar_lea.vmem %s1, 12
      %v2079 = vld [vmem:[%s2078] sm:$0x3]
      %v2081 = vsel %vm715, %v2060, 0
      %v2084 = vsel %vm715, %v2061, 0
      %v2087 = vsel %vm715, %v2062, 0
      %v2090 = vsel %vm715, %v2063, 0
      %v2093 = vsel %vm715, %v2064, 0
      %v2096 = vsel %vm715, %v2065, 0
      %v2099 = vsel %vm715, %v2066, 0
      %v2102 = vsel %vm715, %v2067, 0
      %v2105 = vsel %vm715, %v2068, 0
      %v2108 = vsel %vm715, %v2069, 0
      %v2111 = vsel %vm715, %v2070, 0
      %v2114 = vsel %vm715, %v2071, 0
      %v2117 = vsel %vm715, %v2072, 0
      %v2120 = vsel %vm715, %v2073, 0
      %v2123 = vsel %vm715, %v2074, 0
      %v2126 = vsel %vm715, %v2075, 0
      %v2129 = vsel %vm715, %v2076, 0
      %v2132 = vsel %vm715, %v2077, 0
      %v2135 = vand.u32 %v2079, %v773
      %2137 = vmatpush.bf16.msra.mxu0 0
      %2138 = vmatpush.bf16.msra.mxu0 0
      %2139 = vmatpush.bf16.msra.mxu0 0
      %2140 = vmatpush.bf16.msra.mxu0 0
      %2141 = vmatpush.bf16.msra.mxu0 0
      %2142 = vmatpush.bf16.msra.mxu0 0
      %2143 = vmatpush.bf16.msra.mxu0 0
      %2144 = vmatpush.bf16.msra.mxu0 %v2135
      %2145 = vmatmul.bf16.gmra.mxu0 %v2081
      %v2146 = vpop.f32.mrf.mxu0
      %v2147 = vadd.f32 0.0, %v2146
      %v2148 = vpop.f32.mrf.mxu0
      %v2149 = vadd.f32 0.0, %v2148
      %2150 = vmatmul.bf16.gmra.mxu0 %v2084
      %v2151 = vpop.f32.mrf.mxu0
      %v2152 = vadd.f32 0.0, %v2151
      %v2153 = vpop.f32.mrf.mxu0
      %v2154 = vadd.f32 0.0, %v2153
      %2155 = vmatmul.bf16.gmra.mxu0 %v2087
      %v2156 = vpop.f32.mrf.mxu0
      %v2157 = vadd.f32 0.0, %v2156
      %v2158 = vpop.f32.mrf.mxu0
      %v2159 = vadd.f32 0.0, %v2158
      %2160 = vmatmul.bf16.gmra.mxu0 %v2090
      %v2161 = vpop.f32.mrf.mxu0
      %v2162 = vadd.f32 0.0, %v2161
      %v2163 = vpop.f32.mrf.mxu0
      %v2164 = vadd.f32 0.0, %v2163
      %2165 = vmatmul.bf16.gmra.mxu0 %v2093
      %v2166 = vpop.f32.mrf.mxu0
      %v2167 = vadd.f32 0.0, %v2166
      %v2168 = vpop.f32.mrf.mxu0
      %v2169 = vadd.f32 0.0, %v2168
      %2170 = vmatmul.bf16.gmra.mxu0 %v2096
      %v2171 = vpop.f32.mrf.mxu0
      %v2172 = vadd.f32 0.0, %v2171
      %v2173 = vpop.f32.mrf.mxu0
      %v2174 = vadd.f32 0.0, %v2173
      %2175 = vmatmul.bf16.gmra.mxu0 %v2099
      %v2176 = vpop.f32.mrf.mxu0
      %v2177 = vadd.f32 0.0, %v2176
      %v2178 = vpop.f32.mrf.mxu0
      %v2179 = vadd.f32 0.0, %v2178
      %2180 = vmatmul.bf16.gmra.mxu0 %v2102
      %v2181 = vpop.f32.mrf.mxu0
      %v2182 = vadd.f32 0.0, %v2181
      %v2183 = vpop.f32.mrf.mxu0
      %v2184 = vadd.f32 0.0, %v2183
      %2185 = vmatmul.bf16.gmra.mxu0 %v2105
      %v2186 = vpop.f32.mrf.mxu0
      %v2187 = vadd.f32 0.0, %v2186
      %v2188 = vpop.f32.mrf.mxu0
      %v2189 = vadd.f32 0.0, %v2188
      %2190 = vmatmul.bf16.gmra.mxu0 %v2108
      %v2191 = vpop.f32.mrf.mxu0
      %v2192 = vadd.f32 0.0, %v2191
      %v2193 = vpop.f32.mrf.mxu0
      %v2194 = vadd.f32 0.0, %v2193
      %2195 = vmatmul.bf16.gmra.mxu0 %v2111
      %v2196 = vpop.f32.mrf.mxu0
      %v2197 = vadd.f32 0.0, %v2196
      %v2198 = vpop.f32.mrf.mxu0
      %v2199 = vadd.f32 0.0, %v2198
      %2200 = vmatmul.bf16.gmra.mxu0 %v2114
      %v2201 = vpop.f32.mrf.mxu0
      %v2202 = vadd.f32 0.0, %v2201
      %v2203 = vpop.f32.mrf.mxu0
      %v2204 = vadd.f32 0.0, %v2203
      %2205 = vmatmul.bf16.gmra.mxu0 %v2117
      %v2206 = vpop.f32.mrf.mxu0
      %v2207 = vadd.f32 0.0, %v2206
      %v2208 = vpop.f32.mrf.mxu0
      %v2209 = vadd.f32 0.0, %v2208
      %2210 = vmatmul.bf16.gmra.mxu0 %v2120
      %v2211 = vpop.f32.mrf.mxu0
      %v2212 = vadd.f32 0.0, %v2211
      %v2213 = vpop.f32.mrf.mxu0
      %v2214 = vadd.f32 0.0, %v2213
      %2215 = vmatmul.bf16.gmra.mxu0 %v2123
      %v2216 = vpop.f32.mrf.mxu0
      %v2217 = vadd.f32 0.0, %v2216
      %v2218 = vpop.f32.mrf.mxu0
      %v2219 = vadd.f32 0.0, %v2218
      %2220 = vmatmul.bf16.gmra.mxu0 %v2126
      %v2221 = vpop.f32.mrf.mxu0
      %v2222 = vadd.f32 0.0, %v2221
      %v2223 = vpop.f32.mrf.mxu0
      %v2224 = vadd.f32 0.0, %v2223
      %2225 = vmatmul.bf16.gmra.mxu0 %v2129
      %v2226 = vpop.f32.mrf.mxu0
      %v2227 = vadd.f32 0.0, %v2226
      %v2228 = vpop.f32.mrf.mxu0
      %v2229 = vadd.f32 0.0, %v2228
      %2230 = vmatmul.bf16.gmra.mxu0 %v2132
      %v2231 = vpop.f32.mrf.mxu0
      %v2232 = vadd.f32 0.0, %v2231
      %v2233 = vpop.f32.mrf.mxu0
      %v2234 = vadd.f32 0.0, %v2233
      %2235 = vdwg.mxu0
      %v2236 = vadd.f32 %v1988, %v2147
      %v2237 = vadd.f32 %v1989, %v2149
      %v2238 = vadd.f32 %v1990, %v2152
      %v2239 = vadd.f32 %v1991, %v2154
      %v2240 = vadd.f32 %v1992, %v2157
      %v2241 = vadd.f32 %v1993, %v2159
      %v2242 = vadd.f32 %v1994, %v2162
      %v2243 = vadd.f32 %v1995, %v2164
      %v2244 = vadd.f32 %v1996, %v2167
      %v2245 = vadd.f32 %v1997, %v2169
      %v2246 = vadd.f32 %v1998, %v2172
      %v2247 = vadd.f32 %v1999, %v2174
      %v2248 = vadd.f32 %v2000, %v2177
      %v2249 = vadd.f32 %v2001, %v2179
      %v2250 = vadd.f32 %v2002, %v2182
      %v2251 = vadd.f32 %v2003, %v2184
      %v2252 = vadd.f32 %v2004, %v2187
      %v2253 = vadd.f32 %v2005, %v2189
      %v2254 = vadd.f32 %v2006, %v2192
      %v2255 = vadd.f32 %v2007, %v2194
      %v2256 = vadd.f32 %v2008, %v2197
      %v2257 = vadd.f32 %v2009, %v2199
      %v2258 = vadd.f32 %v2010, %v2202
      %v2259 = vadd.f32 %v2011, %v2204
      %v2260 = vadd.f32 %v2012, %v2207
      %v2261 = vadd.f32 %v2013, %v2209
      %v2262 = vadd.f32 %v2014, %v2212
      %v2263 = vadd.f32 %v2015, %v2214
      %v2264 = vadd.f32 %v2016, %v2217
      %v2265 = vadd.f32 %v2017, %v2219
      %v2266 = vadd.f32 %v2018, %v2222
      %v2267 = vadd.f32 %v2019, %v2224
      %v2268 = vadd.f32 %v2020, %v2227
      %v2269 = vadd.f32 %v2021, %v2229
      %v2270 = vadd.f32 %v2022, %v2232
      %v2271 = vadd.f32 %v2023, %v2234
      %v2272 = vld [vmem:[%s597 + $0x25] sm:$0xff]
      %v2273 = vld [vmem:[%s597 + $0x2d] sm:$0xff]
      %v2274 = vld [vmem:[%s597 + $0x35] sm:$0xff]
      %v2275 = vld [vmem:[%s597 + $0x3d] sm:$0xff]
      %v2276 = vld [vmem:[%s597 + $0x45] sm:$0xff]
      %v2277 = vld [vmem:[%s597 + $0x4d] sm:$0xff]
      %v2278 = vld [vmem:[%s597 + $0x55] sm:$0xff]
      %v2279 = vld [vmem:[%s597 + $0x5d] sm:$0xff]
      %v2280 = vld [vmem:[%s597 + $0x65] sm:$0xff]
      %v2281 = vld [vmem:[%s597 + $0x6d] sm:$0xff]
      %v2282 = vld [vmem:[%s597 + $0x75] sm:$0xff]
      %v2283 = vld [vmem:[%s597 + $0x7d] sm:$0xff]
      %v2284 = vld [vmem:[%s597 + $0x85] sm:$0xff]
      %v2285 = vld [vmem:[%s597 + $0x8d] sm:$0xff]
      %v2286 = vld [vmem:[%s597 + $0x95] sm:$0xff]
      %v2287 = vld [vmem:[%s597 + $0x9d] sm:$0xff]
      %v2288 = vld [vmem:[%s597 + $0xa5] sm:$0xff]
      %v2289 = vld [vmem:[%s597 + $0xad] sm:$0xff]
      %v2290 = vld [vmem:[%s597 + $0xb5] sm:$0xff]
      %v2291 = vld [vmem:[%s597 + $0xbd] sm:$0xff]
      %v2292 = vld [vmem:[%s597 + $0xc5] sm:$0xff]
      %v2293 = vld [vmem:[%s597 + $0xcd] sm:$0xff]
      %v2294 = vld [vmem:[%s597 + $0xd5] sm:$0xff]
      %v2295 = vld [vmem:[%s597 + $0xdd] sm:$0xff]
      %v2296 = vld [vmem:[%s597 + $0xe5] sm:$0xff]
      %v2297 = vld [vmem:[%s597 + $0xed] sm:$0xff]
      %v2298 = vld [vmem:[%s597 + $0xf5] sm:$0xff]
      %v2299 = vld [vmem:[%s597 + $0xfd] sm:$0xff]
      %v2300 = vld [vmem:[%s597 + $0x105] sm:$0xff]
      %v2301 = vld [vmem:[%s597 + $0x10d] sm:$0xff]
      %v2302 = vld [vmem:[%s597 + $0x115] sm:$0xff]
      %v2303 = vld [vmem:[%s597 + $0x11d] sm:$0xff]
      %v2304 = vld [vmem:[%s597 + $0x125] sm:$0xff]
      %v2305 = vld [vmem:[%s597 + $0x12d] sm:$0xff]
      %v2306 = vld [vmem:[%s597 + $0x135] sm:$0xff]
      %v2307 = vld [vmem:[%s597 + $0x13d] sm:$0xff]
      %v2308 = vpack.c.bf16 %v2273, %v2272
      %v2309 = vpack.c.bf16 %v2275, %v2274
      %v2310 = vpack.c.bf16 %v2277, %v2276
      %v2311 = vpack.c.bf16 %v2279, %v2278
      %v2312 = vpack.c.bf16 %v2281, %v2280
      %v2313 = vpack.c.bf16 %v2283, %v2282
      %v2314 = vpack.c.bf16 %v2285, %v2284
      %v2315 = vpack.c.bf16 %v2287, %v2286
      %v2316 = vpack.c.bf16 %v2289, %v2288
      %v2317 = vpack.c.bf16 %v2291, %v2290
      %v2318 = vpack.c.bf16 %v2293, %v2292
      %v2319 = vpack.c.bf16 %v2295, %v2294
      %v2320 = vpack.c.bf16 %v2297, %v2296
      %v2321 = vpack.c.bf16 %v2299, %v2298
      %v2322 = vpack.c.bf16 %v2301, %v2300
      %v2323 = vpack.c.bf16 %v2303, %v2302
      %v2324 = vpack.c.bf16 %v2305, %v2304
      %v2325 = vpack.c.bf16 %v2307, %v2306
      %s2326 = scalar_lea.vmem %s1, 14
      %v2327 = vld [vmem:[%s2326] sm:$0x3]
      %v2329 = vsel %vm715, %v2308, 0
      %v2332 = vsel %vm715, %v2309, 0
      %v2335 = vsel %vm715, %v2310, 0
      %v2338 = vsel %vm715, %v2311, 0
      %v2341 = vsel %vm715, %v2312, 0
      %v2344 = vsel %vm715, %v2313, 0
      %v2347 = vsel %vm715, %v2314, 0
      %v2350 = vsel %vm715, %v2315, 0
      %v2353 = vsel %vm715, %v2316, 0
      %v2356 = vsel %vm715, %v2317, 0
      %v2359 = vsel %vm715, %v2318, 0
      %v2362 = vsel %vm715, %v2319, 0
      %v2365 = vsel %vm715, %v2320, 0
      %v2368 = vsel %vm715, %v2321, 0
      %v2371 = vsel %vm715, %v2322, 0
      %v2374 = vsel %vm715, %v2323, 0
      %v2377 = vsel %vm715, %v2324, 0
      %v2380 = vsel %vm715, %v2325, 0
      %v2383 = vand.u32 %v2327, %v773
      %2385 = vmatpush.bf16.msra.mxu0 0
      %2386 = vmatpush.bf16.msra.mxu0 0
      %2387 = vmatpush.bf16.msra.mxu0 0
      %2388 = vmatpush.bf16.msra.mxu0 0
      %2389 = vmatpush.bf16.msra.mxu0 0
      %2390 = vmatpush.bf16.msra.mxu0 0
      %2391 = vmatpush.bf16.msra.mxu0 0
      %2392 = vmatpush.bf16.msra.mxu0 %v2383
      %2393 = vmatmul.bf16.gmra.mxu0 %v2329
      %v2394 = vpop.f32.mrf.mxu0
      %v2395 = vadd.f32 0.0, %v2394
      %v2396 = vpop.f32.mrf.mxu0
      %v2397 = vadd.f32 0.0, %v2396
      %2398 = vmatmul.bf16.gmra.mxu0 %v2332
      %v2399 = vpop.f32.mrf.mxu0
      %v2400 = vadd.f32 0.0, %v2399
      %v2401 = vpop.f32.mrf.mxu0
      %v2402 = vadd.f32 0.0, %v2401
      %2403 = vmatmul.bf16.gmra.mxu0 %v2335
      %v2404 = vpop.f32.mrf.mxu0
      %v2405 = vadd.f32 0.0, %v2404
      %v2406 = vpop.f32.mrf.mxu0
      %v2407 = vadd.f32 0.0, %v2406
      %2408 = vmatmul.bf16.gmra.mxu0 %v2338
      %v2409 = vpop.f32.mrf.mxu0
      %v2410 = vadd.f32 0.0, %v2409
      %v2411 = vpop.f32.mrf.mxu0
      %v2412 = vadd.f32 0.0, %v2411
      %2413 = vmatmul.bf16.gmra.mxu0 %v2341
      %v2414 = vpop.f32.mrf.mxu0
      %v2415 = vadd.f32 0.0, %v2414
      %v2416 = vpop.f32.mrf.mxu0
      %v2417 = vadd.f32 0.0, %v2416
      %2418 = vmatmul.bf16.gmra.mxu0 %v2344
      %v2419 = vpop.f32.mrf.mxu0
      %v2420 = vadd.f32 0.0, %v2419
      %v2421 = vpop.f32.mrf.mxu0
      %v2422 = vadd.f32 0.0, %v2421
      %2423 = vmatmul.bf16.gmra.mxu0 %v2347
      %v2424 = vpop.f32.mrf.mxu0
      %v2425 = vadd.f32 0.0, %v2424
      %v2426 = vpop.f32.mrf.mxu0
      %v2427 = vadd.f32 0.0, %v2426
      %2428 = vmatmul.bf16.gmra.mxu0 %v2350
      %v2429 = vpop.f32.mrf.mxu0
      %v2430 = vadd.f32 0.0, %v2429
      %v2431 = vpop.f32.mrf.mxu0
      %v2432 = vadd.f32 0.0, %v2431
      %2433 = vmatmul.bf16.gmra.mxu0 %v2353
      %v2434 = vpop.f32.mrf.mxu0
      %v2435 = vadd.f32 0.0, %v2434
      %v2436 = vpop.f32.mrf.mxu0
      %v2437 = vadd.f32 0.0, %v2436
      %2438 = vmatmul.bf16.gmra.mxu0 %v2356
      %v2439 = vpop.f32.mrf.mxu0
      %v2440 = vadd.f32 0.0, %v2439
      %v2441 = vpop.f32.mrf.mxu0
      %v2442 = vadd.f32 0.0, %v2441
      %2443 = vmatmul.bf16.gmra.mxu0 %v2359
      %v2444 = vpop.f32.mrf.mxu0
      %v2445 = vadd.f32 0.0, %v2444
      %v2446 = vpop.f32.mrf.mxu0
      %v2447 = vadd.f32 0.0, %v2446
      %2448 = vmatmul.bf16.gmra.mxu0 %v2362
      %v2449 = vpop.f32.mrf.mxu0
      %v2450 = vadd.f32 0.0, %v2449
      %v2451 = vpop.f32.mrf.mxu0
      %v2452 = vadd.f32 0.0, %v2451
      %2453 = vmatmul.bf16.gmra.mxu0 %v2365
      %v2454 = vpop.f32.mrf.mxu0
      %v2455 = vadd.f32 0.0, %v2454
      %v2456 = vpop.f32.mrf.mxu0
      %v2457 = vadd.f32 0.0, %v2456
      %2458 = vmatmul.bf16.gmra.mxu0 %v2368
      %v2459 = vpop.f32.mrf.mxu0
      %v2460 = vadd.f32 0.0, %v2459
      %v2461 = vpop.f32.mrf.mxu0
      %v2462 = vadd.f32 0.0, %v2461
      %2463 = vmatmul.bf16.gmra.mxu0 %v2371
      %v2464 = vpop.f32.mrf.mxu0
      %v2465 = vadd.f32 0.0, %v2464
      %v2466 = vpop.f32.mrf.mxu0
      %v2467 = vadd.f32 0.0, %v2466
      %2468 = vmatmul.bf16.gmra.mxu0 %v2374
      %v2469 = vpop.f32.mrf.mxu0
      %v2470 = vadd.f32 0.0, %v2469
      %v2471 = vpop.f32.mrf.mxu0
      %v2472 = vadd.f32 0.0, %v2471
      %2473 = vmatmul.bf16.gmra.mxu0 %v2377
      %v2474 = vpop.f32.mrf.mxu0
      %v2475 = vadd.f32 0.0, %v2474
      %v2476 = vpop.f32.mrf.mxu0
      %v2477 = vadd.f32 0.0, %v2476
      %2478 = vmatmul.bf16.gmra.mxu0 %v2380
      %v2479 = vpop.f32.mrf.mxu0
      %v2480 = vadd.f32 0.0, %v2479
      %v2481 = vpop.f32.mrf.mxu0
      %v2482 = vadd.f32 0.0, %v2481
      %2483 = vdwg.mxu0
      %v2484 = vadd.f32 %v2236, %v2395
      %v2485 = vadd.f32 %v2237, %v2397
      %v2486 = vadd.f32 %v2238, %v2400
      %v2487 = vadd.f32 %v2239, %v2402
      %v2488 = vadd.f32 %v2240, %v2405
      %v2489 = vadd.f32 %v2241, %v2407
      %v2490 = vadd.f32 %v2242, %v2410
      %v2491 = vadd.f32 %v2243, %v2412
      %v2492 = vadd.f32 %v2244, %v2415
      %v2493 = vadd.f32 %v2245, %v2417
      %v2494 = vadd.f32 %v2246, %v2420
      %v2495 = vadd.f32 %v2247, %v2422
      %v2496 = vadd.f32 %v2248, %v2425
      %v2497 = vadd.f32 %v2249, %v2427
      %v2498 = vadd.f32 %v2250, %v2430
      %v2499 = vadd.f32 %v2251, %v2432
      %v2500 = vadd.f32 %v2252, %v2435
      %v2501 = vadd.f32 %v2253, %v2437
      %v2502 = vadd.f32 %v2254, %v2440
      %v2503 = vadd.f32 %v2255, %v2442
      %v2504 = vadd.f32 %v2256, %v2445
      %v2505 = vadd.f32 %v2257, %v2447
      %v2506 = vadd.f32 %v2258, %v2450
      %v2507 = vadd.f32 %v2259, %v2452
      %v2508 = vadd.f32 %v2260, %v2455
      %v2509 = vadd.f32 %v2261, %v2457
      %v2510 = vadd.f32 %v2262, %v2460
      %v2511 = vadd.f32 %v2263, %v2462
      %v2512 = vadd.f32 %v2264, %v2465
      %v2513 = vadd.f32 %v2265, %v2467
      %v2514 = vadd.f32 %v2266, %v2470
      %v2515 = vadd.f32 %v2267, %v2472
      %v2516 = vadd.f32 %v2268, %v2475
      %v2517 = vadd.f32 %v2269, %v2477
      %v2518 = vadd.f32 %v2270, %v2480
      %v2519 = vadd.f32 %v2271, %v2482
      %v2520 = vld [vmem:[%s597 + $0x26] sm:$0xff]
      %v2521 = vld [vmem:[%s597 + $0x2e] sm:$0xff]
      %v2522 = vld [vmem:[%s597 + $0x36] sm:$0xff]
      %v2523 = vld [vmem:[%s597 + $0x3e] sm:$0xff]
      %v2524 = vld [vmem:[%s597 + $0x46] sm:$0xff]
      %v2525 = vld [vmem:[%s597 + $0x4e] sm:$0xff]
      %v2526 = vld [vmem:[%s597 + $0x56] sm:$0xff]
      %v2527 = vld [vmem:[%s597 + $0x5e] sm:$0xff]
      %v2528 = vld [vmem:[%s597 + $0x66] sm:$0xff]
      %v2529 = vld [vmem:[%s597 + $0x6e] sm:$0xff]
      %v2530 = vld [vmem:[%s597 + $0x76] sm:$0xff]
      %v2531 = vld [vmem:[%s597 + $0x7e] sm:$0xff]
      %v2532 = vld [vmem:[%s597 + $0x86] sm:$0xff]
      %v2533 = vld [vmem:[%s597 + $0x8e] sm:$0xff]
      %v2534 = vld [vmem:[%s597 + $0x96] sm:$0xff]
      %v2535 = vld [vmem:[%s597 + $0x9e] sm:$0xff]
      %v2536 = vld [vmem:[%s597 + $0xa6] sm:$0xff]
      %v2537 = vld [vmem:[%s597 + $0xae] sm:$0xff]
      %v2538 = vld [vmem:[%s597 + $0xb6] sm:$0xff]
      %v2539 = vld [vmem:[%s597 + $0xbe] sm:$0xff]
      %v2540 = vld [vmem:[%s597 + $0xc6] sm:$0xff]
      %v2541 = vld [vmem:[%s597 + $0xce] sm:$0xff]
      %v2542 = vld [vmem:[%s597 + $0xd6] sm:$0xff]
      %v2543 = vld [vmem:[%s597 + $0xde] sm:$0xff]
      %v2544 = vld [vmem:[%s597 + $0xe6] sm:$0xff]
      %v2545 = vld [vmem:[%s597 + $0xee] sm:$0xff]
      %v2546 = vld [vmem:[%s597 + $0xf6] sm:$0xff]
      %v2547 = vld [vmem:[%s597 + $0xfe] sm:$0xff]
      %v2548 = vld [vmem:[%s597 + $0x106] sm:$0xff]
      %v2549 = vld [vmem:[%s597 + $0x10e] sm:$0xff]
      %v2550 = vld [vmem:[%s597 + $0x116] sm:$0xff]
      %v2551 = vld [vmem:[%s597 + $0x11e] sm:$0xff]
      %v2552 = vld [vmem:[%s597 + $0x126] sm:$0xff]
      %v2553 = vld [vmem:[%s597 + $0x12e] sm:$0xff]
      %v2554 = vld [vmem:[%s597 + $0x136] sm:$0xff]
      %v2555 = vld [vmem:[%s597 + $0x13e] sm:$0xff]
      %v2556 = vpack.c.bf16 %v2521, %v2520
      %v2557 = vpack.c.bf16 %v2523, %v2522
      %v2558 = vpack.c.bf16 %v2525, %v2524
      %v2559 = vpack.c.bf16 %v2527, %v2526
      %v2560 = vpack.c.bf16 %v2529, %v2528
      %v2561 = vpack.c.bf16 %v2531, %v2530
      %v2562 = vpack.c.bf16 %v2533, %v2532
      %v2563 = vpack.c.bf16 %v2535, %v2534
      %v2564 = vpack.c.bf16 %v2537, %v2536
      %v2565 = vpack.c.bf16 %v2539, %v2538
      %v2566 = vpack.c.bf16 %v2541, %v2540
      %v2567 = vpack.c.bf16 %v2543, %v2542
      %v2568 = vpack.c.bf16 %v2545, %v2544
      %v2569 = vpack.c.bf16 %v2547, %v2546
      %v2570 = vpack.c.bf16 %v2549, %v2548
      %v2571 = vpack.c.bf16 %v2551, %v2550
      %v2572 = vpack.c.bf16 %v2553, %v2552
      %v2573 = vpack.c.bf16 %v2555, %v2554
      %s2574 = scalar_lea.vmem %s1, 16
      %v2575 = vld [vmem:[%s2574] sm:$0x3]
      %v2577 = vsel %vm715, %v2556, 0
      %v2580 = vsel %vm715, %v2557, 0
      %v2583 = vsel %vm715, %v2558, 0
      %v2586 = vsel %vm715, %v2559, 0
      %v2589 = vsel %vm715, %v2560, 0
      %v2592 = vsel %vm715, %v2561, 0
      %v2595 = vsel %vm715, %v2562, 0
      %v2598 = vsel %vm715, %v2563, 0
      %v2601 = vsel %vm715, %v2564, 0
      %v2604 = vsel %vm715, %v2565, 0
      %v2607 = vsel %vm715, %v2566, 0
      %v2610 = vsel %vm715, %v2567, 0
      %v2613 = vsel %vm715, %v2568, 0
      %v2616 = vsel %vm715, %v2569, 0
      %v2619 = vsel %vm715, %v2570, 0
      %v2622 = vsel %vm715, %v2571, 0
      %v2625 = vsel %vm715, %v2572, 0
      %v2628 = vsel %vm715, %v2573, 0
      %v2631 = vand.u32 %v2575, %v773
      %2633 = vmatpush.bf16.msra.mxu0 0
      %2634 = vmatpush.bf16.msra.mxu0 0
      %2635 = vmatpush.bf16.msra.mxu0 0
      %2636 = vmatpush.bf16.msra.mxu0 0
      %2637 = vmatpush.bf16.msra.mxu0 0
      %2638 = vmatpush.bf16.msra.mxu0 0
      %2639 = vmatpush.bf16.msra.mxu0 0
      %2640 = vmatpush.bf16.msra.mxu0 %v2631
      %2641 = vmatmul.bf16.gmra.mxu0 %v2577
      %v2642 = vpop.f32.mrf.mxu0
      %v2643 = vadd.f32 0.0, %v2642
      %v2644 = vpop.f32.mrf.mxu0
      %v2645 = vadd.f32 0.0, %v2644
      %2646 = vmatmul.bf16.gmra.mxu0 %v2580
      %v2647 = vpop.f32.mrf.mxu0
      %v2648 = vadd.f32 0.0, %v2647
      %v2649 = vpop.f32.mrf.mxu0
      %v2650 = vadd.f32 0.0, %v2649
      %2651 = vmatmul.bf16.gmra.mxu0 %v2583
      %v2652 = vpop.f32.mrf.mxu0
      %v2653 = vadd.f32 0.0, %v2652
      %v2654 = vpop.f32.mrf.mxu0
      %v2655 = vadd.f32 0.0, %v2654
      %2656 = vmatmul.bf16.gmra.mxu0 %v2586
      %v2657 = vpop.f32.mrf.mxu0
      %v2658 = vadd.f32 0.0, %v2657
      %v2659 = vpop.f32.mrf.mxu0
      %v2660 = vadd.f32 0.0, %v2659
      %2661 = vmatmul.bf16.gmra.mxu0 %v2589
      %v2662 = vpop.f32.mrf.mxu0
      %v2663 = vadd.f32 0.0, %v2662
      %v2664 = vpop.f32.mrf.mxu0
      %v2665 = vadd.f32 0.0, %v2664
      %2666 = vmatmul.bf16.gmra.mxu0 %v2592
      %v2667 = vpop.f32.mrf.mxu0
      %v2668 = vadd.f32 0.0, %v2667
      %v2669 = vpop.f32.mrf.mxu0
      %v2670 = vadd.f32 0.0, %v2669
      %2671 = vmatmul.bf16.gmra.mxu0 %v2595
      %v2672 = vpop.f32.mrf.mxu0
      %v2673 = vadd.f32 0.0, %v2672
      %v2674 = vpop.f32.mrf.mxu0
      %v2675 = vadd.f32 0.0, %v2674
      %2676 = vmatmul.bf16.gmra.mxu0 %v2598
      %v2677 = vpop.f32.mrf.mxu0
      %v2678 = vadd.f32 0.0, %v2677
      %v2679 = vpop.f32.mrf.mxu0
      %v2680 = vadd.f32 0.0, %v2679
      %2681 = vmatmul.bf16.gmra.mxu0 %v2601
      %v2682 = vpop.f32.mrf.mxu0
      %v2683 = vadd.f32 0.0, %v2682
      %v2684 = vpop.f32.mrf.mxu0
      %v2685 = vadd.f32 0.0, %v2684
      %2686 = vmatmul.bf16.gmra.mxu0 %v2604
      %v2687 = vpop.f32.mrf.mxu0
      %v2688 = vadd.f32 0.0, %v2687
      %v2689 = vpop.f32.mrf.mxu0
      %v2690 = vadd.f32 0.0, %v2689
      %2691 = vmatmul.bf16.gmra.mxu0 %v2607
      %v2692 = vpop.f32.mrf.mxu0
      %v2693 = vadd.f32 0.0, %v2692
      %v2694 = vpop.f32.mrf.mxu0
      %v2695 = vadd.f32 0.0, %v2694
      %2696 = vmatmul.bf16.gmra.mxu0 %v2610
      %v2697 = vpop.f32.mrf.mxu0
      %v2698 = vadd.f32 0.0, %v2697
      %v2699 = vpop.f32.mrf.mxu0
      %v2700 = vadd.f32 0.0, %v2699
      %2701 = vmatmul.bf16.gmra.mxu0 %v2613
      %v2702 = vpop.f32.mrf.mxu0
      %v2703 = vadd.f32 0.0, %v2702
      %v2704 = vpop.f32.mrf.mxu0
      %v2705 = vadd.f32 0.0, %v2704
      %2706 = vmatmul.bf16.gmra.mxu0 %v2616
      %v2707 = vpop.f32.mrf.mxu0
      %v2708 = vadd.f32 0.0, %v2707
      %v2709 = vpop.f32.mrf.mxu0
      %v2710 = vadd.f32 0.0, %v2709
      %2711 = vmatmul.bf16.gmra.mxu0 %v2619
      %v2712 = vpop.f32.mrf.mxu0
      %v2713 = vadd.f32 0.0, %v2712
      %v2714 = vpop.f32.mrf.mxu0
      %v2715 = vadd.f32 0.0, %v2714
      %2716 = vmatmul.bf16.gmra.mxu0 %v2622
      %v2717 = vpop.f32.mrf.mxu0
      %v2718 = vadd.f32 0.0, %v2717
      %v2719 = vpop.f32.mrf.mxu0
      %v2720 = vadd.f32 0.0, %v2719
      %2721 = vmatmul.bf16.gmra.mxu0 %v2625
      %v2722 = vpop.f32.mrf.mxu0
      %v2723 = vadd.f32 0.0, %v2722
      %v2724 = vpop.f32.mrf.mxu0
      %v2725 = vadd.f32 0.0, %v2724
      %2726 = vmatmul.bf16.gmra.mxu0 %v2628
      %v2727 = vpop.f32.mrf.mxu0
      %v2728 = vadd.f32 0.0, %v2727
      %v2729 = vpop.f32.mrf.mxu0
      %v2730 = vadd.f32 0.0, %v2729
      %2731 = vdwg.mxu0
      %v2732 = vadd.f32 %v2484, %v2643
      %v2733 = vadd.f32 %v2485, %v2645
      %v2734 = vadd.f32 %v2486, %v2648
      %v2735 = vadd.f32 %v2487, %v2650
      %v2736 = vadd.f32 %v2488, %v2653
      %v2737 = vadd.f32 %v2489, %v2655
      %v2738 = vadd.f32 %v2490, %v2658
      %v2739 = vadd.f32 %v2491, %v2660
      %v2740 = vadd.f32 %v2492, %v2663
      %v2741 = vadd.f32 %v2493, %v2665
      %v2742 = vadd.f32 %v2494, %v2668
      %v2743 = vadd.f32 %v2495, %v2670
      %v2744 = vadd.f32 %v2496, %v2673
      %v2745 = vadd.f32 %v2497, %v2675
      %v2746 = vadd.f32 %v2498, %v2678
      %v2747 = vadd.f32 %v2499, %v2680
      %v2748 = vadd.f32 %v2500, %v2683
      %v2749 = vadd.f32 %v2501, %v2685
      %v2750 = vadd.f32 %v2502, %v2688
      %v2751 = vadd.f32 %v2503, %v2690
      %v2752 = vadd.f32 %v2504, %v2693
      %v2753 = vadd.f32 %v2505, %v2695
      %v2754 = vadd.f32 %v2506, %v2698
      %v2755 = vadd.f32 %v2507, %v2700
      %v2756 = vadd.f32 %v2508, %v2703
      %v2757 = vadd.f32 %v2509, %v2705
      %v2758 = vadd.f32 %v2510, %v2708
      %v2759 = vadd.f32 %v2511, %v2710
      %v2760 = vadd.f32 %v2512, %v2713
      %v2761 = vadd.f32 %v2513, %v2715
      %v2762 = vadd.f32 %v2514, %v2718
      %v2763 = vadd.f32 %v2515, %v2720
      %v2764 = vadd.f32 %v2516, %v2723
      %v2765 = vadd.f32 %v2517, %v2725
      %v2766 = vadd.f32 %v2518, %v2728
      %v2767 = vadd.f32 %v2519, %v2730
      %v2768 = vld [vmem:[%s2] sm:$0x1]
      %v2770 = vperm.slane %v2768, 0
      %v2772 = vadd.f32 %v2732, %v2770
      %v2773 = vadd.f32 %v2733, %v2770
      %v2774 = vadd.f32 %v2734, %v2770
      %v2775 = vadd.f32 %v2735, %v2770
      %v2776 = vadd.f32 %v2736, %v2770
      %v2777 = vadd.f32 %v2737, %v2770
      %v2778 = vadd.f32 %v2738, %v2770
      %v2779 = vadd.f32 %v2739, %v2770
      %v2780 = vadd.f32 %v2740, %v2770
      %v2781 = vadd.f32 %v2741, %v2770
      %v2782 = vadd.f32 %v2742, %v2770
      %v2783 = vadd.f32 %v2743, %v2770
      %v2784 = vadd.f32 %v2744, %v2770
      %v2785 = vadd.f32 %v2745, %v2770
      %v2786 = vadd.f32 %v2746, %v2770
      %v2787 = vadd.f32 %v2747, %v2770
      %v2788 = vadd.f32 %v2748, %v2770
      %v2789 = vadd.f32 %v2749, %v2770
      %v2790 = vadd.f32 %v2750, %v2770
      %v2791 = vadd.f32 %v2751, %v2770
      %v2792 = vadd.f32 %v2752, %v2770
      %v2793 = vadd.f32 %v2753, %v2770
      %v2794 = vadd.f32 %v2754, %v2770
      %v2795 = vadd.f32 %v2755, %v2770
      %v2796 = vadd.f32 %v2756, %v2770
      %v2797 = vadd.f32 %v2757, %v2770
      %v2798 = vadd.f32 %v2758, %v2770
      %v2799 = vadd.f32 %v2759, %v2770
      %v2800 = vadd.f32 %v2760, %v2770
      %v2801 = vadd.f32 %v2761, %v2770
      %v2802 = vadd.f32 %v2762, %v2770
      %v2803 = vadd.f32 %v2763, %v2770
      %v2804 = vadd.f32 %v2764, %v2770
      %v2805 = vadd.f32 %v2765, %v2770
      %v2806 = vadd.f32 %v2766, %v2770
      %v2807 = vadd.f32 %v2767, %v2770
      %v2808 = vmax.f32 %v2772, 0.0
      %v2809 = vmax.f32 %v2773, 0.0
      %v2810 = vmax.f32 %v2774, 0.0
      %v2811 = vmax.f32 %v2775, 0.0
      %v2812 = vmax.f32 %v2776, 0.0
      %v2813 = vmax.f32 %v2777, 0.0
      %v2814 = vmax.f32 %v2778, 0.0
      %v2815 = vmax.f32 %v2779, 0.0
      %v2816 = vmax.f32 %v2780, 0.0
      %v2817 = vmax.f32 %v2781, 0.0
      %v2818 = vmax.f32 %v2782, 0.0
      %v2819 = vmax.f32 %v2783, 0.0
      %v2820 = vmax.f32 %v2784, 0.0
      %v2821 = vmax.f32 %v2785, 0.0
      %v2822 = vmax.f32 %v2786, 0.0
      %v2823 = vmax.f32 %v2787, 0.0
      %v2824 = vmax.f32 %v2788, 0.0
      %v2825 = vmax.f32 %v2789, 0.0
      %v2826 = vmax.f32 %v2790, 0.0
      %v2827 = vmax.f32 %v2791, 0.0
      %v2828 = vmax.f32 %v2792, 0.0
      %v2829 = vmax.f32 %v2793, 0.0
      %v2830 = vmax.f32 %v2794, 0.0
      %v2831 = vmax.f32 %v2795, 0.0
      %v2832 = vmax.f32 %v2796, 0.0
      %v2833 = vmax.f32 %v2797, 0.0
      %v2834 = vmax.f32 %v2798, 0.0
      %v2835 = vmax.f32 %v2799, 0.0
      %v2836 = vmax.f32 %v2800, 0.0
      %v2837 = vmax.f32 %v2801, 0.0
      %v2838 = vmax.f32 %v2802, 0.0
      %v2839 = vmax.f32 %v2803, 0.0
      %v2840 = vmax.f32 %v2804, 0.0
      %v2841 = vmax.f32 %v2805, 0.0
      %v2842 = vmax.f32 %v2806, 0.0
      %v2843 = vmax.f32 %v2807, 0.0
      %v2844 = vld [vmem:[%s3] sm:$0xff]
      %v2845 = vld [vmem:[%s3 + $0x8] sm:$0xff]
      %v2846 = vld [vmem:[%s3 + $0x10] sm:$0xff]
      %v2847 = vld [vmem:[%s3 + $0x18] sm:$0xff]
      %v2848 = vld [vmem:[%s3 + $0x20] sm:$0xff]
      %v2849 = vld [vmem:[%s3 + $0x28] sm:$0xff]
      %v2850 = vld [vmem:[%s3 + $0x30] sm:$0xff]
      %v2851 = vld [vmem:[%s3 + $0x38] sm:$0xff]
      %v2852 = vld [vmem:[%s3 + $0x40] sm:$0xff]
      %v2853 = vld [vmem:[%s3 + $0x48] sm:$0xff]
      %v2854 = vld [vmem:[%s3 + $0x50] sm:$0xff]
      %v2855 = vld [vmem:[%s3 + $0x58] sm:$0xff]
      %v2856 = vld [vmem:[%s3 + $0x60] sm:$0xff]
      %v2857 = vld [vmem:[%s3 + $0x68] sm:$0xff]
      %v2858 = vld [vmem:[%s3 + $0x70] sm:$0xff]
      %v2859 = vld [vmem:[%s3 + $0x78] sm:$0xff]
      %v2860 = vld [vmem:[%s3 + $0x80] sm:$0xff]
      %v2861 = vld [vmem:[%s3 + $0x88] sm:$0xff]
      %v2862 = vld [vmem:[%s3 + $0x90] sm:$0xff]
      %v2863 = vld [vmem:[%s3 + $0x98] sm:$0xff]
      %v2864 = vld [vmem:[%s3 + $0xa0] sm:$0xff]
      %v2865 = vld [vmem:[%s3 + $0xa8] sm:$0xff]
      %v2866 = vld [vmem:[%s3 + $0xb0] sm:$0xff]
      %v2867 = vld [vmem:[%s3 + $0xb8] sm:$0xff]
      %v2868 = vld [vmem:[%s3 + $0xc0] sm:$0xff]
      %v2869 = vld [vmem:[%s3 + $0xc8] sm:$0xff]
      %v2870 = vld [vmem:[%s3 + $0xd0] sm:$0xff]
      %v2871 = vld [vmem:[%s3 + $0xd8] sm:$0xff]
      %v2872 = vld [vmem:[%s3 + $0xe0] sm:$0xff]
      %v2873 = vld [vmem:[%s3 + $0xe8] sm:$0xff]
      %v2874 = vld [vmem:[%s3 + $0xf0] sm:$0xff]
      %v2875 = vld [vmem:[%s3 + $0xf8] sm:$0xff]
      %v2876 = vld [vmem:[%s3 + $0x100] sm:$0xff]
      %v2877 = vld [vmem:[%s3 + $0x108] sm:$0xff]
      %v2878 = vld [vmem:[%s3 + $0x110] sm:$0xff]
      %v2879 = vld [vmem:[%s3 + $0x118] sm:$0xff]
      %2881 = vset.pattern.permute.xlu0 0
      %2882 = vperm.xlu0 %2881, %v2844
      %v2883 = vpop.permute.xlu0 %2882
      %2886 = vset.pattern.permute.xlu0 0
      %2887 = vperm.xlu0 %2886, %v2845
      %v2888 = vpop.permute.xlu0 %2887
      %2891 = vset.pattern.permute.xlu0 0
      %2892 = vperm.xlu0 %2891, %v2846
      %v2893 = vpop.permute.xlu0 %2892
      %2896 = vset.pattern.permute.xlu0 0
      %2897 = vperm.xlu0 %2896, %v2847
      %v2898 = vpop.permute.xlu0 %2897
      %2901 = vset.pattern.permute.xlu0 0
      %2902 = vperm.xlu0 %2901, %v2848
      %v2903 = vpop.permute.xlu0 %2902
      %2906 = vset.pattern.permute.xlu0 0
      %2907 = vperm.xlu0 %2906, %v2849
      %v2908 = vpop.permute.xlu0 %2907
      %2911 = vset.pattern.permute.xlu0 0
      %2912 = vperm.xlu0 %2911, %v2850
      %v2913 = vpop.permute.xlu0 %2912
      %2916 = vset.pattern.permute.xlu0 0
      %2917 = vperm.xlu0 %2916, %v2851
      %v2918 = vpop.permute.xlu0 %2917
      %2921 = vset.pattern.permute.xlu0 0
      %2922 = vperm.xlu0 %2921, %v2852
      %v2923 = vpop.permute.xlu0 %2922
      %2926 = vset.pattern.permute.xlu0 0
      %2927 = vperm.xlu0 %2926, %v2853
      %v2928 = vpop.permute.xlu0 %2927
      %2931 = vset.pattern.permute.xlu0 0
      %2932 = vperm.xlu0 %2931, %v2854
      %v2933 = vpop.permute.xlu0 %2932
      %2936 = vset.pattern.permute.xlu0 0
      %2937 = vperm.xlu0 %2936, %v2855
      %v2938 = vpop.permute.xlu0 %2937
      %2941 = vset.pattern.permute.xlu0 0
      %2942 = vperm.xlu0 %2941, %v2856
      %v2943 = vpop.permute.xlu0 %2942
      %2946 = vset.pattern.permute.xlu0 0
      %2947 = vperm.xlu0 %2946, %v2857
      %v2948 = vpop.permute.xlu0 %2947
      %2951 = vset.pattern.permute.xlu0 0
      %2952 = vperm.xlu0 %2951, %v2858
      %v2953 = vpop.permute.xlu0 %2952
      %2956 = vset.pattern.permute.xlu0 0
      %2957 = vperm.xlu0 %2956, %v2859
      %v2958 = vpop.permute.xlu0 %2957
      %2961 = vset.pattern.permute.xlu0 0
      %2962 = vperm.xlu0 %2961, %v2860
      %v2963 = vpop.permute.xlu0 %2962
      %2966 = vset.pattern.permute.xlu0 0
      %2967 = vperm.xlu0 %2966, %v2861
      %v2968 = vpop.permute.xlu0 %2967
      %2971 = vset.pattern.permute.xlu0 0
      %2972 = vperm.xlu0 %2971, %v2862
      %v2973 = vpop.permute.xlu0 %2972
      %2976 = vset.pattern.permute.xlu0 0
      %2977 = vperm.xlu0 %2976, %v2863
      %v2978 = vpop.permute.xlu0 %2977
      %2981 = vset.pattern.permute.xlu0 0
      %2982 = vperm.xlu0 %2981, %v2864
      %v2983 = vpop.permute.xlu0 %2982
      %2986 = vset.pattern.permute.xlu0 0
      %2987 = vperm.xlu0 %2986, %v2865
      %v2988 = vpop.permute.xlu0 %2987
      %2991 = vset.pattern.permute.xlu0 0
      %2992 = vperm.xlu0 %2991, %v2866
      %v2993 = vpop.permute.xlu0 %2992
      %2996 = vset.pattern.permute.xlu0 0
      %2997 = vperm.xlu0 %2996, %v2867
      %v2998 = vpop.permute.xlu0 %2997
      %3001 = vset.pattern.permute.xlu0 0
      %3002 = vperm.xlu0 %3001, %v2868
      %v3003 = vpop.permute.xlu0 %3002
      %3006 = vset.pattern.permute.xlu0 0
      %3007 = vperm.xlu0 %3006, %v2869
      %v3008 = vpop.permute.xlu0 %3007
      %3011 = vset.pattern.permute.xlu0 0
      %3012 = vperm.xlu0 %3011, %v2870
      %v3013 = vpop.permute.xlu0 %3012
      %3016 = vset.pattern.permute.xlu0 0
      %3017 = vperm.xlu0 %3016, %v2871
      %v3018 = vpop.permute.xlu0 %3017
      %3021 = vset.pattern.permute.xlu0 0
      %3022 = vperm.xlu0 %3021, %v2872
      %v3023 = vpop.permute.xlu0 %3022
      %3026 = vset.pattern.permute.xlu0 0
      %3027 = vperm.xlu0 %3026, %v2873
      %v3028 = vpop.permute.xlu0 %3027
      %3031 = vset.pattern.permute.xlu0 0
      %3032 = vperm.xlu0 %3031, %v2874
      %v3033 = vpop.permute.xlu0 %3032
      %3036 = vset.pattern.permute.xlu0 0
      %3037 = vperm.xlu0 %3036, %v2875
      %v3038 = vpop.permute.xlu0 %3037
      %3041 = vset.pattern.permute.xlu0 0
      %3042 = vperm.xlu0 %3041, %v2876
      %v3043 = vpop.permute.xlu0 %3042
      %3046 = vset.pattern.permute.xlu0 0
      %3047 = vperm.xlu0 %3046, %v2877
      %v3048 = vpop.permute.xlu0 %3047
      %3051 = vset.pattern.permute.xlu0 0
      %3052 = vperm.xlu0 %3051, %v2878
      %v3053 = vpop.permute.xlu0 %3052
      %3056 = vset.pattern.permute.xlu0 0
      %3057 = vperm.xlu0 %3056, %v2879
      %v3058 = vpop.permute.xlu0 %3057
      %v3060 = vmul.f32 %v2808, %v2883
      %v3061 = vmul.f32 %v2809, %v2888
      %v3062 = vmul.f32 %v2810, %v2893
      %v3063 = vmul.f32 %v2811, %v2898
      %v3064 = vmul.f32 %v2812, %v2903
      %v3065 = vmul.f32 %v2813, %v2908
      %v3066 = vmul.f32 %v2814, %v2913
      %v3067 = vmul.f32 %v2815, %v2918
      %v3068 = vmul.f32 %v2816, %v2923
      %v3069 = vmul.f32 %v2817, %v2928
      %v3070 = vmul.f32 %v2818, %v2933
      %v3071 = vmul.f32 %v2819, %v2938
      %v3072 = vmul.f32 %v2820, %v2943
      %v3073 = vmul.f32 %v2821, %v2948
      %v3074 = vmul.f32 %v2822, %v2953
      %v3075 = vmul.f32 %v2823, %v2958
      %v3076 = vmul.f32 %v2824, %v2963
      %v3077 = vmul.f32 %v2825, %v2968
      %v3078 = vmul.f32 %v2826, %v2973
      %v3079 = vmul.f32 %v2827, %v2978
      %v3080 = vmul.f32 %v2828, %v2983
      %v3081 = vmul.f32 %v2829, %v2988
      %v3082 = vmul.f32 %v2830, %v2993
      %v3083 = vmul.f32 %v2831, %v2998
      %v3084 = vmul.f32 %v2832, %v3003
      %v3085 = vmul.f32 %v2833, %v3008
      %v3086 = vmul.f32 %v2834, %v3013
      %v3087 = vmul.f32 %v2835, %v3018
      %v3088 = vmul.f32 %v2836, %v3023
      %v3089 = vmul.f32 %v2837, %v3028
      %v3090 = vmul.f32 %v2838, %v3033
      %v3091 = vmul.f32 %v2839, %v3038
      %v3092 = vmul.f32 %v2840, %v3043
      %v3093 = vmul.f32 %v2841, %v3048
      %v3094 = vmul.f32 %v2842, %v3053
      %v3095 = vmul.f32 %v2843, %v3058
      %vm3096 = vcmask 64512
      %3097 = vst.msk [vmem:[#allocation2] sm:$0xff] %vm3096, 0.0
      %3098 = vst.msk [vmem:[#allocation2 + $0x8] sm:$0xff] %vm3096, 0.0
      %vm3099 = vcmask 59392
      %3100 = vst.msk [vmem:[#allocation2 + $0x10] sm:$0x7] %vm3099, 0.0
      %3101 = vst.msk [vmem:[#allocation2 + $0x13] sm:$0xff] %vm3096, %v3060
      %3102 = vst.msk [vmem:[#allocation2 + $0x1b] sm:$0xff] %vm3096, %v3061
      %3103 = vst.msk [vmem:[#allocation2 + $0x23] sm:$0xff] %vm3096, %v3062
      %3104 = vst.msk [vmem:[#allocation2 + $0x2b] sm:$0xff] %vm3096, %v3063
      %3105 = vst.msk [vmem:[#allocation2 + $0x33] sm:$0xff] %vm3096, %v3064
      %3106 = vst.msk [vmem:[#allocation2 + $0x3b] sm:$0xff] %vm3096, %v3065
      %3107 = vst.msk [vmem:[#allocation2 + $0x43] sm:$0xff] %vm3096, %v3066
      %3108 = vst.msk [vmem:[#allocation2 + $0x4b] sm:$0xff] %vm3096, %v3067
      %3109 = vst.msk [vmem:[#allocation2 + $0x53] sm:$0xff] %vm3096, %v3068
      %3110 = vst.msk [vmem:[#allocation2 + $0x5b] sm:$0xff] %vm3096, %v3069
      %3111 = vst.msk [vmem:[#allocation2 + $0x63] sm:$0xff] %vm3096, %v3070
      %3112 = vst.msk [vmem:[#allocation2 + $0x6b] sm:$0xff] %vm3096, %v3071
      %3113 = vst.msk [vmem:[#allocation2 + $0x73] sm:$0xff] %vm3096, %v3072
      %3114 = vst.msk [vmem:[#allocation2 + $0x7b] sm:$0xff] %vm3096, %v3073
      %3115 = vst.msk [vmem:[#allocation2 + $0x83] sm:$0xff] %vm3096, %v3074
      %3116 = vst.msk [vmem:[#allocation2 + $0x8b] sm:$0xff] %vm3096, %v3075
      %3117 = vst.msk [vmem:[#allocation2 + $0x93] sm:$0xff] %vm3096, %v3076
      %3118 = vst.msk [vmem:[#allocation2 + $0x9b] sm:$0xff] %vm3096, %v3077
      %3119 = vst.msk [vmem:[#allocation2 + $0xa3] sm:$0xff] %vm3096, %v3078
      %3120 = vst.msk [vmem:[#allocation2 + $0xab] sm:$0xff] %vm3096, %v3079
      %3121 = vst.msk [vmem:[#allocation2 + $0xb3] sm:$0xff] %vm3096, %v3080
      %3122 = vst.msk [vmem:[#allocation2 + $0xbb] sm:$0xff] %vm3096, %v3081
      %3123 = vst.msk [vmem:[#allocation2 + $0xc3] sm:$0xff] %vm3096, %v3082
      %3124 = vst.msk [vmem:[#allocation2 + $0xcb] sm:$0xff] %vm3096, %v3083
      %3125 = vst.msk [vmem:[#allocation2 + $0xd3] sm:$0xff] %vm3096, %v3084
      %3126 = vst.msk [vmem:[#allocation2 + $0xdb] sm:$0xff] %vm3096, %v3085
      %3127 = vst.msk [vmem:[#allocation2 + $0xe3] sm:$0xff] %vm3096, %v3086
      %3128 = vst.msk [vmem:[#allocation2 + $0xeb] sm:$0xff] %vm3096, %v3087
      %3129 = vst.msk [vmem:[#allocation2 + $0xf3] sm:$0xff] %vm3096, %v3088
      %3130 = vst.msk [vmem:[#allocation2 + $0xfb] sm:$0xff] %vm3096, %v3089
      %3131 = vst.msk [vmem:[#allocation2 + $0x103] sm:$0xff] %vm3096, %v3090
      %3132 = vst.msk [vmem:[#allocation2 + $0x10b] sm:$0xff] %vm3096, %v3091
      %3133 = vst.msk [vmem:[#allocation2 + $0x113] sm:$0xff] %vm3096, %v3092
      %3134 = vst.msk [vmem:[#allocation2 + $0x11b] sm:$0xff] %vm3096, %v3093
      %3135 = vst.msk [vmem:[#allocation2 + $0x123] sm:$0xff] %vm3096, %v3094
      %3136 = vst.msk [vmem:[#allocation2 + $0x12b] sm:$0xff] %vm3096, %v3095
      %3137 = vst.msk [vmem:[#allocation2 + $0x133] sm:$0xff] %vm3096, 0.0
      %3138 = vst.msk [vmem:[#allocation2 + $0x13b] sm:$0xff] %vm3096, 0.0
      %3139 = vst.msk [vmem:[#allocation2 + $0x143] sm:$0x7] %vm3099, 0.0
      %s3140 = scalar_lea.vmem [#allocation2], 19
      %v3141 = vld [vmem:[%s3140] ss:$2 sm:$0xff]
      %s3142 = scalar_lea.vmem [#allocation2], 35
      %v3143 = vld [vmem:[%s3142] ss:$2 sm:$0xff]
      %s3144 = scalar_lea.vmem [#allocation2], 51
      %v3145 = vld [vmem:[%s3144] ss:$2 sm:$0xff]
      %s3146 = scalar_lea.vmem [#allocation2], 67
      %v3147 = vld [vmem:[%s3146] ss:$2 sm:$0xff]
      %s3148 = scalar_lea.vmem [#allocation2], 83
      %v3149 = vld [vmem:[%s3148] ss:$2 sm:$0xff]
      %s3150 = scalar_lea.vmem [#allocation2], 99
      %v3151 = vld [vmem:[%s3150] ss:$2 sm:$0xff]
      %s3152 = scalar_lea.vmem [#allocation2], 115
      %v3153 = vld [vmem:[%s3152] ss:$2 sm:$0xff]
      %s3154 = scalar_lea.vmem [#allocation2], 131
      %v3155 = vld [vmem:[%s3154] ss:$2 sm:$0xff]
      %s3156 = scalar_lea.vmem [#allocation2], 147
      %v3157 = vld [vmem:[%s3156] ss:$2 sm:$0xff]
      %s3158 = scalar_lea.vmem [#allocation2], 163
      %v3159 = vld [vmem:[%s3158] ss:$2 sm:$0xff]
      %s3160 = scalar_lea.vmem [#allocation2], 179
      %v3161 = vld [vmem:[%s3160] ss:$2 sm:$0xff]
      %s3162 = scalar_lea.vmem [#allocation2], 195
      %v3163 = vld [vmem:[%s3162] ss:$2 sm:$0xff]
      %s3164 = scalar_lea.vmem [#allocation2], 211
      %v3165 = vld [vmem:[%s3164] ss:$2 sm:$0xff]
      %s3166 = scalar_lea.vmem [#allocation2], 227
      %v3167 = vld [vmem:[%s3166] ss:$2 sm:$0xff]
      %s3168 = scalar_lea.vmem [#allocation2], 243
      %v3169 = vld [vmem:[%s3168] ss:$2 sm:$0xff]
      %s3170 = scalar_lea.vmem [#allocation2], 259
      %v3171 = vld [vmem:[%s3170] ss:$2 sm:$0xff]
      %s3172 = scalar_lea.vmem [#allocation2], 275
      %v3173 = vld [vmem:[%s3172] ss:$2 sm:$0xff]
      %s3174 = scalar_lea.vmem [#allocation2], 291
      %v3175 = vld [vmem:[%s3174] ss:$2 sm:$0xff]
      %s3176 = scalar_lea.vmem [#allocation2], 20
      %v3177 = vld [vmem:[%s3176] ss:$2 sm:$0xff]
      %s3178 = scalar_lea.vmem [#allocation2], 36
      %v3179 = vld [vmem:[%s3178] ss:$2 sm:$0xff]
      %s3180 = scalar_lea.vmem [#allocation2], 52
      %v3181 = vld [vmem:[%s3180] ss:$2 sm:$0xff]
      %s3182 = scalar_lea.vmem [#allocation2], 68
      %v3183 = vld [vmem:[%s3182] ss:$2 sm:$0xff]
      %s3184 = scalar_lea.vmem [#allocation2], 84
      %v3185 = vld [vmem:[%s3184] ss:$2 sm:$0xff]
      %s3186 = scalar_lea.vmem [#allocation2], 100
      %v3187 = vld [vmem:[%s3186] ss:$2 sm:$0xff]
      %s3188 = scalar_lea.vmem [#allocation2], 116
      %v3189 = vld [vmem:[%s3188] ss:$2 sm:$0xff]
      %s3190 = scalar_lea.vmem [#allocation2], 132
      %v3191 = vld [vmem:[%s3190] ss:$2 sm:$0xff]
      %s3192 = scalar_lea.vmem [#allocation2], 148
      %v3193 = vld [vmem:[%s3192] ss:$2 sm:$0xff]
      %s3194 = scalar_lea.vmem [#allocation2], 164
      %v3195 = vld [vmem:[%s3194] ss:$2 sm:$0xff]
      %s3196 = scalar_lea.vmem [#allocation2], 180
      %v3197 = vld [vmem:[%s3196] ss:$2 sm:$0xff]
      %s3198 = scalar_lea.vmem [#allocation2], 196
      %v3199 = vld [vmem:[%s3198] ss:$2 sm:$0xff]
      %s3200 = scalar_lea.vmem [#allocation2], 212
      %v3201 = vld [vmem:[%s3200] ss:$2 sm:$0xff]
      %s3202 = scalar_lea.vmem [#allocation2], 228
      %v3203 = vld [vmem:[%s3202] ss:$2 sm:$0xff]
      %s3204 = scalar_lea.vmem [#allocation2], 244
      %v3205 = vld [vmem:[%s3204] ss:$2 sm:$0xff]
      %s3206 = scalar_lea.vmem [#allocation2], 260
      %v3207 = vld [vmem:[%s3206] ss:$2 sm:$0xff]
      %s3208 = scalar_lea.vmem [#allocation2], 276
      %v3209 = vld [vmem:[%s3208] ss:$2 sm:$0xff]
      %s3210 = scalar_lea.vmem [#allocation2], 292
      %v3211 = vld [vmem:[%s3210] ss:$2 sm:$0xff]
      %v3212 = vmax.f32 %v3141, %v3177
      %v3213 = vmax.f32 %v3143, %v3179
      %v3214 = vmax.f32 %v3145, %v3181
      %v3215 = vmax.f32 %v3147, %v3183
      %v3216 = vmax.f32 %v3149, %v3185
      %v3217 = vmax.f32 %v3151, %v3187
      %v3218 = vmax.f32 %v3153, %v3189
      %v3219 = vmax.f32 %v3155, %v3191
      %v3220 = vmax.f32 %v3157, %v3193
      %v3221 = vmax.f32 %v3159, %v3195
      %v3222 = vmax.f32 %v3161, %v3197
      %v3223 = vmax.f32 %v3163, %v3199
      %v3224 = vmax.f32 %v3165, %v3201
      %v3225 = vmax.f32 %v3167, %v3203
      %v3226 = vmax.f32 %v3169, %v3205
      %v3227 = vmax.f32 %v3171, %v3207
      %v3228 = vmax.f32 %v3173, %v3209
      %v3229 = vmax.f32 %v3175, %v3211
      %3230 = vst.msk [vmem:[#allocation5] sm:$0xff] %vm3096, 0.0
      %3231 = vst.msk [vmem:[#allocation5 + $0x8] sm:$0xff] %vm3096, 0.0
      %3232 = vst.msk [vmem:[#allocation5 + $0x10] sm:$0xff] %vm3096, 0.0
      %3233 = vst.msk [vmem:[#allocation5 + $0x18] sm:$0xff] %vm3096, 0.0
      %3234 = vst.msk [vmem:[#allocation5 + $0x20] sm:$0xff] %vm3096, 0.0
      %3235 = vst.msk [vmem:[#allocation5 + $0x28] sm:$0xff] %vm3096, 0.0
      %3236 = vst.msk [vmem:[#allocation5 + $0x30] sm:$0xff] %vm3096, 0.0
      %3237 = vst.msk [vmem:[#allocation5 + $0x38] sm:$0xff] %vm3096, 0.0
      %3238 = vst.msk [vmem:[#allocation5 + $0x40] sm:$0xff] %vm3096, 0.0
      %3239 = vst.msk [vmem:[#allocation5 + $0x48] sm:$0xff] %vm3096, 0.0
      %3240 = vst.msk [vmem:[#allocation5 + $0x50] sm:$0xff] %vm3096, 0.0
      %3241 = vst.msk [vmem:[#allocation5 + $0x58] sm:$0xff] %vm3096, 0.0
      %vm3242 = vcmask 62464
      %3243 = vst.msk [vmem:[#allocation5 + $0x60] sm:$0x3f] %vm3242, 0.0
      %vm3246 = vcmask 1046528
      %v3247 = vrot.slane %v3213, 1
      %v3248 = vrot.slane %v3214, 1
      %v3249 = vsel %vm3246, %v3247, %v3248
      %v3252 = vmax.f32 %v3212, %v3249
      %v3253 = vmax.f32 %v3213, %v3248
      %3254 = vst.msk [vmem:[#allocation5 + $0xb] sm:$0xff] %vm3096, %v3252
      %vm3255 = vcmask 57344
      %3256 = vst.msk [vmem:[#allocation5 + $0x13] sm:$0x1] %vm3255, %v3253
      %v3259 = vrot.slane %v3215, 1
      %v3260 = vrot.slane %v3216, 1
      %v3261 = vsel %vm3246, %v3259, %v3260
      %v3264 = vmax.f32 %v3214, %v3261
      %v3265 = vmax.f32 %v3215, %v3260
      %vm3266 = vcmask 64514
      %3267 = vst.msk [vmem:[#allocation5 + $0x13] sm:$0xfc] %vm3266, %v3264
      %3268 = vst.msk [vmem:[#allocation5 + $0x1b] sm:$0x7] %vm3099, %v3265
      %v3271 = vrot.slane %v3217, 1
      %v3272 = vrot.slane %v3218, 1
      %v3273 = vsel %vm3246, %v3271, %v3272
      %v3276 = vmax.f32 %v3216, %v3273
      %v3277 = vmax.f32 %v3217, %v3272
      %vm3278 = vcmask 64516
      %3279 = vst.msk [vmem:[#allocation5 + $0x1b] sm:$0xf0] %vm3278, %v3276
      %vm3280 = vcmask 61440
      %3281 = vst.msk [vmem:[#allocation5 + $0x23] sm:$0x1f] %vm3280, %v3277
      %v3284 = vrot.slane %v3219, 1
      %v3285 = vrot.slane %v3220, 1
      %v3286 = vsel %vm3246, %v3284, %v3285
      %v3289 = vmax.f32 %v3218, %v3286
      %v3290 = vmax.f32 %v3219, %v3285
      %vm3291 = vcmask 64518
      %3292 = vst.msk [vmem:[#allocation5 + $0x23] sm:$0xc0] %vm3291, %v3289
      %vm3293 = vcmask 63488
      %3294 = vst.msk [vmem:[#allocation5 + $0x2b] sm:$0x7f] %vm3293, %v3290
      %v3297 = vrot.slane %v3222, 1
      %v3298 = vrot.slane %v3223, 1
      %v3299 = vsel %vm3246, %v3297, %v3298
      %v3302 = vmax.f32 %v3221, %v3299
      %v3303 = vmax.f32 %v3222, %v3298
      %3304 = vst.msk [vmem:[#allocation5 + $0x33] sm:$0xff] %vm3096, %v3302
      %3305 = vst.msk [vmem:[#allocation5 + $0x3b] sm:$0x1] %vm3255, %v3303
      %v3308 = vrot.slane %v3224, 1
      %v3309 = vrot.slane %v3225, 1
      %v3310 = vsel %vm3246, %v3308, %v3309
      %v3313 = vmax.f32 %v3223, %v3310
      %v3314 = vmax.f32 %v3224, %v3309
      %3315 = vst.msk [vmem:[#allocation5 + $0x3b] sm:$0xfc] %vm3266, %v3313
      %3316 = vst.msk [vmem:[#allocation5 + $0x43] sm:$0x7] %vm3099, %v3314
      %v3319 = vrot.slane %v3226, 1
      %v3320 = vrot.slane %v3227, 1
      %v3321 = vsel %vm3246, %v3319, %v3320
      %v3324 = vmax.f32 %v3225, %v3321
      %v3325 = vmax.f32 %v3226, %v3320
      %3326 = vst.msk [vmem:[#allocation5 + $0x43] sm:$0xf0] %vm3278, %v3324
      %3327 = vst.msk [vmem:[#allocation5 + $0x4b] sm:$0x1f] %vm3280, %v3325
      %v3330 = vrot.slane %v3228, 1
      %v3331 = vrot.slane %v3229, 1
      %v3332 = vsel %vm3246, %v3330, %v3331
      %v3335 = vmax.f32 %v3227, %v3332
      %v3336 = vmax.f32 %v3228, %v3331
      %3337 = vst.msk [vmem:[#allocation5 + $0x4b] sm:$0xc0] %vm3291, %v3335
      %3338 = vst.msk [vmem:[#allocation5 + $0x53] sm:$0x7f] %vm3293, %v3336
      %v3339 = vld [vmem:[#allocation5] sm:$0xff]
      %v3340 = vld [vmem:[#allocation5 + $0x8] sm:$0xff]
      %v3341 = vld [vmem:[#allocation5 + $0x10] sm:$0xff]
      %v3342 = vld [vmem:[#allocation5 + $0x18] sm:$0xff]
      %v3343 = vld [vmem:[#allocation5 + $0x20] sm:$0xff]
      %v3344 = vld [vmem:[#allocation5 + $0x28] sm:$0xff]
      %v3345 = vld [vmem:[#allocation5 + $0x30] sm:$0xff]
      %v3346 = vld [vmem:[#allocation5 + $0x38] sm:$0xff]
      %v3347 = vld [vmem:[#allocation5 + $0x40] sm:$0xff]
      %v3348 = vld [vmem:[#allocation5 + $0x48] sm:$0xff]
      %v3349 = vpack.c.bf16 %v3340, %v3339
      %v3350 = vpack.c.bf16 %v3342, %v3341
      %v3351 = vpack.c.bf16 %v3344, %v3343
      %v3352 = vpack.c.bf16 %v3346, %v3345
      %v3353 = vpack.c.bf16 %v3348, %v3347
      %v3354 = vld [vmem:[%s4] sm:$0xf]
      %v3355 = vld [vmem:[#allocation5 + $0x1] sm:$0xff]
      %v3356 = vld [vmem:[#allocation5 + $0x9] sm:$0xff]
      %v3357 = vld [vmem:[#allocation5 + $0x11] sm:$0xff]
      %v3358 = vld [vmem:[#allocation5 + $0x19] sm:$0xff]
      %v3359 = vld [vmem:[#allocation5 + $0x21] sm:$0xff]
      %v3360 = vld [vmem:[#allocation5 + $0x29] sm:$0xff]
      %v3361 = vld [vmem:[#allocation5 + $0x31] sm:$0xff]
      %v3362 = vld [vmem:[#allocation5 + $0x39] sm:$0xff]
      %v3363 = vld [vmem:[#allocation5 + $0x41] sm:$0xff]
      %v3364 = vld [vmem:[#allocation5 + $0x49] sm:$0xff]
      %v3365 = vpack.c.bf16 %v3356, %v3355
      %v3366 = vpack.c.bf16 %v3358, %v3357
      %v3367 = vpack.c.bf16 %v3360, %v3359
      %v3368 = vpack.c.bf16 %v3362, %v3361
      %v3369 = vpack.c.bf16 %v3364, %v3363
      %s3370 = scalar_lea.vmem %s4, 4
      %v3371 = vld [vmem:[%s3370] sm:$0xf]
      %v3373 = vsel %vm3096, %v3365, 0
      %v3376 = vsel %vm3096, %v3366, 0
      %v3379 = vsel %vm3096, %v3367, 0
      %v3382 = vsel %vm3096, %v3368, 0
      %v3385 = vsel %vm3096, %v3369, 0
      %vm3387 = vcmask 1043456
      %v3389 = vsel %vm3387, %v3371, 0
      %3391 = vmatpush.bf16.msra.mxu0 0
      %3392 = vmatpush.bf16.msra.mxu0 0
      %3393 = vmatpush.bf16.msra.mxu0 0
      %3394 = vmatpush.bf16.msra.mxu0 0
      %3395 = vmatpush.bf16.msra.mxu0 0
      %3396 = vmatpush.bf16.msra.mxu0 0
      %3397 = vmatpush.bf16.msra.mxu0 0
      %3398 = vmatpush.bf16.msra.mxu0 %v3389
      %3399 = vmatmul.bf16.gmra.mxu0 %v3373
      %v3400 = vpop.f32.mrf.mxu0
      %v3401 = vadd.f32 0.0, %v3400
      %v3402 = vpop.f32.mrf.mxu0
      %v3403 = vadd.f32 0.0, %v3402
      %3404 = vmatmul.bf16.gmra.mxu0 %v3376
      %v3405 = vpop.f32.mrf.mxu0
      %v3406 = vadd.f32 0.0, %v3405
      %v3407 = vpop.f32.mrf.mxu0
      %v3408 = vadd.f32 0.0, %v3407
      %3409 = vmatmul.bf16.gmra.mxu0 %v3379
      %v3410 = vpop.f32.mrf.mxu0
      %v3411 = vadd.f32 0.0, %v3410
      %v3412 = vpop.f32.mrf.mxu0
      %v3413 = vadd.f32 0.0, %v3412
      %3414 = vmatmul.bf16.gmra.mxu0 %v3382
      %v3415 = vpop.f32.mrf.mxu0
      %v3416 = vadd.f32 0.0, %v3415
      %v3417 = vpop.f32.mrf.mxu0
      %v3418 = vadd.f32 0.0, %v3417
      %3419 = vmatmul.bf16.gmra.mxu0 %v3385
      %v3420 = vpop.f32.mrf.mxu0
      %v3421 = vadd.f32 0.0, %v3420
      %v3422 = vpop.f32.mrf.mxu0
      %v3423 = vadd.f32 0.0, %v3422
      %3424 = vdwg.mxu0
      %v3426 = vsel %vm3096, %v3349, 0
      %v3429 = vsel %vm3096, %v3350, 0
      %v3432 = vsel %vm3096, %v3351, 0
      %v3435 = vsel %vm3096, %v3352, 0
      %v3438 = vsel %vm3096, %v3353, 0
      %v3441 = vsel %vm3387, %v3354, 0
      %3443 = vmatpush.bf16.msra.mxu0 0
      %3444 = vmatpush.bf16.msra.mxu0 0
      %3445 = vmatpush.bf16.msra.mxu0 0
      %3446 = vmatpush.bf16.msra.mxu0 0
      %3447 = vmatpush.bf16.msra.mxu0 0
      %3448 = vmatpush.bf16.msra.mxu0 0
      %3449 = vmatpush.bf16.msra.mxu0 0
      %3450 = vmatpush.bf16.msra.mxu0 %v3441
      %3451 = vmatmul.bf16.gmra.mxu0 %v3426
      %v3452 = vpop.f32.mrf.mxu0
      %v3453 = vadd.f32 %v3401, %v3452
      %v3454 = vpop.f32.mrf.mxu0
      %v3455 = vadd.f32 %v3403, %v3454
      %3456 = vmatmul.bf16.gmra.mxu0 %v3429
      %v3457 = vpop.f32.mrf.mxu0
      %v3458 = vadd.f32 %v3406, %v3457
      %v3459 = vpop.f32.mrf.mxu0
      %v3460 = vadd.f32 %v3408, %v3459
      %3461 = vmatmul.bf16.gmra.mxu0 %v3432
      %v3462 = vpop.f32.mrf.mxu0
      %v3463 = vadd.f32 %v3411, %v3462
      %v3464 = vpop.f32.mrf.mxu0
      %v3465 = vadd.f32 %v3413, %v3464
      %3466 = vmatmul.bf16.gmra.mxu0 %v3435
      %v3467 = vpop.f32.mrf.mxu0
      %v3468 = vadd.f32 %v3416, %v3467
      %v3469 = vpop.f32.mrf.mxu0
      %v3470 = vadd.f32 %v3418, %v3469
      %3471 = vmatmul.bf16.gmra.mxu0 %v3438
      %v3472 = vpop.f32.mrf.mxu0
      %v3473 = vadd.f32 %v3421, %v3472
      %v3474 = vpop.f32.mrf.mxu0
      %v3475 = vadd.f32 %v3423, %v3474
      %3476 = vdwg.mxu0
      %v3477 = vld [vmem:[#allocation5 + $0x2] sm:$0xff]
      %v3478 = vld [vmem:[#allocation5 + $0xa] sm:$0xff]
      %v3479 = vld [vmem:[#allocation5 + $0x12] sm:$0xff]
      %v3480 = vld [vmem:[#allocation5 + $0x1a] sm:$0xff]
      %v3481 = vld [vmem:[#allocation5 + $0x22] sm:$0xff]
      %v3482 = vld [vmem:[#allocation5 + $0x2a] sm:$0xff]
      %v3483 = vld [vmem:[#allocation5 + $0x32] sm:$0xff]
      %v3484 = vld [vmem:[#allocation5 + $0x3a] sm:$0xff]
      %v3485 = vld [vmem:[#allocation5 + $0x42] sm:$0xff]
      %v3486 = vld [vmem:[#allocation5 + $0x4a] sm:$0xff]
      %v3487 = vpack.c.bf16 %v3478, %v3477
      %v3488 = vpack.c.bf16 %v3480, %v3479
      %v3489 = vpack.c.bf16 %v3482, %v3481
      %v3490 = vpack.c.bf16 %v3484, %v3483
      %v3491 = vpack.c.bf16 %v3486, %v3485
      %s3492 = scalar_lea.vmem %s4, 8
      %v3493 = vld [vmem:[%s3492] sm:$0xf]
      %v3495 = vsel %vm3096, %v3487, 0
      %v3498 = vsel %vm3096, %v3488, 0
      %v3501 = vsel %vm3096, %v3489, 0
      %v3504 = vsel %vm3096, %v3490, 0
      %v3507 = vsel %vm3096, %v3491, 0
      %v3510 = vsel %vm3387, %v3493, 0
      %3512 = vmatpush.bf16.msra.mxu0 0
      %3513 = vmatpush.bf16.msra.mxu0 0
      %3514 = vmatpush.bf16.msra.mxu0 0
      %3515 = vmatpush.bf16.msra.mxu0 0
      %3516 = vmatpush.bf16.msra.mxu0 0
      %3517 = vmatpush.bf16.msra.mxu0 0
      %3518 = vmatpush.bf16.msra.mxu0 0
      %3519 = vmatpush.bf16.msra.mxu0 %v3510
      %3520 = vmatmul.bf16.gmra.mxu0 %v3495
      %v3521 = vpop.f32.mrf.mxu0
      %v3522 = vadd.f32 0.0, %v3521
      %v3523 = vpop.f32.mrf.mxu0
      %v3524 = vadd.f32 0.0, %v3523
      %3525 = vmatmul.bf16.gmra.mxu0 %v3498
      %v3526 = vpop.f32.mrf.mxu0
      %v3527 = vadd.f32 0.0, %v3526
      %v3528 = vpop.f32.mrf.mxu0
      %v3529 = vadd.f32 0.0, %v3528
      %3530 = vmatmul.bf16.gmra.mxu0 %v3501
      %v3531 = vpop.f32.mrf.mxu0
      %v3532 = vadd.f32 0.0, %v3531
      %v3533 = vpop.f32.mrf.mxu0
      %v3534 = vadd.f32 0.0, %v3533
      %3535 = vmatmul.bf16.gmra.mxu0 %v3504
      %v3536 = vpop.f32.mrf.mxu0
      %v3537 = vadd.f32 0.0, %v3536
      %v3538 = vpop.f32.mrf.mxu0
      %v3539 = vadd.f32 0.0, %v3538
      %3540 = vmatmul.bf16.gmra.mxu0 %v3507
      %v3541 = vpop.f32.mrf.mxu0
      %v3542 = vadd.f32 0.0, %v3541
      %v3543 = vpop.f32.mrf.mxu0
      %v3544 = vadd.f32 0.0, %v3543
      %3545 = vdwg.mxu0
      %v3546 = vadd.f32 %v3453, %v3522
      %v3547 = vadd.f32 %v3455, %v3524
      %v3548 = vadd.f32 %v3458, %v3527
      %v3549 = vadd.f32 %v3460, %v3529
      %v3550 = vadd.f32 %v3463, %v3532
      %v3551 = vadd.f32 %v3465, %v3534
      %v3552 = vadd.f32 %v3468, %v3537
      %v3553 = vadd.f32 %v3470, %v3539
      %v3554 = vadd.f32 %v3473, %v3542
      %v3555 = vadd.f32 %v3475, %v3544
      %v3556 = vld [vmem:[#allocation5 + $0xa] sm:$0xff]
      %v3557 = vld [vmem:[#allocation5 + $0x12] sm:$0xff]
      %v3558 = vld [vmem:[#allocation5 + $0x1a] sm:$0xff]
      %v3559 = vld [vmem:[#allocation5 + $0x22] sm:$0xff]
      %v3560 = vld [vmem:[#allocation5 + $0x2a] sm:$0xff]
      %v3561 = vld [vmem:[#allocation5 + $0x32] sm:$0xff]
      %v3562 = vld [vmem:[#allocation5 + $0x3a] sm:$0xff]
      %v3563 = vld [vmem:[#allocation5 + $0x42] sm:$0xff]
      %v3564 = vld [vmem:[#allocation5 + $0x4a] sm:$0xff]
      %v3565 = vld [vmem:[#allocation5 + $0x52] sm:$0xff]
      %v3566 = vpack.c.bf16 %v3557, %v3556
      %v3567 = vpack.c.bf16 %v3559, %v3558
      %v3568 = vpack.c.bf16 %v3561, %v3560
      %v3569 = vpack.c.bf16 %v3563, %v3562
      %v3570 = vpack.c.bf16 %v3565, %v3564
      %s3571 = scalar_lea.vmem %s4, 12
      %v3572 = vld [vmem:[%s3571] sm:$0xf]
      %v3574 = vsel %vm3096, %v3566, 0
      %v3577 = vsel %vm3096, %v3567, 0
      %v3580 = vsel %vm3096, %v3568, 0
      %v3583 = vsel %vm3096, %v3569, 0
      %v3586 = vsel %vm3096, %v3570, 0
      %v3589 = vsel %vm3387, %v3572, 0
      %3591 = vmatpush.bf16.msra.mxu0 0
      %3592 = vmatpush.bf16.msra.mxu0 0
      %3593 = vmatpush.bf16.msra.mxu0 0
      %3594 = vmatpush.bf16.msra.mxu0 0
      %3595 = vmatpush.bf16.msra.mxu0 0
      %3596 = vmatpush.bf16.msra.mxu0 0
      %3597 = vmatpush.bf16.msra.mxu0 0
      %3598 = vmatpush.bf16.msra.mxu0 %v3589
      %3599 = vmatmul.bf16.gmra.mxu0 %v3574
      %v3600 = vpop.f32.mrf.mxu0
      %v3601 = vadd.f32 0.0, %v3600
      %v3602 = vpop.f32.mrf.mxu0
      %v3603 = vadd.f32 0.0, %v3602
      %3604 = vmatmul.bf16.gmra.mxu0 %v3577
      %v3605 = vpop.f32.mrf.mxu0
      %v3606 = vadd.f32 0.0, %v3605
      %v3607 = vpop.f32.mrf.mxu0
      %v3608 = vadd.f32 0.0, %v3607
      %3609 = vmatmul.bf16.gmra.mxu0 %v3580
      %v3610 = vpop.f32.mrf.mxu0
      %v3611 = vadd.f32 0.0, %v3610
      %v3612 = vpop.f32.mrf.mxu0
      %v3613 = vadd.f32 0.0, %v3612
      %3614 = vmatmul.bf16.gmra.mxu0 %v3583
      %v3615 = vpop.f32.mrf.mxu0
      %v3616 = vadd.f32 0.0, %v3615
      %v3617 = vpop.f32.mrf.mxu0
      %v3618 = vadd.f32 0.0, %v3617
      %3619 = vmatmul.bf16.gmra.mxu0 %v3586
      %v3620 = vpop.f32.mrf.mxu0
      %v3621 = vadd.f32 0.0, %v3620
      %v3622 = vpop.f32.mrf.mxu0
      %v3623 = vadd.f32 0.0, %v3622
      %3624 = vdwg.mxu0
      %v3625 = vadd.f32 %v3546, %v3601
      %v3626 = vadd.f32 %v3547, %v3603
      %v3627 = vadd.f32 %v3548, %v3606
      %v3628 = vadd.f32 %v3549, %v3608
      %v3629 = vadd.f32 %v3550, %v3611
      %v3630 = vadd.f32 %v3551, %v3613
      %v3631 = vadd.f32 %v3552, %v3616
      %v3632 = vadd.f32 %v3553, %v3618
      %v3633 = vadd.f32 %v3554, %v3621
      %v3634 = vadd.f32 %v3555, %v3623
      %v3635 = vld [vmem:[#allocation5 + $0xb] sm:$0xff]
      %v3636 = vld [vmem:[#allocation5 + $0x13] sm:$0xff]
      %v3637 = vld [vmem:[#allocation5 + $0x1b] sm:$0xff]
      %v3638 = vld [vmem:[#allocation5 + $0x23] sm:$0xff]
      %v3639 = vld [vmem:[#allocation5 + $0x2b] sm:$0xff]
      %v3640 = vld [vmem:[#allocation5 + $0x33] sm:$0xff]
      %v3641 = vld [vmem:[#allocation5 + $0x3b] sm:$0xff]
      %v3642 = vld [vmem:[#allocation5 + $0x43] sm:$0xff]
      %v3643 = vld [vmem:[#allocation5 + $0x4b] sm:$0xff]
      %v3644 = vld [vmem:[#allocation5 + $0x53] sm:$0xff]
      %v3645 = vpack.c.bf16 %v3636, %v3635
      %v3646 = vpack.c.bf16 %v3638, %v3637
      %v3647 = vpack.c.bf16 %v3640, %v3639
      %v3648 = vpack.c.bf16 %v3642, %v3641
      %v3649 = vpack.c.bf16 %v3644, %v3643
      %s3650 = scalar_lea.vmem %s4, 16
      %v3651 = vld [vmem:[%s3650] sm:$0xf]
      %v3653 = vsel %vm3096, %v3645, 0
      %v3656 = vsel %vm3096, %v3646, 0
      %v3659 = vsel %vm3096, %v3647, 0
      %v3662 = vsel %vm3096, %v3648, 0
      %v3665 = vsel %vm3096, %v3649, 0
      %v3668 = vsel %vm3387, %v3651, 0
      %3670 = vmatpush.bf16.msra.mxu0 0
      %3671 = vmatpush.bf16.msra.mxu0 0
      %3672 = vmatpush.bf16.msra.mxu0 0
      %3673 = vmatpush.bf16.msra.mxu0 0
      %3674 = vmatpush.bf16.msra.mxu0 0
      %3675 = vmatpush.bf16.msra.mxu0 0
      %3676 = vmatpush.bf16.msra.mxu0 0
      %3677 = vmatpush.bf16.msra.mxu0 %v3668
      %3678 = vmatmul.bf16.gmra.mxu0 %v3653
      %v3679 = vpop.f32.mrf.mxu0
      %v3680 = vadd.f32 0.0, %v3679
      %v3681 = vpop.f32.mrf.mxu0
      %v3682 = vadd.f32 0.0, %v3681
      %3683 = vmatmul.bf16.gmra.mxu0 %v3656
      %v3684 = vpop.f32.mrf.mxu0
      %v3685 = vadd.f32 0.0, %v3684
      %v3686 = vpop.f32.mrf.mxu0
      %v3687 = vadd.f32 0.0, %v3686
      %3688 = vmatmul.bf16.gmra.mxu0 %v3659
      %v3689 = vpop.f32.mrf.mxu0
      %v3690 = vadd.f32 0.0, %v3689
      %v3691 = vpop.f32.mrf.mxu0
      %v3692 = vadd.f32 0.0, %v3691
      %3693 = vmatmul.bf16.gmra.mxu0 %v3662
      %v3694 = vpop.f32.mrf.mxu0
      %v3695 = vadd.f32 0.0, %v3694
      %v3696 = vpop.f32.mrf.mxu0
      %v3697 = vadd.f32 0.0, %v3696
      %3698 = vmatmul.bf16.gmra.mxu0 %v3665
      %v3699 = vpop.f32.mrf.mxu0
      %v3700 = vadd.f32 0.0, %v3699
      %v3701 = vpop.f32.mrf.mxu0
      %v3702 = vadd.f32 0.0, %v3701
      %3703 = vdwg.mxu0
      %v3704 = vadd.f32 %v3625, %v3680
      %v3705 = vadd.f32 %v3626, %v3682
      %v3706 = vadd.f32 %v3627, %v3685
      %v3707 = vadd.f32 %v3628, %v3687
      %v3708 = vadd.f32 %v3629, %v3690
      %v3709 = vadd.f32 %v3630, %v3692
      %v3710 = vadd.f32 %v3631, %v3695
      %v3711 = vadd.f32 %v3632, %v3697
      %v3712 = vadd.f32 %v3633, %v3700
      %v3713 = vadd.f32 %v3634, %v3702
      %v3714 = vld [vmem:[#allocation5 + $0xc] sm:$0xff]
      %v3715 = vld [vmem:[#allocation5 + $0x14] sm:$0xff]
      %v3716 = vld [vmem:[#allocation5 + $0x1c] sm:$0xff]
      %v3717 = vld [vmem:[#allocation5 + $0x24] sm:$0xff]
      %v3718 = vld [vmem:[#allocation5 + $0x2c] sm:$0xff]
      %v3719 = vld [vmem:[#allocation5 + $0x34] sm:$0xff]
      %v3720 = vld [vmem:[#allocation5 + $0x3c] sm:$0xff]
      %v3721 = vld [vmem:[#allocation5 + $0x44] sm:$0xff]
      %v3722 = vld [vmem:[#allocation5 + $0x4c] sm:$0xff]
      %v3723 = vld [vmem:[#allocation5 + $0x54] sm:$0xff]
      %v3724 = vpack.c.bf16 %v3715, %v3714
      %v3725 = vpack.c.bf16 %v3717, %v3716
      %v3726 = vpack.c.bf16 %v3719, %v3718
      %v3727 = vpack.c.bf16 %v3721, %v3720
      %v3728 = vpack.c.bf16 %v3723, %v3722
      %s3729 = scalar_lea.vmem %s4, 20
      %v3730 = vld [vmem:[%s3729] sm:$0xf]
      %v3732 = vsel %vm3096, %v3724, 0
      %v3735 = vsel %vm3096, %v3725, 0
      %v3738 = vsel %vm3096, %v3726, 0
      %v3741 = vsel %vm3096, %v3727, 0
      %v3744 = vsel %vm3096, %v3728, 0
      %v3747 = vsel %vm3387, %v3730, 0
      %3749 = vmatpush.bf16.msra.mxu0 0
      %3750 = vmatpush.bf16.msra.mxu0 0
      %3751 = vmatpush.bf16.msra.mxu0 0
      %3752 = vmatpush.bf16.msra.mxu0 0
      %3753 = vmatpush.bf16.msra.mxu0 0
      %3754 = vmatpush.bf16.msra.mxu0 0
      %3755 = vmatpush.bf16.msra.mxu0 0
      %3756 = vmatpush.bf16.msra.mxu0 %v3747
      %3757 = vmatmul.bf16.gmra.mxu0 %v3732
      %v3758 = vpop.f32.mrf.mxu0
      %v3759 = vadd.f32 0.0, %v3758
      %v3760 = vpop.f32.mrf.mxu0
      %v3761 = vadd.f32 0.0, %v3760
      %3762 = vmatmul.bf16.gmra.mxu0 %v3735
      %v3763 = vpop.f32.mrf.mxu0
      %v3764 = vadd.f32 0.0, %v3763
      %v3765 = vpop.f32.mrf.mxu0
      %v3766 = vadd.f32 0.0, %v3765
      %3767 = vmatmul.bf16.gmra.mxu0 %v3738
      %v3768 = vpop.f32.mrf.mxu0
      %v3769 = vadd.f32 0.0, %v3768
      %v3770 = vpop.f32.mrf.mxu0
      %v3771 = vadd.f32 0.0, %v3770
      %3772 = vmatmul.bf16.gmra.mxu0 %v3741
      %v3773 = vpop.f32.mrf.mxu0
      %v3774 = vadd.f32 0.0, %v3773
      %v3775 = vpop.f32.mrf.mxu0
      %v3776 = vadd.f32 0.0, %v3775
      %3777 = vmatmul.bf16.gmra.mxu0 %v3744
      %v3778 = vpop.f32.mrf.mxu0
      %v3779 = vadd.f32 0.0, %v3778
      %v3780 = vpop.f32.mrf.mxu0
      %v3781 = vadd.f32 0.0, %v3780
      %3782 = vdwg.mxu0
      %v3783 = vadd.f32 %v3704, %v3759
      %v3784 = vadd.f32 %v3705, %v3761
      %v3785 = vadd.f32 %v3706, %v3764
      %v3786 = vadd.f32 %v3707, %v3766
      %v3787 = vadd.f32 %v3708, %v3769
      %v3788 = vadd.f32 %v3709, %v3771
      %v3789 = vadd.f32 %v3710, %v3774
      %v3790 = vadd.f32 %v3711, %v3776
      %v3791 = vadd.f32 %v3712, %v3779
      %v3792 = vadd.f32 %v3713, %v3781
      %v3793 = vld [vmem:[#allocation5 + $0x14] sm:$0xff]
      %v3794 = vld [vmem:[#allocation5 + $0x1c] sm:$0xff]
      %v3795 = vld [vmem:[#allocation5 + $0x24] sm:$0xff]
      %v3796 = vld [vmem:[#allocation5 + $0x2c] sm:$0xff]
      %v3797 = vld [vmem:[#allocation5 + $0x34] sm:$0xff]
      %v3798 = vld [vmem:[#allocation5 + $0x3c] sm:$0xff]
      %v3799 = vld [vmem:[#allocation5 + $0x44] sm:$0xff]
      %v3800 = vld [vmem:[#allocation5 + $0x4c] sm:$0xff]
      %v3801 = vld [vmem:[#allocation5 + $0x54] sm:$0xff]
      %v3802 = vld [vmem:[#allocation5 + $0x5c] sm:$0xff]
      %v3803 = vpack.c.bf16 %v3794, %v3793
      %v3804 = vpack.c.bf16 %v3796, %v3795
      %v3805 = vpack.c.bf16 %v3798, %v3797
      %v3806 = vpack.c.bf16 %v3800, %v3799
      %v3807 = vpack.c.bf16 %v3802, %v3801
      %s3808 = scalar_lea.vmem %s4, 24
      %v3809 = vld [vmem:[%s3808] sm:$0xf]
      %v3811 = vsel %vm3096, %v3803, 0
      %v3814 = vsel %vm3096, %v3804, 0
      %v3817 = vsel %vm3096, %v3805, 0
      %v3820 = vsel %vm3096, %v3806, 0
      %v3823 = vsel %vm3096, %v3807, 0
      %v3826 = vsel %vm3387, %v3809, 0
      %3828 = vmatpush.bf16.msra.mxu0 0
      %3829 = vmatpush.bf16.msra.mxu0 0
      %3830 = vmatpush.bf16.msra.mxu0 0
      %3831 = vmatpush.bf16.msra.mxu0 0
      %3832 = vmatpush.bf16.msra.mxu0 0
      %3833 = vmatpush.bf16.msra.mxu0 0
      %3834 = vmatpush.bf16.msra.mxu0 0
      %3835 = vmatpush.bf16.msra.mxu0 %v3826
      %3836 = vmatmul.bf16.gmra.mxu0 %v3811
      %v3837 = vpop.f32.mrf.mxu0
      %v3838 = vadd.f32 0.0, %v3837
      %v3839 = vpop.f32.mrf.mxu0
      %v3840 = vadd.f32 0.0, %v3839
      %3841 = vmatmul.bf16.gmra.mxu0 %v3814
      %v3842 = vpop.f32.mrf.mxu0
      %v3843 = vadd.f32 0.0, %v3842
      %v3844 = vpop.f32.mrf.mxu0
      %v3845 = vadd.f32 0.0, %v3844
      %3846 = vmatmul.bf16.gmra.mxu0 %v3817
      %v3847 = vpop.f32.mrf.mxu0
      %v3848 = vadd.f32 0.0, %v3847
      %v3849 = vpop.f32.mrf.mxu0
      %v3850 = vadd.f32 0.0, %v3849
      %3851 = vmatmul.bf16.gmra.mxu0 %v3820
      %v3852 = vpop.f32.mrf.mxu0
      %v3853 = vadd.f32 0.0, %v3852
      %v3854 = vpop.f32.mrf.mxu0
      %v3855 = vadd.f32 0.0, %v3854
      %3856 = vmatmul.bf16.gmra.mxu0 %v3823
      %v3857 = vpop.f32.mrf.mxu0
      %v3858 = vadd.f32 0.0, %v3857
      %v3859 = vpop.f32.mrf.mxu0
      %v3860 = vadd.f32 0.0, %v3859
      %3861 = vdwg.mxu0
      %v3862 = vadd.f32 %v3783, %v3838
      %v3863 = vadd.f32 %v3784, %v3840
      %v3864 = vadd.f32 %v3785, %v3843
      %v3865 = vadd.f32 %v3786, %v3845
      %v3866 = vadd.f32 %v3787, %v3848
      %v3867 = vadd.f32 %v3788, %v3850
      %v3868 = vadd.f32 %v3789, %v3853
      %v3869 = vadd.f32 %v3790, %v3855
      %v3870 = vadd.f32 %v3791, %v3858
      %v3871 = vadd.f32 %v3792, %v3860
      %v3872 = vld [vmem:[#allocation5 + $0x15] sm:$0xff]
      %v3873 = vld [vmem:[#allocation5 + $0x1d] sm:$0xff]
      %v3874 = vld [vmem:[#allocation5 + $0x25] sm:$0xff]
      %v3875 = vld [vmem:[#allocation5 + $0x2d] sm:$0xff]
      %v3876 = vld [vmem:[#allocation5 + $0x35] sm:$0xff]
      %v3877 = vld [vmem:[#allocation5 + $0x3d] sm:$0xff]
      %v3878 = vld [vmem:[#allocation5 + $0x45] sm:$0xff]
      %v3879 = vld [vmem:[#allocation5 + $0x4d] sm:$0xff]
      %v3880 = vld [vmem:[#allocation5 + $0x55] sm:$0xff]
      %v3881 = vld [vmem:[#allocation5 + $0x5d] sm:$0xff]
      %v3882 = vpack.c.bf16 %v3873, %v3872
      %v3883 = vpack.c.bf16 %v3875, %v3874
      %v3884 = vpack.c.bf16 %v3877, %v3876
      %v3885 = vpack.c.bf16 %v3879, %v3878
      %v3886 = vpack.c.bf16 %v3881, %v3880
      %s3887 = scalar_lea.vmem %s4, 28
      %v3888 = vld [vmem:[%s3887] sm:$0xf]
      %v3890 = vsel %vm3096, %v3882, 0
      %v3893 = vsel %vm3096, %v3883, 0
      %v3896 = vsel %vm3096, %v3884, 0
      %v3899 = vsel %vm3096, %v3885, 0
      %v3902 = vsel %vm3096, %v3886, 0
      %v3905 = vsel %vm3387, %v3888, 0
      %3907 = vmatpush.bf16.msra.mxu0 0
      %3908 = vmatpush.bf16.msra.mxu0 0
      %3909 = vmatpush.bf16.msra.mxu0 0
      %3910 = vmatpush.bf16.msra.mxu0 0
      %3911 = vmatpush.bf16.msra.mxu0 0
      %3912 = vmatpush.bf16.msra.mxu0 0
      %3913 = vmatpush.bf16.msra.mxu0 0
      %3914 = vmatpush.bf16.msra.mxu0 %v3905
      %3915 = vmatmul.bf16.gmra.mxu0 %v3890
      %v3916 = vpop.f32.mrf.mxu0
      %v3917 = vadd.f32 0.0, %v3916
      %v3918 = vpop.f32.mrf.mxu0
      %v3919 = vadd.f32 0.0, %v3918
      %3920 = vmatmul.bf16.gmra.mxu0 %v3893
      %v3921 = vpop.f32.mrf.mxu0
      %v3922 = vadd.f32 0.0, %v3921
      %v3923 = vpop.f32.mrf.mxu0
      %v3924 = vadd.f32 0.0, %v3923
      %3925 = vmatmul.bf16.gmra.mxu0 %v3896
      %v3926 = vpop.f32.mrf.mxu0
      %v3927 = vadd.f32 0.0, %v3926
      %v3928 = vpop.f32.mrf.mxu0
      %v3929 = vadd.f32 0.0, %v3928
      %3930 = vmatmul.bf16.gmra.mxu0 %v3899
      %v3931 = vpop.f32.mrf.mxu0
      %v3932 = vadd.f32 0.0, %v3931
      %v3933 = vpop.f32.mrf.mxu0
      %v3934 = vadd.f32 0.0, %v3933
      %3935 = vmatmul.bf16.gmra.mxu0 %v3902
      %v3936 = vpop.f32.mrf.mxu0
      %v3937 = vadd.f32 0.0, %v3936
      %v3938 = vpop.f32.mrf.mxu0
      %v3939 = vadd.f32 0.0, %v3938
      %3940 = vdwg.mxu0
      %v3941 = vadd.f32 %v3862, %v3917
      %v3942 = vadd.f32 %v3863, %v3919
      %v3943 = vadd.f32 %v3864, %v3922
      %v3944 = vadd.f32 %v3865, %v3924
      %v3945 = vadd.f32 %v3866, %v3927
      %v3946 = vadd.f32 %v3867, %v3929
      %v3947 = vadd.f32 %v3868, %v3932
      %v3948 = vadd.f32 %v3869, %v3934
      %v3949 = vadd.f32 %v3870, %v3937
      %v3950 = vadd.f32 %v3871, %v3939
      %v3951 = vld [vmem:[#allocation5 + $0x16] sm:$0xff]
      %v3952 = vld [vmem:[#allocation5 + $0x1e] sm:$0xff]
      %v3953 = vld [vmem:[#allocation5 + $0x26] sm:$0xff]
      %v3954 = vld [vmem:[#allocation5 + $0x2e] sm:$0xff]
      %v3955 = vld [vmem:[#allocation5 + $0x36] sm:$0xff]
      %v3956 = vld [vmem:[#allocation5 + $0x3e] sm:$0xff]
      %v3957 = vld [vmem:[#allocation5 + $0x46] sm:$0xff]
      %v3958 = vld [vmem:[#allocation5 + $0x4e] sm:$0xff]
      %v3959 = vld [vmem:[#allocation5 + $0x56] sm:$0xff]
      %v3960 = vld [vmem:[#allocation5 + $0x5e] sm:$0xff]
      %v3961 = vpack.c.bf16 %v3952, %v3951
      %v3962 = vpack.c.bf16 %v3954, %v3953
      %v3963 = vpack.c.bf16 %v3956, %v3955
      %v3964 = vpack.c.bf16 %v3958, %v3957
      %v3965 = vpack.c.bf16 %v3960, %v3959
      %s3966 = scalar_lea.vmem %s4, 32
      %v3967 = vld [vmem:[%s3966] sm:$0xf]
      %v3969 = vsel %vm3096, %v3961, 0
      %v3972 = vsel %vm3096, %v3962, 0
      %v3975 = vsel %vm3096, %v3963, 0
      %v3978 = vsel %vm3096, %v3964, 0
      %v3981 = vsel %vm3096, %v3965, 0
      %v3984 = vsel %vm3387, %v3967, 0
      %3986 = vmatpush.bf16.msra.mxu0 0
      %3987 = vmatpush.bf16.msra.mxu0 0
      %3988 = vmatpush.bf16.msra.mxu0 0
      %3989 = vmatpush.bf16.msra.mxu0 0
      %3990 = vmatpush.bf16.msra.mxu0 0
      %3991 = vmatpush.bf16.msra.mxu0 0
      %3992 = vmatpush.bf16.msra.mxu0 0
      %3993 = vmatpush.bf16.msra.mxu0 %v3984
      %3994 = vmatmul.bf16.gmra.mxu0 %v3969
      %v3995 = vpop.f32.mrf.mxu0
      %v3996 = vadd.f32 0.0, %v3995
      %v3997 = vpop.f32.mrf.mxu0
      %v3998 = vadd.f32 0.0, %v3997
      %3999 = vmatmul.bf16.gmra.mxu0 %v3972
      %v4000 = vpop.f32.mrf.mxu0
      %v4001 = vadd.f32 0.0, %v4000
      %v4002 = vpop.f32.mrf.mxu0
      %v4003 = vadd.f32 0.0, %v4002
      %4004 = vmatmul.bf16.gmra.mxu0 %v3975
      %v4005 = vpop.f32.mrf.mxu0
      %v4006 = vadd.f32 0.0, %v4005
      %v4007 = vpop.f32.mrf.mxu0
      %v4008 = vadd.f32 0.0, %v4007
      %4009 = vmatmul.bf16.gmra.mxu0 %v3978
      %v4010 = vpop.f32.mrf.mxu0
      %v4011 = vadd.f32 0.0, %v4010
      %v4012 = vpop.f32.mrf.mxu0
      %v4013 = vadd.f32 0.0, %v4012
      %4014 = vmatmul.bf16.gmra.mxu0 %v3981
      %v4015 = vpop.f32.mrf.mxu0
      %v4016 = vadd.f32 0.0, %v4015
      %v4017 = vpop.f32.mrf.mxu0
      %v4018 = vadd.f32 0.0, %v4017
      %4019 = vdwg.mxu0
      %v4020 = vadd.f32 %v3941, %v3996
      %v4021 = vadd.f32 %v3942, %v3998
      %v4022 = vadd.f32 %v3943, %v4001
      %v4023 = vadd.f32 %v3944, %v4003
      %v4024 = vadd.f32 %v3945, %v4006
      %v4025 = vadd.f32 %v3946, %v4008
      %v4026 = vadd.f32 %v3947, %v4011
      %v4027 = vadd.f32 %v3948, %v4013
      %v4028 = vadd.f32 %v3949, %v4016
      %v4029 = vadd.f32 %v3950, %v4018
      %v4030 = vld [vmem:[%s5] sm:$0x1]
      %v4032 = vperm.slane %v4030, 0
      %v4034 = vadd.f32 %v4020, %v4032
      %v4035 = vadd.f32 %v4021, %v4032
      %v4036 = vadd.f32 %v4022, %v4032
      %v4037 = vadd.f32 %v4023, %v4032
      %v4038 = vadd.f32 %v4024, %v4032
      %v4039 = vadd.f32 %v4025, %v4032
      %v4040 = vadd.f32 %v4026, %v4032
      %v4041 = vadd.f32 %v4027, %v4032
      %v4042 = vadd.f32 %v4028, %v4032
      %v4043 = vadd.f32 %v4029, %v4032
      %v4044 = vmax.f32 %v4034, 0.0
      %v4045 = vmax.f32 %v4035, 0.0
      %v4046 = vmax.f32 %v4036, 0.0
      %v4047 = vmax.f32 %v4037, 0.0
      %v4048 = vmax.f32 %v4038, 0.0
      %v4049 = vmax.f32 %v4039, 0.0
      %v4050 = vmax.f32 %v4040, 0.0
      %v4051 = vmax.f32 %v4041, 0.0
      %v4052 = vmax.f32 %v4042, 0.0
      %v4053 = vmax.f32 %v4043, 0.0
      %v4054 = vld [vmem:[%s6] sm:$0xff]
      %v4055 = vld [vmem:[%s6 + $0x8] sm:$0xff]
      %v4056 = vld [vmem:[%s6 + $0x10] sm:$0xff]
      %v4057 = vld [vmem:[%s6 + $0x18] sm:$0xff]
      %v4058 = vld [vmem:[%s6 + $0x20] sm:$0xff]
      %v4059 = vld [vmem:[%s6 + $0x28] sm:$0xff]
      %v4060 = vld [vmem:[%s6 + $0x30] sm:$0xff]
      %v4061 = vld [vmem:[%s6 + $0x38] sm:$0xff]
      %v4062 = vld [vmem:[%s6 + $0x40] sm:$0xff]
      %v4063 = vld [vmem:[%s6 + $0x48] sm:$0xff]
      %4065 = vset.pattern.permute.xlu0 0
      %4066 = vperm.xlu0 %4065, %v4054
      %v4067 = vpop.permute.xlu0 %4066
      %4070 = vset.pattern.permute.xlu0 0
      %4071 = vperm.xlu0 %4070, %v4055
      %v4072 = vpop.permute.xlu0 %4071
      %4075 = vset.pattern.permute.xlu0 0
      %4076 = vperm.xlu0 %4075, %v4056
      %v4077 = vpop.permute.xlu0 %4076
      %4080 = vset.pattern.permute.xlu0 0
      %4081 = vperm.xlu0 %4080, %v4057
      %v4082 = vpop.permute.xlu0 %4081
      %4085 = vset.pattern.permute.xlu0 0
      %4086 = vperm.xlu0 %4085, %v4058
      %v4087 = vpop.permute.xlu0 %4086
      %4090 = vset.pattern.permute.xlu0 0
      %4091 = vperm.xlu0 %4090, %v4059
      %v4092 = vpop.permute.xlu0 %4091
      %4095 = vset.pattern.permute.xlu0 0
      %4096 = vperm.xlu0 %4095, %v4060
      %v4097 = vpop.permute.xlu0 %4096
      %4100 = vset.pattern.permute.xlu0 0
      %4101 = vperm.xlu0 %4100, %v4061
      %v4102 = vpop.permute.xlu0 %4101
      %4105 = vset.pattern.permute.xlu0 0
      %4106 = vperm.xlu0 %4105, %v4062
      %v4107 = vpop.permute.xlu0 %4106
      %4110 = vset.pattern.permute.xlu0 0
      %4111 = vperm.xlu0 %4110, %v4063
      %v4112 = vpop.permute.xlu0 %4111
      %v4114 = vmul.f32 %v4044, %v4067
      %v4115 = vmul.f32 %v4045, %v4072
      %v4116 = vmul.f32 %v4046, %v4077
      %v4117 = vmul.f32 %v4047, %v4082
      %v4118 = vmul.f32 %v4048, %v4087
      %v4119 = vmul.f32 %v4049, %v4092
      %v4120 = vmul.f32 %v4050, %v4097
      %v4121 = vmul.f32 %v4051, %v4102
      %v4122 = vmul.f32 %v4052, %v4107
      %v4123 = vmul.f32 %v4053, %v4112
      %vm4124 = vcmask 130048
      %4125 = vst.msk [vmem:[#allocation3] sm:$0xff] %vm4124, 0.0
      %vm4126 = vcmask 124928
      %4127 = vst.msk [vmem:[#allocation3 + $0x8] sm:$0x7] %vm4126, 0.0
      %4128 = vst.msk [vmem:[#allocation3 + $0xb] sm:$0xff] %vm4124, %v4114
      %4129 = vst.msk [vmem:[#allocation3 + $0x13] sm:$0xff] %vm4124, %v4115
      %4130 = vst.msk [vmem:[#allocation3 + $0x1b] sm:$0xff] %vm4124, %v4116
      %4131 = vst.msk [vmem:[#allocation3 + $0x23] sm:$0xff] %vm4124, %v4117
      %4132 = vst.msk [vmem:[#allocation3 + $0x2b] sm:$0xff] %vm4124, %v4118
      %4133 = vst.msk [vmem:[#allocation3 + $0x33] sm:$0xff] %vm4124, %v4119
      %4134 = vst.msk [vmem:[#allocation3 + $0x3b] sm:$0xff] %vm4124, %v4120
      %4135 = vst.msk [vmem:[#allocation3 + $0x43] sm:$0xff] %vm4124, %v4121
      %4136 = vst.msk [vmem:[#allocation3 + $0x4b] sm:$0xff] %vm4124, %v4122
      %4137 = vst.msk [vmem:[#allocation3 + $0x53] sm:$0xff] %vm4124, %v4123
      %4138 = vst.msk [vmem:[#allocation3 + $0x5b] sm:$0xff] %vm4124, 0.0
      %4139 = vst.msk [vmem:[#allocation3 + $0x63] sm:$0x7] %vm4126, 0.0
      %s4140 = scalar_lea.vmem [#allocation3], 11
      %v4141 = vld [vmem:[%s4140] ss:$2 sm:$0xff]
      %s4142 = scalar_lea.vmem [#allocation3], 27
      %v4143 = vld [vmem:[%s4142] ss:$2 sm:$0xff]
      %s4144 = scalar_lea.vmem [#allocation3], 43
      %v4145 = vld [vmem:[%s4144] ss:$2 sm:$0xff]
      %s4146 = scalar_lea.vmem [#allocation3], 59
      %v4147 = vld [vmem:[%s4146] ss:$2 sm:$0xff]
      %s4148 = scalar_lea.vmem [#allocation3], 75
      %v4149 = vld [vmem:[%s4148] ss:$2 sm:$0xff]
      %s4150 = scalar_lea.vmem [#allocation3], 12
      %v4151 = vld [vmem:[%s4150] ss:$2 sm:$0xff]
      %s4152 = scalar_lea.vmem [#allocation3], 28
      %v4153 = vld [vmem:[%s4152] ss:$2 sm:$0xff]
      %s4154 = scalar_lea.vmem [#allocation3], 44
      %v4155 = vld [vmem:[%s4154] ss:$2 sm:$0xff]
      %s4156 = scalar_lea.vmem [#allocation3], 60
      %v4157 = vld [vmem:[%s4156] ss:$2 sm:$0xff]
      %s4158 = scalar_lea.vmem [#allocation3], 76
      %v4159 = vld [vmem:[%s4158] ss:$2 sm:$0xff]
      %v4160 = vmax.f32 %v4141, %v4151
      %v4161 = vmax.f32 %v4143, %v4153
      %v4162 = vmax.f32 %v4145, %v4155
      %v4163 = vmax.f32 %v4147, %v4157
      %v4164 = vmax.f32 %v4149, %v4159
      %4165 = vst.msk [vmem:[#allocation6] sm:$0xff] %vm4124, 0.0
      %4166 = vst.msk [vmem:[#allocation6 + $0x8] sm:$0xff] %vm4124, 0.0
      %4167 = vst.msk [vmem:[#allocation6 + $0x10] sm:$0xff] %vm4124, 0.0
      %4168 = vst.msk [vmem:[#allocation6 + $0x18] sm:$0xff] %vm4124, 0.0
      %vm4169 = vcmask 128000
      %4170 = vst.msk [vmem:[#allocation6 + $0x20] sm:$0x3f] %vm4169, 0.0
      %vm4173 = vcmask 1042432
      %v4174 = vrot.slane %v4160, 5
      %v4175 = vrot.slane %v4161, 5
      %v4176 = vsel %vm4173, %v4174, %v4175
      %v4178 = vmax.f32 %v4160, %v4176
      %vm4179 = vcmask 126976
      %4180 = vst.msk [vmem:[#allocation6 + $0x7] sm:$0x1f] %vm4179, %v4178
      %v4182 = vrot.slane %v4162, 5
      %v4183 = vsel %vm4173, %v4175, %v4182
      %v4185 = vmax.f32 %v4161, %v4183
      %vm4186 = vcmask 129026
      %4187 = vst.msk [vmem:[#allocation6 + $0xb] sm:$0x7c] %vm4186, %v4185
      %v4189 = vrot.slane %v4163, 5
      %v4191 = vmax.f32 %v4162, %v4189
      %v4192 = vmax.f32 %v4163, %v4189
      %vm4193 = vcmask 130052
      %4194 = vst.msk [vmem:[#allocation6 + $0xf] sm:$0xf0] %vm4193, %v4191
      %vm4195 = vcmask 122880
      %4196 = vst.msk [vmem:[#allocation6 + $0x17] sm:$0x1] %vm4195, %v4192
      %v4198 = vrot.slane %v4164, 5
      %v4200 = vmax.f32 %v4163, %v4198
      %v4201 = vmax.f32 %v4164, %v4198
      %vm4202 = vcmask 130054
      %4203 = vst.msk [vmem:[#allocation6 + $0x13] sm:$0xc0] %vm4202, %v4200
      %4204 = vst.msk [vmem:[#allocation6 + $0x1b] sm:$0x7] %vm4126, %v4201
      %v4205 = vld [vmem:[#allocation6] sm:$0xff]
      %v4206 = vld [vmem:[#allocation6 + $0x8] sm:$0xff]
      %v4207 = vld [vmem:[#allocation6 + $0x10] sm:$0xff]
      %v4208 = vpack.c.bf16 %v4206, %v4205
      %v4209 = vpack.c.bf16 %v4207, %v4207
      %v4210 = vld [vmem:[%s7] sm:$0xf]
      %v4211 = vld [vmem:[%s7 + $0x4] sm:$0xf]
      %v4212 = vld [vmem:[#allocation6 + $0x1] sm:$0xff]
      %v4213 = vld [vmem:[#allocation6 + $0x9] sm:$0xff]
      %v4214 = vld [vmem:[#allocation6 + $0x11] sm:$0xff]
      %v4215 = vpack.c.bf16 %v4213, %v4212
      %v4216 = vpack.c.bf16 %v4214, %v4214
      %s4217 = scalar_lea.vmem %s7, 8
      %v4218 = vld [vmem:[%s4217] sm:$0xf]
      %v4219 = vld [vmem:[%s4217 + $0x4] sm:$0xf]
      %v4222 = vunpack.c.l.b16 %v4218
      %v4223 = vunpack.c.l.b16 %v4219
      %v4224 = vpack.c.b16 %v4223, %v4222
      %v4227 = vsel %vm4124, %v4215, 0
      %v4230 = vsel %vm4124, %v4216, 0
      %4232 = vmatpush.bf16.msra.mxu0 0
      %4233 = vmatpush.bf16.msra.mxu0 0
      %4234 = vmatpush.bf16.msra.mxu0 0
      %4235 = vmatpush.bf16.msra.mxu0 0
      %4236 = vmatpush.bf16.msra.mxu0 0
      %4237 = vmatpush.bf16.msra.mxu0 0
      %4238 = vmatpush.bf16.msra.mxu0 0
      %4239 = vmatpush.bf16.msra.mxu0 %v4224
      %4240 = vmatmul.bf16.gmra.mxu0 %v4227
      %v4241 = vpop.f32.mrf.mxu0
      %v4242 = vadd.f32 0.0, %v4241
      %v4243 = vpop.f32.mrf.mxu0
      %v4244 = vadd.f32 0.0, %v4243
      %4245 = vmatmul.bf16.gmra.mxu0 %v4230
      %v4246 = vpop.f32.mrf.mxu0
      %v4247 = vadd.f32 0.0, %v4246
      %v4248 = vpop.f32.mrf.mxu0
      %4249 = vdwg.mxu0
      %v4252 = vunpack.c.l.b16 %v4210
      %v4253 = vunpack.c.l.b16 %v4211
      %v4254 = vpack.c.b16 %v4253, %v4252
      %v4257 = vsel %vm4124, %v4208, 0
      %v4260 = vsel %vm4124, %v4209, 0
      %4262 = vmatpush.bf16.msra.mxu0 0
      %4263 = vmatpush.bf16.msra.mxu0 0
      %4264 = vmatpush.bf16.msra.mxu0 0
      %4265 = vmatpush.bf16.msra.mxu0 0
      %4266 = vmatpush.bf16.msra.mxu0 0
      %4267 = vmatpush.bf16.msra.mxu0 0
      %4268 = vmatpush.bf16.msra.mxu0 0
      %4269 = vmatpush.bf16.msra.mxu0 %v4254
      %4270 = vmatmul.bf16.gmra.mxu0 %v4257
      %v4271 = vpop.f32.mrf.mxu0
      %v4272 = vadd.f32 %v4242, %v4271
      %v4273 = vpop.f32.mrf.mxu0
      %v4274 = vadd.f32 %v4244, %v4273
      %4275 = vmatmul.bf16.gmra.mxu0 %v4260
      %v4276 = vpop.f32.mrf.mxu0
      %v4277 = vadd.f32 %v4247, %v4276
      %v4278 = vpop.f32.mrf.mxu0
      %4279 = vdwg.mxu0
      %v4280 = vld [vmem:[#allocation6 + $0x2] sm:$0xff]
      %v4281 = vld [vmem:[#allocation6 + $0xa] sm:$0xff]
      %v4282 = vld [vmem:[#allocation6 + $0x12] sm:$0xff]
      %v4283 = vpack.c.bf16 %v4281, %v4280
      %v4284 = vpack.c.bf16 %v4282, %v4282
      %s4285 = scalar_lea.vmem %s7, 16
      %v4286 = vld [vmem:[%s4285] sm:$0xf]
      %v4287 = vld [vmem:[%s4285 + $0x4] sm:$0xf]
      %v4290 = vunpack.c.l.b16 %v4286
      %v4291 = vunpack.c.l.b16 %v4287
      %v4292 = vpack.c.b16 %v4291, %v4290
      %v4295 = vsel %vm4124, %v4283, 0
      %v4298 = vsel %vm4124, %v4284, 0
      %4300 = vmatpush.bf16.msra.mxu0 0
      %4301 = vmatpush.bf16.msra.mxu0 0
      %4302 = vmatpush.bf16.msra.mxu0 0
      %4303 = vmatpush.bf16.msra.mxu0 0
      %4304 = vmatpush.bf16.msra.mxu0 0
      %4305 = vmatpush.bf16.msra.mxu0 0
      %4306 = vmatpush.bf16.msra.mxu0 0
      %4307 = vmatpush.bf16.msra.mxu0 %v4292
      %4308 = vmatmul.bf16.gmra.mxu0 %v4295
      %v4309 = vpop.f32.mrf.mxu0
      %v4310 = vadd.f32 0.0, %v4309
      %v4311 = vpop.f32.mrf.mxu0
      %v4312 = vadd.f32 0.0, %v4311
      %4313 = vmatmul.bf16.gmra.mxu0 %v4298
      %v4314 = vpop.f32.mrf.mxu0
      %v4315 = vadd.f32 0.0, %v4314
      %v4316 = vpop.f32.mrf.mxu0
      %4317 = vdwg.mxu0
      %v4318 = vadd.f32 %v4272, %v4310
      %v4319 = vadd.f32 %v4274, %v4312
      %v4320 = vadd.f32 %v4277, %v4315
      %v4321 = vld [vmem:[#allocation6 + $0x6] sm:$0xff]
      %v4322 = vld [vmem:[#allocation6 + $0xe] sm:$0xff]
      %v4323 = vld [vmem:[#allocation6 + $0x16] sm:$0xff]
      %v4324 = vpack.c.bf16 %v4322, %v4321
      %v4325 = vpack.c.bf16 %v4323, %v4323
      %s4326 = scalar_lea.vmem %s7, 24
      %v4327 = vld [vmem:[%s4326] sm:$0xf]
      %v4328 = vld [vmem:[%s4326 + $0x4] sm:$0xf]
      %v4331 = vunpack.c.l.b16 %v4327
      %v4332 = vunpack.c.l.b16 %v4328
      %v4333 = vpack.c.b16 %v4332, %v4331
      %v4336 = vsel %vm4124, %v4324, 0
      %v4339 = vsel %vm4124, %v4325, 0
      %4341 = vmatpush.bf16.msra.mxu0 0
      %4342 = vmatpush.bf16.msra.mxu0 0
      %4343 = vmatpush.bf16.msra.mxu0 0
      %4344 = vmatpush.bf16.msra.mxu0 0
      %4345 = vmatpush.bf16.msra.mxu0 0
      %4346 = vmatpush.bf16.msra.mxu0 0
      %4347 = vmatpush.bf16.msra.mxu0 0
      %4348 = vmatpush.bf16.msra.mxu0 %v4333
      %4349 = vmatmul.bf16.gmra.mxu0 %v4336
      %v4350 = vpop.f32.mrf.mxu0
      %v4351 = vadd.f32 0.0, %v4350
      %v4352 = vpop.f32.mrf.mxu0
      %v4353 = vadd.f32 0.0, %v4352
      %4354 = vmatmul.bf16.gmra.mxu0 %v4339
      %v4355 = vpop.f32.mrf.mxu0
      %v4356 = vadd.f32 0.0, %v4355
      %v4357 = vpop.f32.mrf.mxu0
      %4358 = vdwg.mxu0
      %v4359 = vadd.f32 %v4318, %v4351
      %v4360 = vadd.f32 %v4319, %v4353
      %v4361 = vadd.f32 %v4320, %v4356
      %v4362 = vld [vmem:[#allocation6 + $0x7] sm:$0xff]
      %v4363 = vld [vmem:[#allocation6 + $0xf] sm:$0xff]
      %v4364 = vld [vmem:[#allocation6 + $0x17] sm:$0xff]
      %v4365 = vpack.c.bf16 %v4363, %v4362
      %v4366 = vpack.c.bf16 %v4364, %v4364
      %s4367 = scalar_lea.vmem %s7, 32
      %v4368 = vld [vmem:[%s4367] sm:$0xf]
      %v4369 = vld [vmem:[%s4367 + $0x4] sm:$0xf]
      %v4372 = vunpack.c.l.b16 %v4368
      %v4373 = vunpack.c.l.b16 %v4369
      %v4374 = vpack.c.b16 %v4373, %v4372
      %v4377 = vsel %vm4124, %v4365, 0
      %v4380 = vsel %vm4124, %v4366, 0
      %4382 = vmatpush.bf16.msra.mxu0 0
      %4383 = vmatpush.bf16.msra.mxu0 0
      %4384 = vmatpush.bf16.msra.mxu0 0
      %4385 = vmatpush.bf16.msra.mxu0 0
      %4386 = vmatpush.bf16.msra.mxu0 0
      %4387 = vmatpush.bf16.msra.mxu0 0
      %4388 = vmatpush.bf16.msra.mxu0 0
      %4389 = vmatpush.bf16.msra.mxu0 %v4374
      %4390 = vmatmul.bf16.gmra.mxu0 %v4377
      %v4391 = vpop.f32.mrf.mxu0
      %v4392 = vadd.f32 0.0, %v4391
      %v4393 = vpop.f32.mrf.mxu0
      %v4394 = vadd.f32 0.0, %v4393
      %4395 = vmatmul.bf16.gmra.mxu0 %v4380
      %v4396 = vpop.f32.mrf.mxu0
      %v4397 = vadd.f32 0.0, %v4396
      %v4398 = vpop.f32.mrf.mxu0
      %4399 = vdwg.mxu0
      %v4400 = vadd.f32 %v4359, %v4392
      %v4401 = vadd.f32 %v4360, %v4394
      %v4402 = vadd.f32 %v4361, %v4397
      %v4403 = vld [vmem:[#allocation6 + $0x8] sm:$0xff]
      %v4404 = vld [vmem:[#allocation6 + $0x10] sm:$0xff]
      %v4405 = vld [vmem:[#allocation6 + $0x18] sm:$0xff]
      %v4406 = vpack.c.bf16 %v4404, %v4403
      %v4407 = vpack.c.bf16 %v4405, %v4405
      %s4408 = scalar_lea.vmem %s7, 40
      %v4409 = vld [vmem:[%s4408] sm:$0xf]
      %v4410 = vld [vmem:[%s4408 + $0x4] sm:$0xf]
      %v4413 = vunpack.c.l.b16 %v4409
      %v4414 = vunpack.c.l.b16 %v4410
      %v4415 = vpack.c.b16 %v4414, %v4413
      %v4418 = vsel %vm4124, %v4406, 0
      %v4421 = vsel %vm4124, %v4407, 0
      %4423 = vmatpush.bf16.msra.mxu0 0
      %4424 = vmatpush.bf16.msra.mxu0 0
      %4425 = vmatpush.bf16.msra.mxu0 0
      %4426 = vmatpush.bf16.msra.mxu0 0
      %4427 = vmatpush.bf16.msra.mxu0 0
      %4428 = vmatpush.bf16.msra.mxu0 0
      %4429 = vmatpush.bf16.msra.mxu0 0
      %4430 = vmatpush.bf16.msra.mxu0 %v4415
      %4431 = vmatmul.bf16.gmra.mxu0 %v4418
      %v4432 = vpop.f32.mrf.mxu0
      %v4433 = vadd.f32 0.0, %v4432
      %v4434 = vpop.f32.mrf.mxu0
      %v4435 = vadd.f32 0.0, %v4434
      %4436 = vmatmul.bf16.gmra.mxu0 %v4421
      %v4437 = vpop.f32.mrf.mxu0
      %v4438 = vadd.f32 0.0, %v4437
      %v4439 = vpop.f32.mrf.mxu0
      %4440 = vdwg.mxu0
      %v4441 = vadd.f32 %v4400, %v4433
      %v4442 = vadd.f32 %v4401, %v4435
      %v4443 = vadd.f32 %v4402, %v4438
      %v4444 = vld [vmem:[#allocation6 + $0xc] sm:$0xff]
      %v4445 = vld [vmem:[#allocation6 + $0x14] sm:$0xff]
      %v4446 = vld [vmem:[#allocation6 + $0x1c] sm:$0xff]
      %v4447 = vpack.c.bf16 %v4445, %v4444
      %v4448 = vpack.c.bf16 %v4446, %v4446
      %s4449 = scalar_lea.vmem %s7, 48
      %v4450 = vld [vmem:[%s4449] sm:$0xf]
      %v4451 = vld [vmem:[%s4449 + $0x4] sm:$0xf]
      %v4454 = vunpack.c.l.b16 %v4450
      %v4455 = vunpack.c.l.b16 %v4451
      %v4456 = vpack.c.b16 %v4455, %v4454
      %v4459 = vsel %vm4124, %v4447, 0
      %v4462 = vsel %vm4124, %v4448, 0
      %4464 = vmatpush.bf16.msra.mxu0 0
      %4465 = vmatpush.bf16.msra.mxu0 0
      %4466 = vmatpush.bf16.msra.mxu0 0
      %4467 = vmatpush.bf16.msra.mxu0 0
      %4468 = vmatpush.bf16.msra.mxu0 0
      %4469 = vmatpush.bf16.msra.mxu0 0
      %4470 = vmatpush.bf16.msra.mxu0 0
      %4471 = vmatpush.bf16.msra.mxu0 %v4456
      %4472 = vmatmul.bf16.gmra.mxu0 %v4459
      %v4473 = vpop.f32.mrf.mxu0
      %v4474 = vadd.f32 0.0, %v4473
      %v4475 = vpop.f32.mrf.mxu0
      %v4476 = vadd.f32 0.0, %v4475
      %4477 = vmatmul.bf16.gmra.mxu0 %v4462
      %v4478 = vpop.f32.mrf.mxu0
      %v4479 = vadd.f32 0.0, %v4478
      %v4480 = vpop.f32.mrf.mxu0
      %4481 = vdwg.mxu0
      %v4482 = vadd.f32 %v4441, %v4474
      %v4483 = vadd.f32 %v4442, %v4476
      %v4484 = vadd.f32 %v4443, %v4479
      %v4485 = vld [vmem:[#allocation6 + $0xd] sm:$0xff]
      %v4486 = vld [vmem:[#allocation6 + $0x15] sm:$0xff]
      %v4487 = vld [vmem:[#allocation6 + $0x1d] sm:$0xff]
      %v4488 = vpack.c.bf16 %v4486, %v4485
      %v4489 = vpack.c.bf16 %v4487, %v4487
      %s4490 = scalar_lea.vmem %s7, 56
      %v4491 = vld [vmem:[%s4490] sm:$0xf]
      %v4492 = vld [vmem:[%s4490 + $0x4] sm:$0xf]
      %v4495 = vunpack.c.l.b16 %v4491
      %v4496 = vunpack.c.l.b16 %v4492
      %v4497 = vpack.c.b16 %v4496, %v4495
      %v4500 = vsel %vm4124, %v4488, 0
      %v4503 = vsel %vm4124, %v4489, 0
      %4505 = vmatpush.bf16.msra.mxu0 0
      %4506 = vmatpush.bf16.msra.mxu0 0
      %4507 = vmatpush.bf16.msra.mxu0 0
      %4508 = vmatpush.bf16.msra.mxu0 0
      %4509 = vmatpush.bf16.msra.mxu0 0
      %4510 = vmatpush.bf16.msra.mxu0 0
      %4511 = vmatpush.bf16.msra.mxu0 0
      %4512 = vmatpush.bf16.msra.mxu0 %v4497
      %4513 = vmatmul.bf16.gmra.mxu0 %v4500
      %v4514 = vpop.f32.mrf.mxu0
      %v4515 = vadd.f32 0.0, %v4514
      %v4516 = vpop.f32.mrf.mxu0
      %v4517 = vadd.f32 0.0, %v4516
      %4518 = vmatmul.bf16.gmra.mxu0 %v4503
      %v4519 = vpop.f32.mrf.mxu0
      %v4520 = vadd.f32 0.0, %v4519
      %v4521 = vpop.f32.mrf.mxu0
      %4522 = vdwg.mxu0
      %v4523 = vadd.f32 %v4482, %v4515
      %v4524 = vadd.f32 %v4483, %v4517
      %v4525 = vadd.f32 %v4484, %v4520
      %v4526 = vld [vmem:[#allocation6 + $0xe] sm:$0xff]
      %v4527 = vld [vmem:[#allocation6 + $0x16] sm:$0xff]
      %v4528 = vld [vmem:[#allocation6 + $0x1e] sm:$0xff]
      %v4529 = vpack.c.bf16 %v4527, %v4526
      %v4530 = vpack.c.bf16 %v4528, %v4528
      %s4531 = scalar_lea.vmem %s7, 64
      %v4532 = vld [vmem:[%s4531] sm:$0xf]
      %v4533 = vld [vmem:[%s4531 + $0x4] sm:$0xf]
      %v4536 = vunpack.c.l.b16 %v4532
      %v4537 = vunpack.c.l.b16 %v4533
      %v4538 = vpack.c.b16 %v4537, %v4536
      %v4541 = vsel %vm4124, %v4529, 0
      %v4544 = vsel %vm4124, %v4530, 0
      %4546 = vmatpush.bf16.msra.mxu0 0
      %4547 = vmatpush.bf16.msra.mxu0 0
      %4548 = vmatpush.bf16.msra.mxu0 0
      %4549 = vmatpush.bf16.msra.mxu0 0
      %4550 = vmatpush.bf16.msra.mxu0 0
      %4551 = vmatpush.bf16.msra.mxu0 0
      %4552 = vmatpush.bf16.msra.mxu0 0
      %4553 = vmatpush.bf16.msra.mxu0 %v4538
      %4554 = vmatmul.bf16.gmra.mxu0 %v4541
      %v4555 = vpop.f32.mrf.mxu0
      %v4556 = vadd.f32 0.0, %v4555
      %v4557 = vpop.f32.mrf.mxu0
      %v4558 = vadd.f32 0.0, %v4557
      %4559 = vmatmul.bf16.gmra.mxu0 %v4544
      %v4560 = vpop.f32.mrf.mxu0
      %v4561 = vadd.f32 0.0, %v4560
      %v4562 = vpop.f32.mrf.mxu0
      %4563 = vdwg.mxu0
      %v4564 = vadd.f32 %v4523, %v4556
      %v4565 = vadd.f32 %v4524, %v4558
      %v4566 = vadd.f32 %v4525, %v4561
      %v4567 = vld [vmem:[%s8] sm:$0x1]
      %v4569 = vperm.slane %v4567, 0
      %v4571 = vadd.f32 %v4564, %v4569
      %v4572 = vadd.f32 %v4565, %v4569
      %v4573 = vadd.f32 %v4566, %v4569
      %v4574 = vmax.f32 %v4571, 0.0
      %v4575 = vmax.f32 %v4572, 0.0
      %v4576 = vmax.f32 %v4573, 0.0
      %v4577 = vld [vmem:[%s9] sm:$0xff]
      %v4578 = vld [vmem:[%s9 + $0x8] sm:$0xff]
      %v4579 = vld [vmem:[%s9 + $0x10] sm:$0xff]
      %4581 = vset.pattern.permute.xlu0 0
      %4582 = vperm.xlu0 %4581, %v4577
      %v4583 = vpop.permute.xlu0 %4582
      %4586 = vset.pattern.permute.xlu0 0
      %4587 = vperm.xlu0 %4586, %v4578
      %v4588 = vpop.permute.xlu0 %4587
      %4591 = vset.pattern.permute.xlu0 0
      %4592 = vperm.xlu0 %4591, %v4579
      %v4593 = vpop.permute.xlu0 %4592
      %v4595 = vmul.f32 %v4574, %v4583
      %v4596 = vmul.f32 %v4575, %v4588
      %v4597 = vmul.f32 %v4576, %v4593
      %vm4598 = vcmask 260096
      %4599 = vst.msk [vmem:[#allocation4] sm:$0x7f] %vm4598, 0.0
      %vm4600 = vcmask 261120
      %4601 = vst.msk [vmem:[#allocation4 + $0x7] sm:$0xff] %vm4600, %v4595
      %4602 = vst.msk [vmem:[#allocation4 + $0xf] sm:$0xff] %vm4600, %v4596
      %4603 = vst.msk [vmem:[#allocation4 + $0x17] sm:$0xff] %vm4600, %v4597
      %4604 = vst.msk [vmem:[#allocation4 + $0x1f] sm:$0x7f] %vm4598, 0.0
      %s4605 = scalar_lea.vmem [#allocation4], 7
      %v4606 = vld [vmem:[%s4605] ss:$2 sm:$0xff]
      %s4607 = scalar_lea.vmem [#allocation4], 23
      %v4608 = vld [vmem:[%s4607] ss:$2 sm:$0xf]
      %s4609 = scalar_lea.vmem [#allocation4], 8
      %v4610 = vld [vmem:[%s4609] ss:$2 sm:$0xff]
      %s4611 = scalar_lea.vmem [#allocation4], 24
      %v4612 = vld [vmem:[%s4611] ss:$2 sm:$0xf]
      %v4613 = vmax.f32 %v4606, %v4610
      %v4614 = vmax.f32 %v4608, %v4612
      %4615 = vst.msk [vmem:[#allocation7] sm:$0xff] %vm4600, 0.0
      %4616 = vst.msk [vmem:[#allocation7 + $0x8] sm:$0xff] %vm4600, 0.0
      %vm4617 = vcmask 254976
      %4618 = vst.msk [vmem:[#allocation7 + $0x10] sm:$0x3] %vm4617, 0.0
      %v4620 = vrot.slane %v4613, 3
      %v4622 = vmax.f32 %v4613, %v4620
      %vm4623 = vcmask 256000
      %4624 = vst.msk [vmem:[#allocation7 + $0x5] sm:$0x7] %vm4623, %v4622
      %v4626 = vrot.slane %v4614, 3
      %v4628 = vmax.f32 %v4613, %v4626
      %v4629 = vmax.f32 %v4614, %v4626
      %vm4630 = vcmask 261126
      %4631 = vst.msk [vmem:[#allocation7 + $0x3] sm:$0xc0] %vm4630, %v4628
      %vm4632 = vcmask 253952
      %4633 = vst.msk [vmem:[#allocation7 + $0xb] sm:$0x1] %vm4632, %v4629
      %v4634 = vld [vmem:[%s10] sm:$0xf]
      %v4635 = vld [vmem:[%s10 + $0x4] sm:$0xf]
      %v4636 = vld [vmem:[%s10 + $0x8] sm:$0xf]
      %v4637 = vld [vmem:[%s10 + $0xc] sm:$0xf]
      %v4638 = vld [vmem:[%s10 + $0x10] sm:$0x7]
      %v4639 = vld [vmem:[#allocation7] sm:$0xff]
      %v4640 = vld [vmem:[#allocation7 + $0x8] sm:$0xff]
      %v4641 = vld [vmem:[#allocation7 + $0x10] sm:$0x3]
      %v4642 = vpack.c.bf16 %v4640, %v4639
      %v4643 = vpack.c.bf16 %v4641, %v4641
      %v4644 = vld [vmem:[#allocation4] sm:$0xff]
      %v4645 = vld [vmem:[#allocation4 + $0x8] sm:$0xff]
      %v4646 = vld [vmem:[#allocation4 + $0x10] sm:$0xff]
      %v4647 = vld [vmem:[#allocation4 + $0x18] sm:$0xff]
      %v4648 = vld [vmem:[#allocation4 + $0x20] sm:$0x3f]
      %v4654 = vunpack.c.l.b16 %v4634
      %v4655 = vunpack.c.l.b16 %v4635
      %v4656 = vunpack.c.l.b16 %v4636
      %v4657 = vunpack.c.l.b16 %v4637
      %v4658 = vunpack.c.l.b16 %v4638
      %v4659 = vpack.c.b16 %v4655, %v4654
      %v4660 = vpack.c.b16 %v4657, %v4656
      %v4661 = vpack.c.b16 %v4658, %v4658
      %vm4662 = vcmask 146432
      %v4664 = vsel %vm4662, %v4659, 0
      %v4667 = vsel %vm4662, %v4660, 0
      %v4670 = vsel %vm4662, %v4661, 0
      %v4673 = vsel %vm770, %v4643, 0
      %4675 = vmatpush.bf16.msra.mxu0 0
      %4676 = vmatpush.bf16.msra.mxu0 0
      %4677 = vmatpush.bf16.msra.mxu0 0
      %4678 = vmatpush.bf16.msra.mxu0 0
      %4679 = vmatpush.bf16.msra.mxu0 0
      %4680 = vmatpush.bf16.msra.mxu0 0
      %4681 = vmatpush.bf16.msra.mxu0 %v4673
      %4682 = vmatpush.bf16.msra.mxu0 %v4642
      %4683 = vmatmul.bf16.gmra.mxu0 %v4664
      %v4684 = vpop.f32.mrf.mxu0
      %v4685 = vadd.f32 %v4644, %v4684
      %v4686 = vpop.f32.mrf.mxu0
      %v4687 = vadd.f32 %v4645, %v4686
      %4688 = vmatmul.bf16.gmra.mxu0 %v4667
      %v4689 = vpop.f32.mrf.mxu0
      %v4690 = vadd.f32 %v4646, %v4689
      %v4691 = vpop.f32.mrf.mxu0
      %v4692 = vadd.f32 %v4647, %v4691
      %4693 = vmatmul.bf16.gmra.mxu0 %v4670
      %v4694 = vpop.f32.mrf.mxu0
      %v4695 = vadd.f32 %v4648, %v4694
      %v4696 = vpop.f32.mrf.mxu0
      %4697 = vdwg.mxu0
      %4698 = vst.msk [vmem:[#allocation8] sm:$0xff] %vm4600, %v4685
      %4699 = vst.msk [vmem:[#allocation8 + $0x8] sm:$0xff] %vm4600, %v4687
      %4700 = vst.msk [vmem:[#allocation8 + $0x10] sm:$0xff] %vm4600, %v4690
      %4701 = vst.msk [vmem:[#allocation8 + $0x18] sm:$0xff] %vm4600, %v4692
      %vm4702 = vcmask 259072
      %4703 = vst.msk [vmem:[#allocation8 + $0x20] sm:$0x3f] %vm4702, %v4695
      %v4704 = vld [vmem:[#allocation8] sm:$0xff]
      %v4705 = vld [vmem:[#allocation8 + $0x8] sm:$0xff]
      %v4706 = vld [vmem:[#allocation8 + $0x10] sm:$0xff]
      %v4707 = vpack.c.bf16 %v4705, %v4704
      %v4708 = vpack.c.bf16 %v4706, %v4706
      %v4709 = vld [vmem:[%s11] sm:$0xf]
      %v4710 = vld [vmem:[%s11 + $0x4] sm:$0xf]
      %v4711 = vld [vmem:[%s11 + $0x8] sm:$0xf]
      %v4712 = vld [vmem:[%s11 + $0xc] sm:$0xf]
      %v4713 = vld [vmem:[#allocation8 + $0x1] sm:$0xff]
      %v4714 = vld [vmem:[#allocation8 + $0x9] sm:$0xff]
      %v4715 = vld [vmem:[#allocation8 + $0x11] sm:$0xff]
      %v4716 = vpack.c.bf16 %v4714, %v4713
      %v4717 = vpack.c.bf16 %v4715, %v4715
      %s4718 = scalar_lea.vmem %s11, 16
      %v4719 = vld [vmem:[%s4718] sm:$0xf]
      %v4720 = vld [vmem:[%s4718 + $0x4] sm:$0xf]
      %v4721 = vld [vmem:[%s4718 + $0x8] sm:$0xf]
      %v4722 = vld [vmem:[%s4718 + $0xc] sm:$0xf]
      %v4727 = vunpack.c.l.b16 %v4719
      %v4728 = vunpack.c.l.b16 %v4720
      %v4729 = vunpack.c.l.b16 %v4721
      %v4730 = vunpack.c.l.b16 %v4722
      %v4731 = vpack.c.b16 %v4728, %v4727
      %v4732 = vpack.c.b16 %v4730, %v4729
      %v4736 = vsel %vm4600, %v4716, 0
      %v4739 = vsel %vm4600, %v4717, 0
      %4741 = vmatpush.bf16.msra.mxu0 0
      %4742 = vmatpush.bf16.msra.mxu0 0
      %4743 = vmatpush.bf16.msra.mxu0 0
      %4744 = vmatpush.bf16.msra.mxu0 0
      %4745 = vmatpush.bf16.msra.mxu0 0
      %4746 = vmatpush.bf16.msra.mxu0 0
      %4747 = vmatpush.bf16.msra.mxu0 %v4732
      %4748 = vmatpush.bf16.msra.mxu0 %v4731
      %4749 = vmatmul.bf16.gmra.mxu0 %v4736
      %v4750 = vpop.f32.mrf.mxu0
      %v4751 = vadd.f32 0.0, %v4750
      %v4752 = vpop.f32.mrf.mxu0
      %v4753 = vadd.f32 0.0, %v4752
      %4754 = vmatmul.bf16.gmra.mxu0 %v4739
      %v4755 = vpop.f32.mrf.mxu0
      %v4756 = vadd.f32 0.0, %v4755
      %v4757 = vpop.f32.mrf.mxu0
      %4758 = vdwg.mxu0
      %v4763 = vunpack.c.l.b16 %v4709
      %v4764 = vunpack.c.l.b16 %v4710
      %v4765 = vunpack.c.l.b16 %v4711
      %v4766 = vunpack.c.l.b16 %v4712
      %v4767 = vpack.c.b16 %v4764, %v4763
      %v4768 = vpack.c.b16 %v4766, %v4765
      %v4772 = vsel %vm4600, %v4707, 0
      %v4775 = vsel %vm4600, %v4708, 0
      %4777 = vmatpush.bf16.msra.mxu0 0
      %4778 = vmatpush.bf16.msra.mxu0 0
      %4779 = vmatpush.bf16.msra.mxu0 0
      %4780 = vmatpush.bf16.msra.mxu0 0
      %4781 = vmatpush.bf16.msra.mxu0 0
      %4782 = vmatpush.bf16.msra.mxu0 0
      %4783 = vmatpush.bf16.msra.mxu0 %v4768
      %4784 = vmatpush.bf16.msra.mxu0 %v4767
      %4785 = vmatmul.bf16.gmra.mxu0 %v4772
      %v4786 = vpop.f32.mrf.mxu0
      %v4787 = vadd.f32 %v4751, %v4786
      %v4788 = vpop.f32.mrf.mxu0
      %v4789 = vadd.f32 %v4753, %v4788
      %4790 = vmatmul.bf16.gmra.mxu0 %v4775
      %v4791 = vpop.f32.mrf.mxu0
      %v4792 = vadd.f32 %v4756, %v4791
      %v4793 = vpop.f32.mrf.mxu0
      %4794 = vdwg.mxu0
      %v4795 = vld [vmem:[#allocation8 + $0x2] sm:$0xff]
      %v4796 = vld [vmem:[#allocation8 + $0xa] sm:$0xff]
      %v4797 = vld [vmem:[#allocation8 + $0x12] sm:$0xff]
      %v4798 = vpack.c.bf16 %v4796, %v4795
      %v4799 = vpack.c.bf16 %v4797, %v4797
      %s4800 = scalar_lea.vmem %s11, 32
      %v4801 = vld [vmem:[%s4800] sm:$0xf]
      %v4802 = vld [vmem:[%s4800 + $0x4] sm:$0xf]
      %v4803 = vld [vmem:[%s4800 + $0x8] sm:$0xf]
      %v4804 = vld [vmem:[%s4800 + $0xc] sm:$0xf]
      %v4809 = vunpack.c.l.b16 %v4801
      %v4810 = vunpack.c.l.b16 %v4802
      %v4811 = vunpack.c.l.b16 %v4803
      %v4812 = vunpack.c.l.b16 %v4804
      %v4813 = vpack.c.b16 %v4810, %v4809
      %v4814 = vpack.c.b16 %v4812, %v4811
      %v4818 = vsel %vm4600, %v4798, 0
      %v4821 = vsel %vm4600, %v4799, 0
      %4823 = vmatpush.bf16.msra.mxu0 0
      %4824 = vmatpush.bf16.msra.mxu0 0
      %4825 = vmatpush.bf16.msra.mxu0 0
      %4826 = vmatpush.bf16.msra.mxu0 0
      %4827 = vmatpush.bf16.msra.mxu0 0
      %4828 = vmatpush.bf16.msra.mxu0 0
      %4829 = vmatpush.bf16.msra.mxu0 %v4814
      %4830 = vmatpush.bf16.msra.mxu0 %v4813
      %4831 = vmatmul.bf16.gmra.mxu0 %v4818
      %v4832 = vpop.f32.mrf.mxu0
      %v4833 = vadd.f32 0.0, %v4832
      %v4834 = vpop.f32.mrf.mxu0
      %v4835 = vadd.f32 0.0, %v4834
      %4836 = vmatmul.bf16.gmra.mxu0 %v4821
      %v4837 = vpop.f32.mrf.mxu0
      %v4838 = vadd.f32 0.0, %v4837
      %v4839 = vpop.f32.mrf.mxu0
      %4840 = vdwg.mxu0
      %v4841 = vadd.f32 %v4787, %v4833
      %v4842 = vadd.f32 %v4789, %v4835
      %v4843 = vadd.f32 %v4792, %v4838
      %v4844 = vld [vmem:[#allocation8 + $0x6] sm:$0xff]
      %v4845 = vld [vmem:[#allocation8 + $0xe] sm:$0xff]
      %v4846 = vld [vmem:[#allocation8 + $0x16] sm:$0xff]
      %v4847 = vpack.c.bf16 %v4845, %v4844
      %v4848 = vpack.c.bf16 %v4846, %v4846
      %s4849 = scalar_lea.vmem %s11, 48
      %v4850 = vld [vmem:[%s4849] sm:$0xf]
      %v4851 = vld [vmem:[%s4849 + $0x4] sm:$0xf]
      %v4852 = vld [vmem:[%s4849 + $0x8] sm:$0xf]
      %v4853 = vld [vmem:[%s4849 + $0xc] sm:$0xf]
      %v4858 = vunpack.c.l.b16 %v4850
      %v4859 = vunpack.c.l.b16 %v4851
      %v4860 = vunpack.c.l.b16 %v4852
      %v4861 = vunpack.c.l.b16 %v4853
      %v4862 = vpack.c.b16 %v4859, %v4858
      %v4863 = vpack.c.b16 %v4861, %v4860
      %v4867 = vsel %vm4600, %v4847, 0
      %v4870 = vsel %vm4600, %v4848, 0
      %4872 = vmatpush.bf16.msra.mxu0 0
      %4873 = vmatpush.bf16.msra.mxu0 0
      %4874 = vmatpush.bf16.msra.mxu0 0
      %4875 = vmatpush.bf16.msra.mxu0 0
      %4876 = vmatpush.bf16.msra.mxu0 0
      %4877 = vmatpush.bf16.msra.mxu0 0
      %4878 = vmatpush.bf16.msra.mxu0 %v4863
      %4879 = vmatpush.bf16.msra.mxu0 %v4862
      %4880 = vmatmul.bf16.gmra.mxu0 %v4867
      %v4881 = vpop.f32.mrf.mxu0
      %v4882 = vadd.f32 0.0, %v4881
      %v4883 = vpop.f32.mrf.mxu0
      %v4884 = vadd.f32 0.0, %v4883
      %4885 = vmatmul.bf16.gmra.mxu0 %v4870
      %v4886 = vpop.f32.mrf.mxu0
      %v4887 = vadd.f32 0.0, %v4886
      %v4888 = vpop.f32.mrf.mxu0
      %4889 = vdwg.mxu0
      %v4890 = vadd.f32 %v4841, %v4882
      %v4891 = vadd.f32 %v4842, %v4884
      %v4892 = vadd.f32 %v4843, %v4887
      %v4893 = vld [vmem:[#allocation8 + $0x7] sm:$0xff]
      %v4894 = vld [vmem:[#allocation8 + $0xf] sm:$0xff]
      %v4895 = vld [vmem:[#allocation8 + $0x17] sm:$0xff]
      %v4896 = vpack.c.bf16 %v4894, %v4893
      %v4897 = vpack.c.bf16 %v4895, %v4895
      %s4898 = scalar_lea.vmem %s11, 64
      %v4899 = vld [vmem:[%s4898] sm:$0xf]
      %v4900 = vld [vmem:[%s4898 + $0x4] sm:$0xf]
      %v4901 = vld [vmem:[%s4898 + $0x8] sm:$0xf]
      %v4902 = vld [vmem:[%s4898 + $0xc] sm:$0xf]
      %v4907 = vunpack.c.l.b16 %v4899
      %v4908 = vunpack.c.l.b16 %v4900
      %v4909 = vunpack.c.l.b16 %v4901
      %v4910 = vunpack.c.l.b16 %v4902
      %v4911 = vpack.c.b16 %v4908, %v4907
      %v4912 = vpack.c.b16 %v4910, %v4909
      %v4916 = vsel %vm4600, %v4896, 0
      %v4919 = vsel %vm4600, %v4897, 0
      %4921 = vmatpush.bf16.msra.mxu0 0
      %4922 = vmatpush.bf16.msra.mxu0 0
      %4923 = vmatpush.bf16.msra.mxu0 0
      %4924 = vmatpush.bf16.msra.mxu0 0
      %4925 = vmatpush.bf16.msra.mxu0 0
      %4926 = vmatpush.bf16.msra.mxu0 0
      %4927 = vmatpush.bf16.msra.mxu0 %v4912
      %4928 = vmatpush.bf16.msra.mxu0 %v4911
      %4929 = vmatmul.bf16.gmra.mxu0 %v4916
      %v4930 = vpop.f32.mrf.mxu0
      %v4931 = vadd.f32 0.0, %v4930
      %v4932 = vpop.f32.mrf.mxu0
      %v4933 = vadd.f32 0.0, %v4932
      %4934 = vmatmul.bf16.gmra.mxu0 %v4919
      %v4935 = vpop.f32.mrf.mxu0
      %v4936 = vadd.f32 0.0, %v4935
      %v4937 = vpop.f32.mrf.mxu0
      %4938 = vdwg.mxu0
      %v4939 = vadd.f32 %v4890, %v4931
      %v4940 = vadd.f32 %v4891, %v4933
      %v4941 = vadd.f32 %v4892, %v4936
      %v4942 = vld [vmem:[#allocation8 + $0x8] sm:$0xff]
      %v4943 = vld [vmem:[#allocation8 + $0x10] sm:$0xff]
      %v4944 = vld [vmem:[#allocation8 + $0x18] sm:$0xff]
      %v4945 = vpack.c.bf16 %v4943, %v4942
      %v4946 = vpack.c.bf16 %v4944, %v4944
      %s4947 = scalar_lea.vmem %s11, 80
      %v4948 = vld [vmem:[%s4947] sm:$0xf]
      %v4949 = vld [vmem:[%s4947 + $0x4] sm:$0xf]
      %v4950 = vld [vmem:[%s4947 + $0x8] sm:$0xf]
      %v4951 = vld [vmem:[%s4947 + $0xc] sm:$0xf]
      %v4956 = vunpack.c.l.b16 %v4948
      %v4957 = vunpack.c.l.b16 %v4949
      %v4958 = vunpack.c.l.b16 %v4950
      %v4959 = vunpack.c.l.b16 %v4951
      %v4960 = vpack.c.b16 %v4957, %v4956
      %v4961 = vpack.c.b16 %v4959, %v4958
      %v4965 = vsel %vm4600, %v4945, 0
      %v4968 = vsel %vm4600, %v4946, 0
      %4970 = vmatpush.bf16.msra.mxu0 0
      %4971 = vmatpush.bf16.msra.mxu0 0
      %4972 = vmatpush.bf16.msra.mxu0 0
      %4973 = vmatpush.bf16.msra.mxu0 0
      %4974 = vmatpush.bf16.msra.mxu0 0
      %4975 = vmatpush.bf16.msra.mxu0 0
      %4976 = vmatpush.bf16.msra.mxu0 %v4961
      %4977 = vmatpush.bf16.msra.mxu0 %v4960
      %4978 = vmatmul.bf16.gmra.mxu0 %v4965
      %v4979 = vpop.f32.mrf.mxu0
      %v4980 = vadd.f32 0.0, %v4979
      %v4981 = vpop.f32.mrf.mxu0
      %v4982 = vadd.f32 0.0, %v4981
      %4983 = vmatmul.bf16.gmra.mxu0 %v4968
      %v4984 = vpop.f32.mrf.mxu0
      %v4985 = vadd.f32 0.0, %v4984
      %v4986 = vpop.f32.mrf.mxu0
      %4987 = vdwg.mxu0
      %v4988 = vadd.f32 %v4939, %v4980
      %v4989 = vadd.f32 %v4940, %v4982
      %v4990 = vadd.f32 %v4941, %v4985
      %v4991 = vld [vmem:[#allocation8 + $0xc] sm:$0xff]
      %v4992 = vld [vmem:[#allocation8 + $0x14] sm:$0xff]
      %v4993 = vld [vmem:[#allocation8 + $0x1c] sm:$0xff]
      %v4994 = vpack.c.bf16 %v4992, %v4991
      %v4995 = vpack.c.bf16 %v4993, %v4993
      %s4996 = scalar_lea.vmem %s11, 96
      %v4997 = vld [vmem:[%s4996] sm:$0xf]
      %v4998 = vld [vmem:[%s4996 + $0x4] sm:$0xf]
      %v4999 = vld [vmem:[%s4996 + $0x8] sm:$0xf]
      %v5000 = vld [vmem:[%s4996 + $0xc] sm:$0xf]
      %v5005 = vunpack.c.l.b16 %v4997
      %v5006 = vunpack.c.l.b16 %v4998
      %v5007 = vunpack.c.l.b16 %v4999
      %v5008 = vunpack.c.l.b16 %v5000
      %v5009 = vpack.c.b16 %v5006, %v5005
      %v5010 = vpack.c.b16 %v5008, %v5007
      %v5014 = vsel %vm4600, %v4994, 0
      %v5017 = vsel %vm4600, %v4995, 0
      %5019 = vmatpush.bf16.msra.mxu0 0
      %5020 = vmatpush.bf16.msra.mxu0 0
      %5021 = vmatpush.bf16.msra.mxu0 0
      %5022 = vmatpush.bf16.msra.mxu0 0
      %5023 = vmatpush.bf16.msra.mxu0 0
      %5024 = vmatpush.bf16.msra.mxu0 0
      %5025 = vmatpush.bf16.msra.mxu0 %v5010
      %5026 = vmatpush.bf16.msra.mxu0 %v5009
      %5027 = vmatmul.bf16.gmra.mxu0 %v5014
      %v5028 = vpop.f32.mrf.mxu0
      %v5029 = vadd.f32 0.0, %v5028
      %v5030 = vpop.f32.mrf.mxu0
      %v5031 = vadd.f32 0.0, %v5030
      %5032 = vmatmul.bf16.gmra.mxu0 %v5017
      %v5033 = vpop.f32.mrf.mxu0
      %v5034 = vadd.f32 0.0, %v5033
      %v5035 = vpop.f32.mrf.mxu0
      %5036 = vdwg.mxu0
      %v5037 = vadd.f32 %v4988, %v5029
      %v5038 = vadd.f32 %v4989, %v5031
      %v5039 = vadd.f32 %v4990, %v5034
      %v5040 = vld [vmem:[#allocation8 + $0xd] sm:$0xff]
      %v5041 = vld [vmem:[#allocation8 + $0x15] sm:$0xff]
      %v5042 = vld [vmem:[#allocation8 + $0x1d] sm:$0xff]
      %v5043 = vpack.c.bf16 %v5041, %v5040
      %v5044 = vpack.c.bf16 %v5042, %v5042
      %s5045 = scalar_lea.vmem %s11, 112
      %v5046 = vld [vmem:[%s5045] sm:$0xf]
      %v5047 = vld [vmem:[%s5045 + $0x4] sm:$0xf]
      %v5048 = vld [vmem:[%s5045 + $0x8] sm:$0xf]
      %v5049 = vld [vmem:[%s5045 + $0xc] sm:$0xf]
      %v5054 = vunpack.c.l.b16 %v5046
      %v5055 = vunpack.c.l.b16 %v5047
      %v5056 = vunpack.c.l.b16 %v5048
      %v5057 = vunpack.c.l.b16 %v5049
      %v5058 = vpack.c.b16 %v5055, %v5054
      %v5059 = vpack.c.b16 %v5057, %v5056
      %v5063 = vsel %vm4600, %v5043, 0
      %v5066 = vsel %vm4600, %v5044, 0
      %5068 = vmatpush.bf16.msra.mxu0 0
      %5069 = vmatpush.bf16.msra.mxu0 0
      %5070 = vmatpush.bf16.msra.mxu0 0
      %5071 = vmatpush.bf16.msra.mxu0 0
      %5072 = vmatpush.bf16.msra.mxu0 0
      %5073 = vmatpush.bf16.msra.mxu0 0
      %5074 = vmatpush.bf16.msra.mxu0 %v5059
      %5075 = vmatpush.bf16.msra.mxu0 %v5058
      %5076 = vmatmul.bf16.gmra.mxu0 %v5063
      %v5077 = vpop.f32.mrf.mxu0
      %v5078 = vadd.f32 0.0, %v5077
      %v5079 = vpop.f32.mrf.mxu0
      %v5080 = vadd.f32 0.0, %v5079
      %5081 = vmatmul.bf16.gmra.mxu0 %v5066
      %v5082 = vpop.f32.mrf.mxu0
      %v5083 = vadd.f32 0.0, %v5082
      %v5084 = vpop.f32.mrf.mxu0
      %5085 = vdwg.mxu0
      %v5086 = vadd.f32 %v5037, %v5078
      %v5087 = vadd.f32 %v5038, %v5080
      %v5088 = vadd.f32 %v5039, %v5083
      %v5089 = vld [vmem:[#allocation8 + $0xe] sm:$0xff]
      %v5090 = vld [vmem:[#allocation8 + $0x16] sm:$0xff]
      %v5091 = vld [vmem:[#allocation8 + $0x1e] sm:$0xff]
      %v5092 = vpack.c.bf16 %v5090, %v5089
      %v5093 = vpack.c.bf16 %v5091, %v5091
      %s5094 = scalar_lea.vmem %s11, 128
      %v5095 = vld [vmem:[%s5094] sm:$0xf]
      %v5096 = vld [vmem:[%s5094 + $0x4] sm:$0xf]
      %v5097 = vld [vmem:[%s5094 + $0x8] sm:$0xf]
      %v5098 = vld [vmem:[%s5094 + $0xc] sm:$0xf]
      %v5103 = vunpack.c.l.b16 %v5095
      %v5104 = vunpack.c.l.b16 %v5096
      %v5105 = vunpack.c.l.b16 %v5097
      %v5106 = vunpack.c.l.b16 %v5098
      %v5107 = vpack.c.b16 %v5104, %v5103
      %v5108 = vpack.c.b16 %v5106, %v5105
      %v5112 = vsel %vm4600, %v5092, 0
      %v5115 = vsel %vm4600, %v5093, 0
      %5117 = vmatpush.bf16.msra.mxu0 0
      %5118 = vmatpush.bf16.msra.mxu0 0
      %5119 = vmatpush.bf16.msra.mxu0 0
      %5120 = vmatpush.bf16.msra.mxu0 0
      %5121 = vmatpush.bf16.msra.mxu0 0
      %5122 = vmatpush.bf16.msra.mxu0 0
      %5123 = vmatpush.bf16.msra.mxu0 %v5108
      %5124 = vmatpush.bf16.msra.mxu0 %v5107
      %5125 = vmatmul.bf16.gmra.mxu0 %v5112
      %v5126 = vpop.f32.mrf.mxu0
      %v5127 = vadd.f32 0.0, %v5126
      %v5128 = vpop.f32.mrf.mxu0
      %v5129 = vadd.f32 0.0, %v5128
      %5130 = vmatmul.bf16.gmra.mxu0 %v5115
      %v5131 = vpop.f32.mrf.mxu0
      %v5132 = vadd.f32 0.0, %v5131
      %v5133 = vpop.f32.mrf.mxu0
      %5134 = vdwg.mxu0
      %v5135 = vadd.f32 %v5086, %v5127
      %v5136 = vadd.f32 %v5087, %v5129
      %v5137 = vadd.f32 %v5088, %v5132
      %v5138 = vld [vmem:[%s12] sm:$0x1]
      %v5140 = vperm.slane %v5138, 0
      %v5142 = vadd.f32 %v5135, %v5140
      %v5143 = vadd.f32 %v5136, %v5140
      %v5144 = vadd.f32 %v5137, %v5140
      %v5145 = vmax.f32 %v5142, 0.0
      %v5146 = vmax.f32 %v5143, 0.0
      %v5147 = vmax.f32 %v5144, 0.0
      %5148 = vst.msk [vmem:[#allocation11] sm:$0xff] %vm4124, %v5145
      %5149 = vst.msk [vmem:[#allocation11 + $0x8] sm:$0xff] %vm4124, %v5146
      %5150 = vst.msk [vmem:[#allocation11 + $0x10] sm:$0xff] %vm4124, %v5147
      %v5151 = vld [vmem:[%s13] sm:$0xf]
      %v5152 = vld [vmem:[%s13 + $0x4] sm:$0xf]
      %v5153 = vld [vmem:[%s13 + $0x8] sm:$0xf]
      %v5154 = vld [vmem:[%s13 + $0xc] sm:$0xf]
      %v5155 = vld [vmem:[%s13 + $0x10] sm:$0xf]
      %v5156 = vld [vmem:[%s13 + $0x14] sm:$0xf]
      %v5157 = vld [vmem:[%s13 + $0x18] sm:$0xf]
      %v5158 = vld [vmem:[%s13 + $0x1c] sm:$0xf]
      %v5159 = vld [vmem:[%s13 + $0x20] sm:$0xf]
      %v5160 = vld [vmem:[%s13 + $0x24] sm:$0xf]
      %v5161 = vld [vmem:[%s13 + $0x28] sm:$0xf]
      %v5162 = vld [vmem:[%s13 + $0x2c] sm:$0xf]
      %v5163 = vld [vmem:[%s13 + $0x30] sm:$0x7]
      %v5164 = vld [vmem:[#allocation11] sm:$0xff]
      %v5165 = vld [vmem:[#allocation11 + $0x8] sm:$0xff]
      %v5166 = vld [vmem:[#allocation11 + $0x10] sm:$0xff]
      %v5167 = vpack.c.bf16 %v5165, %v5164
      %v5168 = vpack.c.bf16 %v5166, %v5166
      %v5169 = vld [vmem:[#allocation3] sm:$0xff]
      %v5170 = vld [vmem:[#allocation3 + $0x8] sm:$0xff]
      %v5171 = vld [vmem:[#allocation3 + $0x10] sm:$0xff]
      %v5172 = vld [vmem:[#allocation3 + $0x18] sm:$0xff]
      %v5173 = vld [vmem:[#allocation3 + $0x20] sm:$0xff]
      %v5174 = vld [vmem:[#allocation3 + $0x28] sm:$0xff]
      %v5175 = vld [vmem:[#allocation3 + $0x30] sm:$0xff]
      %v5176 = vld [vmem:[#allocation3 + $0x38] sm:$0xff]
      %v5177 = vld [vmem:[#allocation3 + $0x40] sm:$0xff]
      %v5178 = vld [vmem:[#allocation3 + $0x48] sm:$0xff]
      %v5179 = vld [vmem:[#allocation3 + $0x50] sm:$0xff]
      %v5180 = vld [vmem:[#allocation3 + $0x58] sm:$0xff]
      %v5181 = vld [vmem:[#allocation3 + $0x60] sm:$0x3f]
      %v5195 = vunpack.c.l.b16 %v5151
      %v5196 = vunpack.c.l.b16 %v5152
      %v5197 = vunpack.c.l.b16 %v5153
      %v5198 = vunpack.c.l.b16 %v5154
      %v5199 = vunpack.c.l.b16 %v5155
      %v5200 = vunpack.c.l.b16 %v5156
      %v5201 = vunpack.c.l.b16 %v5157
      %v5202 = vunpack.c.l.b16 %v5158
      %v5203 = vunpack.c.l.b16 %v5159
      %v5204 = vunpack.c.l.b16 %v5160
      %v5205 = vunpack.c.l.b16 %v5161
      %v5206 = vunpack.c.l.b16 %v5162
      %v5207 = vunpack.c.l.b16 %v5163
      %v5208 = vpack.c.b16 %v5196, %v5195
      %v5209 = vpack.c.b16 %v5198, %v5197
      %v5210 = vpack.c.b16 %v5200, %v5199
      %v5211 = vpack.c.b16 %v5202, %v5201
      %v5212 = vpack.c.b16 %v5204, %v5203
      %v5213 = vpack.c.b16 %v5206, %v5205
      %v5214 = vpack.c.b16 %v5207, %v5207
      %vm5215 = vcmask 195584
      %v5217 = vsel %vm5215, %v5208, 0
      %v5220 = vsel %vm5215, %v5209, 0
      %v5223 = vsel %vm5215, %v5210, 0
      %v5226 = vsel %vm5215, %v5211, 0
      %v5229 = vsel %vm5215, %v5212, 0
      %v5232 = vsel %vm5215, %v5213, 0
      %v5235 = vsel %vm5215, %v5214, 0
      %v5238 = vsel %vm3387, %v5168, 0
      %5240 = vmatpush.bf16.msra.mxu0 0
      %5241 = vmatpush.bf16.msra.mxu0 0
      %5242 = vmatpush.bf16.msra.mxu0 0
      %5243 = vmatpush.bf16.msra.mxu0 0
      %5244 = vmatpush.bf16.msra.mxu0 0
      %5245 = vmatpush.bf16.msra.mxu0 0
      %5246 = vmatpush.bf16.msra.mxu0 %v5238
      %5247 = vmatpush.bf16.msra.mxu0 %v5167
      %5248 = vmatmul.bf16.gmra.mxu0 %v5217
      %v5249 = vpop.f32.mrf.mxu0
      %v5250 = vadd.f32 %v5169, %v5249
      %v5251 = vpop.f32.mrf.mxu0
      %v5252 = vadd.f32 %v5170, %v5251
      %5253 = vmatmul.bf16.gmra.mxu0 %v5220
      %v5254 = vpop.f32.mrf.mxu0
      %v5255 = vadd.f32 %v5171, %v5254
      %v5256 = vpop.f32.mrf.mxu0
      %v5257 = vadd.f32 %v5172, %v5256
      %5258 = vmatmul.bf16.gmra.mxu0 %v5223
      %v5259 = vpop.f32.mrf.mxu0
      %v5260 = vadd.f32 %v5173, %v5259
      %v5261 = vpop.f32.mrf.mxu0
      %v5262 = vadd.f32 %v5174, %v5261
      %5263 = vmatmul.bf16.gmra.mxu0 %v5226
      %v5264 = vpop.f32.mrf.mxu0
      %v5265 = vadd.f32 %v5175, %v5264
      %v5266 = vpop.f32.mrf.mxu0
      %v5267 = vadd.f32 %v5176, %v5266
      %5268 = vmatmul.bf16.gmra.mxu0 %v5229
      %v5269 = vpop.f32.mrf.mxu0
      %v5270 = vadd.f32 %v5177, %v5269
      %v5271 = vpop.f32.mrf.mxu0
      %v5272 = vadd.f32 %v5178, %v5271
      %5273 = vmatmul.bf16.gmra.mxu0 %v5232
      %v5274 = vpop.f32.mrf.mxu0
      %v5275 = vadd.f32 %v5179, %v5274
      %v5276 = vpop.f32.mrf.mxu0
      %v5277 = vadd.f32 %v5180, %v5276
      %5278 = vmatmul.bf16.gmra.mxu0 %v5235
      %v5279 = vpop.f32.mrf.mxu0
      %v5280 = vadd.f32 %v5181, %v5279
      %v5281 = vpop.f32.mrf.mxu0
      %5282 = vdwg.mxu0
      %5283 = vst.msk [vmem:[#allocation9] sm:$0xff] %vm4124, %v5250
      %5284 = vst.msk [vmem:[#allocation9 + $0x8] sm:$0xff] %vm4124, %v5252
      %5285 = vst.msk [vmem:[#allocation9 + $0x10] sm:$0xff] %vm4124, %v5255
      %5286 = vst.msk [vmem:[#allocation9 + $0x18] sm:$0xff] %vm4124, %v5257
      %5287 = vst.msk [vmem:[#allocation9 + $0x20] sm:$0xff] %vm4124, %v5260
      %5288 = vst.msk [vmem:[#allocation9 + $0x28] sm:$0xff] %vm4124, %v5262
      %5289 = vst.msk [vmem:[#allocation9 + $0x30] sm:$0xff] %vm4124, %v5265
      %5290 = vst.msk [vmem:[#allocation9 + $0x38] sm:$0xff] %vm4124, %v5267
      %5291 = vst.msk [vmem:[#allocation9 + $0x40] sm:$0xff] %vm4124, %v5270
      %5292 = vst.msk [vmem:[#allocation9 + $0x48] sm:$0xff] %vm4124, %v5272
      %5293 = vst.msk [vmem:[#allocation9 + $0x50] sm:$0xff] %vm4124, %v5275
      %5294 = vst.msk [vmem:[#allocation9 + $0x58] sm:$0xff] %vm4124, %v5277
      %5295 = vst.msk [vmem:[#allocation9 + $0x60] sm:$0x3f] %vm4169, %v5280
      %v5296 = vld [vmem:[#allocation9] sm:$0xff]
      %v5297 = vld [vmem:[#allocation9 + $0x8] sm:$0xff]
      %v5298 = vld [vmem:[#allocation9 + $0x10] sm:$0xff]
      %v5299 = vld [vmem:[#allocation9 + $0x18] sm:$0xff]
      %v5300 = vld [vmem:[#allocation9 + $0x20] sm:$0xff]
      %v5301 = vld [vmem:[#allocation9 + $0x28] sm:$0xff]
      %v5302 = vld [vmem:[#allocation9 + $0x30] sm:$0xff]
      %v5303 = vld [vmem:[#allocation9 + $0x38] sm:$0xff]
      %v5304 = vld [vmem:[#allocation9 + $0x40] sm:$0xff]
      %v5305 = vld [vmem:[#allocation9 + $0x48] sm:$0xff]
      %v5306 = vpack.c.bf16 %v5297, %v5296
      %v5307 = vpack.c.bf16 %v5299, %v5298
      %v5308 = vpack.c.bf16 %v5301, %v5300
      %v5309 = vpack.c.bf16 %v5303, %v5302
      %v5310 = vpack.c.bf16 %v5305, %v5304
      %v5311 = vld [vmem:[%s14] sm:$0xf]
      %v5312 = vld [vmem:[%s14 + $0x4] sm:$0xf]
      %v5313 = vld [vmem:[#allocation9 + $0x1] sm:$0xff]
      %v5314 = vld [vmem:[#allocation9 + $0x9] sm:$0xff]
      %v5315 = vld [vmem:[#allocation9 + $0x11] sm:$0xff]
      %v5316 = vld [vmem:[#allocation9 + $0x19] sm:$0xff]
      %v5317 = vld [vmem:[#allocation9 + $0x21] sm:$0xff]
      %v5318 = vld [vmem:[#allocation9 + $0x29] sm:$0xff]
      %v5319 = vld [vmem:[#allocation9 + $0x31] sm:$0xff]
      %v5320 = vld [vmem:[#allocation9 + $0x39] sm:$0xff]
      %v5321 = vld [vmem:[#allocation9 + $0x41] sm:$0xff]
      %v5322 = vld [vmem:[#allocation9 + $0x49] sm:$0xff]
      %v5323 = vpack.c.bf16 %v5314, %v5313
      %v5324 = vpack.c.bf16 %v5316, %v5315
      %v5325 = vpack.c.bf16 %v5318, %v5317
      %v5326 = vpack.c.bf16 %v5320, %v5319
      %v5327 = vpack.c.bf16 %v5322, %v5321
      %s5328 = scalar_lea.vmem %s14, 8
      %v5329 = vld [vmem:[%s5328] sm:$0xf]
      %v5330 = vld [vmem:[%s5328 + $0x4] sm:$0xf]
      %v5333 = vunpack.c.l.b16 %v5329
      %v5334 = vunpack.c.l.b16 %v5330
      %v5335 = vpack.c.b16 %v5334, %v5333
      %v5338 = vsel %vm4124, %v5323, 0
      %v5341 = vsel %vm4124, %v5324, 0
      %v5344 = vsel %vm4124, %v5325, 0
      %v5347 = vsel %vm4124, %v5326, 0
      %v5350 = vsel %vm4124, %v5327, 0
      %5352 = vmatpush.bf16.msra.mxu0 0
      %5353 = vmatpush.bf16.msra.mxu0 0
      %5354 = vmatpush.bf16.msra.mxu0 0
      %5355 = vmatpush.bf16.msra.mxu0 0
      %5356 = vmatpush.bf16.msra.mxu0 0
      %5357 = vmatpush.bf16.msra.mxu0 0
      %5358 = vmatpush.bf16.msra.mxu0 0
      %5359 = vmatpush.bf16.msra.mxu0 %v5335
      %5360 = vmatmul.bf16.gmra.mxu0 %v5338
      %v5361 = vpop.f32.mrf.mxu0
      %v5362 = vadd.f32 0.0, %v5361
      %v5363 = vpop.f32.mrf.mxu0
      %v5364 = vadd.f32 0.0, %v5363
      %5365 = vmatmul.bf16.gmra.mxu0 %v5341
      %v5366 = vpop.f32.mrf.mxu0
      %v5367 = vadd.f32 0.0, %v5366
      %v5368 = vpop.f32.mrf.mxu0
      %v5369 = vadd.f32 0.0, %v5368
      %5370 = vmatmul.bf16.gmra.mxu0 %v5344
      %v5371 = vpop.f32.mrf.mxu0
      %v5372 = vadd.f32 0.0, %v5371
      %v5373 = vpop.f32.mrf.mxu0
      %v5374 = vadd.f32 0.0, %v5373
      %5375 = vmatmul.bf16.gmra.mxu0 %v5347
      %v5376 = vpop.f32.mrf.mxu0
      %v5377 = vadd.f32 0.0, %v5376
      %v5378 = vpop.f32.mrf.mxu0
      %v5379 = vadd.f32 0.0, %v5378
      %5380 = vmatmul.bf16.gmra.mxu0 %v5350
      %v5381 = vpop.f32.mrf.mxu0
      %v5382 = vadd.f32 0.0, %v5381
      %v5383 = vpop.f32.mrf.mxu0
      %v5384 = vadd.f32 0.0, %v5383
      %5385 = vdwg.mxu0
      %v5388 = vunpack.c.l.b16 %v5311
      %v5389 = vunpack.c.l.b16 %v5312
      %v5390 = vpack.c.b16 %v5389, %v5388
      %v5393 = vsel %vm4124, %v5306, 0
      %v5396 = vsel %vm4124, %v5307, 0
      %v5399 = vsel %vm4124, %v5308, 0
      %v5402 = vsel %vm4124, %v5309, 0
      %v5405 = vsel %vm4124, %v5310, 0
      %5407 = vmatpush.bf16.msra.mxu0 0
      %5408 = vmatpush.bf16.msra.mxu0 0
      %5409 = vmatpush.bf16.msra.mxu0 0
      %5410 = vmatpush.bf16.msra.mxu0 0
      %5411 = vmatpush.bf16.msra.mxu0 0
      %5412 = vmatpush.bf16.msra.mxu0 0
      %5413 = vmatpush.bf16.msra.mxu0 0
      %5414 = vmatpush.bf16.msra.mxu0 %v5390
      %5415 = vmatmul.bf16.gmra.mxu0 %v5393
      %v5416 = vpop.f32.mrf.mxu0
      %v5417 = vadd.f32 %v5362, %v5416
      %v5418 = vpop.f32.mrf.mxu0
      %v5419 = vadd.f32 %v5364, %v5418
      %5420 = vmatmul.bf16.gmra.mxu0 %v5396
      %v5421 = vpop.f32.mrf.mxu0
      %v5422 = vadd.f32 %v5367, %v5421
      %v5423 = vpop.f32.mrf.mxu0
      %v5424 = vadd.f32 %v5369, %v5423
      %5425 = vmatmul.bf16.gmra.mxu0 %v5399
      %v5426 = vpop.f32.mrf.mxu0
      %v5427 = vadd.f32 %v5372, %v5426
      %v5428 = vpop.f32.mrf.mxu0
      %v5429 = vadd.f32 %v5374, %v5428
      %5430 = vmatmul.bf16.gmra.mxu0 %v5402
      %v5431 = vpop.f32.mrf.mxu0
      %v5432 = vadd.f32 %v5377, %v5431
      %v5433 = vpop.f32.mrf.mxu0
      %v5434 = vadd.f32 %v5379, %v5433
      %5435 = vmatmul.bf16.gmra.mxu0 %v5405
      %v5436 = vpop.f32.mrf.mxu0
      %v5437 = vadd.f32 %v5382, %v5436
      %v5438 = vpop.f32.mrf.mxu0
      %v5439 = vadd.f32 %v5384, %v5438
      %5440 = vdwg.mxu0
      %v5441 = vld [vmem:[#allocation9 + $0x2] sm:$0xff]
      %v5442 = vld [vmem:[#allocation9 + $0xa] sm:$0xff]
      %v5443 = vld [vmem:[#allocation9 + $0x12] sm:$0xff]
      %v5444 = vld [vmem:[#allocation9 + $0x1a] sm:$0xff]
      %v5445 = vld [vmem:[#allocation9 + $0x22] sm:$0xff]
      %v5446 = vld [vmem:[#allocation9 + $0x2a] sm:$0xff]
      %v5447 = vld [vmem:[#allocation9 + $0x32] sm:$0xff]
      %v5448 = vld [vmem:[#allocation9 + $0x3a] sm:$0xff]
      %v5449 = vld [vmem:[#allocation9 + $0x42] sm:$0xff]
      %v5450 = vld [vmem:[#allocation9 + $0x4a] sm:$0xff]
      %v5451 = vpack.c.bf16 %v5442, %v5441
      %v5452 = vpack.c.bf16 %v5444, %v5443
      %v5453 = vpack.c.bf16 %v5446, %v5445
      %v5454 = vpack.c.bf16 %v5448, %v5447
      %v5455 = vpack.c.bf16 %v5450, %v5449
      %s5456 = scalar_lea.vmem %s14, 16
      %v5457 = vld [vmem:[%s5456] sm:$0xf]
      %v5458 = vld [vmem:[%s5456 + $0x4] sm:$0xf]
      %v5461 = vunpack.c.l.b16 %v5457
      %v5462 = vunpack.c.l.b16 %v5458
      %v5463 = vpack.c.b16 %v5462, %v5461
      %v5466 = vsel %vm4124, %v5451, 0
      %v5469 = vsel %vm4124, %v5452, 0
      %v5472 = vsel %vm4124, %v5453, 0
      %v5475 = vsel %vm4124, %v5454, 0
      %v5478 = vsel %vm4124, %v5455, 0
      %5480 = vmatpush.bf16.msra.mxu0 0
      %5481 = vmatpush.bf16.msra.mxu0 0
      %5482 = vmatpush.bf16.msra.mxu0 0
      %5483 = vmatpush.bf16.msra.mxu0 0
      %5484 = vmatpush.bf16.msra.mxu0 0
      %5485 = vmatpush.bf16.msra.mxu0 0
      %5486 = vmatpush.bf16.msra.mxu0 0
      %5487 = vmatpush.bf16.msra.mxu0 %v5463
      %5488 = vmatmul.bf16.gmra.mxu0 %v5466
      %v5489 = vpop.f32.mrf.mxu0
      %v5490 = vadd.f32 0.0, %v5489
      %v5491 = vpop.f32.mrf.mxu0
      %v5492 = vadd.f32 0.0, %v5491
      %5493 = vmatmul.bf16.gmra.mxu0 %v5469
      %v5494 = vpop.f32.mrf.mxu0
      %v5495 = vadd.f32 0.0, %v5494
      %v5496 = vpop.f32.mrf.mxu0
      %v5497 = vadd.f32 0.0, %v5496
      %5498 = vmatmul.bf16.gmra.mxu0 %v5472
      %v5499 = vpop.f32.mrf.mxu0
      %v5500 = vadd.f32 0.0, %v5499
      %v5501 = vpop.f32.mrf.mxu0
      %v5502 = vadd.f32 0.0, %v5501
      %5503 = vmatmul.bf16.gmra.mxu0 %v5475
      %v5504 = vpop.f32.mrf.mxu0
      %v5505 = vadd.f32 0.0, %v5504
      %v5506 = vpop.f32.mrf.mxu0
      %v5507 = vadd.f32 0.0, %v5506
      %5508 = vmatmul.bf16.gmra.mxu0 %v5478
      %v5509 = vpop.f32.mrf.mxu0
      %v5510 = vadd.f32 0.0, %v5509
      %v5511 = vpop.f32.mrf.mxu0
      %v5512 = vadd.f32 0.0, %v5511
      %5513 = vdwg.mxu0
      %v5514 = vadd.f32 %v5417, %v5490
      %v5515 = vadd.f32 %v5419, %v5492
      %v5516 = vadd.f32 %v5422, %v5495
      %v5517 = vadd.f32 %v5424, %v5497
      %v5518 = vadd.f32 %v5427, %v5500
      %v5519 = vadd.f32 %v5429, %v5502
      %v5520 = vadd.f32 %v5432, %v5505
      %v5521 = vadd.f32 %v5434, %v5507
      %v5522 = vadd.f32 %v5437, %v5510
      %v5523 = vadd.f32 %v5439, %v5512
      %v5524 = vld [vmem:[#allocation9 + $0xa] sm:$0xff]
      %v5525 = vld [vmem:[#allocation9 + $0x12] sm:$0xff]
      %v5526 = vld [vmem:[#allocation9 + $0x1a] sm:$0xff]
      %v5527 = vld [vmem:[#allocation9 + $0x22] sm:$0xff]
      %v5528 = vld [vmem:[#allocation9 + $0x2a] sm:$0xff]
      %v5529 = vld [vmem:[#allocation9 + $0x32] sm:$0xff]
      %v5530 = vld [vmem:[#allocation9 + $0x3a] sm:$0xff]
      %v5531 = vld [vmem:[#allocation9 + $0x42] sm:$0xff]
      %v5532 = vld [vmem:[#allocation9 + $0x4a] sm:$0xff]
      %v5533 = vld [vmem:[#allocation9 + $0x52] sm:$0xff]
      %v5534 = vpack.c.bf16 %v5525, %v5524
      %v5535 = vpack.c.bf16 %v5527, %v5526
      %v5536 = vpack.c.bf16 %v5529, %v5528
      %v5537 = vpack.c.bf16 %v5531, %v5530
      %v5538 = vpack.c.bf16 %v5533, %v5532
      %s5539 = scalar_lea.vmem %s14, 24
      %v5540 = vld [vmem:[%s5539] sm:$0xf]
      %v5541 = vld [vmem:[%s5539 + $0x4] sm:$0xf]
      %v5544 = vunpack.c.l.b16 %v5540
      %v5545 = vunpack.c.l.b16 %v5541
      %v5546 = vpack.c.b16 %v5545, %v5544
      %v5549 = vsel %vm4124, %v5534, 0
      %v5552 = vsel %vm4124, %v5535, 0
      %v5555 = vsel %vm4124, %v5536, 0
      %v5558 = vsel %vm4124, %v5537, 0
      %v5561 = vsel %vm4124, %v5538, 0
      %5563 = vmatpush.bf16.msra.mxu0 0
      %5564 = vmatpush.bf16.msra.mxu0 0
      %5565 = vmatpush.bf16.msra.mxu0 0
      %5566 = vmatpush.bf16.msra.mxu0 0
      %5567 = vmatpush.bf16.msra.mxu0 0
      %5568 = vmatpush.bf16.msra.mxu0 0
      %5569 = vmatpush.bf16.msra.mxu0 0
      %5570 = vmatpush.bf16.msra.mxu0 %v5546
      %5571 = vmatmul.bf16.gmra.mxu0 %v5549
      %v5572 = vpop.f32.mrf.mxu0
      %v5573 = vadd.f32 0.0, %v5572
      %v5574 = vpop.f32.mrf.mxu0
      %v5575 = vadd.f32 0.0, %v5574
      %5576 = vmatmul.bf16.gmra.mxu0 %v5552
      %v5577 = vpop.f32.mrf.mxu0
      %v5578 = vadd.f32 0.0, %v5577
      %v5579 = vpop.f32.mrf.mxu0
      %v5580 = vadd.f32 0.0, %v5579
      %5581 = vmatmul.bf16.gmra.mxu0 %v5555
      %v5582 = vpop.f32.mrf.mxu0
      %v5583 = vadd.f32 0.0, %v5582
      %v5584 = vpop.f32.mrf.mxu0
      %v5585 = vadd.f32 0.0, %v5584
      %5586 = vmatmul.bf16.gmra.mxu0 %v5558
      %v5587 = vpop.f32.mrf.mxu0
      %v5588 = vadd.f32 0.0, %v5587
      %v5589 = vpop.f32.mrf.mxu0
      %v5590 = vadd.f32 0.0, %v5589
      %5591 = vmatmul.bf16.gmra.mxu0 %v5561
      %v5592 = vpop.f32.mrf.mxu0
      %v5593 = vadd.f32 0.0, %v5592
      %v5594 = vpop.f32.mrf.mxu0
      %v5595 = vadd.f32 0.0, %v5594
      %5596 = vdwg.mxu0
      %v5597 = vadd.f32 %v5514, %v5573
      %v5598 = vadd.f32 %v5515, %v5575
      %v5599 = vadd.f32 %v5516, %v5578
      %v5600 = vadd.f32 %v5517, %v5580
      %v5601 = vadd.f32 %v5518, %v5583
      %v5602 = vadd.f32 %v5519, %v5585
      %v5603 = vadd.f32 %v5520, %v5588
      %v5604 = vadd.f32 %v5521, %v5590
      %v5605 = vadd.f32 %v5522, %v5593
      %v5606 = vadd.f32 %v5523, %v5595
      %v5607 = vld [vmem:[#allocation9 + $0xb] sm:$0xff]
      %v5608 = vld [vmem:[#allocation9 + $0x13] sm:$0xff]
      %v5609 = vld [vmem:[#allocation9 + $0x1b] sm:$0xff]
      %v5610 = vld [vmem:[#allocation9 + $0x23] sm:$0xff]
      %v5611 = vld [vmem:[#allocation9 + $0x2b] sm:$0xff]
      %v5612 = vld [vmem:[#allocation9 + $0x33] sm:$0xff]
      %v5613 = vld [vmem:[#allocation9 + $0x3b] sm:$0xff]
      %v5614 = vld [vmem:[#allocation9 + $0x43] sm:$0xff]
      %v5615 = vld [vmem:[#allocation9 + $0x4b] sm:$0xff]
      %v5616 = vld [vmem:[#allocation9 + $0x53] sm:$0xff]
      %v5617 = vpack.c.bf16 %v5608, %v5607
      %v5618 = vpack.c.bf16 %v5610, %v5609
      %v5619 = vpack.c.bf16 %v5612, %v5611
      %v5620 = vpack.c.bf16 %v5614, %v5613
      %v5621 = vpack.c.bf16 %v5616, %v5615
      %s5622 = scalar_lea.vmem %s14, 32
      %v5623 = vld [vmem:[%s5622] sm:$0xf]
      %v5624 = vld [vmem:[%s5622 + $0x4] sm:$0xf]
      %v5627 = vunpack.c.l.b16 %v5623
      %v5628 = vunpack.c.l.b16 %v5624
      %v5629 = vpack.c.b16 %v5628, %v5627
      %v5632 = vsel %vm4124, %v5617, 0
      %v5635 = vsel %vm4124, %v5618, 0
      %v5638 = vsel %vm4124, %v5619, 0
      %v5641 = vsel %vm4124, %v5620, 0
      %v5644 = vsel %vm4124, %v5621, 0
      %5646 = vmatpush.bf16.msra.mxu0 0
      %5647 = vmatpush.bf16.msra.mxu0 0
      %5648 = vmatpush.bf16.msra.mxu0 0
      %5649 = vmatpush.bf16.msra.mxu0 0
      %5650 = vmatpush.bf16.msra.mxu0 0
      %5651 = vmatpush.bf16.msra.mxu0 0
      %5652 = vmatpush.bf16.msra.mxu0 0
      %5653 = vmatpush.bf16.msra.mxu0 %v5629
      %5654 = vmatmul.bf16.gmra.mxu0 %v5632
      %v5655 = vpop.f32.mrf.mxu0
      %v5656 = vadd.f32 0.0, %v5655
      %v5657 = vpop.f32.mrf.mxu0
      %v5658 = vadd.f32 0.0, %v5657
      %5659 = vmatmul.bf16.gmra.mxu0 %v5635
      %v5660 = vpop.f32.mrf.mxu0
      %v5661 = vadd.f32 0.0, %v5660
      %v5662 = vpop.f32.mrf.mxu0
      %v5663 = vadd.f32 0.0, %v5662
      %5664 = vmatmul.bf16.gmra.mxu0 %v5638
      %v5665 = vpop.f32.mrf.mxu0
      %v5666 = vadd.f32 0.0, %v5665
      %v5667 = vpop.f32.mrf.mxu0
      %v5668 = vadd.f32 0.0, %v5667
      %5669 = vmatmul.bf16.gmra.mxu0 %v5641
      %v5670 = vpop.f32.mrf.mxu0
      %v5671 = vadd.f32 0.0, %v5670
      %v5672 = vpop.f32.mrf.mxu0
      %v5673 = vadd.f32 0.0, %v5672
      %5674 = vmatmul.bf16.gmra.mxu0 %v5644
      %v5675 = vpop.f32.mrf.mxu0
      %v5676 = vadd.f32 0.0, %v5675
      %v5677 = vpop.f32.mrf.mxu0
      %v5678 = vadd.f32 0.0, %v5677
      %5679 = vdwg.mxu0
      %v5680 = vadd.f32 %v5597, %v5656
      %v5681 = vadd.f32 %v5598, %v5658
      %v5682 = vadd.f32 %v5599, %v5661
      %v5683 = vadd.f32 %v5600, %v5663
      %v5684 = vadd.f32 %v5601, %v5666
      %v5685 = vadd.f32 %v5602, %v5668
      %v5686 = vadd.f32 %v5603, %v5671
      %v5687 = vadd.f32 %v5604, %v5673
      %v5688 = vadd.f32 %v5605, %v5676
      %v5689 = vadd.f32 %v5606, %v5678
      %v5690 = vld [vmem:[#allocation9 + $0xc] sm:$0xff]
      %v5691 = vld [vmem:[#allocation9 + $0x14] sm:$0xff]
      %v5692 = vld [vmem:[#allocation9 + $0x1c] sm:$0xff]
      %v5693 = vld [vmem:[#allocation9 + $0x24] sm:$0xff]
      %v5694 = vld [vmem:[#allocation9 + $0x2c] sm:$0xff]
      %v5695 = vld [vmem:[#allocation9 + $0x34] sm:$0xff]
      %v5696 = vld [vmem:[#allocation9 + $0x3c] sm:$0xff]
      %v5697 = vld [vmem:[#allocation9 + $0x44] sm:$0xff]
      %v5698 = vld [vmem:[#allocation9 + $0x4c] sm:$0xff]
      %v5699 = vld [vmem:[#allocation9 + $0x54] sm:$0xff]
      %v5700 = vpack.c.bf16 %v5691, %v5690
      %v5701 = vpack.c.bf16 %v5693, %v5692
      %v5702 = vpack.c.bf16 %v5695, %v5694
      %v5703 = vpack.c.bf16 %v5697, %v5696
      %v5704 = vpack.c.bf16 %v5699, %v5698
      %s5705 = scalar_lea.vmem %s14, 40
      %v5706 = vld [vmem:[%s5705] sm:$0xf]
      %v5707 = vld [vmem:[%s5705 + $0x4] sm:$0xf]
      %v5710 = vunpack.c.l.b16 %v5706
      %v5711 = vunpack.c.l.b16 %v5707
      %v5712 = vpack.c.b16 %v5711, %v5710
      %v5715 = vsel %vm4124, %v5700, 0
      %v5718 = vsel %vm4124, %v5701, 0
      %v5721 = vsel %vm4124, %v5702, 0
      %v5724 = vsel %vm4124, %v5703, 0
      %v5727 = vsel %vm4124, %v5704, 0
      %5729 = vmatpush.bf16.msra.mxu0 0
      %5730 = vmatpush.bf16.msra.mxu0 0
      %5731 = vmatpush.bf16.msra.mxu0 0
      %5732 = vmatpush.bf16.msra.mxu0 0
      %5733 = vmatpush.bf16.msra.mxu0 0
      %5734 = vmatpush.bf16.msra.mxu0 0
      %5735 = vmatpush.bf16.msra.mxu0 0
      %5736 = vmatpush.bf16.msra.mxu0 %v5712
      %5737 = vmatmul.bf16.gmra.mxu0 %v5715
      %v5738 = vpop.f32.mrf.mxu0
      %v5739 = vadd.f32 0.0, %v5738
      %v5740 = vpop.f32.mrf.mxu0
      %v5741 = vadd.f32 0.0, %v5740
      %5742 = vmatmul.bf16.gmra.mxu0 %v5718
      %v5743 = vpop.f32.mrf.mxu0
      %v5744 = vadd.f32 0.0, %v5743
      %v5745 = vpop.f32.mrf.mxu0
      %v5746 = vadd.f32 0.0, %v5745
      %5747 = vmatmul.bf16.gmra.mxu0 %v5721
      %v5748 = vpop.f32.mrf.mxu0
      %v5749 = vadd.f32 0.0, %v5748
      %v5750 = vpop.f32.mrf.mxu0
      %v5751 = vadd.f32 0.0, %v5750
      %5752 = vmatmul.bf16.gmra.mxu0 %v5724
      %v5753 = vpop.f32.mrf.mxu0
      %v5754 = vadd.f32 0.0, %v5753
      %v5755 = vpop.f32.mrf.mxu0
      %v5756 = vadd.f32 0.0, %v5755
      %5757 = vmatmul.bf16.gmra.mxu0 %v5727
      %v5758 = vpop.f32.mrf.mxu0
      %v5759 = vadd.f32 0.0, %v5758
      %v5760 = vpop.f32.mrf.mxu0
      %v5761 = vadd.f32 0.0, %v5760
      %5762 = vdwg.mxu0
      %v5763 = vadd.f32 %v5680, %v5739
      %v5764 = vadd.f32 %v5681, %v5741
      %v5765 = vadd.f32 %v5682, %v5744
      %v5766 = vadd.f32 %v5683, %v5746
      %v5767 = vadd.f32 %v5684, %v5749
      %v5768 = vadd.f32 %v5685, %v5751
      %v5769 = vadd.f32 %v5686, %v5754
      %v5770 = vadd.f32 %v5687, %v5756
      %v5771 = vadd.f32 %v5688, %v5759
      %v5772 = vadd.f32 %v5689, %v5761
      %v5773 = vld [vmem:[#allocation9 + $0x14] sm:$0xff]
      %v5774 = vld [vmem:[#allocation9 + $0x1c] sm:$0xff]
      %v5775 = vld [vmem:[#allocation9 + $0x24] sm:$0xff]
      %v5776 = vld [vmem:[#allocation9 + $0x2c] sm:$0xff]
      %v5777 = vld [vmem:[#allocation9 + $0x34] sm:$0xff]
      %v5778 = vld [vmem:[#allocation9 + $0x3c] sm:$0xff]
      %v5779 = vld [vmem:[#allocation9 + $0x44] sm:$0xff]
      %v5780 = vld [vmem:[#allocation9 + $0x4c] sm:$0xff]
      %v5781 = vld [vmem:[#allocation9 + $0x54] sm:$0xff]
      %v5782 = vld [vmem:[#allocation9 + $0x5c] sm:$0xff]
      %v5783 = vpack.c.bf16 %v5774, %v5773
      %v5784 = vpack.c.bf16 %v5776, %v5775
      %v5785 = vpack.c.bf16 %v5778, %v5777
      %v5786 = vpack.c.bf16 %v5780, %v5779
      %v5787 = vpack.c.bf16 %v5782, %v5781
      %s5788 = scalar_lea.vmem %s14, 48
      %v5789 = vld [vmem:[%s5788] sm:$0xf]
      %v5790 = vld [vmem:[%s5788 + $0x4] sm:$0xf]
      %v5793 = vunpack.c.l.b16 %v5789
      %v5794 = vunpack.c.l.b16 %v5790
      %v5795 = vpack.c.b16 %v5794, %v5793
      %v5798 = vsel %vm4124, %v5783, 0
      %v5801 = vsel %vm4124, %v5784, 0
      %v5804 = vsel %vm4124, %v5785, 0
      %v5807 = vsel %vm4124, %v5786, 0
      %v5810 = vsel %vm4124, %v5787, 0
      %5812 = vmatpush.bf16.msra.mxu0 0
      %5813 = vmatpush.bf16.msra.mxu0 0
      %5814 = vmatpush.bf16.msra.mxu0 0
      %5815 = vmatpush.bf16.msra.mxu0 0
      %5816 = vmatpush.bf16.msra.mxu0 0
      %5817 = vmatpush.bf16.msra.mxu0 0
      %5818 = vmatpush.bf16.msra.mxu0 0
      %5819 = vmatpush.bf16.msra.mxu0 %v5795
      %5820 = vmatmul.bf16.gmra.mxu0 %v5798
      %v5821 = vpop.f32.mrf.mxu0
      %v5822 = vadd.f32 0.0, %v5821
      %v5823 = vpop.f32.mrf.mxu0
      %v5824 = vadd.f32 0.0, %v5823
      %5825 = vmatmul.bf16.gmra.mxu0 %v5801
      %v5826 = vpop.f32.mrf.mxu0
      %v5827 = vadd.f32 0.0, %v5826
      %v5828 = vpop.f32.mrf.mxu0
      %v5829 = vadd.f32 0.0, %v5828
      %5830 = vmatmul.bf16.gmra.mxu0 %v5804
      %v5831 = vpop.f32.mrf.mxu0
      %v5832 = vadd.f32 0.0, %v5831
      %v5833 = vpop.f32.mrf.mxu0
      %v5834 = vadd.f32 0.0, %v5833
      %5835 = vmatmul.bf16.gmra.mxu0 %v5807
      %v5836 = vpop.f32.mrf.mxu0
      %v5837 = vadd.f32 0.0, %v5836
      %v5838 = vpop.f32.mrf.mxu0
      %v5839 = vadd.f32 0.0, %v5838
      %5840 = vmatmul.bf16.gmra.mxu0 %v5810
      %v5841 = vpop.f32.mrf.mxu0
      %v5842 = vadd.f32 0.0, %v5841
      %v5843 = vpop.f32.mrf.mxu0
      %v5844 = vadd.f32 0.0, %v5843
      %5845 = vdwg.mxu0
      %v5846 = vadd.f32 %v5763, %v5822
      %v5847 = vadd.f32 %v5764, %v5824
      %v5848 = vadd.f32 %v5765, %v5827
      %v5849 = vadd.f32 %v5766, %v5829
      %v5850 = vadd.f32 %v5767, %v5832
      %v5851 = vadd.f32 %v5768, %v5834
      %v5852 = vadd.f32 %v5769, %v5837
      %v5853 = vadd.f32 %v5770, %v5839
      %v5854 = vadd.f32 %v5771, %v5842
      %v5855 = vadd.f32 %v5772, %v5844
      %v5856 = vld [vmem:[#allocation9 + $0x15] sm:$0xff]
      %v5857 = vld [vmem:[#allocation9 + $0x1d] sm:$0xff]
      %v5858 = vld [vmem:[#allocation9 + $0x25] sm:$0xff]
      %v5859 = vld [vmem:[#allocation9 + $0x2d] sm:$0xff]
      %v5860 = vld [vmem:[#allocation9 + $0x35] sm:$0xff]
      %v5861 = vld [vmem:[#allocation9 + $0x3d] sm:$0xff]
      %v5862 = vld [vmem:[#allocation9 + $0x45] sm:$0xff]
      %v5863 = vld [vmem:[#allocation9 + $0x4d] sm:$0xff]
      %v5864 = vld [vmem:[#allocation9 + $0x55] sm:$0xff]
      %v5865 = vld [vmem:[#allocation9 + $0x5d] sm:$0xff]
      %v5866 = vpack.c.bf16 %v5857, %v5856
      %v5867 = vpack.c.bf16 %v5859, %v5858
      %v5868 = vpack.c.bf16 %v5861, %v5860
      %v5869 = vpack.c.bf16 %v5863, %v5862
      %v5870 = vpack.c.bf16 %v5865, %v5864
      %s5871 = scalar_lea.vmem %s14, 56
      %v5872 = vld [vmem:[%s5871] sm:$0xf]
      %v5873 = vld [vmem:[%s5871 + $0x4] sm:$0xf]
      %v5876 = vunpack.c.l.b16 %v5872
      %v5877 = vunpack.c.l.b16 %v5873
      %v5878 = vpack.c.b16 %v5877, %v5876
      %v5881 = vsel %vm4124, %v5866, 0
      %v5884 = vsel %vm4124, %v5867, 0
      %v5887 = vsel %vm4124, %v5868, 0
      %v5890 = vsel %vm4124, %v5869, 0
      %v5893 = vsel %vm4124, %v5870, 0
      %5895 = vmatpush.bf16.msra.mxu0 0
      %5896 = vmatpush.bf16.msra.mxu0 0
      %5897 = vmatpush.bf16.msra.mxu0 0
      %5898 = vmatpush.bf16.msra.mxu0 0
      %5899 = vmatpush.bf16.msra.mxu0 0
      %5900 = vmatpush.bf16.msra.mxu0 0
      %5901 = vmatpush.bf16.msra.mxu0 0
      %5902 = vmatpush.bf16.msra.mxu0 %v5878
      %5903 = vmatmul.bf16.gmra.mxu0 %v5881
      %v5904 = vpop.f32.mrf.mxu0
      %v5905 = vadd.f32 0.0, %v5904
      %v5906 = vpop.f32.mrf.mxu0
      %v5907 = vadd.f32 0.0, %v5906
      %5908 = vmatmul.bf16.gmra.mxu0 %v5884
      %v5909 = vpop.f32.mrf.mxu0
      %v5910 = vadd.f32 0.0, %v5909
      %v5911 = vpop.f32.mrf.mxu0
      %v5912 = vadd.f32 0.0, %v5911
      %5913 = vmatmul.bf16.gmra.mxu0 %v5887
      %v5914 = vpop.f32.mrf.mxu0
      %v5915 = vadd.f32 0.0, %v5914
      %v5916 = vpop.f32.mrf.mxu0
      %v5917 = vadd.f32 0.0, %v5916
      %5918 = vmatmul.bf16.gmra.mxu0 %v5890
      %v5919 = vpop.f32.mrf.mxu0
      %v5920 = vadd.f32 0.0, %v5919
      %v5921 = vpop.f32.mrf.mxu0
      %v5922 = vadd.f32 0.0, %v5921
      %5923 = vmatmul.bf16.gmra.mxu0 %v5893
      %v5924 = vpop.f32.mrf.mxu0
      %v5925 = vadd.f32 0.0, %v5924
      %v5926 = vpop.f32.mrf.mxu0
      %v5927 = vadd.f32 0.0, %v5926
      %5928 = vdwg.mxu0
      %v5929 = vadd.f32 %v5846, %v5905
      %v5930 = vadd.f32 %v5847, %v5907
      %v5931 = vadd.f32 %v5848, %v5910
      %v5932 = vadd.f32 %v5849, %v5912
      %v5933 = vadd.f32 %v5850, %v5915
      %v5934 = vadd.f32 %v5851, %v5917
      %v5935 = vadd.f32 %v5852, %v5920
      %v5936 = vadd.f32 %v5853, %v5922
      %v5937 = vadd.f32 %v5854, %v5925
      %v5938 = vadd.f32 %v5855, %v5927
      %v5939 = vld [vmem:[#allocation9 + $0x16] sm:$0xff]
      %v5940 = vld [vmem:[#allocation9 + $0x1e] sm:$0xff]
      %v5941 = vld [vmem:[#allocation9 + $0x26] sm:$0xff]
      %v5942 = vld [vmem:[#allocation9 + $0x2e] sm:$0xff]
      %v5943 = vld [vmem:[#allocation9 + $0x36] sm:$0xff]
      %v5944 = vld [vmem:[#allocation9 + $0x3e] sm:$0xff]
      %v5945 = vld [vmem:[#allocation9 + $0x46] sm:$0xff]
      %v5946 = vld [vmem:[#allocation9 + $0x4e] sm:$0xff]
      %v5947 = vld [vmem:[#allocation9 + $0x56] sm:$0xff]
      %v5948 = vld [vmem:[#allocation9 + $0x5e] sm:$0xff]
      %v5949 = vpack.c.bf16 %v5940, %v5939
      %v5950 = vpack.c.bf16 %v5942, %v5941
      %v5951 = vpack.c.bf16 %v5944, %v5943
      %v5952 = vpack.c.bf16 %v5946, %v5945
      %v5953 = vpack.c.bf16 %v5948, %v5947
      %s5954 = scalar_lea.vmem %s14, 64
      %v5955 = vld [vmem:[%s5954] sm:$0xf]
      %v5956 = vld [vmem:[%s5954 + $0x4] sm:$0xf]
      %v5959 = vunpack.c.l.b16 %v5955
      %v5960 = vunpack.c.l.b16 %v5956
      %v5961 = vpack.c.b16 %v5960, %v5959
      %v5964 = vsel %vm4124, %v5949, 0
      %v5967 = vsel %vm4124, %v5950, 0
      %v5970 = vsel %vm4124, %v5951, 0
      %v5973 = vsel %vm4124, %v5952, 0
      %v5976 = vsel %vm4124, %v5953, 0
      %5978 = vmatpush.bf16.msra.mxu0 0
      %5979 = vmatpush.bf16.msra.mxu0 0
      %5980 = vmatpush.bf16.msra.mxu0 0
      %5981 = vmatpush.bf16.msra.mxu0 0
      %5982 = vmatpush.bf16.msra.mxu0 0
      %5983 = vmatpush.bf16.msra.mxu0 0
      %5984 = vmatpush.bf16.msra.mxu0 0
      %5985 = vmatpush.bf16.msra.mxu0 %v5961
      %5986 = vmatmul.bf16.gmra.mxu0 %v5964
      %v5987 = vpop.f32.mrf.mxu0
      %v5988 = vadd.f32 0.0, %v5987
      %v5989 = vpop.f32.mrf.mxu0
      %v5990 = vadd.f32 0.0, %v5989
      %5991 = vmatmul.bf16.gmra.mxu0 %v5967
      %v5992 = vpop.f32.mrf.mxu0
      %v5993 = vadd.f32 0.0, %v5992
      %v5994 = vpop.f32.mrf.mxu0
      %v5995 = vadd.f32 0.0, %v5994
      %5996 = vmatmul.bf16.gmra.mxu0 %v5970
      %v5997 = vpop.f32.mrf.mxu0
      %v5998 = vadd.f32 0.0, %v5997
      %v5999 = vpop.f32.mrf.mxu0
      %v6000 = vadd.f32 0.0, %v5999
      %6001 = vmatmul.bf16.gmra.mxu0 %v5973
      %v6002 = vpop.f32.mrf.mxu0
      %v6003 = vadd.f32 0.0, %v6002
      %v6004 = vpop.f32.mrf.mxu0
      %v6005 = vadd.f32 0.0, %v6004
      %6006 = vmatmul.bf16.gmra.mxu0 %v5976
      %v6007 = vpop.f32.mrf.mxu0
      %v6008 = vadd.f32 0.0, %v6007
      %v6009 = vpop.f32.mrf.mxu0
      %v6010 = vadd.f32 0.0, %v6009
      %6011 = vdwg.mxu0
      %v6012 = vadd.f32 %v5929, %v5988
      %v6013 = vadd.f32 %v5930, %v5990
      %v6014 = vadd.f32 %v5931, %v5993
      %v6015 = vadd.f32 %v5932, %v5995
      %v6016 = vadd.f32 %v5933, %v5998
      %v6017 = vadd.f32 %v5934, %v6000
      %v6018 = vadd.f32 %v5935, %v6003
      %v6019 = vadd.f32 %v5936, %v6005
      %v6020 = vadd.f32 %v5937, %v6008
      %v6021 = vadd.f32 %v5938, %v6010
      %v6022 = vld [vmem:[%s15] sm:$0x1]
      %v6024 = vperm.slane %v6022, 0
      %v6026 = vadd.f32 %v6012, %v6024
      %v6027 = vadd.f32 %v6013, %v6024
      %v6028 = vadd.f32 %v6014, %v6024
      %v6029 = vadd.f32 %v6015, %v6024
      %v6030 = vadd.f32 %v6016, %v6024
      %v6031 = vadd.f32 %v6017, %v6024
      %v6032 = vadd.f32 %v6018, %v6024
      %v6033 = vadd.f32 %v6019, %v6024
      %v6034 = vadd.f32 %v6020, %v6024
      %v6035 = vadd.f32 %v6021, %v6024
      %v6036 = vmax.f32 %v6026, 0.0
      %v6037 = vmax.f32 %v6027, 0.0
      %v6038 = vmax.f32 %v6028, 0.0
      %v6039 = vmax.f32 %v6029, 0.0
      %v6040 = vmax.f32 %v6030, 0.0
      %v6041 = vmax.f32 %v6031, 0.0
      %v6042 = vmax.f32 %v6032, 0.0
      %v6043 = vmax.f32 %v6033, 0.0
      %v6044 = vmax.f32 %v6034, 0.0
      %v6045 = vmax.f32 %v6035, 0.0
      %6046 = vst.msk [vmem:[#allocation12] sm:$0xff] %vm3096, %v6036
      %6047 = vst.msk [vmem:[#allocation12 + $0x8] sm:$0xff] %vm3096, %v6037
      %6048 = vst.msk [vmem:[#allocation12 + $0x10] sm:$0xff] %vm3096, %v6038
      %6049 = vst.msk [vmem:[#allocation12 + $0x18] sm:$0xff] %vm3096, %v6039
      %6050 = vst.msk [vmem:[#allocation12 + $0x20] sm:$0xff] %vm3096, %v6040
      %6051 = vst.msk [vmem:[#allocation12 + $0x28] sm:$0xff] %vm3096, %v6041
      %6052 = vst.msk [vmem:[#allocation12 + $0x30] sm:$0xff] %vm3096, %v6042
      %6053 = vst.msk [vmem:[#allocation12 + $0x38] sm:$0xff] %vm3096, %v6043
      %6054 = vst.msk [vmem:[#allocation12 + $0x40] sm:$0xff] %vm3096, %v6044
      %6055 = vst.msk [vmem:[#allocation12 + $0x48] sm:$0xff] %vm3096, %v6045
      %v6056 = vld [vmem:[%s16] sm:$0xf]
      %v6057 = vld [vmem:[%s16 + $0x4] sm:$0xf]
      %v6058 = vld [vmem:[%s16 + $0x8] sm:$0xf]
      %v6059 = vld [vmem:[%s16 + $0xc] sm:$0xf]
      %v6060 = vld [vmem:[%s16 + $0x10] sm:$0xf]
      %v6061 = vld [vmem:[%s16 + $0x14] sm:$0xf]
      %v6062 = vld [vmem:[%s16 + $0x18] sm:$0xf]
      %v6063 = vld [vmem:[%s16 + $0x1c] sm:$0xf]
      %v6064 = vld [vmem:[%s16 + $0x20] sm:$0xf]
      %v6065 = vld [vmem:[%s16 + $0x24] sm:$0xf]
      %v6066 = vld [vmem:[%s16 + $0x28] sm:$0xf]
      %v6067 = vld [vmem:[%s16 + $0x2c] sm:$0xf]
      %v6068 = vld [vmem:[%s16 + $0x30] sm:$0xf]
      %v6069 = vld [vmem:[%s16 + $0x34] sm:$0xf]
      %v6070 = vld [vmem:[%s16 + $0x38] sm:$0xf]
      %v6071 = vld [vmem:[%s16 + $0x3c] sm:$0xf]
      %v6072 = vld [vmem:[%s16 + $0x40] sm:$0xf]
      %v6073 = vld [vmem:[%s16 + $0x44] sm:$0xf]
      %v6074 = vld [vmem:[%s16 + $0x48] sm:$0xf]
      %v6075 = vld [vmem:[%s16 + $0x4c] sm:$0xf]
      %v6076 = vld [vmem:[%s16 + $0x50] sm:$0xf]
      %v6077 = vld [vmem:[%s16 + $0x54] sm:$0xf]
      %v6078 = vld [vmem:[%s16 + $0x58] sm:$0xf]
      %v6079 = vld [vmem:[%s16 + $0x5c] sm:$0xf]
      %v6080 = vld [vmem:[%s16 + $0x60] sm:$0xf]
      %v6081 = vld [vmem:[%s16 + $0x64] sm:$0xf]
      %v6082 = vld [vmem:[%s16 + $0x68] sm:$0xf]
      %v6083 = vld [vmem:[%s16 + $0x6c] sm:$0xf]
      %v6084 = vld [vmem:[%s16 + $0x70] sm:$0xf]
      %v6085 = vld [vmem:[%s16 + $0x74] sm:$0xf]
      %v6086 = vld [vmem:[%s16 + $0x78] sm:$0xf]
      %v6087 = vld [vmem:[%s16 + $0x7c] sm:$0xf]
      %v6088 = vld [vmem:[%s16 + $0x80] sm:$0xf]
      %v6089 = vld [vmem:[%s16 + $0x84] sm:$0xf]
      %v6090 = vld [vmem:[%s16 + $0x88] sm:$0xf]
      %v6091 = vld [vmem:[%s16 + $0x8c] sm:$0xf]
      %v6092 = vld [vmem:[%s16 + $0x90] sm:$0xf]
      %v6093 = vld [vmem:[%s16 + $0x94] sm:$0xf]
      %v6094 = vld [vmem:[%s16 + $0x98] sm:$0xf]
      %v6095 = vld [vmem:[%s16 + $0x9c] sm:$0xf]
      %v6096 = vld [vmem:[%s16 + $0xa0] sm:$0x7]
      %v6097 = vld [vmem:[#allocation12] sm:$0xff]
      %v6098 = vld [vmem:[#allocation12 + $0x8] sm:$0xff]
      %v6099 = vld [vmem:[#allocation12 + $0x10] sm:$0xff]
      %v6100 = vld [vmem:[#allocation12 + $0x18] sm:$0xff]
      %v6101 = vld [vmem:[#allocation12 + $0x20] sm:$0xff]
      %v6102 = vld [vmem:[#allocation12 + $0x28] sm:$0xff]
      %v6103 = vld [vmem:[#allocation12 + $0x30] sm:$0xff]
      %v6104 = vld [vmem:[#allocation12 + $0x38] sm:$0xff]
      %v6105 = vld [vmem:[#allocation12 + $0x40] sm:$0xff]
      %v6106 = vld [vmem:[#allocation12 + $0x48] sm:$0xff]
      %v6107 = vpack.c.bf16 %v6098, %v6097
      %v6108 = vpack.c.bf16 %v6100, %v6099
      %v6109 = vpack.c.bf16 %v6102, %v6101
      %v6110 = vpack.c.bf16 %v6104, %v6103
      %v6111 = vpack.c.bf16 %v6106, %v6105
      %v6112 = vld [vmem:[#allocation2] sm:$0xff]
      %v6113 = vld [vmem:[#allocation2 + $0x8] sm:$0xff]
      %v6114 = vld [vmem:[#allocation2 + $0x10] sm:$0xff]
      %v6115 = vld [vmem:[#allocation2 + $0x18] sm:$0xff]
      %v6116 = vld [vmem:[#allocation2 + $0x20] sm:$0xff]
      %v6117 = vld [vmem:[#allocation2 + $0x28] sm:$0xff]
      %v6118 = vld [vmem:[#allocation2 + $0x30] sm:$0xff]
      %v6119 = vld [vmem:[#allocation2 + $0x38] sm:$0xff]
      %v6120 = vld [vmem:[#allocation2 + $0x40] sm:$0xff]
      %v6121 = vld [vmem:[#allocation2 + $0x48] sm:$0xff]
      %v6122 = vld [vmem:[#allocation2 + $0x50] sm:$0xff]
      %v6123 = vld [vmem:[#allocation2 + $0x58] sm:$0xff]
      %v6124 = vld [vmem:[#allocation2 + $0x60] sm:$0xff]
      %v6125 = vld [vmem:[#allocation2 + $0x68] sm:$0xff]
      %v6126 = vld [vmem:[#allocation2 + $0x70] sm:$0xff]
      %v6127 = vld [vmem:[#allocation2 + $0x78] sm:$0xff]
      %v6128 = vld [vmem:[#allocation2 + $0x80] sm:$0xff]
      %v6129 = vld [vmem:[#allocation2 + $0x88] sm:$0xff]
      %v6130 = vld [vmem:[#allocation2 + $0x90] sm:$0xff]
      %v6131 = vld [vmem:[#allocation2 + $0x98] sm:$0xff]
      %v6132 = vld [vmem:[#allocation2 + $0xa0] sm:$0xff]
      %v6133 = vld [vmem:[#allocation2 + $0xa8] sm:$0xff]
      %v6134 = vld [vmem:[#allocation2 + $0xb0] sm:$0xff]
      %v6135 = vld [vmem:[#allocation2 + $0xb8] sm:$0xff]
      %v6136 = vld [vmem:[#allocation2 + $0xc0] sm:$0xff]
      %v6137 = vld [vmem:[#allocation2 + $0xc8] sm:$0xff]
      %v6138 = vld [vmem:[#allocation2 + $0xd0] sm:$0xff]
      %v6139 = vld [vmem:[#allocation2 + $0xd8] sm:$0xff]
      %v6140 = vld [vmem:[#allocation2 + $0xe0] sm:$0xff]
      %v6141 = vld [vmem:[#allocation2 + $0xe8] sm:$0xff]
      %v6142 = vld [vmem:[#allocation2 + $0xf0] sm:$0xff]
      %v6143 = vld [vmem:[#allocation2 + $0xf8] sm:$0xff]
      %v6144 = vld [vmem:[#allocation2 + $0x100] sm:$0xff]
      %v6145 = vld [vmem:[#allocation2 + $0x108] sm:$0xff]
      %v6146 = vld [vmem:[#allocation2 + $0x110] sm:$0xff]
      %v6147 = vld [vmem:[#allocation2 + $0x118] sm:$0xff]
      %v6148 = vld [vmem:[#allocation2 + $0x120] sm:$0xff]
      %v6149 = vld [vmem:[#allocation2 + $0x128] sm:$0xff]
      %v6150 = vld [vmem:[#allocation2 + $0x130] sm:$0xff]
      %v6151 = vld [vmem:[#allocation2 + $0x138] sm:$0xff]
      %v6152 = vld [vmem:[#allocation2 + $0x140] sm:$0x3f]
      %v6194 = vunpack.c.l.b16 %v6056
      %v6195 = vunpack.c.l.b16 %v6057
      %v6196 = vunpack.c.l.b16 %v6058
      %v6197 = vunpack.c.l.b16 %v6059
      %v6198 = vunpack.c.l.b16 %v6060
      %v6199 = vunpack.c.l.b16 %v6061
      %v6200 = vunpack.c.l.b16 %v6062
      %v6201 = vunpack.c.l.b16 %v6063
      %v6202 = vunpack.c.l.b16 %v6064
      %v6203 = vunpack.c.l.b16 %v6065
      %v6204 = vunpack.c.l.b16 %v6066
      %v6205 = vunpack.c.l.b16 %v6067
      %v6206 = vunpack.c.l.b16 %v6068
      %v6207 = vunpack.c.l.b16 %v6069
      %v6208 = vunpack.c.l.b16 %v6070
      %v6209 = vunpack.c.l.b16 %v6071
      %v6210 = vunpack.c.l.b16 %v6072
      %v6211 = vunpack.c.l.b16 %v6073
      %v6212 = vunpack.c.l.b16 %v6074
      %v6213 = vunpack.c.l.b16 %v6075
      %v6214 = vunpack.c.l.b16 %v6076
      %v6215 = vunpack.c.l.b16 %v6077
      %v6216 = vunpack.c.l.b16 %v6078
      %v6217 = vunpack.c.l.b16 %v6079
      %v6218 = vunpack.c.l.b16 %v6080
      %v6219 = vunpack.c.l.b16 %v6081
      %v6220 = vunpack.c.l.b16 %v6082
      %v6221 = vunpack.c.l.b16 %v6083
      %v6222 = vunpack.c.l.b16 %v6084
      %v6223 = vunpack.c.l.b16 %v6085
      %v6224 = vunpack.c.l.b16 %v6086
      %v6225 = vunpack.c.l.b16 %v6087
      %v6226 = vunpack.c.l.b16 %v6088
      %v6227 = vunpack.c.l.b16 %v6089
      %v6228 = vunpack.c.l.b16 %v6090
      %v6229 = vunpack.c.l.b16 %v6091
      %v6230 = vunpack.c.l.b16 %v6092
      %v6231 = vunpack.c.l.b16 %v6093
      %v6232 = vunpack.c.l.b16 %v6094
      %v6233 = vunpack.c.l.b16 %v6095
      %v6234 = vunpack.c.l.b16 %v6096
      %v6235 = vpack.c.b16 %v6195, %v6194
      %v6236 = vpack.c.b16 %v6197, %v6196
      %v6237 = vpack.c.b16 %v6199, %v6198
      %v6238 = vpack.c.b16 %v6201, %v6200
      %v6239 = vpack.c.b16 %v6203, %v6202
      %v6240 = vpack.c.b16 %v6205, %v6204
      %v6241 = vpack.c.b16 %v6207, %v6206
      %v6242 = vpack.c.b16 %v6209, %v6208
      %v6243 = vpack.c.b16 %v6211, %v6210
      %v6244 = vpack.c.b16 %v6213, %v6212
      %v6245 = vpack.c.b16 %v6215, %v6214
      %v6246 = vpack.c.b16 %v6217, %v6216
      %v6247 = vpack.c.b16 %v6219, %v6218
      %v6248 = vpack.c.b16 %v6221, %v6220
      %v6249 = vpack.c.b16 %v6223, %v6222
      %v6250 = vpack.c.b16 %v6225, %v6224
      %v6251 = vpack.c.b16 %v6227, %v6226
      %v6252 = vpack.c.b16 %v6229, %v6228
      %v6253 = vpack.c.b16 %v6231, %v6230
      %v6254 = vpack.c.b16 %v6233, %v6232
      %v6255 = vpack.c.b16 %v6234, %v6234
      %vm6256 = vcmask 654336
      %v6258 = vsel %vm6256, %v6235, 0
      %v6261 = vsel %vm6256, %v6236, 0
      %v6264 = vsel %vm6256, %v6237, 0
      %v6267 = vsel %vm6256, %v6238, 0
      %v6270 = vsel %vm6256, %v6239, 0
      %v6273 = vsel %vm6256, %v6240, 0
      %v6276 = vsel %vm6256, %v6241, 0
      %v6279 = vsel %vm6256, %v6242, 0
      %v6282 = vsel %vm6256, %v6243, 0
      %v6285 = vsel %vm6256, %v6244, 0
      %v6288 = vsel %vm6256, %v6245, 0
      %v6291 = vsel %vm6256, %v6246, 0
      %v6294 = vsel %vm6256, %v6247, 0
      %v6297 = vsel %vm6256, %v6248, 0
      %v6300 = vsel %vm6256, %v6249, 0
      %v6303 = vsel %vm6256, %v6250, 0
      %v6306 = vsel %vm6256, %v6251, 0
      %v6309 = vsel %vm6256, %v6252, 0
      %v6312 = vsel %vm6256, %v6253, 0
      %v6315 = vsel %vm6256, %v6254, 0
      %v6318 = vsel %vm6256, %v6255, 0
      %6320 = vmatpush.bf16.msra.mxu0 0
      %6321 = vmatpush.bf16.msra.mxu0 0
      %6322 = vmatpush.bf16.msra.mxu0 0
      %6323 = vmatpush.bf16.msra.mxu0 %v6111
      %6324 = vmatpush.bf16.msra.mxu0 %v6110
      %6325 = vmatpush.bf16.msra.mxu0 %v6109
      %6326 = vmatpush.bf16.msra.mxu0 %v6108
      %6327 = vmatpush.bf16.msra.mxu0 %v6107
      %6328 = vmatmul.bf16.gmra.mxu0 %v6258
      %v6329 = vpop.f32.mrf.mxu0
      %v6330 = vadd.f32 %v6112, %v6329
      %v6331 = vpop.f32.mrf.mxu0
      %v6332 = vadd.f32 %v6113, %v6331
      %6333 = vmatmul.bf16.gmra.mxu0 %v6261
      %v6334 = vpop.f32.mrf.mxu0
      %v6335 = vadd.f32 %v6114, %v6334
      %v6336 = vpop.f32.mrf.mxu0
      %v6337 = vadd.f32 %v6115, %v6336
      %6338 = vmatmul.bf16.gmra.mxu0 %v6264
      %v6339 = vpop.f32.mrf.mxu0
      %v6340 = vadd.f32 %v6116, %v6339
      %v6341 = vpop.f32.mrf.mxu0
      %v6342 = vadd.f32 %v6117, %v6341
      %6343 = vmatmul.bf16.gmra.mxu0 %v6267
      %v6344 = vpop.f32.mrf.mxu0
      %v6345 = vadd.f32 %v6118, %v6344
      %v6346 = vpop.f32.mrf.mxu0
      %v6347 = vadd.f32 %v6119, %v6346
      %6348 = vmatmul.bf16.gmra.mxu0 %v6270
      %v6349 = vpop.f32.mrf.mxu0
      %v6350 = vadd.f32 %v6120, %v6349
      %v6351 = vpop.f32.mrf.mxu0
      %v6352 = vadd.f32 %v6121, %v6351
      %6353 = vmatmul.bf16.gmra.mxu0 %v6273
      %v6354 = vpop.f32.mrf.mxu0
      %v6355 = vadd.f32 %v6122, %v6354
      %v6356 = vpop.f32.mrf.mxu0
      %v6357 = vadd.f32 %v6123, %v6356
      %6358 = vmatmul.bf16.gmra.mxu0 %v6276
      %v6359 = vpop.f32.mrf.mxu0
      %v6360 = vadd.f32 %v6124, %v6359
      %v6361 = vpop.f32.mrf.mxu0
      %v6362 = vadd.f32 %v6125, %v6361
      %6363 = vmatmul.bf16.gmra.mxu0 %v6279
      %v6364 = vpop.f32.mrf.mxu0
      %v6365 = vadd.f32 %v6126, %v6364
      %v6366 = vpop.f32.mrf.mxu0
      %v6367 = vadd.f32 %v6127, %v6366
      %6368 = vmatmul.bf16.gmra.mxu0 %v6282
      %v6369 = vpop.f32.mrf.mxu0
      %v6370 = vadd.f32 %v6128, %v6369
      %v6371 = vpop.f32.mrf.mxu0
      %v6372 = vadd.f32 %v6129, %v6371
      %6373 = vmatmul.bf16.gmra.mxu0 %v6285
      %v6374 = vpop.f32.mrf.mxu0
      %v6375 = vadd.f32 %v6130, %v6374
      %v6376 = vpop.f32.mrf.mxu0
      %v6377 = vadd.f32 %v6131, %v6376
      %6378 = vmatmul.bf16.gmra.mxu0 %v6288
      %v6379 = vpop.f32.mrf.mxu0
      %v6380 = vadd.f32 %v6132, %v6379
      %v6381 = vpop.f32.mrf.mxu0
      %v6382 = vadd.f32 %v6133, %v6381
      %6383 = vmatmul.bf16.gmra.mxu0 %v6291
      %v6384 = vpop.f32.mrf.mxu0
      %v6385 = vadd.f32 %v6134, %v6384
      %v6386 = vpop.f32.mrf.mxu0
      %v6387 = vadd.f32 %v6135, %v6386
      %6388 = vmatmul.bf16.gmra.mxu0 %v6294
      %v6389 = vpop.f32.mrf.mxu0
      %v6390 = vadd.f32 %v6136, %v6389
      %v6391 = vpop.f32.mrf.mxu0
      %v6392 = vadd.f32 %v6137, %v6391
      %6393 = vmatmul.bf16.gmra.mxu0 %v6297
      %v6394 = vpop.f32.mrf.mxu0
      %v6395 = vadd.f32 %v6138, %v6394
      %v6396 = vpop.f32.mrf.mxu0
      %v6397 = vadd.f32 %v6139, %v6396
      %6398 = vmatmul.bf16.gmra.mxu0 %v6300
      %v6399 = vpop.f32.mrf.mxu0
      %v6400 = vadd.f32 %v6140, %v6399
      %v6401 = vpop.f32.mrf.mxu0
      %v6402 = vadd.f32 %v6141, %v6401
      %6403 = vmatmul.bf16.gmra.mxu0 %v6303
      %v6404 = vpop.f32.mrf.mxu0
      %v6405 = vadd.f32 %v6142, %v6404
      %v6406 = vpop.f32.mrf.mxu0
      %v6407 = vadd.f32 %v6143, %v6406
      %6408 = vmatmul.bf16.gmra.mxu0 %v6306
      %v6409 = vpop.f32.mrf.mxu0
      %v6410 = vadd.f32 %v6144, %v6409
      %v6411 = vpop.f32.mrf.mxu0
      %v6412 = vadd.f32 %v6145, %v6411
      %6413 = vmatmul.bf16.gmra.mxu0 %v6309
      %v6414 = vpop.f32.mrf.mxu0
      %v6415 = vadd.f32 %v6146, %v6414
      %v6416 = vpop.f32.mrf.mxu0
      %v6417 = vadd.f32 %v6147, %v6416
      %6418 = vmatmul.bf16.gmra.mxu0 %v6312
      %v6419 = vpop.f32.mrf.mxu0
      %v6420 = vadd.f32 %v6148, %v6419
      %v6421 = vpop.f32.mrf.mxu0
      %v6422 = vadd.f32 %v6149, %v6421
      %6423 = vmatmul.bf16.gmra.mxu0 %v6315
      %v6424 = vpop.f32.mrf.mxu0
      %v6425 = vadd.f32 %v6150, %v6424
      %v6426 = vpop.f32.mrf.mxu0
      %v6427 = vadd.f32 %v6151, %v6426
      %6428 = vmatmul.bf16.gmra.mxu0 %v6318
      %v6429 = vpop.f32.mrf.mxu0
      %v6430 = vadd.f32 %v6152, %v6429
      %v6431 = vpop.f32.mrf.mxu0
      %6432 = vdwg.mxu0
      %6433 = vst.msk [vmem:[#allocation10] sm:$0xff] %vm3096, %v6330
      %6434 = vst.msk [vmem:[#allocation10 + $0x8] sm:$0xff] %vm3096, %v6332
      %6435 = vst.msk [vmem:[#allocation10 + $0x10] sm:$0xff] %vm3096, %v6335
      %6436 = vst.msk [vmem:[#allocation10 + $0x18] sm:$0xff] %vm3096, %v6337
      %6437 = vst.msk [vmem:[#allocation10 + $0x20] sm:$0xff] %vm3096, %v6340
      %6438 = vst.msk [vmem:[#allocation10 + $0x28] sm:$0xff] %vm3096, %v6342
      %6439 = vst.msk [vmem:[#allocation10 + $0x30] sm:$0xff] %vm3096, %v6345
      %6440 = vst.msk [vmem:[#allocation10 + $0x38] sm:$0xff] %vm3096, %v6347
      %6441 = vst.msk [vmem:[#allocation10 + $0x40] sm:$0xff] %vm3096, %v6350
      %6442 = vst.msk [vmem:[#allocation10 + $0x48] sm:$0xff] %vm3096, %v6352
      %6443 = vst.msk [vmem:[#allocation10 + $0x50] sm:$0xff] %vm3096, %v6355
      %6444 = vst.msk [vmem:[#allocation10 + $0x58] sm:$0xff] %vm3096, %v6357
      %6445 = vst.msk [vmem:[#allocation10 + $0x60] sm:$0xff] %vm3096, %v6360
      %6446 = vst.msk [vmem:[#allocation10 + $0x68] sm:$0xff] %vm3096, %v6362
      %6447 = vst.msk [vmem:[#allocation10 + $0x70] sm:$0xff] %vm3096, %v6365
      %6448 = vst.msk [vmem:[#allocation10 + $0x78] sm:$0xff] %vm3096, %v6367
      %6449 = vst.msk [vmem:[#allocation10 + $0x80] sm:$0xff] %vm3096, %v6370
      %6450 = vst.msk [vmem:[#allocation10 + $0x88] sm:$0xff] %vm3096, %v6372
      %6451 = vst.msk [vmem:[#allocation10 + $0x90] sm:$0xff] %vm3096, %v6375
      %6452 = vst.msk [vmem:[#allocation10 + $0x98] sm:$0xff] %vm3096, %v6377
      %6453 = vst.msk [vmem:[#allocation10 + $0xa0] sm:$0xff] %vm3096, %v6380
      %6454 = vst.msk [vmem:[#allocation10 + $0xa8] sm:$0xff] %vm3096, %v6382
      %6455 = vst.msk [vmem:[#allocation10 + $0xb0] sm:$0xff] %vm3096, %v6385
      %6456 = vst.msk [vmem:[#allocation10 + $0xb8] sm:$0xff] %vm3096, %v6387
      %6457 = vst.msk [vmem:[#allocation10 + $0xc0] sm:$0xff] %vm3096, %v6390
      %6458 = vst.msk [vmem:[#allocation10 + $0xc8] sm:$0xff] %vm3096, %v6392
      %6459 = vst.msk [vmem:[#allocation10 + $0xd0] sm:$0xff] %vm3096, %v6395
      %6460 = vst.msk [vmem:[#allocation10 + $0xd8] sm:$0xff] %vm3096, %v6397
      %6461 = vst.msk [vmem:[#allocation10 + $0xe0] sm:$0xff] %vm3096, %v6400
      %6462 = vst.msk [vmem:[#allocation10 + $0xe8] sm:$0xff] %vm3096, %v6402
      %6463 = vst.msk [vmem:[#allocation10 + $0xf0] sm:$0xff] %vm3096, %v6405
      %6464 = vst.msk [vmem:[#allocation10 + $0xf8] sm:$0xff] %vm3096, %v6407
      %6465 = vst.msk [vmem:[#allocation10 + $0x100] sm:$0xff] %vm3096, %v6410
      %6466 = vst.msk [vmem:[#allocation10 + $0x108] sm:$0xff] %vm3096, %v6412
      %6467 = vst.msk [vmem:[#allocation10 + $0x110] sm:$0xff] %vm3096, %v6415
      %6468 = vst.msk [vmem:[#allocation10 + $0x118] sm:$0xff] %vm3096, %v6417
      %6469 = vst.msk [vmem:[#allocation10 + $0x120] sm:$0xff] %vm3096, %v6420
      %6470 = vst.msk [vmem:[#allocation10 + $0x128] sm:$0xff] %vm3096, %v6422
      %6471 = vst.msk [vmem:[#allocation10 + $0x130] sm:$0xff] %vm3096, %v6425
      %6472 = vst.msk [vmem:[#allocation10 + $0x138] sm:$0xff] %vm3096, %v6427
      %6473 = vst.msk [vmem:[#allocation10 + $0x140] sm:$0x3f] %vm3242, %v6430
      %v6474 = vld [vmem:[#allocation10] sm:$0xff]
      %v6475 = vld [vmem:[#allocation10 + $0x8] sm:$0xff]
      %v6476 = vld [vmem:[#allocation10 + $0x10] sm:$0xff]
      %v6477 = vld [vmem:[#allocation10 + $0x18] sm:$0xff]
      %v6478 = vld [vmem:[#allocation10 + $0x20] sm:$0xff]
      %v6479 = vld [vmem:[#allocation10 + $0x28] sm:$0xff]
      %v6480 = vld [vmem:[#allocation10 + $0x30] sm:$0xff]
      %v6481 = vld [vmem:[#allocation10 + $0x38] sm:$0xff]
      %v6482 = vld [vmem:[#allocation10 + $0x40] sm:$0xff]
      %v6483 = vld [vmem:[#allocation10 + $0x48] sm:$0xff]
      %v6484 = vld [vmem:[#allocation10 + $0x50] sm:$0xff]
      %v6485 = vld [vmem:[#allocation10 + $0x58] sm:$0xff]
      %v6486 = vld [vmem:[#allocation10 + $0x60] sm:$0xff]
      %v6487 = vld [vmem:[#allocation10 + $0x68] sm:$0xff]
      %v6488 = vld [vmem:[#allocation10 + $0x70] sm:$0xff]
      %v6489 = vld [vmem:[#allocation10 + $0x78] sm:$0xff]
      %v6490 = vld [vmem:[#allocation10 + $0x80] sm:$0xff]
      %v6491 = vld [vmem:[#allocation10 + $0x88] sm:$0xff]
      %v6492 = vld [vmem:[#allocation10 + $0x90] sm:$0xff]
      %v6493 = vld [vmem:[#allocation10 + $0x98] sm:$0xff]
      %v6494 = vld [vmem:[#allocation10 + $0xa0] sm:$0xff]
      %v6495 = vld [vmem:[#allocation10 + $0xa8] sm:$0xff]
      %v6496 = vld [vmem:[#allocation10 + $0xb0] sm:$0xff]
      %v6497 = vld [vmem:[#allocation10 + $0xb8] sm:$0xff]
      %v6498 = vld [vmem:[#allocation10 + $0xc0] sm:$0xff]
      %v6499 = vld [vmem:[#allocation10 + $0xc8] sm:$0xff]
      %v6500 = vld [vmem:[#allocation10 + $0xd0] sm:$0xff]
      %v6501 = vld [vmem:[#allocation10 + $0xd8] sm:$0xff]
      %v6502 = vld [vmem:[#allocation10 + $0xe0] sm:$0xff]
      %v6503 = vld [vmem:[#allocation10 + $0xe8] sm:$0xff]
      %v6504 = vld [vmem:[#allocation10 + $0xf0] sm:$0xff]
      %v6505 = vld [vmem:[#allocation10 + $0xf8] sm:$0xff]
      %v6506 = vld [vmem:[#allocation10 + $0x100] sm:$0xff]
      %v6507 = vld [vmem:[#allocation10 + $0x108] sm:$0xff]
      %v6508 = vld [vmem:[#allocation10 + $0x110] sm:$0xff]
      %v6509 = vld [vmem:[#allocation10 + $0x118] sm:$0xff]
      %v6510 = vpack.c.bf16 %v6475, %v6474
      %v6511 = vpack.c.bf16 %v6477, %v6476
      %v6512 = vpack.c.bf16 %v6479, %v6478
      %v6513 = vpack.c.bf16 %v6481, %v6480
      %v6514 = vpack.c.bf16 %v6483, %v6482
      %v6515 = vpack.c.bf16 %v6485, %v6484
      %v6516 = vpack.c.bf16 %v6487, %v6486
      %v6517 = vpack.c.bf16 %v6489, %v6488
      %v6518 = vpack.c.bf16 %v6491, %v6490
      %v6519 = vpack.c.bf16 %v6493, %v6492
      %v6520 = vpack.c.bf16 %v6495, %v6494
      %v6521 = vpack.c.bf16 %v6497, %v6496
      %v6522 = vpack.c.bf16 %v6499, %v6498
      %v6523 = vpack.c.bf16 %v6501, %v6500
      %v6524 = vpack.c.bf16 %v6503, %v6502
      %v6525 = vpack.c.bf16 %v6505, %v6504
      %v6526 = vpack.c.bf16 %v6507, %v6506
      %v6527 = vpack.c.bf16 %v6509, %v6508
      %v6528 = vld [vmem:[%s17] sm:$0xf]
      %v6529 = vld [vmem:[#allocation10 + $0x1] sm:$0xff]
      %v6530 = vld [vmem:[#allocation10 + $0x9] sm:$0xff]
      %v6531 = vld [vmem:[#allocation10 + $0x11] sm:$0xff]
      %v6532 = vld [vmem:[#allocation10 + $0x19] sm:$0xff]
      %v6533 = vld [vmem:[#allocation10 + $0x21] sm:$0xff]
      %v6534 = vld [vmem:[#allocation10 + $0x29] sm:$0xff]
      %v6535 = vld [vmem:[#allocation10 + $0x31] sm:$0xff]
      %v6536 = vld [vmem:[#allocation10 + $0x39] sm:$0xff]
      %v6537 = vld [vmem:[#allocation10 + $0x41] sm:$0xff]
      %v6538 = vld [vmem:[#allocation10 + $0x49] sm:$0xff]
      %v6539 = vld [vmem:[#allocation10 + $0x51] sm:$0xff]
      %v6540 = vld [vmem:[#allocation10 + $0x59] sm:$0xff]
      %v6541 = vld [vmem:[#allocation10 + $0x61] sm:$0xff]
      %v6542 = vld [vmem:[#allocation10 + $0x69] sm:$0xff]
      %v6543 = vld [vmem:[#allocation10 + $0x71] sm:$0xff]
      %v6544 = vld [vmem:[#allocation10 + $0x79] sm:$0xff]
      %v6545 = vld [vmem:[#allocation10 + $0x81] sm:$0xff]
      %v6546 = vld [vmem:[#allocation10 + $0x89] sm:$0xff]
      %v6547 = vld [vmem:[#allocation10 + $0x91] sm:$0xff]
      %v6548 = vld [vmem:[#allocation10 + $0x99] sm:$0xff]
      %v6549 = vld [vmem:[#allocation10 + $0xa1] sm:$0xff]
      %v6550 = vld [vmem:[#allocation10 + $0xa9] sm:$0xff]
      %v6551 = vld [vmem:[#allocation10 + $0xb1] sm:$0xff]
      %v6552 = vld [vmem:[#allocation10 + $0xb9] sm:$0xff]
      %v6553 = vld [vmem:[#allocation10 + $0xc1] sm:$0xff]
      %v6554 = vld [vmem:[#allocation10 + $0xc9] sm:$0xff]
      %v6555 = vld [vmem:[#allocation10 + $0xd1] sm:$0xff]
      %v6556 = vld [vmem:[#allocation10 + $0xd9] sm:$0xff]
      %v6557 = vld [vmem:[#allocation10 + $0xe1] sm:$0xff]
      %v6558 = vld [vmem:[#allocation10 + $0xe9] sm:$0xff]
      %v6559 = vld [vmem:[#allocation10 + $0xf1] sm:$0xff]
      %v6560 = vld [vmem:[#allocation10 + $0xf9] sm:$0xff]
      %v6561 = vld [vmem:[#allocation10 + $0x101] sm:$0xff]
      %v6562 = vld [vmem:[#allocation10 + $0x109] sm:$0xff]
      %v6563 = vld [vmem:[#allocation10 + $0x111] sm:$0xff]
      %v6564 = vld [vmem:[#allocation10 + $0x119] sm:$0xff]
      %v6565 = vpack.c.bf16 %v6530, %v6529
      %v6566 = vpack.c.bf16 %v6532, %v6531
      %v6567 = vpack.c.bf16 %v6534, %v6533
      %v6568 = vpack.c.bf16 %v6536, %v6535
      %v6569 = vpack.c.bf16 %v6538, %v6537
      %v6570 = vpack.c.bf16 %v6540, %v6539
      %v6571 = vpack.c.bf16 %v6542, %v6541
      %v6572 = vpack.c.bf16 %v6544, %v6543
      %v6573 = vpack.c.bf16 %v6546, %v6545
      %v6574 = vpack.c.bf16 %v6548, %v6547
      %v6575 = vpack.c.bf16 %v6550, %v6549
      %v6576 = vpack.c.bf16 %v6552, %v6551
      %v6577 = vpack.c.bf16 %v6554, %v6553
      %v6578 = vpack.c.bf16 %v6556, %v6555
      %v6579 = vpack.c.bf16 %v6558, %v6557
      %v6580 = vpack.c.bf16 %v6560, %v6559
      %v6581 = vpack.c.bf16 %v6562, %v6561
      %v6582 = vpack.c.bf16 %v6564, %v6563
      %s6583 = scalar_lea.vmem %s17, 4
      %v6584 = vld [vmem:[%s6583] sm:$0xf]
      %v6586 = vsel %vm3096, %v6565, 0
      %v6589 = vsel %vm3096, %v6566, 0
      %v6592 = vsel %vm3096, %v6567, 0
      %v6595 = vsel %vm3096, %v6568, 0
      %v6598 = vsel %vm3096, %v6569, 0
      %v6601 = vsel %vm3096, %v6570, 0
      %v6604 = vsel %vm3096, %v6571, 0
      %v6607 = vsel %vm3096, %v6572, 0
      %v6610 = vsel %vm3096, %v6573, 0
      %v6613 = vsel %vm3096, %v6574, 0
      %v6616 = vsel %vm3096, %v6575, 0
      %v6619 = vsel %vm3096, %v6576, 0
      %v6622 = vsel %vm3096, %v6577, 0
      %v6625 = vsel %vm3096, %v6578, 0
      %v6628 = vsel %vm3096, %v6579, 0
      %v6631 = vsel %vm3096, %v6580, 0
      %v6634 = vsel %vm3096, %v6581, 0
      %v6637 = vsel %vm3096, %v6582, 0
      %v6640 = vsel %vm3387, %v6584, 0
      %6642 = vmatpush.bf16.msra.mxu0 0
      %6643 = vmatpush.bf16.msra.mxu0 0
      %6644 = vmatpush.bf16.msra.mxu0 0
      %6645 = vmatpush.bf16.msra.mxu0 0
      %6646 = vmatpush.bf16.msra.mxu0 0
      %6647 = vmatpush.bf16.msra.mxu0 0
      %6648 = vmatpush.bf16.msra.mxu0 0
      %6649 = vmatpush.bf16.msra.mxu0 %v6640
      %6650 = vmatmul.bf16.gmra.mxu0 %v6586
      %v6651 = vpop.f32.mrf.mxu0
      %v6652 = vadd.f32 0.0, %v6651
      %v6653 = vpop.f32.mrf.mxu0
      %v6654 = vadd.f32 0.0, %v6653
      %6655 = vmatmul.bf16.gmra.mxu0 %v6589
      %v6656 = vpop.f32.mrf.mxu0
      %v6657 = vadd.f32 0.0, %v6656
      %v6658 = vpop.f32.mrf.mxu0
      %v6659 = vadd.f32 0.0, %v6658
      %6660 = vmatmul.bf16.gmra.mxu0 %v6592
      %v6661 = vpop.f32.mrf.mxu0
      %v6662 = vadd.f32 0.0, %v6661
      %v6663 = vpop.f32.mrf.mxu0
      %v6664 = vadd.f32 0.0, %v6663
      %6665 = vmatmul.bf16.gmra.mxu0 %v6595
      %v6666 = vpop.f32.mrf.mxu0
      %v6667 = vadd.f32 0.0, %v6666
      %v6668 = vpop.f32.mrf.mxu0
      %v6669 = vadd.f32 0.0, %v6668
      %6670 = vmatmul.bf16.gmra.mxu0 %v6598
      %v6671 = vpop.f32.mrf.mxu0
      %v6672 = vadd.f32 0.0, %v6671
      %v6673 = vpop.f32.mrf.mxu0
      %v6674 = vadd.f32 0.0, %v6673
      %6675 = vmatmul.bf16.gmra.mxu0 %v6601
      %v6676 = vpop.f32.mrf.mxu0
      %v6677 = vadd.f32 0.0, %v6676
      %v6678 = vpop.f32.mrf.mxu0
      %v6679 = vadd.f32 0.0, %v6678
      %6680 = vmatmul.bf16.gmra.mxu0 %v6604
      %v6681 = vpop.f32.mrf.mxu0
      %v6682 = vadd.f32 0.0, %v6681
      %v6683 = vpop.f32.mrf.mxu0
      %v6684 = vadd.f32 0.0, %v6683
      %6685 = vmatmul.bf16.gmra.mxu0 %v6607
      %v6686 = vpop.f32.mrf.mxu0
      %v6687 = vadd.f32 0.0, %v6686
      %v6688 = vpop.f32.mrf.mxu0
      %v6689 = vadd.f32 0.0, %v6688
      %6690 = vmatmul.bf16.gmra.mxu0 %v6610
      %v6691 = vpop.f32.mrf.mxu0
      %v6692 = vadd.f32 0.0, %v6691
      %v6693 = vpop.f32.mrf.mxu0
      %v6694 = vadd.f32 0.0, %v6693
      %6695 = vmatmul.bf16.gmra.mxu0 %v6613
      %v6696 = vpop.f32.mrf.mxu0
      %v6697 = vadd.f32 0.0, %v6696
      %v6698 = vpop.f32.mrf.mxu0
      %v6699 = vadd.f32 0.0, %v6698
      %6700 = vmatmul.bf16.gmra.mxu0 %v6616
      %v6701 = vpop.f32.mrf.mxu0
      %v6702 = vadd.f32 0.0, %v6701
      %v6703 = vpop.f32.mrf.mxu0
      %v6704 = vadd.f32 0.0, %v6703
      %6705 = vmatmul.bf16.gmra.mxu0 %v6619
      %v6706 = vpop.f32.mrf.mxu0
      %v6707 = vadd.f32 0.0, %v6706
      %v6708 = vpop.f32.mrf.mxu0
      %v6709 = vadd.f32 0.0, %v6708
      %6710 = vmatmul.bf16.gmra.mxu0 %v6622
      %v6711 = vpop.f32.mrf.mxu0
      %v6712 = vadd.f32 0.0, %v6711
      %v6713 = vpop.f32.mrf.mxu0
      %v6714 = vadd.f32 0.0, %v6713
      %6715 = vmatmul.bf16.gmra.mxu0 %v6625
      %v6716 = vpop.f32.mrf.mxu0
      %v6717 = vadd.f32 0.0, %v6716
      %v6718 = vpop.f32.mrf.mxu0
      %v6719 = vadd.f32 0.0, %v6718
      %6720 = vmatmul.bf16.gmra.mxu0 %v6628
      %v6721 = vpop.f32.mrf.mxu0
      %v6722 = vadd.f32 0.0, %v6721
      %v6723 = vpop.f32.mrf.mxu0
      %v6724 = vadd.f32 0.0, %v6723
      %6725 = vmatmul.bf16.gmra.mxu0 %v6631
      %v6726 = vpop.f32.mrf.mxu0
      %v6727 = vadd.f32 0.0, %v6726
      %v6728 = vpop.f32.mrf.mxu0
      %v6729 = vadd.f32 0.0, %v6728
      %6730 = vmatmul.bf16.gmra.mxu0 %v6634
      %v6731 = vpop.f32.mrf.mxu0
      %v6732 = vadd.f32 0.0, %v6731
      %v6733 = vpop.f32.mrf.mxu0
      %v6734 = vadd.f32 0.0, %v6733
      %6735 = vmatmul.bf16.gmra.mxu0 %v6637
      %v6736 = vpop.f32.mrf.mxu0
      %v6737 = vadd.f32 0.0, %v6736
      %v6738 = vpop.f32.mrf.mxu0
      %v6739 = vadd.f32 0.0, %v6738
      %6740 = vdwg.mxu0
      %v6742 = vsel %vm3096, %v6510, 0
      %v6745 = vsel %vm3096, %v6511, 0
      %v6748 = vsel %vm3096, %v6512, 0
      %v6751 = vsel %vm3096, %v6513, 0
      %v6754 = vsel %vm3096, %v6514, 0
      %v6757 = vsel %vm3096, %v6515, 0
      %v6760 = vsel %vm3096, %v6516, 0
      %v6763 = vsel %vm3096, %v6517, 0
      %v6766 = vsel %vm3096, %v6518, 0
      %v6769 = vsel %vm3096, %v6519, 0
      %v6772 = vsel %vm3096, %v6520, 0
      %v6775 = vsel %vm3096, %v6521, 0
      %v6778 = vsel %vm3096, %v6522, 0
      %v6781 = vsel %vm3096, %v6523, 0
      %v6784 = vsel %vm3096, %v6524, 0
      %v6787 = vsel %vm3096, %v6525, 0
      %v6790 = vsel %vm3096, %v6526, 0
      %v6793 = vsel %vm3096, %v6527, 0
      %v6796 = vsel %vm3387, %v6528, 0
      %6798 = vmatpush.bf16.msra.mxu0 0
      %6799 = vmatpush.bf16.msra.mxu0 0
      %6800 = vmatpush.bf16.msra.mxu0 0
      %6801 = vmatpush.bf16.msra.mxu0 0
      %6802 = vmatpush.bf16.msra.mxu0 0
      %6803 = vmatpush.bf16.msra.mxu0 0
      %6804 = vmatpush.bf16.msra.mxu0 0
      %6805 = vmatpush.bf16.msra.mxu0 %v6796
      %6806 = vmatmul.bf16.gmra.mxu0 %v6742
      %v6807 = vpop.f32.mrf.mxu0
      %v6808 = vadd.f32 %v6652, %v6807
      %v6809 = vpop.f32.mrf.mxu0
      %v6810 = vadd.f32 %v6654, %v6809
      %6811 = vmatmul.bf16.gmra.mxu0 %v6745
      %v6812 = vpop.f32.mrf.mxu0
      %v6813 = vadd.f32 %v6657, %v6812
      %v6814 = vpop.f32.mrf.mxu0
      %v6815 = vadd.f32 %v6659, %v6814
      %6816 = vmatmul.bf16.gmra.mxu0 %v6748
      %v6817 = vpop.f32.mrf.mxu0
      %v6818 = vadd.f32 %v6662, %v6817
      %v6819 = vpop.f32.mrf.mxu0
      %v6820 = vadd.f32 %v6664, %v6819
      %6821 = vmatmul.bf16.gmra.mxu0 %v6751
      %v6822 = vpop.f32.mrf.mxu0
      %v6823 = vadd.f32 %v6667, %v6822
      %v6824 = vpop.f32.mrf.mxu0
      %v6825 = vadd.f32 %v6669, %v6824
      %6826 = vmatmul.bf16.gmra.mxu0 %v6754
      %v6827 = vpop.f32.mrf.mxu0
      %v6828 = vadd.f32 %v6672, %v6827
      %v6829 = vpop.f32.mrf.mxu0
      %v6830 = vadd.f32 %v6674, %v6829
      %6831 = vmatmul.bf16.gmra.mxu0 %v6757
      %v6832 = vpop.f32.mrf.mxu0
      %v6833 = vadd.f32 %v6677, %v6832
      %v6834 = vpop.f32.mrf.mxu0
      %v6835 = vadd.f32 %v6679, %v6834
      %6836 = vmatmul.bf16.gmra.mxu0 %v6760
      %v6837 = vpop.f32.mrf.mxu0
      %v6838 = vadd.f32 %v6682, %v6837
      %v6839 = vpop.f32.mrf.mxu0
      %v6840 = vadd.f32 %v6684, %v6839
      %6841 = vmatmul.bf16.gmra.mxu0 %v6763
      %v6842 = vpop.f32.mrf.mxu0
      %v6843 = vadd.f32 %v6687, %v6842
      %v6844 = vpop.f32.mrf.mxu0
      %v6845 = vadd.f32 %v6689, %v6844
      %6846 = vmatmul.bf16.gmra.mxu0 %v6766
      %v6847 = vpop.f32.mrf.mxu0
      %v6848 = vadd.f32 %v6692, %v6847
      %v6849 = vpop.f32.mrf.mxu0
      %v6850 = vadd.f32 %v6694, %v6849
      %6851 = vmatmul.bf16.gmra.mxu0 %v6769
      %v6852 = vpop.f32.mrf.mxu0
      %v6853 = vadd.f32 %v6697, %v6852
      %v6854 = vpop.f32.mrf.mxu0
      %v6855 = vadd.f32 %v6699, %v6854
      %6856 = vmatmul.bf16.gmra.mxu0 %v6772
      %v6857 = vpop.f32.mrf.mxu0
      %v6858 = vadd.f32 %v6702, %v6857
      %v6859 = vpop.f32.mrf.mxu0
      %v6860 = vadd.f32 %v6704, %v6859
      %6861 = vmatmul.bf16.gmra.mxu0 %v6775
      %v6862 = vpop.f32.mrf.mxu0
      %v6863 = vadd.f32 %v6707, %v6862
      %v6864 = vpop.f32.mrf.mxu0
      %v6865 = vadd.f32 %v6709, %v6864
      %6866 = vmatmul.bf16.gmra.mxu0 %v6778
      %v6867 = vpop.f32.mrf.mxu0
      %v6868 = vadd.f32 %v6712, %v6867
      %v6869 = vpop.f32.mrf.mxu0
      %v6870 = vadd.f32 %v6714, %v6869
      %6871 = vmatmul.bf16.gmra.mxu0 %v6781
      %v6872 = vpop.f32.mrf.mxu0
      %v6873 = vadd.f32 %v6717, %v6872
      %v6874 = vpop.f32.mrf.mxu0
      %v6875 = vadd.f32 %v6719, %v6874
      %6876 = vmatmul.bf16.gmra.mxu0 %v6784
      %v6877 = vpop.f32.mrf.mxu0
      %v6878 = vadd.f32 %v6722, %v6877
      %v6879 = vpop.f32.mrf.mxu0
      %v6880 = vadd.f32 %v6724, %v6879
      %6881 = vmatmul.bf16.gmra.mxu0 %v6787
      %v6882 = vpop.f32.mrf.mxu0
      %v6883 = vadd.f32 %v6727, %v6882
      %v6884 = vpop.f32.mrf.mxu0
      %v6885 = vadd.f32 %v6729, %v6884
      %6886 = vmatmul.bf16.gmra.mxu0 %v6790
      %v6887 = vpop.f32.mrf.mxu0
      %v6888 = vadd.f32 %v6732, %v6887
      %v6889 = vpop.f32.mrf.mxu0
      %v6890 = vadd.f32 %v6734, %v6889
      %6891 = vmatmul.bf16.gmra.mxu0 %v6793
      %v6892 = vpop.f32.mrf.mxu0
      %v6893 = vadd.f32 %v6737, %v6892
      %v6894 = vpop.f32.mrf.mxu0
      %v6895 = vadd.f32 %v6739, %v6894
      %6896 = vdwg.mxu0
      %v6897 = vld [vmem:[#allocation10 + $0x2] sm:$0xff]
      %v6898 = vld [vmem:[#allocation10 + $0xa] sm:$0xff]
      %v6899 = vld [vmem:[#allocation10 + $0x12] sm:$0xff]
      %v6900 = vld [vmem:[#allocation10 + $0x1a] sm:$0xff]
      %v6901 = vld [vmem:[#allocation10 + $0x22] sm:$0xff]
      %v6902 = vld [vmem:[#allocation10 + $0x2a] sm:$0xff]
      %v6903 = vld [vmem:[#allocation10 + $0x32] sm:$0xff]
      %v6904 = vld [vmem:[#allocation10 + $0x3a] sm:$0xff]
      %v6905 = vld [vmem:[#allocation10 + $0x42] sm:$0xff]
      %v6906 = vld [vmem:[#allocation10 + $0x4a] sm:$0xff]
      %v6907 = vld [vmem:[#allocation10 + $0x52] sm:$0xff]
      %v6908 = vld [vmem:[#allocation10 + $0x5a] sm:$0xff]
      %v6909 = vld [vmem:[#allocation10 + $0x62] sm:$0xff]
      %v6910 = vld [vmem:[#allocation10 + $0x6a] sm:$0xff]
      %v6911 = vld [vmem:[#allocation10 + $0x72] sm:$0xff]
      %v6912 = vld [vmem:[#allocation10 + $0x7a] sm:$0xff]
      %v6913 = vld [vmem:[#allocation10 + $0x82] sm:$0xff]
      %v6914 = vld [vmem:[#allocation10 + $0x8a] sm:$0xff]
      %v6915 = vld [vmem:[#allocation10 + $0x92] sm:$0xff]
      %v6916 = vld [vmem:[#allocation10 + $0x9a] sm:$0xff]
      %v6917 = vld [vmem:[#allocation10 + $0xa2] sm:$0xff]
      %v6918 = vld [vmem:[#allocation10 + $0xaa] sm:$0xff]
      %v6919 = vld [vmem:[#allocation10 + $0xb2] sm:$0xff]
      %v6920 = vld [vmem:[#allocation10 + $0xba] sm:$0xff]
      %v6921 = vld [vmem:[#allocation10 + $0xc2] sm:$0xff]
      %v6922 = vld [vmem:[#allocation10 + $0xca] sm:$0xff]
      %v6923 = vld [vmem:[#allocation10 + $0xd2] sm:$0xff]
      %v6924 = vld [vmem:[#allocation10 + $0xda] sm:$0xff]
      %v6925 = vld [vmem:[#allocation10 + $0xe2] sm:$0xff]
      %v6926 = vld [vmem:[#allocation10 + $0xea] sm:$0xff]
      %v6927 = vld [vmem:[#allocation10 + $0xf2] sm:$0xff]
      %v6928 = vld [vmem:[#allocation10 + $0xfa] sm:$0xff]
      %v6929 = vld [vmem:[#allocation10 + $0x102] sm:$0xff]
      %v6930 = vld [vmem:[#allocation10 + $0x10a] sm:$0xff]
      %v6931 = vld [vmem:[#allocation10 + $0x112] sm:$0xff]
      %v6932 = vld [vmem:[#allocation10 + $0x11a] sm:$0xff]
      %v6933 = vpack.c.bf16 %v6898, %v6897
      %v6934 = vpack.c.bf16 %v6900, %v6899
      %v6935 = vpack.c.bf16 %v6902, %v6901
      %v6936 = vpack.c.bf16 %v6904, %v6903
      %v6937 = vpack.c.bf16 %v6906, %v6905
      %v6938 = vpack.c.bf16 %v6908, %v6907
      %v6939 = vpack.c.bf16 %v6910, %v6909
      %v6940 = vpack.c.bf16 %v6912, %v6911
      %v6941 = vpack.c.bf16 %v6914, %v6913
      %v6942 = vpack.c.bf16 %v6916, %v6915
      %v6943 = vpack.c.bf16 %v6918, %v6917
      %v6944 = vpack.c.bf16 %v6920, %v6919
      %v6945 = vpack.c.bf16 %v6922, %v6921
      %v6946 = vpack.c.bf16 %v6924, %v6923
      %v6947 = vpack.c.bf16 %v6926, %v6925
      %v6948 = vpack.c.bf16 %v6928, %v6927
      %v6949 = vpack.c.bf16 %v6930, %v6929
      %v6950 = vpack.c.bf16 %v6932, %v6931
      %s6951 = scalar_lea.vmem %s17, 8
      %v6952 = vld [vmem:[%s6951] sm:$0xf]
      %v6954 = vsel %vm3096, %v6933, 0
      %v6957 = vsel %vm3096, %v6934, 0
      %v6960 = vsel %vm3096, %v6935, 0
      %v6963 = vsel %vm3096, %v6936, 0
      %v6966 = vsel %vm3096, %v6937, 0
      %v6969 = vsel %vm3096, %v6938, 0
      %v6972 = vsel %vm3096, %v6939, 0
      %v6975 = vsel %vm3096, %v6940, 0
      %v6978 = vsel %vm3096, %v6941, 0
      %v6981 = vsel %vm3096, %v6942, 0
      %v6984 = vsel %vm3096, %v6943, 0
      %v6987 = vsel %vm3096, %v6944, 0
      %v6990 = vsel %vm3096, %v6945, 0
      %v6993 = vsel %vm3096, %v6946, 0
      %v6996 = vsel %vm3096, %v6947, 0
      %v6999 = vsel %vm3096, %v6948, 0
      %v7002 = vsel %vm3096, %v6949, 0
      %v7005 = vsel %vm3096, %v6950, 0
      %v7008 = vsel %vm3387, %v6952, 0
      %7010 = vmatpush.bf16.msra.mxu0 0
      %7011 = vmatpush.bf16.msra.mxu0 0
      %7012 = vmatpush.bf16.msra.mxu0 0
      %7013 = vmatpush.bf16.msra.mxu0 0
      %7014 = vmatpush.bf16.msra.mxu0 0
      %7015 = vmatpush.bf16.msra.mxu0 0
      %7016 = vmatpush.bf16.msra.mxu0 0
      %7017 = vmatpush.bf16.msra.mxu0 %v7008
      %7018 = vmatmul.bf16.gmra.mxu0 %v6954
      %v7019 = vpop.f32.mrf.mxu0
      %v7020 = vadd.f32 0.0, %v7019
      %v7021 = vpop.f32.mrf.mxu0
      %v7022 = vadd.f32 0.0, %v7021
      %7023 = vmatmul.bf16.gmra.mxu0 %v6957
      %v7024 = vpop.f32.mrf.mxu0
      %v7025 = vadd.f32 0.0, %v7024
      %v7026 = vpop.f32.mrf.mxu0
      %v7027 = vadd.f32 0.0, %v7026
      %7028 = vmatmul.bf16.gmra.mxu0 %v6960
      %v7029 = vpop.f32.mrf.mxu0
      %v7030 = vadd.f32 0.0, %v7029
      %v7031 = vpop.f32.mrf.mxu0
      %v7032 = vadd.f32 0.0, %v7031
      %7033 = vmatmul.bf16.gmra.mxu0 %v6963
      %v7034 = vpop.f32.mrf.mxu0
      %v7035 = vadd.f32 0.0, %v7034
      %v7036 = vpop.f32.mrf.mxu0
      %v7037 = vadd.f32 0.0, %v7036
      %7038 = vmatmul.bf16.gmra.mxu0 %v6966
      %v7039 = vpop.f32.mrf.mxu0
      %v7040 = vadd.f32 0.0, %v7039
      %v7041 = vpop.f32.mrf.mxu0
      %v7042 = vadd.f32 0.0, %v7041
      %7043 = vmatmul.bf16.gmra.mxu0 %v6969
      %v7044 = vpop.f32.mrf.mxu0
      %v7045 = vadd.f32 0.0, %v7044
      %v7046 = vpop.f32.mrf.mxu0
      %v7047 = vadd.f32 0.0, %v7046
      %7048 = vmatmul.bf16.gmra.mxu0 %v6972
      %v7049 = vpop.f32.mrf.mxu0
      %v7050 = vadd.f32 0.0, %v7049
      %v7051 = vpop.f32.mrf.mxu0
      %v7052 = vadd.f32 0.0, %v7051
      %7053 = vmatmul.bf16.gmra.mxu0 %v6975
      %v7054 = vpop.f32.mrf.mxu0
      %v7055 = vadd.f32 0.0, %v7054
      %v7056 = vpop.f32.mrf.mxu0
      %v7057 = vadd.f32 0.0, %v7056
      %7058 = vmatmul.bf16.gmra.mxu0 %v6978
      %v7059 = vpop.f32.mrf.mxu0
      %v7060 = vadd.f32 0.0, %v7059
      %v7061 = vpop.f32.mrf.mxu0
      %v7062 = vadd.f32 0.0, %v7061
      %7063 = vmatmul.bf16.gmra.mxu0 %v6981
      %v7064 = vpop.f32.mrf.mxu0
      %v7065 = vadd.f32 0.0, %v7064
      %v7066 = vpop.f32.mrf.mxu0
      %v7067 = vadd.f32 0.0, %v7066
      %7068 = vmatmul.bf16.gmra.mxu0 %v6984
      %v7069 = vpop.f32.mrf.mxu0
      %v7070 = vadd.f32 0.0, %v7069
      %v7071 = vpop.f32.mrf.mxu0
      %v7072 = vadd.f32 0.0, %v7071
      %7073 = vmatmul.bf16.gmra.mxu0 %v6987
      %v7074 = vpop.f32.mrf.mxu0
      %v7075 = vadd.f32 0.0, %v7074
      %v7076 = vpop.f32.mrf.mxu0
      %v7077 = vadd.f32 0.0, %v7076
      %7078 = vmatmul.bf16.gmra.mxu0 %v6990
      %v7079 = vpop.f32.mrf.mxu0
      %v7080 = vadd.f32 0.0, %v7079
      %v7081 = vpop.f32.mrf.mxu0
      %v7082 = vadd.f32 0.0, %v7081
      %7083 = vmatmul.bf16.gmra.mxu0 %v6993
      %v7084 = vpop.f32.mrf.mxu0
      %v7085 = vadd.f32 0.0, %v7084
      %v7086 = vpop.f32.mrf.mxu0
      %v7087 = vadd.f32 0.0, %v7086
      %7088 = vmatmul.bf16.gmra.mxu0 %v6996
      %v7089 = vpop.f32.mrf.mxu0
      %v7090 = vadd.f32 0.0, %v7089
      %v7091 = vpop.f32.mrf.mxu0
      %v7092 = vadd.f32 0.0, %v7091
      %7093 = vmatmul.bf16.gmra.mxu0 %v6999
      %v7094 = vpop.f32.mrf.mxu0
      %v7095 = vadd.f32 0.0, %v7094
      %v7096 = vpop.f32.mrf.mxu0
      %v7097 = vadd.f32 0.0, %v7096
      %7098 = vmatmul.bf16.gmra.mxu0 %v7002
      %v7099 = vpop.f32.mrf.mxu0
      %v7100 = vadd.f32 0.0, %v7099
      %v7101 = vpop.f32.mrf.mxu0
      %v7102 = vadd.f32 0.0, %v7101
      %7103 = vmatmul.bf16.gmra.mxu0 %v7005
      %v7104 = vpop.f32.mrf.mxu0
      %v7105 = vadd.f32 0.0, %v7104
      %v7106 = vpop.f32.mrf.mxu0
      %v7107 = vadd.f32 0.0, %v7106
      %7108 = vdwg.mxu0
      %v7109 = vadd.f32 %v6808, %v7020
      %v7110 = vadd.f32 %v6810, %v7022
      %v7111 = vadd.f32 %v6813, %v7025
      %v7112 = vadd.f32 %v6815, %v7027
      %v7113 = vadd.f32 %v6818, %v7030
      %v7114 = vadd.f32 %v6820, %v7032
      %v7115 = vadd.f32 %v6823, %v7035
      %v7116 = vadd.f32 %v6825, %v7037
      %v7117 = vadd.f32 %v6828, %v7040
      %v7118 = vadd.f32 %v6830, %v7042
      %v7119 = vadd.f32 %v6833, %v7045
      %v7120 = vadd.f32 %v6835, %v7047
      %v7121 = vadd.f32 %v6838, %v7050
      %v7122 = vadd.f32 %v6840, %v7052
      %v7123 = vadd.f32 %v6843, %v7055
      %v7124 = vadd.f32 %v6845, %v7057
      %v7125 = vadd.f32 %v6848, %v7060
      %v7126 = vadd.f32 %v6850, %v7062
      %v7127 = vadd.f32 %v6853, %v7065
      %v7128 = vadd.f32 %v6855, %v7067
      %v7129 = vadd.f32 %v6858, %v7070
      %v7130 = vadd.f32 %v6860, %v7072
      %v7131 = vadd.f32 %v6863, %v7075
      %v7132 = vadd.f32 %v6865, %v7077
      %v7133 = vadd.f32 %v6868, %v7080
      %v7134 = vadd.f32 %v6870, %v7082
      %v7135 = vadd.f32 %v6873, %v7085
      %v7136 = vadd.f32 %v6875, %v7087
      %v7137 = vadd.f32 %v6878, %v7090
      %v7138 = vadd.f32 %v6880, %v7092
      %v7139 = vadd.f32 %v6883, %v7095
      %v7140 = vadd.f32 %v6885, %v7097
      %v7141 = vadd.f32 %v6888, %v7100
      %v7142 = vadd.f32 %v6890, %v7102
      %v7143 = vadd.f32 %v6893, %v7105
      %v7144 = vadd.f32 %v6895, %v7107
      %v7145 = vld [vmem:[#allocation10 + $0x12] sm:$0xff]
      %v7146 = vld [vmem:[#allocation10 + $0x1a] sm:$0xff]
      %v7147 = vld [vmem:[#allocation10 + $0x22] sm:$0xff]
      %v7148 = vld [vmem:[#allocation10 + $0x2a] sm:$0xff]
      %v7149 = vld [vmem:[#allocation10 + $0x32] sm:$0xff]
      %v7150 = vld [vmem:[#allocation10 + $0x3a] sm:$0xff]
      %v7151 = vld [vmem:[#allocation10 + $0x42] sm:$0xff]
      %v7152 = vld [vmem:[#allocation10 + $0x4a] sm:$0xff]
      %v7153 = vld [vmem:[#allocation10 + $0x52] sm:$0xff]
      %v7154 = vld [vmem:[#allocation10 + $0x5a] sm:$0xff]
      %v7155 = vld [vmem:[#allocation10 + $0x62] sm:$0xff]
      %v7156 = vld [vmem:[#allocation10 + $0x6a] sm:$0xff]
      %v7157 = vld [vmem:[#allocation10 + $0x72] sm:$0xff]
      %v7158 = vld [vmem:[#allocation10 + $0x7a] sm:$0xff]
      %v7159 = vld [vmem:[#allocation10 + $0x82] sm:$0xff]
      %v7160 = vld [vmem:[#allocation10 + $0x8a] sm:$0xff]
      %v7161 = vld [vmem:[#allocation10 + $0x92] sm:$0xff]
      %v7162 = vld [vmem:[#allocation10 + $0x9a] sm:$0xff]
      %v7163 = vld [vmem:[#allocation10 + $0xa2] sm:$0xff]
      %v7164 = vld [vmem:[#allocation10 + $0xaa] sm:$0xff]
      %v7165 = vld [vmem:[#allocation10 + $0xb2] sm:$0xff]
      %v7166 = vld [vmem:[#allocation10 + $0xba] sm:$0xff]
      %v7167 = vld [vmem:[#allocation10 + $0xc2] sm:$0xff]
      %v7168 = vld [vmem:[#allocation10 + $0xca] sm:$0xff]
      %v7169 = vld [vmem:[#allocation10 + $0xd2] sm:$0xff]
      %v7170 = vld [vmem:[#allocation10 + $0xda] sm:$0xff]
      %v7171 = vld [vmem:[#allocation10 + $0xe2] sm:$0xff]
      %v7172 = vld [vmem:[#allocation10 + $0xea] sm:$0xff]
      %v7173 = vld [vmem:[#allocation10 + $0xf2] sm:$0xff]
      %v7174 = vld [vmem:[#allocation10 + $0xfa] sm:$0xff]
      %v7175 = vld [vmem:[#allocation10 + $0x102] sm:$0xff]
      %v7176 = vld [vmem:[#allocation10 + $0x10a] sm:$0xff]
      %v7177 = vld [vmem:[#allocation10 + $0x112] sm:$0xff]
      %v7178 = vld [vmem:[#allocation10 + $0x11a] sm:$0xff]
      %v7179 = vld [vmem:[#allocation10 + $0x122] sm:$0xff]
      %v7180 = vld [vmem:[#allocation10 + $0x12a] sm:$0xff]
      %v7181 = vpack.c.bf16 %v7146, %v7145
      %v7182 = vpack.c.bf16 %v7148, %v7147
      %v7183 = vpack.c.bf16 %v7150, %v7149
      %v7184 = vpack.c.bf16 %v7152, %v7151
      %v7185 = vpack.c.bf16 %v7154, %v7153
      %v7186 = vpack.c.bf16 %v7156, %v7155
      %v7187 = vpack.c.bf16 %v7158, %v7157
      %v7188 = vpack.c.bf16 %v7160, %v7159
      %v7189 = vpack.c.bf16 %v7162, %v7161
      %v7190 = vpack.c.bf16 %v7164, %v7163
      %v7191 = vpack.c.bf16 %v7166, %v7165
      %v7192 = vpack.c.bf16 %v7168, %v7167
      %v7193 = vpack.c.bf16 %v7170, %v7169
      %v7194 = vpack.c.bf16 %v7172, %v7171
      %v7195 = vpack.c.bf16 %v7174, %v7173
      %v7196 = vpack.c.bf16 %v7176, %v7175
      %v7197 = vpack.c.bf16 %v7178, %v7177
      %v7198 = vpack.c.bf16 %v7180, %v7179
      %s7199 = scalar_lea.vmem %s17, 12
      %v7200 = vld [vmem:[%s7199] sm:$0xf]
      %v7202 = vsel %vm3096, %v7181, 0
      %v7205 = vsel %vm3096, %v7182, 0
      %v7208 = vsel %vm3096, %v7183, 0
      %v7211 = vsel %vm3096, %v7184, 0
      %v7214 = vsel %vm3096, %v7185, 0
      %v7217 = vsel %vm3096, %v7186, 0
      %v7220 = vsel %vm3096, %v7187, 0
      %v7223 = vsel %vm3096, %v7188, 0
      %v7226 = vsel %vm3096, %v7189, 0
      %v7229 = vsel %vm3096, %v7190, 0
      %v7232 = vsel %vm3096, %v7191, 0
      %v7235 = vsel %vm3096, %v7192, 0
      %v7238 = vsel %vm3096, %v7193, 0
      %v7241 = vsel %vm3096, %v7194, 0
      %v7244 = vsel %vm3096, %v7195, 0
      %v7247 = vsel %vm3096, %v7196, 0
      %v7250 = vsel %vm3096, %v7197, 0
      %v7253 = vsel %vm3096, %v7198, 0
      %v7256 = vsel %vm3387, %v7200, 0
      %7258 = vmatpush.bf16.msra.mxu0 0
      %7259 = vmatpush.bf16.msra.mxu0 0
      %7260 = vmatpush.bf16.msra.mxu0 0
      %7261 = vmatpush.bf16.msra.mxu0 0
      %7262 = vmatpush.bf16.msra.mxu0 0
      %7263 = vmatpush.bf16.msra.mxu0 0
      %7264 = vmatpush.bf16.msra.mxu0 0
      %7265 = vmatpush.bf16.msra.mxu0 %v7256
      %7266 = vmatmul.bf16.gmra.mxu0 %v7202
      %v7267 = vpop.f32.mrf.mxu0
      %v7268 = vadd.f32 0.0, %v7267
      %v7269 = vpop.f32.mrf.mxu0
      %v7270 = vadd.f32 0.0, %v7269
      %7271 = vmatmul.bf16.gmra.mxu0 %v7205
      %v7272 = vpop.f32.mrf.mxu0
      %v7273 = vadd.f32 0.0, %v7272
      %v7274 = vpop.f32.mrf.mxu0
      %v7275 = vadd.f32 0.0, %v7274
      %7276 = vmatmul.bf16.gmra.mxu0 %v7208
      %v7277 = vpop.f32.mrf.mxu0
      %v7278 = vadd.f32 0.0, %v7277
      %v7279 = vpop.f32.mrf.mxu0
      %v7280 = vadd.f32 0.0, %v7279
      %7281 = vmatmul.bf16.gmra.mxu0 %v7211
      %v7282 = vpop.f32.mrf.mxu0
      %v7283 = vadd.f32 0.0, %v7282
      %v7284 = vpop.f32.mrf.mxu0
      %v7285 = vadd.f32 0.0, %v7284
      %7286 = vmatmul.bf16.gmra.mxu0 %v7214
      %v7287 = vpop.f32.mrf.mxu0
      %v7288 = vadd.f32 0.0, %v7287
      %v7289 = vpop.f32.mrf.mxu0
      %v7290 = vadd.f32 0.0, %v7289
      %7291 = vmatmul.bf16.gmra.mxu0 %v7217
      %v7292 = vpop.f32.mrf.mxu0
      %v7293 = vadd.f32 0.0, %v7292
      %v7294 = vpop.f32.mrf.mxu0
      %v7295 = vadd.f32 0.0, %v7294
      %7296 = vmatmul.bf16.gmra.mxu0 %v7220
      %v7297 = vpop.f32.mrf.mxu0
      %v7298 = vadd.f32 0.0, %v7297
      %v7299 = vpop.f32.mrf.mxu0
      %v7300 = vadd.f32 0.0, %v7299
      %7301 = vmatmul.bf16.gmra.mxu0 %v7223
      %v7302 = vpop.f32.mrf.mxu0
      %v7303 = vadd.f32 0.0, %v7302
      %v7304 = vpop.f32.mrf.mxu0
      %v7305 = vadd.f32 0.0, %v7304
      %7306 = vmatmul.bf16.gmra.mxu0 %v7226
      %v7307 = vpop.f32.mrf.mxu0
      %v7308 = vadd.f32 0.0, %v7307
      %v7309 = vpop.f32.mrf.mxu0
      %v7310 = vadd.f32 0.0, %v7309
      %7311 = vmatmul.bf16.gmra.mxu0 %v7229
      %v7312 = vpop.f32.mrf.mxu0
      %v7313 = vadd.f32 0.0, %v7312
      %v7314 = vpop.f32.mrf.mxu0
      %v7315 = vadd.f32 0.0, %v7314
      %7316 = vmatmul.bf16.gmra.mxu0 %v7232
      %v7317 = vpop.f32.mrf.mxu0
      %v7318 = vadd.f32 0.0, %v7317
      %v7319 = vpop.f32.mrf.mxu0
      %v7320 = vadd.f32 0.0, %v7319
      %7321 = vmatmul.bf16.gmra.mxu0 %v7235
      %v7322 = vpop.f32.mrf.mxu0
      %v7323 = vadd.f32 0.0, %v7322
      %v7324 = vpop.f32.mrf.mxu0
      %v7325 = vadd.f32 0.0, %v7324
      %7326 = vmatmul.bf16.gmra.mxu0 %v7238
      %v7327 = vpop.f32.mrf.mxu0
      %v7328 = vadd.f32 0.0, %v7327
      %v7329 = vpop.f32.mrf.mxu0
      %v7330 = vadd.f32 0.0, %v7329
      %7331 = vmatmul.bf16.gmra.mxu0 %v7241
      %v7332 = vpop.f32.mrf.mxu0
      %v7333 = vadd.f32 0.0, %v7332
      %v7334 = vpop.f32.mrf.mxu0
      %v7335 = vadd.f32 0.0, %v7334
      %7336 = vmatmul.bf16.gmra.mxu0 %v7244
      %v7337 = vpop.f32.mrf.mxu0
      %v7338 = vadd.f32 0.0, %v7337
      %v7339 = vpop.f32.mrf.mxu0
      %v7340 = vadd.f32 0.0, %v7339
      %7341 = vmatmul.bf16.gmra.mxu0 %v7247
      %v7342 = vpop.f32.mrf.mxu0
      %v7343 = vadd.f32 0.0, %v7342
      %v7344 = vpop.f32.mrf.mxu0
      %v7345 = vadd.f32 0.0, %v7344
      %7346 = vmatmul.bf16.gmra.mxu0 %v7250
      %v7347 = vpop.f32.mrf.mxu0
      %v7348 = vadd.f32 0.0, %v7347
      %v7349 = vpop.f32.mrf.mxu0
      %v7350 = vadd.f32 0.0, %v7349
      %7351 = vmatmul.bf16.gmra.mxu0 %v7253
      %v7352 = vpop.f32.mrf.mxu0
      %v7353 = vadd.f32 0.0, %v7352
      %v7354 = vpop.f32.mrf.mxu0
      %v7355 = vadd.f32 0.0, %v7354
      %7356 = vdwg.mxu0
      %v7357 = vadd.f32 %v7109, %v7268
      %v7358 = vadd.f32 %v7110, %v7270
      %v7359 = vadd.f32 %v7111, %v7273
      %v7360 = vadd.f32 %v7112, %v7275
      %v7361 = vadd.f32 %v7113, %v7278
      %v7362 = vadd.f32 %v7114, %v7280
      %v7363 = vadd.f32 %v7115, %v7283
      %v7364 = vadd.f32 %v7116, %v7285
      %v7365 = vadd.f32 %v7117, %v7288
      %v7366 = vadd.f32 %v7118, %v7290
      %v7367 = vadd.f32 %v7119, %v7293
      %v7368 = vadd.f32 %v7120, %v7295
      %v7369 = vadd.f32 %v7121, %v7298
      %v7370 = vadd.f32 %v7122, %v7300
      %v7371 = vadd.f32 %v7123, %v7303
      %v7372 = vadd.f32 %v7124, %v7305
      %v7373 = vadd.f32 %v7125, %v7308
      %v7374 = vadd.f32 %v7126, %v7310
      %v7375 = vadd.f32 %v7127, %v7313
      %v7376 = vadd.f32 %v7128, %v7315
      %v7377 = vadd.f32 %v7129, %v7318
      %v7378 = vadd.f32 %v7130, %v7320
      %v7379 = vadd.f32 %v7131, %v7323
      %v7380 = vadd.f32 %v7132, %v7325
      %v7381 = vadd.f32 %v7133, %v7328
      %v7382 = vadd.f32 %v7134, %v7330
      %v7383 = vadd.f32 %v7135, %v7333
      %v7384 = vadd.f32 %v7136, %v7335
      %v7385 = vadd.f32 %v7137, %v7338
      %v7386 = vadd.f32 %v7138, %v7340
      %v7387 = vadd.f32 %v7139, %v7343
      %v7388 = vadd.f32 %v7140, %v7345
      %v7389 = vadd.f32 %v7141, %v7348
      %v7390 = vadd.f32 %v7142, %v7350
      %v7391 = vadd.f32 %v7143, %v7353
      %v7392 = vadd.f32 %v7144, %v7355
      %v7393 = vld [vmem:[#allocation10 + $0x13] sm:$0xff]
      %v7394 = vld [vmem:[#allocation10 + $0x1b] sm:$0xff]
      %v7395 = vld [vmem:[#allocation10 + $0x23] sm:$0xff]
      %v7396 = vld [vmem:[#allocation10 + $0x2b] sm:$0xff]
      %v7397 = vld [vmem:[#allocation10 + $0x33] sm:$0xff]
      %v7398 = vld [vmem:[#allocation10 + $0x3b] sm:$0xff]
      %v7399 = vld [vmem:[#allocation10 + $0x43] sm:$0xff]
      %v7400 = vld [vmem:[#allocation10 + $0x4b] sm:$0xff]
      %v7401 = vld [vmem:[#allocation10 + $0x53] sm:$0xff]
      %v7402 = vld [vmem:[#allocation10 + $0x5b] sm:$0xff]
      %v7403 = vld [vmem:[#allocation10 + $0x63] sm:$0xff]
      %v7404 = vld [vmem:[#allocation10 + $0x6b] sm:$0xff]
      %v7405 = vld [vmem:[#allocation10 + $0x73] sm:$0xff]
      %v7406 = vld [vmem:[#allocation10 + $0x7b] sm:$0xff]
      %v7407 = vld [vmem:[#allocation10 + $0x83] sm:$0xff]
      %v7408 = vld [vmem:[#allocation10 + $0x8b] sm:$0xff]
      %v7409 = vld [vmem:[#allocation10 + $0x93] sm:$0xff]
      %v7410 = vld [vmem:[#allocation10 + $0x9b] sm:$0xff]
      %v7411 = vld [vmem:[#allocation10 + $0xa3] sm:$0xff]
      %v7412 = vld [vmem:[#allocation10 + $0xab] sm:$0xff]
      %v7413 = vld [vmem:[#allocation10 + $0xb3] sm:$0xff]
      %v7414 = vld [vmem:[#allocation10 + $0xbb] sm:$0xff]
      %v7415 = vld [vmem:[#allocation10 + $0xc3] sm:$0xff]
      %v7416 = vld [vmem:[#allocation10 + $0xcb] sm:$0xff]
      %v7417 = vld [vmem:[#allocation10 + $0xd3] sm:$0xff]
      %v7418 = vld [vmem:[#allocation10 + $0xdb] sm:$0xff]
      %v7419 = vld [vmem:[#allocation10 + $0xe3] sm:$0xff]
      %v7420 = vld [vmem:[#allocation10 + $0xeb] sm:$0xff]
      %v7421 = vld [vmem:[#allocation10 + $0xf3] sm:$0xff]
      %v7422 = vld [vmem:[#allocation10 + $0xfb] sm:$0xff]
      %v7423 = vld [vmem:[#allocation10 + $0x103] sm:$0xff]
      %v7424 = vld [vmem:[#allocation10 + $0x10b] sm:$0xff]
      %v7425 = vld [vmem:[#allocation10 + $0x113] sm:$0xff]
      %v7426 = vld [vmem:[#allocation10 + $0x11b] sm:$0xff]
      %v7427 = vld [vmem:[#allocation10 + $0x123] sm:$0xff]
      %v7428 = vld [vmem:[#allocation10 + $0x12b] sm:$0xff]
      %v7429 = vpack.c.bf16 %v7394, %v7393
      %v7430 = vpack.c.bf16 %v7396, %v7395
      %v7431 = vpack.c.bf16 %v7398, %v7397
      %v7432 = vpack.c.bf16 %v7400, %v7399
      %v7433 = vpack.c.bf16 %v7402, %v7401
      %v7434 = vpack.c.bf16 %v7404, %v7403
      %v7435 = vpack.c.bf16 %v7406, %v7405
      %v7436 = vpack.c.bf16 %v7408, %v7407
      %v7437 = vpack.c.bf16 %v7410, %v7409
      %v7438 = vpack.c.bf16 %v7412, %v7411
      %v7439 = vpack.c.bf16 %v7414, %v7413
      %v7440 = vpack.c.bf16 %v7416, %v7415
      %v7441 = vpack.c.bf16 %v7418, %v7417
      %v7442 = vpack.c.bf16 %v7420, %v7419
      %v7443 = vpack.c.bf16 %v7422, %v7421
      %v7444 = vpack.c.bf16 %v7424, %v7423
      %v7445 = vpack.c.bf16 %v7426, %v7425
      %v7446 = vpack.c.bf16 %v7428, %v7427
      %s7447 = scalar_lea.vmem %s17, 16
      %v7448 = vld [vmem:[%s7447] sm:$0xf]
      %v7450 = vsel %vm3096, %v7429, 0
      %v7453 = vsel %vm3096, %v7430, 0
      %v7456 = vsel %vm3096, %v7431, 0
      %v7459 = vsel %vm3096, %v7432, 0
      %v7462 = vsel %vm3096, %v7433, 0
      %v7465 = vsel %vm3096, %v7434, 0
      %v7468 = vsel %vm3096, %v7435, 0
      %v7471 = vsel %vm3096, %v7436, 0
      %v7474 = vsel %vm3096, %v7437, 0
      %v7477 = vsel %vm3096, %v7438, 0
      %v7480 = vsel %vm3096, %v7439, 0
      %v7483 = vsel %vm3096, %v7440, 0
      %v7486 = vsel %vm3096, %v7441, 0
      %v7489 = vsel %vm3096, %v7442, 0
      %v7492 = vsel %vm3096, %v7443, 0
      %v7495 = vsel %vm3096, %v7444, 0
      %v7498 = vsel %vm3096, %v7445, 0
      %v7501 = vsel %vm3096, %v7446, 0
      %v7504 = vsel %vm3387, %v7448, 0
      %7506 = vmatpush.bf16.msra.mxu0 0
      %7507 = vmatpush.bf16.msra.mxu0 0
      %7508 = vmatpush.bf16.msra.mxu0 0
      %7509 = vmatpush.bf16.msra.mxu0 0
      %7510 = vmatpush.bf16.msra.mxu0 0
      %7511 = vmatpush.bf16.msra.mxu0 0
      %7512 = vmatpush.bf16.msra.mxu0 0
      %7513 = vmatpush.bf16.msra.mxu0 %v7504
      %7514 = vmatmul.bf16.gmra.mxu0 %v7450
      %v7515 = vpop.f32.mrf.mxu0
      %v7516 = vadd.f32 0.0, %v7515
      %v7517 = vpop.f32.mrf.mxu0
      %v7518 = vadd.f32 0.0, %v7517
      %7519 = vmatmul.bf16.gmra.mxu0 %v7453
      %v7520 = vpop.f32.mrf.mxu0
      %v7521 = vadd.f32 0.0, %v7520
      %v7522 = vpop.f32.mrf.mxu0
      %v7523 = vadd.f32 0.0, %v7522
      %7524 = vmatmul.bf16.gmra.mxu0 %v7456
      %v7525 = vpop.f32.mrf.mxu0
      %v7526 = vadd.f32 0.0, %v7525
      %v7527 = vpop.f32.mrf.mxu0
      %v7528 = vadd.f32 0.0, %v7527
      %7529 = vmatmul.bf16.gmra.mxu0 %v7459
      %v7530 = vpop.f32.mrf.mxu0
      %v7531 = vadd.f32 0.0, %v7530
      %v7532 = vpop.f32.mrf.mxu0
      %v7533 = vadd.f32 0.0, %v7532
      %7534 = vmatmul.bf16.gmra.mxu0 %v7462
      %v7535 = vpop.f32.mrf.mxu0
      %v7536 = vadd.f32 0.0, %v7535
      %v7537 = vpop.f32.mrf.mxu0
      %v7538 = vadd.f32 0.0, %v7537
      %7539 = vmatmul.bf16.gmra.mxu0 %v7465
      %v7540 = vpop.f32.mrf.mxu0
      %v7541 = vadd.f32 0.0, %v7540
      %v7542 = vpop.f32.mrf.mxu0
      %v7543 = vadd.f32 0.0, %v7542
      %7544 = vmatmul.bf16.gmra.mxu0 %v7468
      %v7545 = vpop.f32.mrf.mxu0
      %v7546 = vadd.f32 0.0, %v7545
      %v7547 = vpop.f32.mrf.mxu0
      %v7548 = vadd.f32 0.0, %v7547
      %7549 = vmatmul.bf16.gmra.mxu0 %v7471
      %v7550 = vpop.f32.mrf.mxu0
      %v7551 = vadd.f32 0.0, %v7550
      %v7552 = vpop.f32.mrf.mxu0
      %v7553 = vadd.f32 0.0, %v7552
      %7554 = vmatmul.bf16.gmra.mxu0 %v7474
      %v7555 = vpop.f32.mrf.mxu0
      %v7556 = vadd.f32 0.0, %v7555
      %v7557 = vpop.f32.mrf.mxu0
      %v7558 = vadd.f32 0.0, %v7557
      %7559 = vmatmul.bf16.gmra.mxu0 %v7477
      %v7560 = vpop.f32.mrf.mxu0
      %v7561 = vadd.f32 0.0, %v7560
      %v7562 = vpop.f32.mrf.mxu0
      %v7563 = vadd.f32 0.0, %v7562
      %7564 = vmatmul.bf16.gmra.mxu0 %v7480
      %v7565 = vpop.f32.mrf.mxu0
      %v7566 = vadd.f32 0.0, %v7565
      %v7567 = vpop.f32.mrf.mxu0
      %v7568 = vadd.f32 0.0, %v7567
      %7569 = vmatmul.bf16.gmra.mxu0 %v7483
      %v7570 = vpop.f32.mrf.mxu0
      %v7571 = vadd.f32 0.0, %v7570
      %v7572 = vpop.f32.mrf.mxu0
      %v7573 = vadd.f32 0.0, %v7572
      %7574 = vmatmul.bf16.gmra.mxu0 %v7486
      %v7575 = vpop.f32.mrf.mxu0
      %v7576 = vadd.f32 0.0, %v7575
      %v7577 = vpop.f32.mrf.mxu0
      %v7578 = vadd.f32 0.0, %v7577
      %7579 = vmatmul.bf16.gmra.mxu0 %v7489
      %v7580 = vpop.f32.mrf.mxu0
      %v7581 = vadd.f32 0.0, %v7580
      %v7582 = vpop.f32.mrf.mxu0
      %v7583 = vadd.f32 0.0, %v7582
      %7584 = vmatmul.bf16.gmra.mxu0 %v7492
      %v7585 = vpop.f32.mrf.mxu0
      %v7586 = vadd.f32 0.0, %v7585
      %v7587 = vpop.f32.mrf.mxu0
      %v7588 = vadd.f32 0.0, %v7587
      %7589 = vmatmul.bf16.gmra.mxu0 %v7495
      %v7590 = vpop.f32.mrf.mxu0
      %v7591 = vadd.f32 0.0, %v7590
      %v7592 = vpop.f32.mrf.mxu0
      %v7593 = vadd.f32 0.0, %v7592
      %7594 = vmatmul.bf16.gmra.mxu0 %v7498
      %v7595 = vpop.f32.mrf.mxu0
      %v7596 = vadd.f32 0.0, %v7595
      %v7597 = vpop.f32.mrf.mxu0
      %v7598 = vadd.f32 0.0, %v7597
      %7599 = vmatmul.bf16.gmra.mxu0 %v7501
      %v7600 = vpop.f32.mrf.mxu0
      %v7601 = vadd.f32 0.0, %v7600
      %v7602 = vpop.f32.mrf.mxu0
      %v7603 = vadd.f32 0.0, %v7602
      %7604 = vdwg.mxu0
      %v7605 = vadd.f32 %v7357, %v7516
      %v7606 = vadd.f32 %v7358, %v7518
      %v7607 = vadd.f32 %v7359, %v7521
      %v7608 = vadd.f32 %v7360, %v7523
      %v7609 = vadd.f32 %v7361, %v7526
      %v7610 = vadd.f32 %v7362, %v7528
      %v7611 = vadd.f32 %v7363, %v7531
      %v7612 = vadd.f32 %v7364, %v7533
      %v7613 = vadd.f32 %v7365, %v7536
      %v7614 = vadd.f32 %v7366, %v7538
      %v7615 = vadd.f32 %v7367, %v7541
      %v7616 = vadd.f32 %v7368, %v7543
      %v7617 = vadd.f32 %v7369, %v7546
      %v7618 = vadd.f32 %v7370, %v7548
      %v7619 = vadd.f32 %v7371, %v7551
      %v7620 = vadd.f32 %v7372, %v7553
      %v7621 = vadd.f32 %v7373, %v7556
      %v7622 = vadd.f32 %v7374, %v7558
      %v7623 = vadd.f32 %v7375, %v7561
      %v7624 = vadd.f32 %v7376, %v7563
      %v7625 = vadd.f32 %v7377, %v7566
      %v7626 = vadd.f32 %v7378, %v7568
      %v7627 = vadd.f32 %v7379, %v7571
      %v7628 = vadd.f32 %v7380, %v7573
      %v7629 = vadd.f32 %v7381, %v7576
      %v7630 = vadd.f32 %v7382, %v7578
      %v7631 = vadd.f32 %v7383, %v7581
      %v7632 = vadd.f32 %v7384, %v7583
      %v7633 = vadd.f32 %v7385, %v7586
      %v7634 = vadd.f32 %v7386, %v7588
      %v7635 = vadd.f32 %v7387, %v7591
      %v7636 = vadd.f32 %v7388, %v7593
      %v7637 = vadd.f32 %v7389, %v7596
      %v7638 = vadd.f32 %v7390, %v7598
      %v7639 = vadd.f32 %v7391, %v7601
      %v7640 = vadd.f32 %v7392, %v7603
      %v7641 = vld [vmem:[#allocation10 + $0x14] sm:$0xff]
      %v7642 = vld [vmem:[#allocation10 + $0x1c] sm:$0xff]
      %v7643 = vld [vmem:[#allocation10 + $0x24] sm:$0xff]
      %v7644 = vld [vmem:[#allocation10 + $0x2c] sm:$0xff]
      %v7645 = vld [vmem:[#allocation10 + $0x34] sm:$0xff]
      %v7646 = vld [vmem:[#allocation10 + $0x3c] sm:$0xff]
      %v7647 = vld [vmem:[#allocation10 + $0x44] sm:$0xff]
      %v7648 = vld [vmem:[#allocation10 + $0x4c] sm:$0xff]
      %v7649 = vld [vmem:[#allocation10 + $0x54] sm:$0xff]
      %v7650 = vld [vmem:[#allocation10 + $0x5c] sm:$0xff]
      %v7651 = vld [vmem:[#allocation10 + $0x64] sm:$0xff]
      %v7652 = vld [vmem:[#allocation10 + $0x6c] sm:$0xff]
      %v7653 = vld [vmem:[#allocation10 + $0x74] sm:$0xff]
      %v7654 = vld [vmem:[#allocation10 + $0x7c] sm:$0xff]
      %v7655 = vld [vmem:[#allocation10 + $0x84] sm:$0xff]
      %v7656 = vld [vmem:[#allocation10 + $0x8c] sm:$0xff]
      %v7657 = vld [vmem:[#allocation10 + $0x94] sm:$0xff]
      %v7658 = vld [vmem:[#allocation10 + $0x9c] sm:$0xff]
      %v7659 = vld [vmem:[#allocation10 + $0xa4] sm:$0xff]
      %v7660 = vld [vmem:[#allocation10 + $0xac] sm:$0xff]
      %v7661 = vld [vmem:[#allocation10 + $0xb4] sm:$0xff]
      %v7662 = vld [vmem:[#allocation10 + $0xbc] sm:$0xff]
      %v7663 = vld [vmem:[#allocation10 + $0xc4] sm:$0xff]
      %v7664 = vld [vmem:[#allocation10 + $0xcc] sm:$0xff]
      %v7665 = vld [vmem:[#allocation10 + $0xd4] sm:$0xff]
      %v7666 = vld [vmem:[#allocation10 + $0xdc] sm:$0xff]
      %v7667 = vld [vmem:[#allocation10 + $0xe4] sm:$0xff]
      %v7668 = vld [vmem:[#allocation10 + $0xec] sm:$0xff]
      %v7669 = vld [vmem:[#allocation10 + $0xf4] sm:$0xff]
      %v7670 = vld [vmem:[#allocation10 + $0xfc] sm:$0xff]
      %v7671 = vld [vmem:[#allocation10 + $0x104] sm:$0xff]
      %v7672 = vld [vmem:[#allocation10 + $0x10c] sm:$0xff]
      %v7673 = vld [vmem:[#allocation10 + $0x114] sm:$0xff]
      %v7674 = vld [vmem:[#allocation10 + $0x11c] sm:$0xff]
      %v7675 = vld [vmem:[#allocation10 + $0x124] sm:$0xff]
      %v7676 = vld [vmem:[#allocation10 + $0x12c] sm:$0xff]
      %v7677 = vpack.c.bf16 %v7642, %v7641
      %v7678 = vpack.c.bf16 %v7644, %v7643
      %v7679 = vpack.c.bf16 %v7646, %v7645
      %v7680 = vpack.c.bf16 %v7648, %v7647
      %v7681 = vpack.c.bf16 %v7650, %v7649
      %v7682 = vpack.c.bf16 %v7652, %v7651
      %v7683 = vpack.c.bf16 %v7654, %v7653
      %v7684 = vpack.c.bf16 %v7656, %v7655
      %v7685 = vpack.c.bf16 %v7658, %v7657
      %v7686 = vpack.c.bf16 %v7660, %v7659
      %v7687 = vpack.c.bf16 %v7662, %v7661
      %v7688 = vpack.c.bf16 %v7664, %v7663
      %v7689 = vpack.c.bf16 %v7666, %v7665
      %v7690 = vpack.c.bf16 %v7668, %v7667
      %v7691 = vpack.c.bf16 %v7670, %v7669
      %v7692 = vpack.c.bf16 %v7672, %v7671
      %v7693 = vpack.c.bf16 %v7674, %v7673
      %v7694 = vpack.c.bf16 %v7676, %v7675
      %s7695 = scalar_lea.vmem %s17, 20
      %v7696 = vld [vmem:[%s7695] sm:$0xf]
      %v7698 = vsel %vm3096, %v7677, 0
      %v7701 = vsel %vm3096, %v7678, 0
      %v7704 = vsel %vm3096, %v7679, 0
      %v7707 = vsel %vm3096, %v7680, 0
      %v7710 = vsel %vm3096, %v7681, 0
      %v7713 = vsel %vm3096, %v7682, 0
      %v7716 = vsel %vm3096, %v7683, 0
      %v7719 = vsel %vm3096, %v7684, 0
      %v7722 = vsel %vm3096, %v7685, 0
      %v7725 = vsel %vm3096, %v7686, 0
      %v7728 = vsel %vm3096, %v7687, 0
      %v7731 = vsel %vm3096, %v7688, 0
      %v7734 = vsel %vm3096, %v7689, 0
      %v7737 = vsel %vm3096, %v7690, 0
      %v7740 = vsel %vm3096, %v7691, 0
      %v7743 = vsel %vm3096, %v7692, 0
      %v7746 = vsel %vm3096, %v7693, 0
      %v7749 = vsel %vm3096, %v7694, 0
      %v7752 = vsel %vm3387, %v7696, 0
      %7754 = vmatpush.bf16.msra.mxu0 0
      %7755 = vmatpush.bf16.msra.mxu0 0
      %7756 = vmatpush.bf16.msra.mxu0 0
      %7757 = vmatpush.bf16.msra.mxu0 0
      %7758 = vmatpush.bf16.msra.mxu0 0
      %7759 = vmatpush.bf16.msra.mxu0 0
      %7760 = vmatpush.bf16.msra.mxu0 0
      %7761 = vmatpush.bf16.msra.mxu0 %v7752
      %7762 = vmatmul.bf16.gmra.mxu0 %v7698
      %v7763 = vpop.f32.mrf.mxu0
      %v7764 = vadd.f32 0.0, %v7763
      %v7765 = vpop.f32.mrf.mxu0
      %v7766 = vadd.f32 0.0, %v7765
      %7767 = vmatmul.bf16.gmra.mxu0 %v7701
      %v7768 = vpop.f32.mrf.mxu0
      %v7769 = vadd.f32 0.0, %v7768
      %v7770 = vpop.f32.mrf.mxu0
      %v7771 = vadd.f32 0.0, %v7770
      %7772 = vmatmul.bf16.gmra.mxu0 %v7704
      %v7773 = vpop.f32.mrf.mxu0
      %v7774 = vadd.f32 0.0, %v7773
      %v7775 = vpop.f32.mrf.mxu0
      %v7776 = vadd.f32 0.0, %v7775
      %7777 = vmatmul.bf16.gmra.mxu0 %v7707
      %v7778 = vpop.f32.mrf.mxu0
      %v7779 = vadd.f32 0.0, %v7778
      %v7780 = vpop.f32.mrf.mxu0
      %v7781 = vadd.f32 0.0, %v7780
      %7782 = vmatmul.bf16.gmra.mxu0 %v7710
      %v7783 = vpop.f32.mrf.mxu0
      %v7784 = vadd.f32 0.0, %v7783
      %v7785 = vpop.f32.mrf.mxu0
      %v7786 = vadd.f32 0.0, %v7785
      %7787 = vmatmul.bf16.gmra.mxu0 %v7713
      %v7788 = vpop.f32.mrf.mxu0
      %v7789 = vadd.f32 0.0, %v7788
      %v7790 = vpop.f32.mrf.mxu0
      %v7791 = vadd.f32 0.0, %v7790
      %7792 = vmatmul.bf16.gmra.mxu0 %v7716
      %v7793 = vpop.f32.mrf.mxu0
      %v7794 = vadd.f32 0.0, %v7793
      %v7795 = vpop.f32.mrf.mxu0
      %v7796 = vadd.f32 0.0, %v7795
      %7797 = vmatmul.bf16.gmra.mxu0 %v7719
      %v7798 = vpop.f32.mrf.mxu0
      %v7799 = vadd.f32 0.0, %v7798
      %v7800 = vpop.f32.mrf.mxu0
      %v7801 = vadd.f32 0.0, %v7800
      %7802 = vmatmul.bf16.gmra.mxu0 %v7722
      %v7803 = vpop.f32.mrf.mxu0
      %v7804 = vadd.f32 0.0, %v7803
      %v7805 = vpop.f32.mrf.mxu0
      %v7806 = vadd.f32 0.0, %v7805
      %7807 = vmatmul.bf16.gmra.mxu0 %v7725
      %v7808 = vpop.f32.mrf.mxu0
      %v7809 = vadd.f32 0.0, %v7808
      %v7810 = vpop.f32.mrf.mxu0
      %v7811 = vadd.f32 0.0, %v7810
      %7812 = vmatmul.bf16.gmra.mxu0 %v7728
      %v7813 = vpop.f32.mrf.mxu0
      %v7814 = vadd.f32 0.0, %v7813
      %v7815 = vpop.f32.mrf.mxu0
      %v7816 = vadd.f32 0.0, %v7815
      %7817 = vmatmul.bf16.gmra.mxu0 %v7731
      %v7818 = vpop.f32.mrf.mxu0
      %v7819 = vadd.f32 0.0, %v7818
      %v7820 = vpop.f32.mrf.mxu0
      %v7821 = vadd.f32 0.0, %v7820
      %7822 = vmatmul.bf16.gmra.mxu0 %v7734
      %v7823 = vpop.f32.mrf.mxu0
      %v7824 = vadd.f32 0.0, %v7823
      %v7825 = vpop.f32.mrf.mxu0
      %v7826 = vadd.f32 0.0, %v7825
      %7827 = vmatmul.bf16.gmra.mxu0 %v7737
      %v7828 = vpop.f32.mrf.mxu0
      %v7829 = vadd.f32 0.0, %v7828
      %v7830 = vpop.f32.mrf.mxu0
      %v7831 = vadd.f32 0.0, %v7830
      %7832 = vmatmul.bf16.gmra.mxu0 %v7740
      %v7833 = vpop.f32.mrf.mxu0
      %v7834 = vadd.f32 0.0, %v7833
      %v7835 = vpop.f32.mrf.mxu0
      %v7836 = vadd.f32 0.0, %v7835
      %7837 = vmatmul.bf16.gmra.mxu0 %v7743
      %v7838 = vpop.f32.mrf.mxu0
      %v7839 = vadd.f32 0.0, %v7838
      %v7840 = vpop.f32.mrf.mxu0
      %v7841 = vadd.f32 0.0, %v7840
      %7842 = vmatmul.bf16.gmra.mxu0 %v7746
      %v7843 = vpop.f32.mrf.mxu0
      %v7844 = vadd.f32 0.0, %v7843
      %v7845 = vpop.f32.mrf.mxu0
      %v7846 = vadd.f32 0.0, %v7845
      %7847 = vmatmul.bf16.gmra.mxu0 %v7749
      %v7848 = vpop.f32.mrf.mxu0
      %v7849 = vadd.f32 0.0, %v7848
      %v7850 = vpop.f32.mrf.mxu0
      %v7851 = vadd.f32 0.0, %v7850
      %7852 = vdwg.mxu0
      %v7853 = vadd.f32 %v7605, %v7764
      %v7854 = vadd.f32 %v7606, %v7766
      %v7855 = vadd.f32 %v7607, %v7769
      %v7856 = vadd.f32 %v7608, %v7771
      %v7857 = vadd.f32 %v7609, %v7774
      %v7858 = vadd.f32 %v7610, %v7776
      %v7859 = vadd.f32 %v7611, %v7779
      %v7860 = vadd.f32 %v7612, %v7781
      %v7861 = vadd.f32 %v7613, %v7784
      %v7862 = vadd.f32 %v7614, %v7786
      %v7863 = vadd.f32 %v7615, %v7789
      %v7864 = vadd.f32 %v7616, %v7791
      %v7865 = vadd.f32 %v7617, %v7794
      %v7866 = vadd.f32 %v7618, %v7796
      %v7867 = vadd.f32 %v7619, %v7799
      %v7868 = vadd.f32 %v7620, %v7801
      %v7869 = vadd.f32 %v7621, %v7804
      %v7870 = vadd.f32 %v7622, %v7806
      %v7871 = vadd.f32 %v7623, %v7809
      %v7872 = vadd.f32 %v7624, %v7811
      %v7873 = vadd.f32 %v7625, %v7814
      %v7874 = vadd.f32 %v7626, %v7816
      %v7875 = vadd.f32 %v7627, %v7819
      %v7876 = vadd.f32 %v7628, %v7821
      %v7877 = vadd.f32 %v7629, %v7824
      %v7878 = vadd.f32 %v7630, %v7826
      %v7879 = vadd.f32 %v7631, %v7829
      %v7880 = vadd.f32 %v7632, %v7831
      %v7881 = vadd.f32 %v7633, %v7834
      %v7882 = vadd.f32 %v7634, %v7836
      %v7883 = vadd.f32 %v7635, %v7839
      %v7884 = vadd.f32 %v7636, %v7841
      %v7885 = vadd.f32 %v7637, %v7844
      %v7886 = vadd.f32 %v7638, %v7846
      %v7887 = vadd.f32 %v7639, %v7849
      %v7888 = vadd.f32 %v7640, %v7851
      %v7889 = vld [vmem:[#allocation10 + $0x24] sm:$0xff]
      %v7890 = vld [vmem:[#allocation10 + $0x2c] sm:$0xff]
      %v7891 = vld [vmem:[#allocation10 + $0x34] sm:$0xff]
      %v7892 = vld [vmem:[#allocation10 + $0x3c] sm:$0xff]
      %v7893 = vld [vmem:[#allocation10 + $0x44] sm:$0xff]
      %v7894 = vld [vmem:[#allocation10 + $0x4c] sm:$0xff]
      %v7895 = vld [vmem:[#allocation10 + $0x54] sm:$0xff]
      %v7896 = vld [vmem:[#allocation10 + $0x5c] sm:$0xff]
      %v7897 = vld [vmem:[#allocation10 + $0x64] sm:$0xff]
      %v7898 = vld [vmem:[#allocation10 + $0x6c] sm:$0xff]
      %v7899 = vld [vmem:[#allocation10 + $0x74] sm:$0xff]
      %v7900 = vld [vmem:[#allocation10 + $0x7c] sm:$0xff]
      %v7901 = vld [vmem:[#allocation10 + $0x84] sm:$0xff]
      %v7902 = vld [vmem:[#allocation10 + $0x8c] sm:$0xff]
      %v7903 = vld [vmem:[#allocation10 + $0x94] sm:$0xff]
      %v7904 = vld [vmem:[#allocation10 + $0x9c] sm:$0xff]
      %v7905 = vld [vmem:[#allocation10 + $0xa4] sm:$0xff]
      %v7906 = vld [vmem:[#allocation10 + $0xac] sm:$0xff]
      %v7907 = vld [vmem:[#allocation10 + $0xb4] sm:$0xff]
      %v7908 = vld [vmem:[#allocation10 + $0xbc] sm:$0xff]
      %v7909 = vld [vmem:[#allocation10 + $0xc4] sm:$0xff]
      %v7910 = vld [vmem:[#allocation10 + $0xcc] sm:$0xff]
      %v7911 = vld [vmem:[#allocation10 + $0xd4] sm:$0xff]
      %v7912 = vld [vmem:[#allocation10 + $0xdc] sm:$0xff]
      %v7913 = vld [vmem:[#allocation10 + $0xe4] sm:$0xff]
      %v7914 = vld [vmem:[#allocation10 + $0xec] sm:$0xff]
      %v7915 = vld [vmem:[#allocation10 + $0xf4] sm:$0xff]
      %v7916 = vld [vmem:[#allocation10 + $0xfc] sm:$0xff]
      %v7917 = vld [vmem:[#allocation10 + $0x104] sm:$0xff]
      %v7918 = vld [vmem:[#allocation10 + $0x10c] sm:$0xff]
      %v7919 = vld [vmem:[#allocation10 + $0x114] sm:$0xff]
      %v7920 = vld [vmem:[#allocation10 + $0x11c] sm:$0xff]
      %v7921 = vld [vmem:[#allocation10 + $0x124] sm:$0xff]
      %v7922 = vld [vmem:[#allocation10 + $0x12c] sm:$0xff]
      %v7923 = vld [vmem:[#allocation10 + $0x134] sm:$0xff]
      %v7924 = vld [vmem:[#allocation10 + $0x13c] sm:$0xff]
      %v7925 = vpack.c.bf16 %v7890, %v7889
      %v7926 = vpack.c.bf16 %v7892, %v7891
      %v7927 = vpack.c.bf16 %v7894, %v7893
      %v7928 = vpack.c.bf16 %v7896, %v7895
      %v7929 = vpack.c.bf16 %v7898, %v7897
      %v7930 = vpack.c.bf16 %v7900, %v7899
      %v7931 = vpack.c.bf16 %v7902, %v7901
      %v7932 = vpack.c.bf16 %v7904, %v7903
      %v7933 = vpack.c.bf16 %v7906, %v7905
      %v7934 = vpack.c.bf16 %v7908, %v7907
      %v7935 = vpack.c.bf16 %v7910, %v7909
      %v7936 = vpack.c.bf16 %v7912, %v7911
      %v7937 = vpack.c.bf16 %v7914, %v7913
      %v7938 = vpack.c.bf16 %v7916, %v7915
      %v7939 = vpack.c.bf16 %v7918, %v7917
      %v7940 = vpack.c.bf16 %v7920, %v7919
      %v7941 = vpack.c.bf16 %v7922, %v7921
      %v7942 = vpack.c.bf16 %v7924, %v7923
      %s7943 = scalar_lea.vmem %s17, 24
      %v7944 = vld [vmem:[%s7943] sm:$0xf]
      %v7946 = vsel %vm3096, %v7925, 0
      %v7949 = vsel %vm3096, %v7926, 0
      %v7952 = vsel %vm3096, %v7927, 0
      %v7955 = vsel %vm3096, %v7928, 0
      %v7958 = vsel %vm3096, %v7929, 0
      %v7961 = vsel %vm3096, %v7930, 0
      %v7964 = vsel %vm3096, %v7931, 0
      %v7967 = vsel %vm3096, %v7932, 0
      %v7970 = vsel %vm3096, %v7933, 0
      %v7973 = vsel %vm3096, %v7934, 0
      %v7976 = vsel %vm3096, %v7935, 0
      %v7979 = vsel %vm3096, %v7936, 0
      %v7982 = vsel %vm3096, %v7937, 0
      %v7985 = vsel %vm3096, %v7938, 0
      %v7988 = vsel %vm3096, %v7939, 0
      %v7991 = vsel %vm3096, %v7940, 0
      %v7994 = vsel %vm3096, %v7941, 0
      %v7997 = vsel %vm3096, %v7942, 0
      %v8000 = vsel %vm3387, %v7944, 0
      %8002 = vmatpush.bf16.msra.mxu0 0
      %8003 = vmatpush.bf16.msra.mxu0 0
      %8004 = vmatpush.bf16.msra.mxu0 0
      %8005 = vmatpush.bf16.msra.mxu0 0
      %8006 = vmatpush.bf16.msra.mxu0 0
      %8007 = vmatpush.bf16.msra.mxu0 0
      %8008 = vmatpush.bf16.msra.mxu0 0
      %8009 = vmatpush.bf16.msra.mxu0 %v8000
      %8010 = vmatmul.bf16.gmra.mxu0 %v7946
      %v8011 = vpop.f32.mrf.mxu0
      %v8012 = vadd.f32 0.0, %v8011
      %v8013 = vpop.f32.mrf.mxu0
      %v8014 = vadd.f32 0.0, %v8013
      %8015 = vmatmul.bf16.gmra.mxu0 %v7949
      %v8016 = vpop.f32.mrf.mxu0
      %v8017 = vadd.f32 0.0, %v8016
      %v8018 = vpop.f32.mrf.mxu0
      %v8019 = vadd.f32 0.0, %v8018
      %8020 = vmatmul.bf16.gmra.mxu0 %v7952
      %v8021 = vpop.f32.mrf.mxu0
      %v8022 = vadd.f32 0.0, %v8021
      %v8023 = vpop.f32.mrf.mxu0
      %v8024 = vadd.f32 0.0, %v8023
      %8025 = vmatmul.bf16.gmra.mxu0 %v7955
      %v8026 = vpop.f32.mrf.mxu0
      %v8027 = vadd.f32 0.0, %v8026
      %v8028 = vpop.f32.mrf.mxu0
      %v8029 = vadd.f32 0.0, %v8028
      %8030 = vmatmul.bf16.gmra.mxu0 %v7958
      %v8031 = vpop.f32.mrf.mxu0
      %v8032 = vadd.f32 0.0, %v8031
      %v8033 = vpop.f32.mrf.mxu0
      %v8034 = vadd.f32 0.0, %v8033
      %8035 = vmatmul.bf16.gmra.mxu0 %v7961
      %v8036 = vpop.f32.mrf.mxu0
      %v8037 = vadd.f32 0.0, %v8036
      %v8038 = vpop.f32.mrf.mxu0
      %v8039 = vadd.f32 0.0, %v8038
      %8040 = vmatmul.bf16.gmra.mxu0 %v7964
      %v8041 = vpop.f32.mrf.mxu0
      %v8042 = vadd.f32 0.0, %v8041
      %v8043 = vpop.f32.mrf.mxu0
      %v8044 = vadd.f32 0.0, %v8043
      %8045 = vmatmul.bf16.gmra.mxu0 %v7967
      %v8046 = vpop.f32.mrf.mxu0
      %v8047 = vadd.f32 0.0, %v8046
      %v8048 = vpop.f32.mrf.mxu0
      %v8049 = vadd.f32 0.0, %v8048
      %8050 = vmatmul.bf16.gmra.mxu0 %v7970
      %v8051 = vpop.f32.mrf.mxu0
      %v8052 = vadd.f32 0.0, %v8051
      %v8053 = vpop.f32.mrf.mxu0
      %v8054 = vadd.f32 0.0, %v8053
      %8055 = vmatmul.bf16.gmra.mxu0 %v7973
      %v8056 = vpop.f32.mrf.mxu0
      %v8057 = vadd.f32 0.0, %v8056
      %v8058 = vpop.f32.mrf.mxu0
      %v8059 = vadd.f32 0.0, %v8058
      %8060 = vmatmul.bf16.gmra.mxu0 %v7976
      %v8061 = vpop.f32.mrf.mxu0
      %v8062 = vadd.f32 0.0, %v8061
      %v8063 = vpop.f32.mrf.mxu0
      %v8064 = vadd.f32 0.0, %v8063
      %8065 = vmatmul.bf16.gmra.mxu0 %v7979
      %v8066 = vpop.f32.mrf.mxu0
      %v8067 = vadd.f32 0.0, %v8066
      %v8068 = vpop.f32.mrf.mxu0
      %v8069 = vadd.f32 0.0, %v8068
      %8070 = vmatmul.bf16.gmra.mxu0 %v7982
      %v8071 = vpop.f32.mrf.mxu0
      %v8072 = vadd.f32 0.0, %v8071
      %v8073 = vpop.f32.mrf.mxu0
      %v8074 = vadd.f32 0.0, %v8073
      %8075 = vmatmul.bf16.gmra.mxu0 %v7985
      %v8076 = vpop.f32.mrf.mxu0
      %v8077 = vadd.f32 0.0, %v8076
      %v8078 = vpop.f32.mrf.mxu0
      %v8079 = vadd.f32 0.0, %v8078
      %8080 = vmatmul.bf16.gmra.mxu0 %v7988
      %v8081 = vpop.f32.mrf.mxu0
      %v8082 = vadd.f32 0.0, %v8081
      %v8083 = vpop.f32.mrf.mxu0
      %v8084 = vadd.f32 0.0, %v8083
      %8085 = vmatmul.bf16.gmra.mxu0 %v7991
      %v8086 = vpop.f32.mrf.mxu0
      %v8087 = vadd.f32 0.0, %v8086
      %v8088 = vpop.f32.mrf.mxu0
      %v8089 = vadd.f32 0.0, %v8088
      %8090 = vmatmul.bf16.gmra.mxu0 %v7994
      %v8091 = vpop.f32.mrf.mxu0
      %v8092 = vadd.f32 0.0, %v8091
      %v8093 = vpop.f32.mrf.mxu0
      %v8094 = vadd.f32 0.0, %v8093
      %8095 = vmatmul.bf16.gmra.mxu0 %v7997
      %v8096 = vpop.f32.mrf.mxu0
      %v8097 = vadd.f32 0.0, %v8096
      %v8098 = vpop.f32.mrf.mxu0
      %v8099 = vadd.f32 0.0, %v8098
      %8100 = vdwg.mxu0
      %v8101 = vadd.f32 %v7853, %v8012
      %v8102 = vadd.f32 %v7854, %v8014
      %v8103 = vadd.f32 %v7855, %v8017
      %v8104 = vadd.f32 %v7856, %v8019
      %v8105 = vadd.f32 %v7857, %v8022
      %v8106 = vadd.f32 %v7858, %v8024
      %v8107 = vadd.f32 %v7859, %v8027
      %v8108 = vadd.f32 %v7860, %v8029
      %v8109 = vadd.f32 %v7861, %v8032
      %v8110 = vadd.f32 %v7862, %v8034
      %v8111 = vadd.f32 %v7863, %v8037
      %v8112 = vadd.f32 %v7864, %v8039
      %v8113 = vadd.f32 %v7865, %v8042
      %v8114 = vadd.f32 %v7866, %v8044
      %v8115 = vadd.f32 %v7867, %v8047
      %v8116 = vadd.f32 %v7868, %v8049
      %v8117 = vadd.f32 %v7869, %v8052
      %v8118 = vadd.f32 %v7870, %v8054
      %v8119 = vadd.f32 %v7871, %v8057
      %v8120 = vadd.f32 %v7872, %v8059
      %v8121 = vadd.f32 %v7873, %v8062
      %v8122 = vadd.f32 %v7874, %v8064
      %v8123 = vadd.f32 %v7875, %v8067
      %v8124 = vadd.f32 %v7876, %v8069
      %v8125 = vadd.f32 %v7877, %v8072
      %v8126 = vadd.f32 %v7878, %v8074
      %v8127 = vadd.f32 %v7879, %v8077
      %v8128 = vadd.f32 %v7880, %v8079
      %v8129 = vadd.f32 %v7881, %v8082
      %v8130 = vadd.f32 %v7882, %v8084
      %v8131 = vadd.f32 %v7883, %v8087
      %v8132 = vadd.f32 %v7884, %v8089
      %v8133 = vadd.f32 %v7885, %v8092
      %v8134 = vadd.f32 %v7886, %v8094
      %v8135 = vadd.f32 %v7887, %v8097
      %v8136 = vadd.f32 %v7888, %v8099
      %v8137 = vld [vmem:[#allocation10 + $0x25] sm:$0xff]
      %v8138 = vld [vmem:[#allocation10 + $0x2d] sm:$0xff]
      %v8139 = vld [vmem:[#allocation10 + $0x35] sm:$0xff]
      %v8140 = vld [vmem:[#allocation10 + $0x3d] sm:$0xff]
      %v8141 = vld [vmem:[#allocation10 + $0x45] sm:$0xff]
      %v8142 = vld [vmem:[#allocation10 + $0x4d] sm:$0xff]
      %v8143 = vld [vmem:[#allocation10 + $0x55] sm:$0xff]
      %v8144 = vld [vmem:[#allocation10 + $0x5d] sm:$0xff]
      %v8145 = vld [vmem:[#allocation10 + $0x65] sm:$0xff]
      %v8146 = vld [vmem:[#allocation10 + $0x6d] sm:$0xff]
      %v8147 = vld [vmem:[#allocation10 + $0x75] sm:$0xff]
      %v8148 = vld [vmem:[#allocation10 + $0x7d] sm:$0xff]
      %v8149 = vld [vmem:[#allocation10 + $0x85] sm:$0xff]
      %v8150 = vld [vmem:[#allocation10 + $0x8d] sm:$0xff]
      %v8151 = vld [vmem:[#allocation10 + $0x95] sm:$0xff]
      %v8152 = vld [vmem:[#allocation10 + $0x9d] sm:$0xff]
      %v8153 = vld [vmem:[#allocation10 + $0xa5] sm:$0xff]
      %v8154 = vld [vmem:[#allocation10 + $0xad] sm:$0xff]
      %v8155 = vld [vmem:[#allocation10 + $0xb5] sm:$0xff]
      %v8156 = vld [vmem:[#allocation10 + $0xbd] sm:$0xff]
      %v8157 = vld [vmem:[#allocation10 + $0xc5] sm:$0xff]
      %v8158 = vld [vmem:[#allocation10 + $0xcd] sm:$0xff]
      %v8159 = vld [vmem:[#allocation10 + $0xd5] sm:$0xff]
      %v8160 = vld [vmem:[#allocation10 + $0xdd] sm:$0xff]
      %v8161 = vld [vmem:[#allocation10 + $0xe5] sm:$0xff]
      %v8162 = vld [vmem:[#allocation10 + $0xed] sm:$0xff]
      %v8163 = vld [vmem:[#allocation10 + $0xf5] sm:$0xff]
      %v8164 = vld [vmem:[#allocation10 + $0xfd] sm:$0xff]
      %v8165 = vld [vmem:[#allocation10 + $0x105] sm:$0xff]
      %v8166 = vld [vmem:[#allocation10 + $0x10d] sm:$0xff]
      %v8167 = vld [vmem:[#allocation10 + $0x115] sm:$0xff]
      %v8168 = vld [vmem:[#allocation10 + $0x11d] sm:$0xff]
      %v8169 = vld [vmem:[#allocation10 + $0x125] sm:$0xff]
      %v8170 = vld [vmem:[#allocation10 + $0x12d] sm:$0xff]
      %v8171 = vld [vmem:[#allocation10 + $0x135] sm:$0xff]
      %v8172 = vld [vmem:[#allocation10 + $0x13d] sm:$0xff]
      %v8173 = vpack.c.bf16 %v8138, %v8137
      %v8174 = vpack.c.bf16 %v8140, %v8139
      %v8175 = vpack.c.bf16 %v8142, %v8141
      %v8176 = vpack.c.bf16 %v8144, %v8143
      %v8177 = vpack.c.bf16 %v8146, %v8145
      %v8178 = vpack.c.bf16 %v8148, %v8147
      %v8179 = vpack.c.bf16 %v8150, %v8149
      %v8180 = vpack.c.bf16 %v8152, %v8151
      %v8181 = vpack.c.bf16 %v8154, %v8153
      %v8182 = vpack.c.bf16 %v8156, %v8155
      %v8183 = vpack.c.bf16 %v8158, %v8157
      %v8184 = vpack.c.bf16 %v8160, %v8159
      %v8185 = vpack.c.bf16 %v8162, %v8161
      %v8186 = vpack.c.bf16 %v8164, %v8163
      %v8187 = vpack.c.bf16 %v8166, %v8165
      %v8188 = vpack.c.bf16 %v8168, %v8167
      %v8189 = vpack.c.bf16 %v8170, %v8169
      %v8190 = vpack.c.bf16 %v8172, %v8171
      %s8191 = scalar_lea.vmem %s17, 28
      %v8192 = vld [vmem:[%s8191] sm:$0xf]
      %v8194 = vsel %vm3096, %v8173, 0
      %v8197 = vsel %vm3096, %v8174, 0
      %v8200 = vsel %vm3096, %v8175, 0
      %v8203 = vsel %vm3096, %v8176, 0
      %v8206 = vsel %vm3096, %v8177, 0
      %v8209 = vsel %vm3096, %v8178, 0
      %v8212 = vsel %vm3096, %v8179, 0
      %v8215 = vsel %vm3096, %v8180, 0
      %v8218 = vsel %vm3096, %v8181, 0
      %v8221 = vsel %vm3096, %v8182, 0
      %v8224 = vsel %vm3096, %v8183, 0
      %v8227 = vsel %vm3096, %v8184, 0
      %v8230 = vsel %vm3096, %v8185, 0
      %v8233 = vsel %vm3096, %v8186, 0
      %v8236 = vsel %vm3096, %v8187, 0
      %v8239 = vsel %vm3096, %v8188, 0
      %v8242 = vsel %vm3096, %v8189, 0
      %v8245 = vsel %vm3096, %v8190, 0
      %v8248 = vsel %vm3387, %v8192, 0
      %8250 = vmatpush.bf16.msra.mxu0 0
      %8251 = vmatpush.bf16.msra.mxu0 0
      %8252 = vmatpush.bf16.msra.mxu0 0
      %8253 = vmatpush.bf16.msra.mxu0 0
      %8254 = vmatpush.bf16.msra.mxu0 0
      %8255 = vmatpush.bf16.msra.mxu0 0
      %8256 = vmatpush.bf16.msra.mxu0 0
      %8257 = vmatpush.bf16.msra.mxu0 %v8248
      %8258 = vmatmul.bf16.gmra.mxu0 %v8194
      %v8259 = vpop.f32.mrf.mxu0
      %v8260 = vadd.f32 0.0, %v8259
      %v8261 = vpop.f32.mrf.mxu0
      %v8262 = vadd.f32 0.0, %v8261
      %8263 = vmatmul.bf16.gmra.mxu0 %v8197
      %v8264 = vpop.f32.mrf.mxu0
      %v8265 = vadd.f32 0.0, %v8264
      %v8266 = vpop.f32.mrf.mxu0
      %v8267 = vadd.f32 0.0, %v8266
      %8268 = vmatmul.bf16.gmra.mxu0 %v8200
      %v8269 = vpop.f32.mrf.mxu0
      %v8270 = vadd.f32 0.0, %v8269
      %v8271 = vpop.f32.mrf.mxu0
      %v8272 = vadd.f32 0.0, %v8271
      %8273 = vmatmul.bf16.gmra.mxu0 %v8203
      %v8274 = vpop.f32.mrf.mxu0
      %v8275 = vadd.f32 0.0, %v8274
      %v8276 = vpop.f32.mrf.mxu0
      %v8277 = vadd.f32 0.0, %v8276
      %8278 = vmatmul.bf16.gmra.mxu0 %v8206
      %v8279 = vpop.f32.mrf.mxu0
      %v8280 = vadd.f32 0.0, %v8279
      %v8281 = vpop.f32.mrf.mxu0
      %v8282 = vadd.f32 0.0, %v8281
      %8283 = vmatmul.bf16.gmra.mxu0 %v8209
      %v8284 = vpop.f32.mrf.mxu0
      %v8285 = vadd.f32 0.0, %v8284
      %v8286 = vpop.f32.mrf.mxu0
      %v8287 = vadd.f32 0.0, %v8286
      %8288 = vmatmul.bf16.gmra.mxu0 %v8212
      %v8289 = vpop.f32.mrf.mxu0
      %v8290 = vadd.f32 0.0, %v8289
      %v8291 = vpop.f32.mrf.mxu0
      %v8292 = vadd.f32 0.0, %v8291
      %8293 = vmatmul.bf16.gmra.mxu0 %v8215
      %v8294 = vpop.f32.mrf.mxu0
      %v8295 = vadd.f32 0.0, %v8294
      %v8296 = vpop.f32.mrf.mxu0
      %v8297 = vadd.f32 0.0, %v8296
      %8298 = vmatmul.bf16.gmra.mxu0 %v8218
      %v8299 = vpop.f32.mrf.mxu0
      %v8300 = vadd.f32 0.0, %v8299
      %v8301 = vpop.f32.mrf.mxu0
      %v8302 = vadd.f32 0.0, %v8301
      %8303 = vmatmul.bf16.gmra.mxu0 %v8221
      %v8304 = vpop.f32.mrf.mxu0
      %v8305 = vadd.f32 0.0, %v8304
      %v8306 = vpop.f32.mrf.mxu0
      %v8307 = vadd.f32 0.0, %v8306
      %8308 = vmatmul.bf16.gmra.mxu0 %v8224
      %v8309 = vpop.f32.mrf.mxu0
      %v8310 = vadd.f32 0.0, %v8309
      %v8311 = vpop.f32.mrf.mxu0
      %v8312 = vadd.f32 0.0, %v8311
      %8313 = vmatmul.bf16.gmra.mxu0 %v8227
      %v8314 = vpop.f32.mrf.mxu0
      %v8315 = vadd.f32 0.0, %v8314
      %v8316 = vpop.f32.mrf.mxu0
      %v8317 = vadd.f32 0.0, %v8316
      %8318 = vmatmul.bf16.gmra.mxu0 %v8230
      %v8319 = vpop.f32.mrf.mxu0
      %v8320 = vadd.f32 0.0, %v8319
      %v8321 = vpop.f32.mrf.mxu0
      %v8322 = vadd.f32 0.0, %v8321
      %8323 = vmatmul.bf16.gmra.mxu0 %v8233
      %v8324 = vpop.f32.mrf.mxu0
      %v8325 = vadd.f32 0.0, %v8324
      %v8326 = vpop.f32.mrf.mxu0
      %v8327 = vadd.f32 0.0, %v8326
      %8328 = vmatmul.bf16.gmra.mxu0 %v8236
      %v8329 = vpop.f32.mrf.mxu0
      %v8330 = vadd.f32 0.0, %v8329
      %v8331 = vpop.f32.mrf.mxu0
      %v8332 = vadd.f32 0.0, %v8331
      %8333 = vmatmul.bf16.gmra.mxu0 %v8239
      %v8334 = vpop.f32.mrf.mxu0
      %v8335 = vadd.f32 0.0, %v8334
      %v8336 = vpop.f32.mrf.mxu0
      %v8337 = vadd.f32 0.0, %v8336
      %8338 = vmatmul.bf16.gmra.mxu0 %v8242
      %v8339 = vpop.f32.mrf.mxu0
      %v8340 = vadd.f32 0.0, %v8339
      %v8341 = vpop.f32.mrf.mxu0
      %v8342 = vadd.f32 0.0, %v8341
      %8343 = vmatmul.bf16.gmra.mxu0 %v8245
      %v8344 = vpop.f32.mrf.mxu0
      %v8345 = vadd.f32 0.0, %v8344
      %v8346 = vpop.f32.mrf.mxu0
      %v8347 = vadd.f32 0.0, %v8346
      %8348 = vdwg.mxu0
      %v8349 = vadd.f32 %v8101, %v8260
      %v8350 = vadd.f32 %v8102, %v8262
      %v8351 = vadd.f32 %v8103, %v8265
      %v8352 = vadd.f32 %v8104, %v8267
      %v8353 = vadd.f32 %v8105, %v8270
      %v8354 = vadd.f32 %v8106, %v8272
      %v8355 = vadd.f32 %v8107, %v8275
      %v8356 = vadd.f32 %v8108, %v8277
      %v8357 = vadd.f32 %v8109, %v8280
      %v8358 = vadd.f32 %v8110, %v8282
      %v8359 = vadd.f32 %v8111, %v8285
      %v8360 = vadd.f32 %v8112, %v8287
      %v8361 = vadd.f32 %v8113, %v8290
      %v8362 = vadd.f32 %v8114, %v8292
      %v8363 = vadd.f32 %v8115, %v8295
      %v8364 = vadd.f32 %v8116, %v8297
      %v8365 = vadd.f32 %v8117, %v8300
      %v8366 = vadd.f32 %v8118, %v8302
      %v8367 = vadd.f32 %v8119, %v8305
      %v8368 = vadd.f32 %v8120, %v8307
      %v8369 = vadd.f32 %v8121, %v8310
      %v8370 = vadd.f32 %v8122, %v8312
      %v8371 = vadd.f32 %v8123, %v8315
      %v8372 = vadd.f32 %v8124, %v8317
      %v8373 = vadd.f32 %v8125, %v8320
      %v8374 = vadd.f32 %v8126, %v8322
      %v8375 = vadd.f32 %v8127, %v8325
      %v8376 = vadd.f32 %v8128, %v8327
      %v8377 = vadd.f32 %v8129, %v8330
      %v8378 = vadd.f32 %v8130, %v8332
      %v8379 = vadd.f32 %v8131, %v8335
      %v8380 = vadd.f32 %v8132, %v8337
      %v8381 = vadd.f32 %v8133, %v8340
      %v8382 = vadd.f32 %v8134, %v8342
      %v8383 = vadd.f32 %v8135, %v8345
      %v8384 = vadd.f32 %v8136, %v8347
      %v8385 = vld [vmem:[#allocation10 + $0x26] sm:$0xff]
      %v8386 = vld [vmem:[#allocation10 + $0x2e] sm:$0xff]
      %v8387 = vld [vmem:[#allocation10 + $0x36] sm:$0xff]
      %v8388 = vld [vmem:[#allocation10 + $0x3e] sm:$0xff]
      %v8389 = vld [vmem:[#allocation10 + $0x46] sm:$0xff]
      %v8390 = vld [vmem:[#allocation10 + $0x4e] sm:$0xff]
      %v8391 = vld [vmem:[#allocation10 + $0x56] sm:$0xff]
      %v8392 = vld [vmem:[#allocation10 + $0x5e] sm:$0xff]
      %v8393 = vld [vmem:[#allocation10 + $0x66] sm:$0xff]
      %v8394 = vld [vmem:[#allocation10 + $0x6e] sm:$0xff]
      %v8395 = vld [vmem:[#allocation10 + $0x76] sm:$0xff]
      %v8396 = vld [vmem:[#allocation10 + $0x7e] sm:$0xff]
      %v8397 = vld [vmem:[#allocation10 + $0x86] sm:$0xff]
      %v8398 = vld [vmem:[#allocation10 + $0x8e] sm:$0xff]
      %v8399 = vld [vmem:[#allocation10 + $0x96] sm:$0xff]
      %v8400 = vld [vmem:[#allocation10 + $0x9e] sm:$0xff]
      %v8401 = vld [vmem:[#allocation10 + $0xa6] sm:$0xff]
      %v8402 = vld [vmem:[#allocation10 + $0xae] sm:$0xff]
      %v8403 = vld [vmem:[#allocation10 + $0xb6] sm:$0xff]
      %v8404 = vld [vmem:[#allocation10 + $0xbe] sm:$0xff]
      %v8405 = vld [vmem:[#allocation10 + $0xc6] sm:$0xff]
      %v8406 = vld [vmem:[#allocation10 + $0xce] sm:$0xff]
      %v8407 = vld [vmem:[#allocation10 + $0xd6] sm:$0xff]
      %v8408 = vld [vmem:[#allocation10 + $0xde] sm:$0xff]
      %v8409 = vld [vmem:[#allocation10 + $0xe6] sm:$0xff]
      %v8410 = vld [vmem:[#allocation10 + $0xee] sm:$0xff]
      %v8411 = vld [vmem:[#allocation10 + $0xf6] sm:$0xff]
      %v8412 = vld [vmem:[#allocation10 + $0xfe] sm:$0xff]
      %v8413 = vld [vmem:[#allocation10 + $0x106] sm:$0xff]
      %v8414 = vld [vmem:[#allocation10 + $0x10e] sm:$0xff]
      %v8415 = vld [vmem:[#allocation10 + $0x116] sm:$0xff]
      %v8416 = vld [vmem:[#allocation10 + $0x11e] sm:$0xff]
      %v8417 = vld [vmem:[#allocation10 + $0x126] sm:$0xff]
      %v8418 = vld [vmem:[#allocation10 + $0x12e] sm:$0xff]
      %v8419 = vld [vmem:[#allocation10 + $0x136] sm:$0xff]
      %v8420 = vld [vmem:[#allocation10 + $0x13e] sm:$0xff]
      %v8421 = vpack.c.bf16 %v8386, %v8385
      %v8422 = vpack.c.bf16 %v8388, %v8387
      %v8423 = vpack.c.bf16 %v8390, %v8389
      %v8424 = vpack.c.bf16 %v8392, %v8391
      %v8425 = vpack.c.bf16 %v8394, %v8393
      %v8426 = vpack.c.bf16 %v8396, %v8395
      %v8427 = vpack.c.bf16 %v8398, %v8397
      %v8428 = vpack.c.bf16 %v8400, %v8399
      %v8429 = vpack.c.bf16 %v8402, %v8401
      %v8430 = vpack.c.bf16 %v8404, %v8403
      %v8431 = vpack.c.bf16 %v8406, %v8405
      %v8432 = vpack.c.bf16 %v8408, %v8407
      %v8433 = vpack.c.bf16 %v8410, %v8409
      %v8434 = vpack.c.bf16 %v8412, %v8411
      %v8435 = vpack.c.bf16 %v8414, %v8413
      %v8436 = vpack.c.bf16 %v8416, %v8415
      %v8437 = vpack.c.bf16 %v8418, %v8417
      %v8438 = vpack.c.bf16 %v8420, %v8419
      %s8439 = scalar_lea.vmem %s17, 32
      %v8440 = vld [vmem:[%s8439] sm:$0xf]
      %v8442 = vsel %vm3096, %v8421, 0
      %v8445 = vsel %vm3096, %v8422, 0
      %v8448 = vsel %vm3096, %v8423, 0
      %v8451 = vsel %vm3096, %v8424, 0
      %v8454 = vsel %vm3096, %v8425, 0
      %v8457 = vsel %vm3096, %v8426, 0
      %v8460 = vsel %vm3096, %v8427, 0
      %v8463 = vsel %vm3096, %v8428, 0
      %v8466 = vsel %vm3096, %v8429, 0
      %v8469 = vsel %vm3096, %v8430, 0
      %v8472 = vsel %vm3096, %v8431, 0
      %v8475 = vsel %vm3096, %v8432, 0
      %v8478 = vsel %vm3096, %v8433, 0
      %v8481 = vsel %vm3096, %v8434, 0
      %v8484 = vsel %vm3096, %v8435, 0
      %v8487 = vsel %vm3096, %v8436, 0
      %v8490 = vsel %vm3096, %v8437, 0
      %v8493 = vsel %vm3096, %v8438, 0
      %v8496 = vsel %vm3387, %v8440, 0
      %8498 = vmatpush.bf16.msra.mxu0 0
      %8499 = vmatpush.bf16.msra.mxu0 0
      %8500 = vmatpush.bf16.msra.mxu0 0
      %8501 = vmatpush.bf16.msra.mxu0 0
      %8502 = vmatpush.bf16.msra.mxu0 0
      %8503 = vmatpush.bf16.msra.mxu0 0
      %8504 = vmatpush.bf16.msra.mxu0 0
      %8505 = vmatpush.bf16.msra.mxu0 %v8496
      %8506 = vmatmul.bf16.gmra.mxu0 %v8442
      %v8507 = vpop.f32.mrf.mxu0
      %v8508 = vadd.f32 0.0, %v8507
      %v8509 = vpop.f32.mrf.mxu0
      %v8510 = vadd.f32 0.0, %v8509
      %8511 = vmatmul.bf16.gmra.mxu0 %v8445
      %v8512 = vpop.f32.mrf.mxu0
      %v8513 = vadd.f32 0.0, %v8512
      %v8514 = vpop.f32.mrf.mxu0
      %v8515 = vadd.f32 0.0, %v8514
      %8516 = vmatmul.bf16.gmra.mxu0 %v8448
      %v8517 = vpop.f32.mrf.mxu0
      %v8518 = vadd.f32 0.0, %v8517
      %v8519 = vpop.f32.mrf.mxu0
      %v8520 = vadd.f32 0.0, %v8519
      %8521 = vmatmul.bf16.gmra.mxu0 %v8451
      %v8522 = vpop.f32.mrf.mxu0
      %v8523 = vadd.f32 0.0, %v8522
      %v8524 = vpop.f32.mrf.mxu0
      %v8525 = vadd.f32 0.0, %v8524
      %8526 = vmatmul.bf16.gmra.mxu0 %v8454
      %v8527 = vpop.f32.mrf.mxu0
      %v8528 = vadd.f32 0.0, %v8527
      %v8529 = vpop.f32.mrf.mxu0
      %v8530 = vadd.f32 0.0, %v8529
      %8531 = vmatmul.bf16.gmra.mxu0 %v8457
      %v8532 = vpop.f32.mrf.mxu0
      %v8533 = vadd.f32 0.0, %v8532
      %v8534 = vpop.f32.mrf.mxu0
      %v8535 = vadd.f32 0.0, %v8534
      %8536 = vmatmul.bf16.gmra.mxu0 %v8460
      %v8537 = vpop.f32.mrf.mxu0
      %v8538 = vadd.f32 0.0, %v8537
      %v8539 = vpop.f32.mrf.mxu0
      %v8540 = vadd.f32 0.0, %v8539
      %8541 = vmatmul.bf16.gmra.mxu0 %v8463
      %v8542 = vpop.f32.mrf.mxu0
      %v8543 = vadd.f32 0.0, %v8542
      %v8544 = vpop.f32.mrf.mxu0
      %v8545 = vadd.f32 0.0, %v8544
      %8546 = vmatmul.bf16.gmra.mxu0 %v8466
      %v8547 = vpop.f32.mrf.mxu0
      %v8548 = vadd.f32 0.0, %v8547
      %v8549 = vpop.f32.mrf.mxu0
      %v8550 = vadd.f32 0.0, %v8549
      %8551 = vmatmul.bf16.gmra.mxu0 %v8469
      %v8552 = vpop.f32.mrf.mxu0
      %v8553 = vadd.f32 0.0, %v8552
      %v8554 = vpop.f32.mrf.mxu0
      %v8555 = vadd.f32 0.0, %v8554
      %8556 = vmatmul.bf16.gmra.mxu0 %v8472
      %v8557 = vpop.f32.mrf.mxu0
      %v8558 = vadd.f32 0.0, %v8557
      %v8559 = vpop.f32.mrf.mxu0
      %v8560 = vadd.f32 0.0, %v8559
      %8561 = vmatmul.bf16.gmra.mxu0 %v8475
      %v8562 = vpop.f32.mrf.mxu0
      %v8563 = vadd.f32 0.0, %v8562
      %v8564 = vpop.f32.mrf.mxu0
      %v8565 = vadd.f32 0.0, %v8564
      %8566 = vmatmul.bf16.gmra.mxu0 %v8478
      %v8567 = vpop.f32.mrf.mxu0
      %v8568 = vadd.f32 0.0, %v8567
      %v8569 = vpop.f32.mrf.mxu0
      %v8570 = vadd.f32 0.0, %v8569
      %8571 = vmatmul.bf16.gmra.mxu0 %v8481
      %v8572 = vpop.f32.mrf.mxu0
      %v8573 = vadd.f32 0.0, %v8572
      %v8574 = vpop.f32.mrf.mxu0
      %v8575 = vadd.f32 0.0, %v8574
      %8576 = vmatmul.bf16.gmra.mxu0 %v8484
      %v8577 = vpop.f32.mrf.mxu0
      %v8578 = vadd.f32 0.0, %v8577
      %v8579 = vpop.f32.mrf.mxu0
      %v8580 = vadd.f32 0.0, %v8579
      %8581 = vmatmul.bf16.gmra.mxu0 %v8487
      %v8582 = vpop.f32.mrf.mxu0
      %v8583 = vadd.f32 0.0, %v8582
      %v8584 = vpop.f32.mrf.mxu0
      %v8585 = vadd.f32 0.0, %v8584
      %8586 = vmatmul.bf16.gmra.mxu0 %v8490
      %v8587 = vpop.f32.mrf.mxu0
      %v8588 = vadd.f32 0.0, %v8587
      %v8589 = vpop.f32.mrf.mxu0
      %v8590 = vadd.f32 0.0, %v8589
      %8591 = vmatmul.bf16.gmra.mxu0 %v8493
      %v8592 = vpop.f32.mrf.mxu0
      %v8593 = vadd.f32 0.0, %v8592
      %v8594 = vpop.f32.mrf.mxu0
      %v8595 = vadd.f32 0.0, %v8594
      %8596 = vdwg.mxu0
      %v8597 = vadd.f32 %v8349, %v8508
      %v8598 = vadd.f32 %v8350, %v8510
      %v8599 = vadd.f32 %v8351, %v8513
      %v8600 = vadd.f32 %v8352, %v8515
      %v8601 = vadd.f32 %v8353, %v8518
      %v8602 = vadd.f32 %v8354, %v8520
      %v8603 = vadd.f32 %v8355, %v8523
      %v8604 = vadd.f32 %v8356, %v8525
      %v8605 = vadd.f32 %v8357, %v8528
      %v8606 = vadd.f32 %v8358, %v8530
      %v8607 = vadd.f32 %v8359, %v8533
      %v8608 = vadd.f32 %v8360, %v8535
      %v8609 = vadd.f32 %v8361, %v8538
      %v8610 = vadd.f32 %v8362, %v8540
      %v8611 = vadd.f32 %v8363, %v8543
      %v8612 = vadd.f32 %v8364, %v8545
      %v8613 = vadd.f32 %v8365, %v8548
      %v8614 = vadd.f32 %v8366, %v8550
      %v8615 = vadd.f32 %v8367, %v8553
      %v8616 = vadd.f32 %v8368, %v8555
      %v8617 = vadd.f32 %v8369, %v8558
      %v8618 = vadd.f32 %v8370, %v8560
      %v8619 = vadd.f32 %v8371, %v8563
      %v8620 = vadd.f32 %v8372, %v8565
      %v8621 = vadd.f32 %v8373, %v8568
      %v8622 = vadd.f32 %v8374, %v8570
      %v8623 = vadd.f32 %v8375, %v8573
      %v8624 = vadd.f32 %v8376, %v8575
      %v8625 = vadd.f32 %v8377, %v8578
      %v8626 = vadd.f32 %v8378, %v8580
      %v8627 = vadd.f32 %v8379, %v8583
      %v8628 = vadd.f32 %v8380, %v8585
      %v8629 = vadd.f32 %v8381, %v8588
      %v8630 = vadd.f32 %v8382, %v8590
      %v8631 = vadd.f32 %v8383, %v8593
      %v8632 = vadd.f32 %v8384, %v8595
      %v8633 = vld [vmem:[%s18] sm:$0x1]
      %v8635 = vperm.slane %v8633, 0
      %v8637 = vadd.f32 %v8597, %v8635
      %v8638 = vadd.f32 %v8598, %v8635
      %v8639 = vadd.f32 %v8599, %v8635
      %v8640 = vadd.f32 %v8600, %v8635
      %v8641 = vadd.f32 %v8601, %v8635
      %v8642 = vadd.f32 %v8602, %v8635
      %v8643 = vadd.f32 %v8603, %v8635
      %v8644 = vadd.f32 %v8604, %v8635
      %v8645 = vadd.f32 %v8605, %v8635
      %v8646 = vadd.f32 %v8606, %v8635
      %v8647 = vadd.f32 %v8607, %v8635
      %v8648 = vadd.f32 %v8608, %v8635
      %v8649 = vadd.f32 %v8609, %v8635
      %v8650 = vadd.f32 %v8610, %v8635
      %v8651 = vadd.f32 %v8611, %v8635
      %v8652 = vadd.f32 %v8612, %v8635
      %v8653 = vadd.f32 %v8613, %v8635
      %v8654 = vadd.f32 %v8614, %v8635
      %v8655 = vadd.f32 %v8615, %v8635
      %v8656 = vadd.f32 %v8616, %v8635
      %v8657 = vadd.f32 %v8617, %v8635
      %v8658 = vadd.f32 %v8618, %v8635
      %v8659 = vadd.f32 %v8619, %v8635
      %v8660 = vadd.f32 %v8620, %v8635
      %v8661 = vadd.f32 %v8621, %v8635
      %v8662 = vadd.f32 %v8622, %v8635
      %v8663 = vadd.f32 %v8623, %v8635
      %v8664 = vadd.f32 %v8624, %v8635
      %v8665 = vadd.f32 %v8625, %v8635
      %v8666 = vadd.f32 %v8626, %v8635
      %v8667 = vadd.f32 %v8627, %v8635
      %v8668 = vadd.f32 %v8628, %v8635
      %v8669 = vadd.f32 %v8629, %v8635
      %v8670 = vadd.f32 %v8630, %v8635
      %v8671 = vadd.f32 %v8631, %v8635
      %v8672 = vadd.f32 %v8632, %v8635
      %8673 = vst.msk [vmem:[%s602] sm:$0xff] %vm715, %v8637
      %8674 = vst.msk [vmem:[%s602 + $0x8] sm:$0xff] %vm715, %v8638
      %8675 = vst.msk [vmem:[%s602 + $0x10] sm:$0xff] %vm715, %v8639
      %8676 = vst.msk [vmem:[%s602 + $0x18] sm:$0xff] %vm715, %v8640
      %8677 = vst.msk [vmem:[%s602 + $0x20] sm:$0xff] %vm715, %v8641
      %8678 = vst.msk [vmem:[%s602 + $0x28] sm:$0xff] %vm715, %v8642
      %8679 = vst.msk [vmem:[%s602 + $0x30] sm:$0xff] %vm715, %v8643
      %8680 = vst.msk [vmem:[%s602 + $0x38] sm:$0xff] %vm715, %v8644
      %8681 = vst.msk [vmem:[%s602 + $0x40] sm:$0xff] %vm715, %v8645
      %8682 = vst.msk [vmem:[%s602 + $0x48] sm:$0xff] %vm715, %v8646
      %8683 = vst.msk [vmem:[%s602 + $0x50] sm:$0xff] %vm715, %v8647
      %8684 = vst.msk [vmem:[%s602 + $0x58] sm:$0xff] %vm715, %v8648
      %8685 = vst.msk [vmem:[%s602 + $0x60] sm:$0xff] %vm715, %v8649
      %8686 = vst.msk [vmem:[%s602 + $0x68] sm:$0xff] %vm715, %v8650
      %8687 = vst.msk [vmem:[%s602 + $0x70] sm:$0xff] %vm715, %v8651
      %8688 = vst.msk [vmem:[%s602 + $0x78] sm:$0xff] %vm715, %v8652
      %8689 = vst.msk [vmem:[%s602 + $0x80] sm:$0xff] %vm715, %v8653
      %8690 = vst.msk [vmem:[%s602 + $0x88] sm:$0xff] %vm715, %v8654
      %8691 = vst.msk [vmem:[%s602 + $0x90] sm:$0xff] %vm715, %v8655
      %8692 = vst.msk [vmem:[%s602 + $0x98] sm:$0xff] %vm715, %v8656
      %8693 = vst.msk [vmem:[%s602 + $0xa0] sm:$0xff] %vm715, %v8657
      %8694 = vst.msk [vmem:[%s602 + $0xa8] sm:$0xff] %vm715, %v8658
      %8695 = vst.msk [vmem:[%s602 + $0xb0] sm:$0xff] %vm715, %v8659
      %8696 = vst.msk [vmem:[%s602 + $0xb8] sm:$0xff] %vm715, %v8660
      %8697 = vst.msk [vmem:[%s602 + $0xc0] sm:$0xff] %vm715, %v8661
      %8698 = vst.msk [vmem:[%s602 + $0xc8] sm:$0xff] %vm715, %v8662
      %8699 = vst.msk [vmem:[%s602 + $0xd0] sm:$0xff] %vm715, %v8663
      %8700 = vst.msk [vmem:[%s602 + $0xd8] sm:$0xff] %vm715, %v8664
      %8701 = vst.msk [vmem:[%s602 + $0xe0] sm:$0xff] %vm715, %v8665
      %8702 = vst.msk [vmem:[%s602 + $0xe8] sm:$0xff] %vm715, %v8666
      %8703 = vst.msk [vmem:[%s602 + $0xf0] sm:$0xff] %vm715, %v8667
      %8704 = vst.msk [vmem:[%s602 + $0xf8] sm:$0xff] %vm715, %v8668
      %8705 = vst.msk [vmem:[%s602 + $0x100] sm:$0xff] %vm715, %v8669
      %8706 = vst.msk [vmem:[%s602 + $0x108] sm:$0xff] %vm715, %v8670
      %8707 = vst.msk [vmem:[%s602 + $0x110] sm:$0xff] %vm715, %v8671
      %8708 = vst.msk [vmem:[%s602 + $0x118] sm:$0xff] %vm715, %v8672
      %p8709 = scmp.lt.s32.totalorder %s30, 1
      %s8710 = scalar_select %p8709, %s30, 1
      %s8711 = smul.addr %s8710, 36
      %s8712 = smul.addr %s8711, 8
      %s8713 = scalar_lea.vmem %s19, %s8712
      // Predicated region
      $region97: #{unet_forward.1} parent=95 // pred_check
        %p8714 = pneg %p452
      $region98: #{unet_forward.1} parent=95 // pred_check_branch
        %8716 = sbr.rel (%p8714) target = $region100
      $region99: #{unet_forward.1} parent=95 // pred_region
        _
      $region100: #{unet_forward.1} parent=95 // pred_fallthru
        _
    $region96: #{unet_forward.1} parent=5 // pred_fallthru
      _
    %p8717 = scmp.le.s32.totalorder 2, %s25
    // Predicated region
    $region101: #{unet_forward.1} parent=5 // pred_check
      %p8718 = pneg %p8717
    $region102: #{unet_forward.1} parent=5 // pred_check_branch
      %8720 = sbr.rel (%p8718) target = $region104
    $region103: #{unet_forward.1} parent=5 // pred_region
      %s8721 = ssub.s32 %s25, 2
      // Predicated region
      $region105: #{unet_forward.1} parent=103 // pred_check
        %p8722 = pneg %p458
      $region106: #{unet_forward.1} parent=103 // pred_check_branch
        %8724 = sbr.rel (%p8722) target = $region108
      $region107: #{unet_forward.1} parent=103 // pred_region
        %p8725 = scmp.lt.s32.totalorder %s31, 1
        %s8726 = scalar_select %p8725, %s31, 1
        %s8727 = smul.addr %s8726, 36
        %s8728 = smul.addr %s8727, 8
        %s8729 = scalar_lea.vmem %s19, %s8728
      $region108: #{unet_forward.1} parent=103 // pred_fallthru
        _
    $region104: #{unet_forward.1} parent=5 // pred_fallthru
      _
  $region6: #{unet_forward.1} parent=0 // loop_footer
    %s29 = sadd.s32 1, %s25
  $region7: #{unet_forward.1} parent=0 // loop_footer_branch
    %24 = sbr.rel target = $region3
  $region8: #{unet_forward.1} parent=0 // loop_exit
    _

</llo_original>
